<compile_context>
chip_gen: v5e
topology: v5e:2x2
jax: 0.10.0
libtpu: 0.0.40
codegen_flags: <defaults>
</compile_context>

<pallas_src>
from functools import partial

import numpy as np
import jax
import jax.numpy as jnp
from jax.experimental import pallas as pl
from jax.experimental.pallas import tpu as pltpu


# ----------------------------------------------------------------------------
# In-kernel building blocks (all operate on (C, H*W) lane-dense activations)
# ----------------------------------------------------------------------------
def _build_patches(read, cin, h, w, patches_ref):
    """Write the 9 zero-padded 3x3-tap shifts of a (cin, h*w) activation into
    patches_ref[0:9*cin, 0:h*w]; row k*cin + c (k = kh*3 + kw) holds
    act[c, (y+kh-1)*w + (x+kw-1)] (0 outside the image)."""
    hw = h * w
    for kh in range(3):
        for kw in range(3):
            dh, dw = kh - 1, kw - 1
            d = dh * w + dw
            k = kh * 3 + kw
            lo = max(0, -d)          # first output position with in-range flat read
            hi = min(hw, hw - d)     # one past the last
            width = hi - lo
            vals = read(lo + d, width)                       # (cin, width)
            if dw != 0:
                # within the flat range only the horizontal wrap is invalid
                col = (lo + jax.lax.broadcasted_iota(jnp.int32, (1, width), 1)) % w
                bad = (w - 1) if dw == 1 else 0
                vals = jnp.where(col != bad, vals, 0.0)
            r0 = k * cin
            patches_ref[r0:r0 + cin, lo:hi] = vals
            if lo > 0:      # out-of-image rows at the top
                patches_ref[r0:r0 + cin, 0:lo] = jnp.zeros((cin, lo), jnp.float32)
            if hi < hw:     # out-of-image rows at the bottom
                patches_ref[r0:r0 + cin, hi:hw] = jnp.zeros((cin, hw - hi), jnp.float32)


def _conv3x3_relu(patches_ref, cin, hw, w_ref, b_ref):
    """(cout, 9*cin) @ (9*cin, hw) + bias, ReLU  ->  (cout, hw)."""
    p = patches_ref[0:9 * cin, 0:hw]
    y = jnp.dot(w_ref[...], p, preferred_element_type=jnp.float32)
    return jnp.maximum(y + b_ref[...], 0.0)


def _maxpool2x2(src_ref, h, w, sel_ref):
    """2x2 stride-2 max pool of a (c, h*w) activation held in src_ref:
    4-way shifted max + exact 0/1 column-selection matmul to compact."""
    hw = h * w
    lim = hw - w - 1
    m = jnp.maximum(
        jnp.maximum(src_ref[:, 0:lim], src_ref[:, 1:1 + lim]),
        jnp.maximum(src_ref[:, w:w + lim], src_ref[:, w + 1:w + 1 + lim]))
    return jnp.dot(m, sel_ref[...], preferred_element_type=jnp.float32)


def _make_kernel(h, w, base):
    """Build the fused per-image kernel for spatial size (h, w) and width `base`."""
    c1, c2, c3 = base, 2 * base, 4 * base
    hw1 = h * w
    hw2 = (h // 2) * (w // 2)
    hw3 = (h // 4) * (w // 4)
    hwf = (h // 8) * (w // 8)        # 16 for 32x32 input (== adaptive (4,4) target)

    def kernel(x_ref,
               w1, b1, w2, b2, w3, b3, w4, b4, w5, b5, w6, b6,
               s1, s2, s3, wp, bp, wc, bc,
               o_ref,
               patches, a1, a2, p1, a3, a4, p2, a5, a6, p3, feat):
        # ---- stage 1: H x W ----
        _build_patches(lambda s, n: x_ref[:, s:s + n], 3, h, w, patches)
        a1[...] = _conv3x3_relu(patches, 3, hw1, w1, b1)
        _build_patches(lambda s, n: a1[:, s:s + n], c1, h, w, patches)
        a2[...] = _conv3x3_relu(patches, c1, hw1, w2, b2)
        p1[...] = _maxpool2x2(a2, h, w, s1)                 # dropout1: identity (eval)

        # ---- stage 2: H/2 x W/2 ----
        _build_patches(lambda s, n: p1[:, s:s + n], c1, h // 2, w // 2, patches)
        a3[...] = _conv3x3_relu(patches, c1, hw2, w3, b3)
        _build_patches(lambda s, n: a3[:, s:s + n], c2, h // 2, w // 2, patches)
        a4[...] = _conv3x3_relu(patches, c2, hw2, w4, b4)
        p2[...] = _maxpool2x2(a4, h // 2, w // 2, s2)       # dropout2: identity

        # ---- stage 3: H/4 x W/4 ----
        _build_patches(lambda s, n: p2[:, s:s + n], c2, h // 4, w // 4, patches)
        a5[...] = _conv3x3_relu(patches, c2, hw3, w5, b5)
        _build_patches(lambda s, n: a5[:, s:s + n], c3, h // 4, w // 4, patches)
        a6[...] = _conv3x3_relu(patches, c3, hw3, w6, b6)
        p3[...] = _maxpool2x2(a6, h // 4, w // 4, s3)       # dropout3: identity
        # adaptive avg-pool (4,4) is the identity for the supported 32x32 path

        # ---- flatten in PyTorch (C, H, W) order into one lane-dense row ----
        for c in range(c3):
            feat[0:1, c * hwf:(c + 1) * hwf] = p3[c:c + 1, :]

        # ---- head: projection + ReLU (+ fc_dropout p=0.0 identity) + classifier
        hidden = jnp.maximum(
            jnp.dot(feat[...], wp[...], preferred_element_type=jnp.float32) + bp[...],
            0.0)
        o_ref[...] = jnp.dot(hidden, wc[...],
                             preferred_element_type=jnp.float32) + bc[...]

    return kernel


# ----------------------------------------------------------------------------
# Host-side parameter / constant preparation
# ----------------------------------------------------------------------------
def _prep_conv(wt, bt):
    """Torch conv weight (Cout, Cin, 3, 3) -> (Cout, 9*Cin) with K order
    (kh, kw, cin) matching the in-kernel patch layout; bias -> (Cout, 1)."""
    cout, cin = wt.shape[0], wt.shape[1]
    w2 = jnp.transpose(wt, (0, 2, 3, 1)).reshape(cout, 9 * cin)
    return w2, bt.reshape(cout, 1)


def _pool_selector(h, w):
    """(hw - w - 1, hw/4) 0/1 matrix selecting the anchor of every 2x2 window."""
    hw = h * w
    lim = hw - w - 1
    hw_out = (h // 2) * (w // 2)
    q = np.arange(hw_out)
    anchors = 2 * (q // (w // 2)) * w + 2 * (q % (w // 2))
    s = np.zeros((lim, hw_out), np.float32)
    s[anchors, q] = 1.0
    return jnp.asarray(s)


# ----------------------------------------------------------------------------
# Model
# ----------------------------------------------------------------------------
def init_params(key, base=8, dense=32, num_classes=43):
    """Deterministic synthetic parameters, stored in PyTorch layouts."""
    chans = [(3, base), (base, base), (base, 2 * base), (2 * base, 2 * base),
             (2 * base, 4 * base), (4 * base, 4 * base)]
    params = {}
    keys = jax.random.split(key, len(chans) + 2)
    for i, (cin, cout) in enumerate(chans):
        kw_, kb_ = jax.random.split(keys[i])
        params[f"conv{i+1}_w"] = 0.1 * jax.random.normal(kw_, (cout, cin, 3, 3),
                                                         jnp.float32)
        params[f"conv{i+1}_b"] = 0.01 * jax.random.normal(kb_, (cout,), jnp.float32)
    feat = 4 * 4 * (4 * base)
    kpw, kpb = jax.random.split(keys[-2])
    params["proj_w"] = 0.05 * jax.random.normal(kpw, (dense, feat), jnp.float32)
    params["proj_b"] = 0.01 * jax.random.normal(kpb, (dense,), jnp.float32)
    # TODO(synk): `self.classifier` is used in forward() but never defined in the
    # reference __init__; synthesized here as Linear(dense, num_classes).
    kcw, kcb = jax.random.split(keys[-1])
    params["cls_w"] = 0.05 * jax.random.normal(kcw, (num_classes, dense), jnp.float32)
    params["cls_b"] = 0.01 * jax.random.normal(kcb, (num_classes,), jnp.float32)
    return params


def traffic_sign_forward(params, x_nchw, *, num_classes=43):
    """x_nchw: (N, 3, 32, 32) float32."""
    n, cin, h, w = x_nchw.shape
    assert cin == 3
    # TODO(synk): nn.AdaptiveAvgPool2d((4,4)) is only implemented for inputs whose
    # stem output is already 4x4 (i.e. 32x32 inputs), where it is the identity.
    assert h == 32 and w == 32, "fused kernel supports 32x32 inputs"

    base = params["conv1_w"].shape[0]
    dense = params["proj_w"].shape[0]
    c1, c2, c3 = base, 2 * base, 4 * base
    hw1, hw2, hw3 = h * w, (h // 2) * (w // 2), (h // 4) * (w // 4)
    hwf = (h // 8) * (w // 8)
    feat_len = c3 * hwf
    assert params["proj_w"].shape[1] == feat_len
    ncls_pad = ((num_classes + 127) // 128) * 128

    # ---- host-side layout prep (cheap, constant-folded under jit) ----
    conv_args = []
    for i in range(1, 7):
        w2, b2 = _prep_conv(params[f"conv{i}_w"], params[f"conv{i}_b"])
        conv_args += [w2, b2]
    s1 = _pool_selector(h, w)
    s2 = _pool_selector(h // 2, w // 2)
    s3 = _pool_selector(h // 4, w // 4)
    wp = params["proj_w"].T                                  # (feat, dense)
    bp = params["proj_b"].reshape(1, dense)
    wc = jnp.zeros((dense, ncls_pad), jnp.float32).at[:, :num_classes].set(
        params["cls_w"].T)
    bc = jnp.zeros((1, ncls_pad), jnp.float32).at[:, :num_classes].set(
        params["cls_b"].reshape(1, num_classes))

    x = x_nchw.reshape(n, 3, h * w)                          # CHW is native here

    kernel = _make_kernel(h, w, base)

    def const_spec(a):
        return pl.BlockSpec(a.shape, lambda i, nd=a.ndim: (0,) * nd)

    ins = [x] + conv_args + [s1, s2, s3, wp, bp, wc, bc]
    in_specs = ([pl.BlockSpec((None, 3, h * w), lambda i: (i, 0, 0))] +
                [const_spec(a) for a in ins[1:]])

    scratch = [
        pltpu.VMEM((9 * c3, hw1), jnp.float32),   # shared patch buffer (max size)
        pltpu.VMEM((c1, hw1), jnp.float32),       # a1
        pltpu.VMEM((c1, hw1), jnp.float32),       # a2
        pltpu.VMEM((c1, hw2), jnp.float32),       # p1
        pltpu.VMEM((c2, hw2), jnp.float32),       # a3
        pltpu.VMEM((c2, hw2), jnp.float32),       # a4
        pltpu.VMEM((c2, hw3), jnp.float32),       # p2
        pltpu.VMEM((c3, hw3), jnp.float32),       # a5
        pltpu.VMEM((c3, hw3), jnp.float32),       # a6
        pltpu.VMEM((c3, hwf), jnp.float32),       # p3 (4x4 features)
        pltpu.VMEM((1, feat_len), jnp.float32),   # flattened features
    ]

    out = pl.pallas_call(
        kernel,
        out_shape=jax.ShapeDtypeStruct((n, 1, ncls_pad), jnp.float32),
        grid=(n,),
        in_specs=in_specs,
        out_specs=pl.BlockSpec((None, 1, ncls_pad), lambda i: (i, 0, 0)),
        scratch_shapes=scratch,
        compiler_params=pltpu.CompilerParams(
            dimension_semantics=("parallel",)),
    )(*ins)

    return out.reshape(n, ncls_pad)[:, :num_classes]


# ----------------------------------------------------------------------------
if __name__ == "__main__":
    key = jax.random.PRNGKey(0)
    kp, kx = jax.random.split(key)

    base, dense, num_classes = 8, 32, 43
    params = init_params(kp, base=base, dense=dense, num_classes=num_classes)

    # 32x32 input: three maxpools -> 4x4, so AdaptiveAvgPool2d((4,4)) is identity.
    x = jax.random.normal(kx, (2, 3, 32, 32), jnp.float32)

    fwd = jax.jit(partial(traffic_sign_forward, num_classes=num_classes))
    logits = fwd(params, x)
    jax.block_until_ready(logits)
    assert logits.shape == (2, num_classes), logits.shape
    print("KERNEL_OK")
</pallas_src>

<mosaic_0001>
module attributes {stable_mosaic.version = 11 : i64} {
  func.func @kernel(%arg0: i32, %arg1: memref<1x3x1024xf32, #tpu.memory_space<vmem>>, %arg2: memref<8x27xf32, #tpu.memory_space<vmem>>, %arg3: memref<8x1xf32, #tpu.memory_space<vmem>>, %arg4: memref<8x72xf32, #tpu.memory_space<vmem>>, %arg5: memref<8x1xf32, #tpu.memory_space<vmem>>, %arg6: memref<16x72xf32, #tpu.memory_space<vmem>>, %arg7: memref<16x1xf32, #tpu.memory_space<vmem>>, %arg8: memref<16x144xf32, #tpu.memory_space<vmem>>, %arg9: memref<16x1xf32, #tpu.memory_space<vmem>>, %arg10: memref<32x144xf32, #tpu.memory_space<vmem>>, %arg11: memref<32x1xf32, #tpu.memory_space<vmem>>, %arg12: memref<32x288xf32, #tpu.memory_space<vmem>>, %arg13: memref<32x1xf32, #tpu.memory_space<vmem>>, %arg14: memref<991x256xf32, #tpu.memory_space<vmem>>, %arg15: memref<239x64xf32, #tpu.memory_space<vmem>>, %arg16: memref<55x16xf32, #tpu.memory_space<vmem>>, %arg17: memref<512x32xf32, #tpu.memory_space<vmem>>, %arg18: memref<1x32xf32, #tpu.memory_space<vmem>>, %arg19: memref<32x128xf32, #tpu.memory_space<vmem>>, %arg20: memref<1x128xf32, #tpu.memory_space<vmem>>, %arg21: memref<1x1x128xf32, #tpu.memory_space<vmem>>, %arg22: memref<288x1024xf32, #tpu.memory_space<vmem>>, %arg23: memref<8x1024xf32, #tpu.memory_space<vmem>>, %arg24: memref<8x1024xf32, #tpu.memory_space<vmem>>, %arg25: memref<8x256xf32, #tpu.memory_space<vmem>>, %arg26: memref<16x256xf32, #tpu.memory_space<vmem>>, %arg27: memref<16x256xf32, #tpu.memory_space<vmem>>, %arg28: memref<16x64xf32, #tpu.memory_space<vmem>>, %arg29: memref<32x64xf32, #tpu.memory_space<vmem>>, %arg30: memref<32x64xf32, #tpu.memory_space<vmem>>, %arg31: memref<32x16xf32, #tpu.memory_space<vmem>>, %arg32: memref<1x512xf32, #tpu.memory_space<vmem>>) attributes {dimension_semantics = [#tpu.dimension_semantics<parallel>], iteration_bounds = array<i64: 2>, scalar_prefetch = 0 : i64, scratch_operands = 11 : i64, tpu.core_type = #tpu.core_type<tc>, window_params = [{transform_indices = @transform_0, window_bounds = array<i64: 1, 3, 1024>}, {pipeline_mode = #tpu.pipeline_mode<synchronous>, transform_indices = @transform_1, window_bounds = array<i64: 8, 27>}, {pipeline_mode = #tpu.pipeline_mode<synchronous>, transform_indices = @transform_2, window_bounds = array<i64: 8, 1>}, {pipeline_mode = #tpu.pipeline_mode<synchronous>, transform_indices = @transform_3, window_bounds = array<i64: 8, 72>}, {pipeline_mode = #tpu.pipeline_mode<synchronous>, transform_indices = @transform_4, window_bounds = array<i64: 8, 1>}, {pipeline_mode = #tpu.pipeline_mode<synchronous>, transform_indices = @transform_5, window_bounds = array<i64: 16, 72>}, {pipeline_mode = #tpu.pipeline_mode<synchronous>, transform_indices = @transform_6, window_bounds = array<i64: 16, 1>}, {pipeline_mode = #tpu.pipeline_mode<synchronous>, transform_indices = @transform_7, window_bounds = array<i64: 16, 144>}, {pipeline_mode = #tpu.pipeline_mode<synchronous>, transform_indices = @transform_8, window_bounds = array<i64: 16, 1>}, {pipeline_mode = #tpu.pipeline_mode<synchronous>, transform_indices = @transform_9, window_bounds = array<i64: 32, 144>}, {pipeline_mode = #tpu.pipeline_mode<synchronous>, transform_indices = @transform_10, window_bounds = array<i64: 32, 1>}, {pipeline_mode = #tpu.pipeline_mode<synchronous>, transform_indices = @transform_11, window_bounds = array<i64: 32, 288>}, {pipeline_mode = #tpu.pipeline_mode<synchronous>, transform_indices = @transform_12, window_bounds = array<i64: 32, 1>}, {pipeline_mode = #tpu.pipeline_mode<synchronous>, transform_indices = @transform_13, window_bounds = array<i64: 991, 256>}, {pipeline_mode = #tpu.pipeline_mode<synchronous>, transform_indices = @transform_14, window_bounds = array<i64: 239, 64>}, {pipeline_mode = #tpu.pipeline_mode<synchronous>, transform_indices = @transform_15, window_bounds = array<i64: 55, 16>}, {pipeline_mode = #tpu.pipeline_mode<synchronous>, transform_indices = @transform_16, window_bounds = array<i64: 512, 32>}, {pipeline_mode = #tpu.pipeline_mode<synchronous>, transform_indices = @transform_17, window_bounds = array<i64: 1, 32>}, {pipeline_mode = #tpu.pipeline_mode<synchronous>, transform_indices = @transform_18, window_bounds = array<i64: 32, 128>}, {pipeline_mode = #tpu.pipeline_mode<synchronous>, transform_indices = @transform_19, window_bounds = array<i64: 1, 128>}, {transform_indices = @transform_20, window_bounds = array<i64: 1, 1, 128>}]} {
    %c0 = arith.constant 0 : index
    %c0_0 = arith.constant 0 : index
    %c0_1 = arith.constant 0 : index
    %0 = vector.load %arg1[%c0, %c0_0, %c0_1] : memref<1x3x1024xf32, #tpu.memory_space<vmem>>, vector<1x3x991xf32>
    %1 = vector.shape_cast %0 : vector<1x3x991xf32> to vector<3x991xf32>
    %2 = tpu.iota {dimensions = array<i32: 1>} : vector<1x991xi32>
    %c33_i32 = arith.constant 33 : i32
    %3 = vector.broadcast %c33_i32 : i32 to vector<1x991xi32>
    %4 = arith.addi %3, %2 : vector<1x991xi32>
    %c32_i32 = arith.constant 32 : i32
    %c0_i32 = arith.constant 0 : i32
    %5 = arith.cmpi eq, %c32_i32, %c0_i32 : i32
    %c1_i32 = arith.constant 1 : i32
    %6 = arith.select %5, %c1_i32, %c32_i32 : i32
    %7 = vector.broadcast %6 : i32 to vector<1x991xi32>
    %8 = arith.remsi %4, %7 : vector<1x991xi32>
    %c0_i32_2 = arith.constant 0 : i32
    %9 = vector.broadcast %c0_i32_2 : i32 to vector<1x991xi32>
    %10 = arith.cmpi ne, %8, %9 : vector<1x991xi32>
    %c0_i32_3 = arith.constant 0 : i32
    %11 = vector.broadcast %c0_i32_3 : i32 to vector<1x991xi32>
    %12 = arith.cmpi slt, %8, %11 : vector<1x991xi32>
    %c0_i32_4 = arith.constant 0 : i32
    %13 = arith.cmpi slt, %6, %c0_i32_4 : i32
    %14 = vector.broadcast %13 : i1 to vector<1x991xi1>
    %15 = vector.broadcast %14 : vector<1x991xi1> to vector<1x991xi1>
    %16 = arith.xori %12, %15 : vector<1x991xi1>
    %17 = arith.andi %16, %10 : vector<1x991xi1>
    %18 = vector.broadcast %6 : i32 to vector<1x991xi32>
    %19 = arith.addi %8, %18 : vector<1x991xi32>
    %20 = arith.select %17, %19, %8 : vector<1x991xi1>, vector<1x991xi32>
    %c0_i32_5 = arith.constant 0 : i32
    %21 = vector.broadcast %c0_i32_5 : i32 to vector<1x991xi32>
    %22 = arith.cmpi ne, %20, %21 : vector<1x991xi32>
    %cst = arith.constant 0.000000e+00 : f32
    %23 = vector.shape_cast %22 : vector<1x991xi1> to vector<1x991xi1>
    %24 = vector.broadcast %23 : vector<1x991xi1> to vector<3x991xi1>
    %25 = vector.broadcast %cst : f32 to vector<3x991xf32>
    %26 = arith.select %24, %1, %25 : vector<3x991xi1>, vector<3x991xf32>
    %c0_6 = arith.constant 0 : index
    %c33 = arith.constant 33 : index
    %27 = vector.load %arg22[%c0_6, %c33] : memref<288x1024xf32, #tpu.memory_space<vmem>>, vector<3x991xf32>
    tpu.vector_store %arg22[%c0_6, %c33], %26 {strides = array<i32>} : memref<288x1024xf32, #tpu.memory_space<vmem>>, vector<3x991xf32>,
    %cst_7 = arith.constant 0.000000e+00 : f32
    %28 = vector.broadcast %cst_7 : f32 to vector<3x33xf32>
    %c0_8 = arith.constant 0 : index
    %c0_9 = arith.constant 0 : index
    %29 = vector.load %arg22[%c0_8, %c0_9] : memref<288x1024xf32, #tpu.memory_space<vmem>>, vector<3x33xf32>
    tpu.vector_store %arg22[%c0_8, %c0_9], %28 {strides = array<i32>} : memref<288x1024xf32, #tpu.memory_space<vmem>>, vector<3x33xf32>,
    %c0_10 = arith.constant 0 : index
    %c0_11 = arith.constant 0 : index
    %c0_12 = arith.constant 0 : index
    %30 = vector.load %arg1[%c0_10, %c0_11, %c0_12] : memref<1x3x1024xf32, #tpu.memory_space<vmem>>, vector<1x3x992xf32>
    %31 = vector.shape_cast %30 : vector<1x3x992xf32> to vector<3x992xf32>
    %c3 = arith.constant 3 : index
    %c32 = arith.constant 32 : index
    %32 = vector.load %arg22[%c3, %c32] : memref<288x1024xf32, #tpu.memory_space<vmem>>, vector<3x992xf32>
    tpu.vector_store %arg22[%c3, %c32], %31 {strides = array<i32>} : memref<288x1024xf32, #tpu.memory_space<vmem>>, vector<3x992xf32>,
    %cst_13 = arith.constant 0.000000e+00 : f32
    %33 = vector.broadcast %cst_13 : f32 to vector<3x32xf32>
    %c3_14 = arith.constant 3 : index
    %c0_15 = arith.constant 0 : index
    %34 = vector.load %arg22[%c3_14, %c0_15] : memref<288x1024xf32, #tpu.memory_space<vmem>>, vector<3x32xf32>
    tpu.vector_store %arg22[%c3_14, %c0_15], %33 {strides = array<i32>} : memref<288x1024xf32, #tpu.memory_space<vmem>>, vector<3x32xf32>,
    %c0_16 = arith.constant 0 : index
    %c0_17 = arith.constant 0 : index
    %c0_18 = arith.constant 0 : index
    %35 = vector.load %arg1[%c0_16, %c0_17, %c0_18] : memref<1x3x1024xf32, #tpu.memory_space<vmem>>, vector<1x3x993xf32>
    %36 = vector.shape_cast %35 : vector<1x3x993xf32> to vector<3x993xf32>
    %37 = tpu.iota {dimensions = array<i32: 1>} : vector<1x993xi32>
    %c31_i32 = arith.constant 31 : i32
    %38 = vector.broadcast %c31_i32 : i32 to vector<1x993xi32>
    %39 = arith.addi %38, %37 : vector<1x993xi32>
    %c32_i32_19 = arith.constant 32 : i32
    %c0_i32_20 = arith.constant 0 : i32
    %40 = arith.cmpi eq, %c32_i32_19, %c0_i32_20 : i32
    %c1_i32_21 = arith.constant 1 : i32
    %41 = arith.select %40, %c1_i32_21, %c32_i32_19 : i32
    %42 = vector.broadcast %41 : i32 to vector<1x993xi32>
    %43 = arith.remsi %39, %42 : vector<1x993xi32>
    %c0_i32_22 = arith.constant 0 : i32
    %44 = vector.broadcast %c0_i32_22 : i32 to vector<1x993xi32>
    %45 = arith.cmpi ne, %43, %44 : vector<1x993xi32>
    %c0_i32_23 = arith.constant 0 : i32
    %46 = vector.broadcast %c0_i32_23 : i32 to vector<1x993xi32>
    %47 = arith.cmpi slt, %43, %46 : vector<1x993xi32>
    %c0_i32_24 = arith.constant 0 : i32
    %48 = arith.cmpi slt, %41, %c0_i32_24 : i32
    %49 = vector.broadcast %48 : i1 to vector<1x993xi1>
    %50 = vector.broadcast %49 : vector<1x993xi1> to vector<1x993xi1>
    %51 = arith.xori %47, %50 : vector<1x993xi1>
    %52 = arith.andi %51, %45 : vector<1x993xi1>
    %53 = vector.broadcast %41 : i32 to vector<1x993xi32>
    %54 = arith.addi %43, %53 : vector<1x993xi32>
    %55 = arith.select %52, %54, %43 : vector<1x993xi1>, vector<1x993xi32>
    %c31_i32_25 = arith.constant 31 : i32
    %56 = vector.broadcast %c31_i32_25 : i32 to vector<1x993xi32>
    %57 = arith.cmpi ne, %55, %56 : vector<1x993xi32>
    %cst_26 = arith.constant 0.000000e+00 : f32
    %58 = vector.shape_cast %57 : vector<1x993xi1> to vector<1x993xi1>
    %59 = vector.broadcast %58 : vector<1x993xi1> to vector<3x993xi1>
    %60 = vector.broadcast %cst_26 : f32 to vector<3x993xf32>
    %61 = arith.select %59, %36, %60 : vector<3x993xi1>, vector<3x993xf32>
    %c6 = arith.constant 6 : index
    %c31 = arith.constant 31 : index
    %62 = vector.load %arg22[%c6, %c31] : memref<288x1024xf32, #tpu.memory_space<vmem>>, vector<3x993xf32>
    tpu.vector_store %arg22[%c6, %c31], %61 {strides = array<i32>} : memref<288x1024xf32, #tpu.memory_space<vmem>>, vector<3x993xf32>,
    %cst_27 = arith.constant 0.000000e+00 : f32
    %63 = vector.broadcast %cst_27 : f32 to vector<3x31xf32>
    %c6_28 = arith.constant 6 : index
    %c0_29 = arith.constant 0 : index
    %64 = vector.load %arg22[%c6_28, %c0_29] : memref<288x1024xf32, #tpu.memory_space<vmem>>, vector<3x31xf32>
    tpu.vector_store %arg22[%c6_28, %c0_29], %63 {strides = array<i32>} : memref<288x1024xf32, #tpu.memory_space<vmem>>, vector<3x31xf32>,
    %c0_30 = arith.constant 0 : index
    %c0_31 = arith.constant 0 : index
    %c0_32 = arith.constant 0 : index
    %65 = vector.load %arg1[%c0_30, %c0_31, %c0_32] : memref<1x3x1024xf32, #tpu.memory_space<vmem>>, vector<1x3x1023xf32>
    %66 = vector.shape_cast %65 : vector<1x3x1023xf32> to vector<3x1023xf32>
    %67 = tpu.iota {dimensions = array<i32: 1>} : vector<1x1023xi32>
    %c1_i32_33 = arith.constant 1 : i32
    %68 = vector.broadcast %c1_i32_33 : i32 to vector<1x1023xi32>
    %69 = arith.addi %68, %67 : vector<1x1023xi32>
    %c32_i32_34 = arith.constant 32 : i32
    %c0_i32_35 = arith.constant 0 : i32
    %70 = arith.cmpi eq, %c32_i32_34, %c0_i32_35 : i32
    %c1_i32_36 = arith.constant 1 : i32
    %71 = arith.select %70, %c1_i32_36, %c32_i32_34 : i32
    %72 = vector.broadcast %71 : i32 to vector<1x1023xi32>
    %73 = arith.remsi %69, %72 : vector<1x1023xi32>
    %c0_i32_37 = arith.constant 0 : i32
    %74 = vector.broadcast %c0_i32_37 : i32 to vector<1x1023xi32>
    %75 = arith.cmpi ne, %73, %74 : vector<1x1023xi32>
    %c0_i32_38 = arith.constant 0 : i32
    %76 = vector.broadcast %c0_i32_38 : i32 to vector<1x1023xi32>
    %77 = arith.cmpi slt, %73, %76 : vector<1x1023xi32>
    %c0_i32_39 = arith.constant 0 : i32
    %78 = arith.cmpi slt, %71, %c0_i32_39 : i32
    %79 = vector.broadcast %78 : i1 to vector<1x1023xi1>
    %80 = vector.broadcast %79 : vector<1x1023xi1> to vector<1x1023xi1>
    %81 = arith.xori %77, %80 : vector<1x1023xi1>
    %82 = arith.andi %81, %75 : vector<1x1023xi1>
    %83 = vector.broadcast %71 : i32 to vector<1x1023xi32>
    %84 = arith.addi %73, %83 : vector<1x1023xi32>
    %85 = arith.select %82, %84, %73 : vector<1x1023xi1>, vector<1x1023xi32>
    %c0_i32_40 = arith.constant 0 : i32
    %86 = vector.broadcast %c0_i32_40 : i32 to vector<1x1023xi32>
    %87 = arith.cmpi ne, %85, %86 : vector<1x1023xi32>
    %cst_41 = arith.constant 0.000000e+00 : f32
    %88 = vector.shape_cast %87 : vector<1x1023xi1> to vector<1x1023xi1>
    %89 = vector.broadcast %88 : vector<1x1023xi1> to vector<3x1023xi1>
    %90 = vector.broadcast %cst_41 : f32 to vector<3x1023xf32>
    %91 = arith.select %89, %66, %90 : vector<3x1023xi1>, vector<3x1023xf32>
    %c9 = arith.constant 9 : index
    %c1 = arith.constant 1 : index
    %92 = vector.load %arg22[%c9, %c1] : memref<288x1024xf32, #tpu.memory_space<vmem>>, vector<3x1023xf32>
    tpu.vector_store %arg22[%c9, %c1], %91 {strides = array<i32>} : memref<288x1024xf32, #tpu.memory_space<vmem>>, vector<3x1023xf32>,
    %cst_42 = arith.constant 0.000000e+00 : f32
    %93 = vector.broadcast %cst_42 : f32 to vector<3x1xf32>
    %c9_43 = arith.constant 9 : index
    %c0_44 = arith.constant 0 : index
    %94 = vector.load %arg22[%c9_43, %c0_44] : memref<288x1024xf32, #tpu.memory_space<vmem>>, vector<3x1xf32>
    tpu.vector_store %arg22[%c9_43, %c0_44], %93 {strides = array<i32>} : memref<288x1024xf32, #tpu.memory_space<vmem>>, vector<3x1xf32>,
    %c0_45 = arith.constant 0 : index
    %c0_46 = arith.constant 0 : index
    %c0_47 = arith.constant 0 : index
    %95 = vector.load %arg1[%c0_45, %c0_46, %c0_47] : memref<1x3x1024xf32, #tpu.memory_space<vmem>>, vector<1x3x1024xf32>
    %96 = vector.shape_cast %95 : vector<1x3x1024xf32> to vector<3x1024xf32>
    %c12 = arith.constant 12 : index
    %c0_48 = arith.constant 0 : index
    %97 = vector.load %arg22[%c12, %c0_48] : memref<288x1024xf32, #tpu.memory_space<vmem>>, vector<3x1024xf32>
    tpu.vector_store %arg22[%c12, %c0_48], %96 {strides = array<i32>} : memref<288x1024xf32, #tpu.memory_space<vmem>>, vector<3x1024xf32>,
    %c0_49 = arith.constant 0 : index
    %c0_50 = arith.constant 0 : index
    %c1_51 = arith.constant 1 : index
    %98 = vector.load %arg1[%c0_49, %c0_50, %c1_51] : memref<1x3x1024xf32, #tpu.memory_space<vmem>>, vector<1x3x1023xf32>
    %99 = vector.shape_cast %98 : vector<1x3x1023xf32> to vector<3x1023xf32>
    %100 = tpu.iota {dimensions = array<i32: 1>} : vector<1x1023xi32>
    %c0_i32_52 = arith.constant 0 : i32
    %101 = vector.broadcast %c0_i32_52 : i32 to vector<1x1023xi32>
    %102 = arith.addi %101, %100 : vector<1x1023xi32>
    %c32_i32_53 = arith.constant 32 : i32
    %c0_i32_54 = arith.constant 0 : i32
    %103 = arith.cmpi eq, %c32_i32_53, %c0_i32_54 : i32
    %c1_i32_55 = arith.constant 1 : i32
    %104 = arith.select %103, %c1_i32_55, %c32_i32_53 : i32
    %105 = vector.broadcast %104 : i32 to vector<1x1023xi32>
    %106 = arith.remsi %102, %105 : vector<1x1023xi32>
    %c0_i32_56 = arith.constant 0 : i32
    %107 = vector.broadcast %c0_i32_56 : i32 to vector<1x1023xi32>
    %108 = arith.cmpi ne, %106, %107 : vector<1x1023xi32>
    %c0_i32_57 = arith.constant 0 : i32
    %109 = vector.broadcast %c0_i32_57 : i32 to vector<1x1023xi32>
    %110 = arith.cmpi slt, %106, %109 : vector<1x1023xi32>
    %c0_i32_58 = arith.constant 0 : i32
    %111 = arith.cmpi slt, %104, %c0_i32_58 : i32
    %112 = vector.broadcast %111 : i1 to vector<1x1023xi1>
    %113 = vector.broadcast %112 : vector<1x1023xi1> to vector<1x1023xi1>
    %114 = arith.xori %110, %113 : vector<1x1023xi1>
    %115 = arith.andi %114, %108 : vector<1x1023xi1>
    %116 = vector.broadcast %104 : i32 to vector<1x1023xi32>
    %117 = arith.addi %106, %116 : vector<1x1023xi32>
    %118 = arith.select %115, %117, %106 : vector<1x1023xi1>, vector<1x1023xi32>
    %c31_i32_59 = arith.constant 31 : i32
    %119 = vector.broadcast %c31_i32_59 : i32 to vector<1x1023xi32>
    %120 = arith.cmpi ne, %118, %119 : vector<1x1023xi32>
    %cst_60 = arith.constant 0.000000e+00 : f32
    %121 = vector.shape_cast %120 : vector<1x1023xi1> to vector<1x1023xi1>
    %122 = vector.broadcast %121 : vector<1x1023xi1> to vector<3x1023xi1>
    %123 = vector.broadcast %cst_60 : f32 to vector<3x1023xf32>
    %124 = arith.select %122, %99, %123 : vector<3x1023xi1>, vector<3x1023xf32>
    %c15 = arith.constant 15 : index
    %c0_61 = arith.constant 0 : index
    %125 = vector.load %arg22[%c15, %c0_61] : memref<288x1024xf32, #tpu.memory_space<vmem>>, vector<3x1023xf32>
    tpu.vector_store %arg22[%c15, %c0_61], %124 {strides = array<i32>} : memref<288x1024xf32, #tpu.memory_space<vmem>>, vector<3x1023xf32>,
    %cst_62 = arith.constant 0.000000e+00 : f32
    %126 = vector.broadcast %cst_62 : f32 to vector<3x1xf32>
    %c15_63 = arith.constant 15 : index
    %c1023 = arith.constant 1023 : index
    %127 = vector.load %arg22[%c15_63, %c1023] : memref<288x1024xf32, #tpu.memory_space<vmem>>, vector<3x1xf32>
    tpu.vector_store %arg22[%c15_63, %c1023], %126 {strides = array<i32>} : memref<288x1024xf32, #tpu.memory_space<vmem>>, vector<3x1xf32>,
    %c0_64 = arith.constant 0 : index
    %c0_65 = arith.constant 0 : index
    %c31_66 = arith.constant 31 : index
    %128 = vector.load %arg1[%c0_64, %c0_65, %c31_66] : memref<1x3x1024xf32, #tpu.memory_space<vmem>>, vector<1x3x993xf32>
    %129 = vector.shape_cast %128 : vector<1x3x993xf32> to vector<3x993xf32>
    %130 = tpu.iota {dimensions = array<i32: 1>} : vector<1x993xi32>
    %c0_i32_67 = arith.constant 0 : i32
    %131 = vector.broadcast %c0_i32_67 : i32 to vector<1x993xi32>
    %132 = arith.addi %131, %130 : vector<1x993xi32>
    %c32_i32_68 = arith.constant 32 : i32
    %c0_i32_69 = arith.constant 0 : i32
    %133 = arith.cmpi eq, %c32_i32_68, %c0_i32_69 : i32
    %c1_i32_70 = arith.constant 1 : i32
    %134 = arith.select %133, %c1_i32_70, %c32_i32_68 : i32
    %135 = vector.broadcast %134 : i32 to vector<1x993xi32>
    %136 = arith.remsi %132, %135 : vector<1x993xi32>
    %c0_i32_71 = arith.constant 0 : i32
    %137 = vector.broadcast %c0_i32_71 : i32 to vector<1x993xi32>
    %138 = arith.cmpi ne, %136, %137 : vector<1x993xi32>
    %c0_i32_72 = arith.constant 0 : i32
    %139 = vector.broadcast %c0_i32_72 : i32 to vector<1x993xi32>
    %140 = arith.cmpi slt, %136, %139 : vector<1x993xi32>
    %c0_i32_73 = arith.constant 0 : i32
    %141 = arith.cmpi slt, %134, %c0_i32_73 : i32
    %142 = vector.broadcast %141 : i1 to vector<1x993xi1>
    %143 = vector.broadcast %142 : vector<1x993xi1> to vector<1x993xi1>
    %144 = arith.xori %140, %143 : vector<1x993xi1>
    %145 = arith.andi %144, %138 : vector<1x993xi1>
    %146 = vector.broadcast %134 : i32 to vector<1x993xi32>
    %147 = arith.addi %136, %146 : vector<1x993xi32>
    %148 = arith.select %145, %147, %136 : vector<1x993xi1>, vector<1x993xi32>
    %c0_i32_74 = arith.constant 0 : i32
    %149 = vector.broadcast %c0_i32_74 : i32 to vector<1x993xi32>
    %150 = arith.cmpi ne, %148, %149 : vector<1x993xi32>
    %cst_75 = arith.constant 0.000000e+00 : f32
    %151 = vector.shape_cast %150 : vector<1x993xi1> to vector<1x993xi1>
    %152 = vector.broadcast %151 : vector<1x993xi1> to vector<3x993xi1>
    %153 = vector.broadcast %cst_75 : f32 to vector<3x993xf32>
    %154 = arith.select %152, %129, %153 : vector<3x993xi1>, vector<3x993xf32>
    %c18 = arith.constant 18 : index
    %c0_76 = arith.constant 0 : index
    %155 = vector.load %arg22[%c18, %c0_76] : memref<288x1024xf32, #tpu.memory_space<vmem>>, vector<3x993xf32>
    tpu.vector_store %arg22[%c18, %c0_76], %154 {strides = array<i32>} : memref<288x1024xf32, #tpu.memory_space<vmem>>, vector<3x993xf32>,
    %cst_77 = arith.constant 0.000000e+00 : f32
    %156 = vector.broadcast %cst_77 : f32 to vector<3x31xf32>
    %c18_78 = arith.constant 18 : index
    %c993 = arith.constant 993 : index
    %157 = vector.load %arg22[%c18_78, %c993] : memref<288x1024xf32, #tpu.memory_space<vmem>>, vector<3x31xf32>
    tpu.vector_store %arg22[%c18_78, %c993], %156 {strides = array<i32>} : memref<288x1024xf32, #tpu.memory_space<vmem>>, vector<3x31xf32>,
    %c0_79 = arith.constant 0 : index
    %c0_80 = arith.constant 0 : index
    %c32_81 = arith.constant 32 : index
    %158 = vector.load %arg1[%c0_79, %c0_80, %c32_81] : memref<1x3x1024xf32, #tpu.memory_space<vmem>>, vector<1x3x992xf32>
    %159 = vector.shape_cast %158 : vector<1x3x992xf32> to vector<3x992xf32>
    %c21 = arith.constant 21 : index
    %c0_82 = arith.constant 0 : index
    %160 = vector.load %arg22[%c21, %c0_82] : memref<288x1024xf32, #tpu.memory_space<vmem>>, vector<3x992xf32>
    tpu.vector_store %arg22[%c21, %c0_82], %159 {strides = array<i32>} : memref<288x1024xf32, #tpu.memory_space<vmem>>, vector<3x992xf32>,
    %cst_83 = arith.constant 0.000000e+00 : f32
    %161 = vector.broadcast %cst_83 : f32 to vector<3x32xf32>
    %c21_84 = arith.constant 21 : index
    %c992 = arith.constant 992 : index
    %162 = vector.load %arg22[%c21_84, %c992] : memref<288x1024xf32, #tpu.memory_space<vmem>>, vector<3x32xf32>
    tpu.vector_store %arg22[%c21_84, %c992], %161 {strides = array<i32>} : memref<288x1024xf32, #tpu.memory_space<vmem>>, vector<3x32xf32>,
    %c0_85 = arith.constant 0 : index
    %c0_86 = arith.constant 0 : index
    %c33_87 = arith.constant 33 : index
    %163 = vector.load %arg1[%c0_85, %c0_86, %c33_87] : memref<1x3x1024xf32, #tpu.memory_space<vmem>>, vector<1x3x991xf32>
    %164 = vector.shape_cast %163 : vector<1x3x991xf32> to vector<3x991xf32>
    %165 = tpu.iota {dimensions = array<i32: 1>} : vector<1x991xi32>
    %c0_i32_88 = arith.constant 0 : i32
    %166 = vector.broadcast %c0_i32_88 : i32 to vector<1x991xi32>
    %167 = arith.addi %166, %165 : vector<1x991xi32>
    %c32_i32_89 = arith.constant 32 : i32
    %c0_i32_90 = arith.constant 0 : i32
    %168 = arith.cmpi eq, %c32_i32_89, %c0_i32_90 : i32
    %c1_i32_91 = arith.constant 1 : i32
    %169 = arith.select %168, %c1_i32_91, %c32_i32_89 : i32
    %170 = vector.broadcast %169 : i32 to vector<1x991xi32>
    %171 = arith.remsi %167, %170 : vector<1x991xi32>
    %c0_i32_92 = arith.constant 0 : i32
    %172 = vector.broadcast %c0_i32_92 : i32 to vector<1x991xi32>
    %173 = arith.cmpi ne, %171, %172 : vector<1x991xi32>
    %c0_i32_93 = arith.constant 0 : i32
    %174 = vector.broadcast %c0_i32_93 : i32 to vector<1x991xi32>
    %175 = arith.cmpi slt, %171, %174 : vector<1x991xi32>
    %c0_i32_94 = arith.constant 0 : i32
    %176 = arith.cmpi slt, %169, %c0_i32_94 : i32
    %177 = vector.broadcast %176 : i1 to vector<1x991xi1>
    %178 = vector.broadcast %177 : vector<1x991xi1> to vector<1x991xi1>
    %179 = arith.xori %175, %178 : vector<1x991xi1>
    %180 = arith.andi %179, %173 : vector<1x991xi1>
    %181 = vector.broadcast %169 : i32 to vector<1x991xi32>
    %182 = arith.addi %171, %181 : vector<1x991xi32>
    %183 = arith.select %180, %182, %171 : vector<1x991xi1>, vector<1x991xi32>
    %c31_i32_95 = arith.constant 31 : i32
    %184 = vector.broadcast %c31_i32_95 : i32 to vector<1x991xi32>
    %185 = arith.cmpi ne, %183, %184 : vector<1x991xi32>
    %cst_96 = arith.constant 0.000000e+00 : f32
    %186 = vector.shape_cast %185 : vector<1x991xi1> to vector<1x991xi1>
    %187 = vector.broadcast %186 : vector<1x991xi1> to vector<3x991xi1>
    %188 = vector.broadcast %cst_96 : f32 to vector<3x991xf32>
    %189 = arith.select %187, %164, %188 : vector<3x991xi1>, vector<3x991xf32>
    %c24 = arith.constant 24 : index
    %c0_97 = arith.constant 0 : index
    %190 = vector.load %arg22[%c24, %c0_97] : memref<288x1024xf32, #tpu.memory_space<vmem>>, vector<3x991xf32>
    tpu.vector_store %arg22[%c24, %c0_97], %189 {strides = array<i32>} : memref<288x1024xf32, #tpu.memory_space<vmem>>, vector<3x991xf32>,
    %cst_98 = arith.constant 0.000000e+00 : f32
    %191 = vector.broadcast %cst_98 : f32 to vector<3x33xf32>
    %c24_99 = arith.constant 24 : index
    %c991 = arith.constant 991 : index
    %192 = vector.load %arg22[%c24_99, %c991] : memref<288x1024xf32, #tpu.memory_space<vmem>>, vector<3x33xf32>
    tpu.vector_store %arg22[%c24_99, %c991], %191 {strides = array<i32>} : memref<288x1024xf32, #tpu.memory_space<vmem>>, vector<3x33xf32>,
    %c0_100 = arith.constant 0 : index
    %c0_101 = arith.constant 0 : index
    %193 = vector.load %arg22[%c0_100, %c0_101] : memref<288x1024xf32, #tpu.memory_space<vmem>>, vector<27x1024xf32>
    %c0_102 = arith.constant 0 : index
    %c0_103 = arith.constant 0 : index
    %194 = vector.load %arg2[%c0_102, %c0_103] : memref<8x27xf32, #tpu.memory_space<vmem>>, vector<8x27xf32>
    %cst_104 = arith.constant dense<0.000000e+00> : vector<8x1024xf32>
    %195 = tpu.matmul %194, %193, %cst_104 {dimension_numbers = #tpu.dot_dimension_numbers<[1], [0], [0], [1], [0, 0, 1, 1], [], []>} : vector<8x27xf32>, vector<27x1024xf32>, vector<8x1024xf32> -> vector<8x1024xf32>
    %c0_105 = arith.constant 0 : index
    %c0_106 = arith.constant 0 : index
    %196 = vector.load %arg3[%c0_105, %c0_106] : memref<8x1xf32, #tpu.memory_space<vmem>>, vector<8x1xf32>
    %197 = vector.broadcast %196 : vector<8x1xf32> to vector<8x1024xf32>
    %198 = arith.addf %195, %197 : vector<8x1024xf32>
    %cst_107 = arith.constant 0.000000e+00 : f32
    %199 = vector.broadcast %cst_107 : f32 to vector<8x1024xf32>
    %200 = arith.maximumf %198, %199 : vector<8x1024xf32>
    %c0_108 = arith.constant 0 : index
    %c0_109 = arith.constant 0 : index
    %201 = vector.load %arg23[%c0_108, %c0_109] : memref<8x1024xf32, #tpu.memory_space<vmem>>, vector<8x1024xf32>
    tpu.vector_store %arg23[%c0_108, %c0_109], %200 {strides = array<i32>} : memref<8x1024xf32, #tpu.memory_space<vmem>>, vector<8x1024xf32>,
    %c0_110 = arith.constant 0 : index
    %c0_111 = arith.constant 0 : index
    %202 = vector.load %arg23[%c0_110, %c0_111] : memref<8x1024xf32, #tpu.memory_space<vmem>>, vector<8x991xf32>
    %203 = tpu.iota {dimensions = array<i32: 1>} : vector<1x991xi32>
    %c33_i32_112 = arith.constant 33 : i32
    %204 = vector.broadcast %c33_i32_112 : i32 to vector<1x991xi32>
    %205 = arith.addi %204, %203 : vector<1x991xi32>
    %c32_i32_113 = arith.constant 32 : i32
    %c0_i32_114 = arith.constant 0 : i32
    %206 = arith.cmpi eq, %c32_i32_113, %c0_i32_114 : i32
    %c1_i32_115 = arith.constant 1 : i32
    %207 = arith.select %206, %c1_i32_115, %c32_i32_113 : i32
    %208 = vector.broadcast %207 : i32 to vector<1x991xi32>
    %209 = arith.remsi %205, %208 : vector<1x991xi32>
    %c0_i32_116 = arith.constant 0 : i32
    %210 = vector.broadcast %c0_i32_116 : i32 to vector<1x991xi32>
    %211 = arith.cmpi ne, %209, %210 : vector<1x991xi32>
    %c0_i32_117 = arith.constant 0 : i32
    %212 = vector.broadcast %c0_i32_117 : i32 to vector<1x991xi32>
    %213 = arith.cmpi slt, %209, %212 : vector<1x991xi32>
    %c0_i32_118 = arith.constant 0 : i32
    %214 = arith.cmpi slt, %207, %c0_i32_118 : i32
    %215 = vector.broadcast %214 : i1 to vector<1x991xi1>
    %216 = vector.broadcast %215 : vector<1x991xi1> to vector<1x991xi1>
    %217 = arith.xori %213, %216 : vector<1x991xi1>
    %218 = arith.andi %217, %211 : vector<1x991xi1>
    %219 = vector.broadcast %207 : i32 to vector<1x991xi32>
    %220 = arith.addi %209, %219 : vector<1x991xi32>
    %221 = arith.select %218, %220, %209 : vector<1x991xi1>, vector<1x991xi32>
    %c0_i32_119 = arith.constant 0 : i32
    %222 = vector.broadcast %c0_i32_119 : i32 to vector<1x991xi32>
    %223 = arith.cmpi ne, %221, %222 : vector<1x991xi32>
    %cst_120 = arith.constant 0.000000e+00 : f32
    %224 = vector.shape_cast %223 : vector<1x991xi1> to vector<1x991xi1>
    %225 = vector.broadcast %224 : vector<1x991xi1> to vector<8x991xi1>
    %226 = vector.broadcast %cst_120 : f32 to vector<8x991xf32>
    %227 = arith.select %225, %202, %226 : vector<8x991xi1>, vector<8x991xf32>
    %c0_121 = arith.constant 0 : index
    %c33_122 = arith.constant 33 : index
    %228 = vector.load %arg22[%c0_121, %c33_122] : memref<288x1024xf32, #tpu.memory_space<vmem>>, vector<8x991xf32>
    tpu.vector_store %arg22[%c0_121, %c33_122], %227 {strides = array<i32>} : memref<288x1024xf32, #tpu.memory_space<vmem>>, vector<8x991xf32>,
    %cst_123 = arith.constant 0.000000e+00 : f32
    %229 = vector.broadcast %cst_123 : f32 to vector<8x33xf32>
    %c0_124 = arith.constant 0 : index
    %c0_125 = arith.constant 0 : index
    %230 = vector.load %arg22[%c0_124, %c0_125] : memref<288x1024xf32, #tpu.memory_space<vmem>>, vector<8x33xf32>
    tpu.vector_store %arg22[%c0_124, %c0_125], %229 {strides = array<i32>} : memref<288x1024xf32, #tpu.memory_space<vmem>>, vector<8x33xf32>,
    %c0_126 = arith.constant 0 : index
    %c0_127 = arith.constant 0 : index
    %231 = vector.load %arg23[%c0_126, %c0_127] : memref<8x1024xf32, #tpu.memory_space<vmem>>, vector<8x992xf32>
    %c8 = arith.constant 8 : index
    %c32_128 = arith.constant 32 : index
    %232 = vector.load %arg22[%c8, %c32_128] : memref<288x1024xf32, #tpu.memory_space<vmem>>, vector<8x992xf32>
    tpu.vector_store %arg22[%c8, %c32_128], %231 {strides = array<i32>} : memref<288x1024xf32, #tpu.memory_space<vmem>>, vector<8x992xf32>,
    %cst_129 = arith.constant 0.000000e+00 : f32
    %233 = vector.broadcast %cst_129 : f32 to vector<8x32xf32>
    %c8_130 = arith.constant 8 : index
    %c0_131 = arith.constant 0 : index
    %234 = vector.load %arg22[%c8_130, %c0_131] : memref<288x1024xf32, #tpu.memory_space<vmem>>, vector<8x32xf32>
    tpu.vector_store %arg22[%c8_130, %c0_131], %233 {strides = array<i32>} : memref<288x1024xf32, #tpu.memory_space<vmem>>, vector<8x32xf32>,
    %c0_132 = arith.constant 0 : index
    %c0_133 = arith.constant 0 : index
    %235 = vector.load %arg23[%c0_132, %c0_133] : memref<8x1024xf32, #tpu.memory_space<vmem>>, vector<8x993xf32>
    %236 = tpu.iota {dimensions = array<i32: 1>} : vector<1x993xi32>
    %c31_i32_134 = arith.constant 31 : i32
    %237 = vector.broadcast %c31_i32_134 : i32 to vector<1x993xi32>
    %238 = arith.addi %237, %236 : vector<1x993xi32>
    %c32_i32_135 = arith.constant 32 : i32
    %c0_i32_136 = arith.constant 0 : i32
    %239 = arith.cmpi eq, %c32_i32_135, %c0_i32_136 : i32
    %c1_i32_137 = arith.constant 1 : i32
    %240 = arith.select %239, %c1_i32_137, %c32_i32_135 : i32
    %241 = vector.broadcast %240 : i32 to vector<1x993xi32>
    %242 = arith.remsi %238, %241 : vector<1x993xi32>
    %c0_i32_138 = arith.constant 0 : i32
    %243 = vector.broadcast %c0_i32_138 : i32 to vector<1x993xi32>
    %244 = arith.cmpi ne, %242, %243 : vector<1x993xi32>
    %c0_i32_139 = arith.constant 0 : i32
    %245 = vector.broadcast %c0_i32_139 : i32 to vector<1x993xi32>
    %246 = arith.cmpi slt, %242, %245 : vector<1x993xi32>
    %c0_i32_140 = arith.constant 0 : i32
    %247 = arith.cmpi slt, %240, %c0_i32_140 : i32
    %248 = vector.broadcast %247 : i1 to vector<1x993xi1>
    %249 = vector.broadcast %248 : vector<1x993xi1> to vector<1x993xi1>
    %250 = arith.xori %246, %249 : vector<1x993xi1>
    %251 = arith.andi %250, %244 : vector<1x993xi1>
    %252 = vector.broadcast %240 : i32 to vector<1x993xi32>
    %253 = arith.addi %242, %252 : vector<1x993xi32>
    %254 = arith.select %251, %253, %242 : vector<1x993xi1>, vector<1x993xi32>
    %c31_i32_141 = arith.constant 31 : i32
    %255 = vector.broadcast %c31_i32_141 : i32 to vector<1x993xi32>
    %256 = arith.cmpi ne, %254, %255 : vector<1x993xi32>
    %cst_142 = arith.constant 0.000000e+00 : f32
    %257 = vector.shape_cast %256 : vector<1x993xi1> to vector<1x993xi1>
    %258 = vector.broadcast %257 : vector<1x993xi1> to vector<8x993xi1>
    %259 = vector.broadcast %cst_142 : f32 to vector<8x993xf32>
    %260 = arith.select %258, %235, %259 : vector<8x993xi1>, vector<8x993xf32>
    %c16 = arith.constant 16 : index
    %c31_143 = arith.constant 31 : index
    %261 = vector.load %arg22[%c16, %c31_143] : memref<288x1024xf32, #tpu.memory_space<vmem>>, vector<8x993xf32>
    tpu.vector_store %arg22[%c16, %c31_143], %260 {strides = array<i32>} : memref<288x1024xf32, #tpu.memory_space<vmem>>, vector<8x993xf32>,
    %cst_144 = arith.constant 0.000000e+00 : f32
    %262 = vector.broadcast %cst_144 : f32 to vector<8x31xf32>
    %c16_145 = arith.constant 16 : index
    %c0_146 = arith.constant 0 : index
    %263 = vector.load %arg22[%c16_145, %c0_146] : memref<288x1024xf32, #tpu.memory_space<vmem>>, vector<8x31xf32>
    tpu.vector_store %arg22[%c16_145, %c0_146], %262 {strides = array<i32>} : memref<288x1024xf32, #tpu.memory_space<vmem>>, vector<8x31xf32>,
    %c0_147 = arith.constant 0 : index
    %c0_148 = arith.constant 0 : index
    %264 = vector.load %arg23[%c0_147, %c0_148] : memref<8x1024xf32, #tpu.memory_space<vmem>>, vector<8x1023xf32>
    %265 = tpu.iota {dimensions = array<i32: 1>} : vector<1x1023xi32>
    %c1_i32_149 = arith.constant 1 : i32
    %266 = vector.broadcast %c1_i32_149 : i32 to vector<1x1023xi32>
    %267 = arith.addi %266, %265 : vector<1x1023xi32>
    %c32_i32_150 = arith.constant 32 : i32
    %c0_i32_151 = arith.constant 0 : i32
    %268 = arith.cmpi eq, %c32_i32_150, %c0_i32_151 : i32
    %c1_i32_152 = arith.constant 1 : i32
    %269 = arith.select %268, %c1_i32_152, %c32_i32_150 : i32
    %270 = vector.broadcast %269 : i32 to vector<1x1023xi32>
    %271 = arith.remsi %267, %270 : vector<1x1023xi32>
    %c0_i32_153 = arith.constant 0 : i32
    %272 = vector.broadcast %c0_i32_153 : i32 to vector<1x1023xi32>
    %273 = arith.cmpi ne, %271, %272 : vector<1x1023xi32>
    %c0_i32_154 = arith.constant 0 : i32
    %274 = vector.broadcast %c0_i32_154 : i32 to vector<1x1023xi32>
    %275 = arith.cmpi slt, %271, %274 : vector<1x1023xi32>
    %c0_i32_155 = arith.constant 0 : i32
    %276 = arith.cmpi slt, %269, %c0_i32_155 : i32
    %277 = vector.broadcast %276 : i1 to vector<1x1023xi1>
    %278 = vector.broadcast %277 : vector<1x1023xi1> to vector<1x1023xi1>
    %279 = arith.xori %275, %278 : vector<1x1023xi1>
    %280 = arith.andi %279, %273 : vector<1x1023xi1>
    %281 = vector.broadcast %269 : i32 to vector<1x1023xi32>
    %282 = arith.addi %271, %281 : vector<1x1023xi32>
    %283 = arith.select %280, %282, %271 : vector<1x1023xi1>, vector<1x1023xi32>
    %c0_i32_156 = arith.constant 0 : i32
    %284 = vector.broadcast %c0_i32_156 : i32 to vector<1x1023xi32>
    %285 = arith.cmpi ne, %283, %284 : vector<1x1023xi32>
    %cst_157 = arith.constant 0.000000e+00 : f32
    %286 = vector.shape_cast %285 : vector<1x1023xi1> to vector<1x1023xi1>
    %287 = vector.broadcast %286 : vector<1x1023xi1> to vector<8x1023xi1>
    %288 = vector.broadcast %cst_157 : f32 to vector<8x1023xf32>
    %289 = arith.select %287, %264, %288 : vector<8x1023xi1>, vector<8x1023xf32>
    %c24_158 = arith.constant 24 : index
    %c1_159 = arith.constant 1 : index
    %290 = vector.load %arg22[%c24_158, %c1_159] : memref<288x1024xf32, #tpu.memory_space<vmem>>, vector<8x1023xf32>
    tpu.vector_store %arg22[%c24_158, %c1_159], %289 {strides = array<i32>} : memref<288x1024xf32, #tpu.memory_space<vmem>>, vector<8x1023xf32>,
    %cst_160 = arith.constant 0.000000e+00 : f32
    %291 = vector.broadcast %cst_160 : f32 to vector<8x1xf32>
    %c24_161 = arith.constant 24 : index
    %c0_162 = arith.constant 0 : index
    %292 = vector.load %arg22[%c24_161, %c0_162] : memref<288x1024xf32, #tpu.memory_space<vmem>>, vector<8x1xf32>
    tpu.vector_store %arg22[%c24_161, %c0_162], %291 {strides = array<i32>} : memref<288x1024xf32, #tpu.memory_space<vmem>>, vector<8x1xf32>,
    %c0_163 = arith.constant 0 : index
    %c0_164 = arith.constant 0 : index
    %293 = vector.load %arg23[%c0_163, %c0_164] : memref<8x1024xf32, #tpu.memory_space<vmem>>, vector<8x1024xf32>
    %c32_165 = arith.constant 32 : index
    %c0_166 = arith.constant 0 : index
    %294 = vector.load %arg22[%c32_165, %c0_166] : memref<288x1024xf32, #tpu.memory_space<vmem>>, vector<8x1024xf32>
    tpu.vector_store %arg22[%c32_165, %c0_166], %293 {strides = array<i32>} : memref<288x1024xf32, #tpu.memory_space<vmem>>, vector<8x1024xf32>,
    %c0_167 = arith.constant 0 : index
    %c1_168 = arith.constant 1 : index
    %295 = vector.load %arg23[%c0_167, %c1_168] : memref<8x1024xf32, #tpu.memory_space<vmem>>, vector<8x1023xf32>
    %296 = tpu.iota {dimensions = array<i32: 1>} : vector<1x1023xi32>
    %c0_i32_169 = arith.constant 0 : i32
    %297 = vector.broadcast %c0_i32_169 : i32 to vector<1x1023xi32>
    %298 = arith.addi %297, %296 : vector<1x1023xi32>
    %c32_i32_170 = arith.constant 32 : i32
    %c0_i32_171 = arith.constant 0 : i32
    %299 = arith.cmpi eq, %c32_i32_170, %c0_i32_171 : i32
    %c1_i32_172 = arith.constant 1 : i32
    %300 = arith.select %299, %c1_i32_172, %c32_i32_170 : i32
    %301 = vector.broadcast %300 : i32 to vector<1x1023xi32>
    %302 = arith.remsi %298, %301 : vector<1x1023xi32>
    %c0_i32_173 = arith.constant 0 : i32
    %303 = vector.broadcast %c0_i32_173 : i32 to vector<1x1023xi32>
    %304 = arith.cmpi ne, %302, %303 : vector<1x1023xi32>
    %c0_i32_174 = arith.constant 0 : i32
    %305 = vector.broadcast %c0_i32_174 : i32 to vector<1x1023xi32>
    %306 = arith.cmpi slt, %302, %305 : vector<1x1023xi32>
    %c0_i32_175 = arith.constant 0 : i32
    %307 = arith.cmpi slt, %300, %c0_i32_175 : i32
    %308 = vector.broadcast %307 : i1 to vector<1x1023xi1>
    %309 = vector.broadcast %308 : vector<1x1023xi1> to vector<1x1023xi1>
    %310 = arith.xori %306, %309 : vector<1x1023xi1>
    %311 = arith.andi %310, %304 : vector<1x1023xi1>
    %312 = vector.broadcast %300 : i32 to vector<1x1023xi32>
    %313 = arith.addi %302, %312 : vector<1x1023xi32>
    %314 = arith.select %311, %313, %302 : vector<1x1023xi1>, vector<1x1023xi32>
    %c31_i32_176 = arith.constant 31 : i32
    %315 = vector.broadcast %c31_i32_176 : i32 to vector<1x1023xi32>
    %316 = arith.cmpi ne, %314, %315 : vector<1x1023xi32>
    %cst_177 = arith.constant 0.000000e+00 : f32
    %317 = vector.shape_cast %316 : vector<1x1023xi1> to vector<1x1023xi1>
    %318 = vector.broadcast %317 : vector<1x1023xi1> to vector<8x1023xi1>
    %319 = vector.broadcast %cst_177 : f32 to vector<8x1023xf32>
    %320 = arith.select %318, %295, %319 : vector<8x1023xi1>, vector<8x1023xf32>
    %c40 = arith.constant 40 : index
    %c0_178 = arith.constant 0 : index
    %321 = vector.load %arg22[%c40, %c0_178] : memref<288x1024xf32, #tpu.memory_space<vmem>>, vector<8x1023xf32>
    tpu.vector_store %arg22[%c40, %c0_178], %320 {strides = array<i32>} : memref<288x1024xf32, #tpu.memory_space<vmem>>, vector<8x1023xf32>,
    %cst_179 = arith.constant 0.000000e+00 : f32
    %322 = vector.broadcast %cst_179 : f32 to vector<8x1xf32>
    %c40_180 = arith.constant 40 : index
    %c1023_181 = arith.constant 1023 : index
    %323 = vector.load %arg22[%c40_180, %c1023_181] : memref<288x1024xf32, #tpu.memory_space<vmem>>, vector<8x1xf32>
    tpu.vector_store %arg22[%c40_180, %c1023_181], %322 {strides = array<i32>} : memref<288x1024xf32, #tpu.memory_space<vmem>>, vector<8x1xf32>,
    %c0_182 = arith.constant 0 : index
    %c31_183 = arith.constant 31 : index
    %324 = vector.load %arg23[%c0_182, %c31_183] : memref<8x1024xf32, #tpu.memory_space<vmem>>, vector<8x993xf32>
    %325 = tpu.iota {dimensions = array<i32: 1>} : vector<1x993xi32>
    %c0_i32_184 = arith.constant 0 : i32
    %326 = vector.broadcast %c0_i32_184 : i32 to vector<1x993xi32>
    %327 = arith.addi %326, %325 : vector<1x993xi32>
    %c32_i32_185 = arith.constant 32 : i32
    %c0_i32_186 = arith.constant 0 : i32
    %328 = arith.cmpi eq, %c32_i32_185, %c0_i32_186 : i32
    %c1_i32_187 = arith.constant 1 : i32
    %329 = arith.select %328, %c1_i32_187, %c32_i32_185 : i32
    %330 = vector.broadcast %329 : i32 to vector<1x993xi32>
    %331 = arith.remsi %327, %330 : vector<1x993xi32>
    %c0_i32_188 = arith.constant 0 : i32
    %332 = vector.broadcast %c0_i32_188 : i32 to vector<1x993xi32>
    %333 = arith.cmpi ne, %331, %332 : vector<1x993xi32>
    %c0_i32_189 = arith.constant 0 : i32
    %334 = vector.broadcast %c0_i32_189 : i32 to vector<1x993xi32>
    %335 = arith.cmpi slt, %331, %334 : vector<1x993xi32>
    %c0_i32_190 = arith.constant 0 : i32
    %336 = arith.cmpi slt, %329, %c0_i32_190 : i32
    %337 = vector.broadcast %336 : i1 to vector<1x993xi1>
    %338 = vector.broadcast %337 : vector<1x993xi1> to vector<1x993xi1>
    %339 = arith.xori %335, %338 : vector<1x993xi1>
    %340 = arith.andi %339, %333 : vector<1x993xi1>
    %341 = vector.broadcast %329 : i32 to vector<1x993xi32>
    %342 = arith.addi %331, %341 : vector<1x993xi32>
    %343 = arith.select %340, %342, %331 : vector<1x993xi1>, vector<1x993xi32>
    %c0_i32_191 = arith.constant 0 : i32
    %344 = vector.broadcast %c0_i32_191 : i32 to vector<1x993xi32>
    %345 = arith.cmpi ne, %343, %344 : vector<1x993xi32>
    %cst_192 = arith.constant 0.000000e+00 : f32
    %346 = vector.shape_cast %345 : vector<1x993xi1> to vector<1x993xi1>
    %347 = vector.broadcast %346 : vector<1x993xi1> to vector<8x993xi1>
    %348 = vector.broadcast %cst_192 : f32 to vector<8x993xf32>
    %349 = arith.select %347, %324, %348 : vector<8x993xi1>, vector<8x993xf32>
    %c48 = arith.constant 48 : index
    %c0_193 = arith.constant 0 : index
    %350 = vector.load %arg22[%c48, %c0_193] : memref<288x1024xf32, #tpu.memory_space<vmem>>, vector<8x993xf32>
    tpu.vector_store %arg22[%c48, %c0_193], %349 {strides = array<i32>} : memref<288x1024xf32, #tpu.memory_space<vmem>>, vector<8x993xf32>,
    %cst_194 = arith.constant 0.000000e+00 : f32
    %351 = vector.broadcast %cst_194 : f32 to vector<8x31xf32>
    %c48_195 = arith.constant 48 : index
    %c993_196 = arith.constant 993 : index
    %352 = vector.load %arg22[%c48_195, %c993_196] : memref<288x1024xf32, #tpu.memory_space<vmem>>, vector<8x31xf32>
    tpu.vector_store %arg22[%c48_195, %c993_196], %351 {strides = array<i32>} : memref<288x1024xf32, #tpu.memory_space<vmem>>, vector<8x31xf32>,
    %c0_197 = arith.constant 0 : index
    %c32_198 = arith.constant 32 : index
    %353 = vector.load %arg23[%c0_197, %c32_198] : memref<8x1024xf32, #tpu.memory_space<vmem>>, vector<8x992xf32>
    %c56 = arith.constant 56 : index
    %c0_199 = arith.constant 0 : index
    %354 = vector.load %arg22[%c56, %c0_199] : memref<288x1024xf32, #tpu.memory_space<vmem>>, vector<8x992xf32>
    tpu.vector_store %arg22[%c56, %c0_199], %353 {strides = array<i32>} : memref<288x1024xf32, #tpu.memory_space<vmem>>, vector<8x992xf32>,
    %cst_200 = arith.constant 0.000000e+00 : f32
    %355 = vector.broadcast %cst_200 : f32 to vector<8x32xf32>
    %c56_201 = arith.constant 56 : index
    %c992_202 = arith.constant 992 : index
    %356 = vector.load %arg22[%c56_201, %c992_202] : memref<288x1024xf32, #tpu.memory_space<vmem>>, vector<8x32xf32>
    tpu.vector_store %arg22[%c56_201, %c992_202], %355 {strides = array<i32>} : memref<288x1024xf32, #tpu.memory_space<vmem>>, vector<8x32xf32>,
    %c0_203 = arith.constant 0 : index
    %c33_204 = arith.constant 33 : index
    %357 = vector.load %arg23[%c0_203, %c33_204] : memref<8x1024xf32, #tpu.memory_space<vmem>>, vector<8x991xf32>
    %358 = tpu.iota {dimensions = array<i32: 1>} : vector<1x991xi32>
    %c0_i32_205 = arith.constant 0 : i32
    %359 = vector.broadcast %c0_i32_205 : i32 to vector<1x991xi32>
    %360 = arith.addi %359, %358 : vector<1x991xi32>
    %c32_i32_206 = arith.constant 32 : i32
    %c0_i32_207 = arith.constant 0 : i32
    %361 = arith.cmpi eq, %c32_i32_206, %c0_i32_207 : i32
    %c1_i32_208 = arith.constant 1 : i32
    %362 = arith.select %361, %c1_i32_208, %c32_i32_206 : i32
    %363 = vector.broadcast %362 : i32 to vector<1x991xi32>
    %364 = arith.remsi %360, %363 : vector<1x991xi32>
    %c0_i32_209 = arith.constant 0 : i32
    %365 = vector.broadcast %c0_i32_209 : i32 to vector<1x991xi32>
    %366 = arith.cmpi ne, %364, %365 : vector<1x991xi32>
    %c0_i32_210 = arith.constant 0 : i32
    %367 = vector.broadcast %c0_i32_210 : i32 to vector<1x991xi32>
    %368 = arith.cmpi slt, %364, %367 : vector<1x991xi32>
    %c0_i32_211 = arith.constant 0 : i32
    %369 = arith.cmpi slt, %362, %c0_i32_211 : i32
    %370 = vector.broadcast %369 : i1 to vector<1x991xi1>
    %371 = vector.broadcast %370 : vector<1x991xi1> to vector<1x991xi1>
    %372 = arith.xori %368, %371 : vector<1x991xi1>
    %373 = arith.andi %372, %366 : vector<1x991xi1>
    %374 = vector.broadcast %362 : i32 to vector<1x991xi32>
    %375 = arith.addi %364, %374 : vector<1x991xi32>
    %376 = arith.select %373, %375, %364 : vector<1x991xi1>, vector<1x991xi32>
    %c31_i32_212 = arith.constant 31 : i32
    %377 = vector.broadcast %c31_i32_212 : i32 to vector<1x991xi32>
    %378 = arith.cmpi ne, %376, %377 : vector<1x991xi32>
    %cst_213 = arith.constant 0.000000e+00 : f32
    %379 = vector.shape_cast %378 : vector<1x991xi1> to vector<1x991xi1>
    %380 = vector.broadcast %379 : vector<1x991xi1> to vector<8x991xi1>
    %381 = vector.broadcast %cst_213 : f32 to vector<8x991xf32>
    %382 = arith.select %380, %357, %381 : vector<8x991xi1>, vector<8x991xf32>
    %c64 = arith.constant 64 : index
    %c0_214 = arith.constant 0 : index
    %383 = vector.load %arg22[%c64, %c0_214] : memref<288x1024xf32, #tpu.memory_space<vmem>>, vector<8x991xf32>
    tpu.vector_store %arg22[%c64, %c0_214], %382 {strides = array<i32>} : memref<288x1024xf32, #tpu.memory_space<vmem>>, vector<8x991xf32>,
    %cst_215 = arith.constant 0.000000e+00 : f32
    %384 = vector.broadcast %cst_215 : f32 to vector<8x33xf32>
    %c64_216 = arith.constant 64 : index
    %c991_217 = arith.constant 991 : index
    %385 = vector.load %arg22[%c64_216, %c991_217] : memref<288x1024xf32, #tpu.memory_space<vmem>>, vector<8x33xf32>
    tpu.vector_store %arg22[%c64_216, %c991_217], %384 {strides = array<i32>} : memref<288x1024xf32, #tpu.memory_space<vmem>>, vector<8x33xf32>,
    %c0_218 = arith.constant 0 : index
    %c0_219 = arith.constant 0 : index
    %386 = vector.load %arg22[%c0_218, %c0_219] : memref<288x1024xf32, #tpu.memory_space<vmem>>, vector<72x1024xf32>
    %c0_220 = arith.constant 0 : index
    %c0_221 = arith.constant 0 : index
    %387 = vector.load %arg4[%c0_220, %c0_221] : memref<8x72xf32, #tpu.memory_space<vmem>>, vector<8x72xf32>
    %cst_222 = arith.constant dense<0.000000e+00> : vector<8x1024xf32>
    %388 = tpu.matmul %387, %386, %cst_222 {dimension_numbers = #tpu.dot_dimension_numbers<[1], [0], [0], [1], [0, 0, 1, 1], [], []>} : vector<8x72xf32>, vector<72x1024xf32>, vector<8x1024xf32> -> vector<8x1024xf32>
    %c0_223 = arith.constant 0 : index
    %c0_224 = arith.constant 0 : index
    %389 = vector.load %arg5[%c0_223, %c0_224] : memref<8x1xf32, #tpu.memory_space<vmem>>, vector<8x1xf32>
    %390 = vector.broadcast %389 : vector<8x1xf32> to vector<8x1024xf32>
    %391 = arith.addf %388, %390 : vector<8x1024xf32>
    %cst_225 = arith.constant 0.000000e+00 : f32
    %392 = vector.broadcast %cst_225 : f32 to vector<8x1024xf32>
    %393 = arith.maximumf %391, %392 : vector<8x1024xf32>
    %c0_226 = arith.constant 0 : index
    %c0_227 = arith.constant 0 : index
    %394 = vector.load %arg24[%c0_226, %c0_227] : memref<8x1024xf32, #tpu.memory_space<vmem>>, vector<8x1024xf32>
    tpu.vector_store %arg24[%c0_226, %c0_227], %393 {strides = array<i32>} : memref<8x1024xf32, #tpu.memory_space<vmem>>, vector<8x1024xf32>,
    %c0_228 = arith.constant 0 : index
    %c0_229 = arith.constant 0 : index
    %395 = vector.load %arg24[%c0_228, %c0_229] : memref<8x1024xf32, #tpu.memory_space<vmem>>, vector<8x991xf32>
    %c0_230 = arith.constant 0 : index
    %c1_231 = arith.constant 1 : index
    %396 = vector.load %arg24[%c0_230, %c1_231] : memref<8x1024xf32, #tpu.memory_space<vmem>>, vector<8x991xf32>
    %397 = arith.maximumf %395, %396 : vector<8x991xf32>
    %c0_232 = arith.constant 0 : index
    %c32_233 = arith.constant 32 : index
    %398 = vector.load %arg24[%c0_232, %c32_233] : memref<8x1024xf32, #tpu.memory_space<vmem>>, vector<8x991xf32>
    %c0_234 = arith.constant 0 : index
    %c33_235 = arith.constant 33 : index
    %399 = vector.load %arg24[%c0_234, %c33_235] : memref<8x1024xf32, #tpu.memory_space<vmem>>, vector<8x991xf32>
    %400 = arith.maximumf %398, %399 : vector<8x991xf32>
    %401 = arith.maximumf %397, %400 : vector<8x991xf32>
    %c0_236 = arith.constant 0 : index
    %c0_237 = arith.constant 0 : index
    %402 = vector.load %arg14[%c0_236, %c0_237] : memref<991x256xf32, #tpu.memory_space<vmem>>, vector<991x256xf32>
    %cst_238 = arith.constant dense<0.000000e+00> : vector<8x256xf32>
    %403 = tpu.matmul %401, %402, %cst_238 {dimension_numbers = #tpu.dot_dimension_numbers<[1], [0], [0], [1], [0, 0, 1, 1], [], []>} : vector<8x991xf32>, vector<991x256xf32>, vector<8x256xf32> -> vector<8x256xf32>
    %c0_239 = arith.constant 0 : index
    %c0_240 = arith.constant 0 : index
    %404 = vector.load %arg25[%c0_239, %c0_240] : memref<8x256xf32, #tpu.memory_space<vmem>>, vector<8x256xf32>
    tpu.vector_store %arg25[%c0_239, %c0_240], %403 {strides = array<i32>} : memref<8x256xf32, #tpu.memory_space<vmem>>, vector<8x256xf32>,
    %c0_241 = arith.constant 0 : index
    %c0_242 = arith.constant 0 : index
    %405 = vector.load %arg25[%c0_241, %c0_242] : memref<8x256xf32, #tpu.memory_space<vmem>>, vector<8x239xf32>
    %406 = tpu.iota {dimensions = array<i32: 1>} : vector<1x239xi32>
    %c17_i32 = arith.constant 17 : i32
    %407 = vector.broadcast %c17_i32 : i32 to vector<1x239xi32>
    %408 = arith.addi %407, %406 : vector<1x239xi32>
    %c16_i32 = arith.constant 16 : i32
    %c0_i32_243 = arith.constant 0 : i32
    %409 = arith.cmpi eq, %c16_i32, %c0_i32_243 : i32
    %c1_i32_244 = arith.constant 1 : i32
    %410 = arith.select %409, %c1_i32_244, %c16_i32 : i32
    %411 = vector.broadcast %410 : i32 to vector<1x239xi32>
    %412 = arith.remsi %408, %411 : vector<1x239xi32>
    %c0_i32_245 = arith.constant 0 : i32
    %413 = vector.broadcast %c0_i32_245 : i32 to vector<1x239xi32>
    %414 = arith.cmpi ne, %412, %413 : vector<1x239xi32>
    %c0_i32_246 = arith.constant 0 : i32
    %415 = vector.broadcast %c0_i32_246 : i32 to vector<1x239xi32>
    %416 = arith.cmpi slt, %412, %415 : vector<1x239xi32>
    %c0_i32_247 = arith.constant 0 : i32
    %417 = arith.cmpi slt, %410, %c0_i32_247 : i32
    %418 = vector.broadcast %417 : i1 to vector<1x239xi1>
    %419 = vector.broadcast %418 : vector<1x239xi1> to vector<1x239xi1>
    %420 = arith.xori %416, %419 : vector<1x239xi1>
    %421 = arith.andi %420, %414 : vector<1x239xi1>
    %422 = vector.broadcast %410 : i32 to vector<1x239xi32>
    %423 = arith.addi %412, %422 : vector<1x239xi32>
    %424 = arith.select %421, %423, %412 : vector<1x239xi1>, vector<1x239xi32>
    %c0_i32_248 = arith.constant 0 : i32
    %425 = vector.broadcast %c0_i32_248 : i32 to vector<1x239xi32>
    %426 = arith.cmpi ne, %424, %425 : vector<1x239xi32>
    %cst_249 = arith.constant 0.000000e+00 : f32
    %427 = vector.shape_cast %426 : vector<1x239xi1> to vector<1x239xi1>
    %428 = vector.broadcast %427 : vector<1x239xi1> to vector<8x239xi1>
    %429 = vector.broadcast %cst_249 : f32 to vector<8x239xf32>
    %430 = arith.select %428, %405, %429 : vector<8x239xi1>, vector<8x239xf32>
    %c0_250 = arith.constant 0 : index
    %c17 = arith.constant 17 : index
    %431 = vector.load %arg22[%c0_250, %c17] : memref<288x1024xf32, #tpu.memory_space<vmem>>, vector<8x239xf32>
    tpu.vector_store %arg22[%c0_250, %c17], %430 {strides = array<i32>} : memref<288x1024xf32, #tpu.memory_space<vmem>>, vector<8x239xf32>,
    %cst_251 = arith.constant 0.000000e+00 : f32
    %432 = vector.broadcast %cst_251 : f32 to vector<8x17xf32>
    %c0_252 = arith.constant 0 : index
    %c0_253 = arith.constant 0 : index
    %433 = vector.load %arg22[%c0_252, %c0_253] : memref<288x1024xf32, #tpu.memory_space<vmem>>, vector<8x17xf32>
    tpu.vector_store %arg22[%c0_252, %c0_253], %432 {strides = array<i32>} : memref<288x1024xf32, #tpu.memory_space<vmem>>, vector<8x17xf32>,
    %c0_254 = arith.constant 0 : index
    %c0_255 = arith.constant 0 : index
    %434 = vector.load %arg25[%c0_254, %c0_255] : memref<8x256xf32, #tpu.memory_space<vmem>>, vector<8x240xf32>
    %c8_256 = arith.constant 8 : index
    %c16_257 = arith.constant 16 : index
    %435 = vector.load %arg22[%c8_256, %c16_257] : memref<288x1024xf32, #tpu.memory_space<vmem>>, vector<8x240xf32>
    tpu.vector_store %arg22[%c8_256, %c16_257], %434 {strides = array<i32>} : memref<288x1024xf32, #tpu.memory_space<vmem>>, vector<8x240xf32>,
    %cst_258 = arith.constant 0.000000e+00 : f32
    %436 = vector.broadcast %cst_258 : f32 to vector<8x16xf32>
    %c8_259 = arith.constant 8 : index
    %c0_260 = arith.constant 0 : index
    %437 = vector.load %arg22[%c8_259, %c0_260] : memref<288x1024xf32, #tpu.memory_space<vmem>>, vector<8x16xf32>
    tpu.vector_store %arg22[%c8_259, %c0_260], %436 {strides = array<i32>} : memref<288x1024xf32, #tpu.memory_space<vmem>>, vector<8x16xf32>,
    %c0_261 = arith.constant 0 : index
    %c0_262 = arith.constant 0 : index
    %438 = vector.load %arg25[%c0_261, %c0_262] : memref<8x256xf32, #tpu.memory_space<vmem>>, vector<8x241xf32>
    %439 = tpu.iota {dimensions = array<i32: 1>} : vector<1x241xi32>
    %c15_i32 = arith.constant 15 : i32
    %440 = vector.broadcast %c15_i32 : i32 to vector<1x241xi32>
    %441 = arith.addi %440, %439 : vector<1x241xi32>
    %c16_i32_263 = arith.constant 16 : i32
    %c0_i32_264 = arith.constant 0 : i32
    %442 = arith.cmpi eq, %c16_i32_263, %c0_i32_264 : i32
    %c1_i32_265 = arith.constant 1 : i32
    %443 = arith.select %442, %c1_i32_265, %c16_i32_263 : i32
    %444 = vector.broadcast %443 : i32 to vector<1x241xi32>
    %445 = arith.remsi %441, %444 : vector<1x241xi32>
    %c0_i32_266 = arith.constant 0 : i32
    %446 = vector.broadcast %c0_i32_266 : i32 to vector<1x241xi32>
    %447 = arith.cmpi ne, %445, %446 : vector<1x241xi32>
    %c0_i32_267 = arith.constant 0 : i32
    %448 = vector.broadcast %c0_i32_267 : i32 to vector<1x241xi32>
    %449 = arith.cmpi slt, %445, %448 : vector<1x241xi32>
    %c0_i32_268 = arith.constant 0 : i32
    %450 = arith.cmpi slt, %443, %c0_i32_268 : i32
    %451 = vector.broadcast %450 : i1 to vector<1x241xi1>
    %452 = vector.broadcast %451 : vector<1x241xi1> to vector<1x241xi1>
    %453 = arith.xori %449, %452 : vector<1x241xi1>
    %454 = arith.andi %453, %447 : vector<1x241xi1>
    %455 = vector.broadcast %443 : i32 to vector<1x241xi32>
    %456 = arith.addi %445, %455 : vector<1x241xi32>
    %457 = arith.select %454, %456, %445 : vector<1x241xi1>, vector<1x241xi32>
    %c15_i32_269 = arith.constant 15 : i32
    %458 = vector.broadcast %c15_i32_269 : i32 to vector<1x241xi32>
    %459 = arith.cmpi ne, %457, %458 : vector<1x241xi32>
    %cst_270 = arith.constant 0.000000e+00 : f32
    %460 = vector.shape_cast %459 : vector<1x241xi1> to vector<1x241xi1>
    %461 = vector.broadcast %460 : vector<1x241xi1> to vector<8x241xi1>
    %462 = vector.broadcast %cst_270 : f32 to vector<8x241xf32>
    %463 = arith.select %461, %438, %462 : vector<8x241xi1>, vector<8x241xf32>
    %c16_271 = arith.constant 16 : index
    %c15_272 = arith.constant 15 : index
    %464 = vector.load %arg22[%c16_271, %c15_272] : memref<288x1024xf32, #tpu.memory_space<vmem>>, vector<8x241xf32>
    tpu.vector_store %arg22[%c16_271, %c15_272], %463 {strides = array<i32>} : memref<288x1024xf32, #tpu.memory_space<vmem>>, vector<8x241xf32>,
    %cst_273 = arith.constant 0.000000e+00 : f32
    %465 = vector.broadcast %cst_273 : f32 to vector<8x15xf32>
    %c16_274 = arith.constant 16 : index
    %c0_275 = arith.constant 0 : index
    %466 = vector.load %arg22[%c16_274, %c0_275] : memref<288x1024xf32, #tpu.memory_space<vmem>>, vector<8x15xf32>
    tpu.vector_store %arg22[%c16_274, %c0_275], %465 {strides = array<i32>} : memref<288x1024xf32, #tpu.memory_space<vmem>>, vector<8x15xf32>,
    %c0_276 = arith.constant 0 : index
    %c0_277 = arith.constant 0 : index
    %467 = vector.load %arg25[%c0_276, %c0_277] : memref<8x256xf32, #tpu.memory_space<vmem>>, vector<8x255xf32>
    %468 = tpu.iota {dimensions = array<i32: 1>} : vector<1x255xi32>
    %c1_i32_278 = arith.constant 1 : i32
    %469 = vector.broadcast %c1_i32_278 : i32 to vector<1x255xi32>
    %470 = arith.addi %469, %468 : vector<1x255xi32>
    %c16_i32_279 = arith.constant 16 : i32
    %c0_i32_280 = arith.constant 0 : i32
    %471 = arith.cmpi eq, %c16_i32_279, %c0_i32_280 : i32
    %c1_i32_281 = arith.constant 1 : i32
    %472 = arith.select %471, %c1_i32_281, %c16_i32_279 : i32
    %473 = vector.broadcast %472 : i32 to vector<1x255xi32>
    %474 = arith.remsi %470, %473 : vector<1x255xi32>
    %c0_i32_282 = arith.constant 0 : i32
    %475 = vector.broadcast %c0_i32_282 : i32 to vector<1x255xi32>
    %476 = arith.cmpi ne, %474, %475 : vector<1x255xi32>
    %c0_i32_283 = arith.constant 0 : i32
    %477 = vector.broadcast %c0_i32_283 : i32 to vector<1x255xi32>
    %478 = arith.cmpi slt, %474, %477 : vector<1x255xi32>
    %c0_i32_284 = arith.constant 0 : i32
    %479 = arith.cmpi slt, %472, %c0_i32_284 : i32
    %480 = vector.broadcast %479 : i1 to vector<1x255xi1>
    %481 = vector.broadcast %480 : vector<1x255xi1> to vector<1x255xi1>
    %482 = arith.xori %478, %481 : vector<1x255xi1>
    %483 = arith.andi %482, %476 : vector<1x255xi1>
    %484 = vector.broadcast %472 : i32 to vector<1x255xi32>
    %485 = arith.addi %474, %484 : vector<1x255xi32>
    %486 = arith.select %483, %485, %474 : vector<1x255xi1>, vector<1x255xi32>
    %c0_i32_285 = arith.constant 0 : i32
    %487 = vector.broadcast %c0_i32_285 : i32 to vector<1x255xi32>
    %488 = arith.cmpi ne, %486, %487 : vector<1x255xi32>
    %cst_286 = arith.constant 0.000000e+00 : f32
    %489 = vector.shape_cast %488 : vector<1x255xi1> to vector<1x255xi1>
    %490 = vector.broadcast %489 : vector<1x255xi1> to vector<8x255xi1>
    %491 = vector.broadcast %cst_286 : f32 to vector<8x255xf32>
    %492 = arith.select %490, %467, %491 : vector<8x255xi1>, vector<8x255xf32>
    %c24_287 = arith.constant 24 : index
    %c1_288 = arith.constant 1 : index
    %493 = vector.load %arg22[%c24_287, %c1_288] : memref<288x1024xf32, #tpu.memory_space<vmem>>, vector<8x255xf32>
    tpu.vector_store %arg22[%c24_287, %c1_288], %492 {strides = array<i32>} : memref<288x1024xf32, #tpu.memory_space<vmem>>, vector<8x255xf32>,
    %cst_289 = arith.constant 0.000000e+00 : f32
    %494 = vector.broadcast %cst_289 : f32 to vector<8x1xf32>
    %c24_290 = arith.constant 24 : index
    %c0_291 = arith.constant 0 : index
    %495 = vector.load %arg22[%c24_290, %c0_291] : memref<288x1024xf32, #tpu.memory_space<vmem>>, vector<8x1xf32>
    tpu.vector_store %arg22[%c24_290, %c0_291], %494 {strides = array<i32>} : memref<288x1024xf32, #tpu.memory_space<vmem>>, vector<8x1xf32>,
    %c0_292 = arith.constant 0 : index
    %c0_293 = arith.constant 0 : index
    %496 = vector.load %arg25[%c0_292, %c0_293] : memref<8x256xf32, #tpu.memory_space<vmem>>, vector<8x256xf32>
    %c32_294 = arith.constant 32 : index
    %c0_295 = arith.constant 0 : index
    %497 = vector.load %arg22[%c32_294, %c0_295] : memref<288x1024xf32, #tpu.memory_space<vmem>>, vector<8x256xf32>
    tpu.vector_store %arg22[%c32_294, %c0_295], %496 {strides = array<i32>} : memref<288x1024xf32, #tpu.memory_space<vmem>>, vector<8x256xf32>,
    %c0_296 = arith.constant 0 : index
    %c1_297 = arith.constant 1 : index
    %498 = vector.load %arg25[%c0_296, %c1_297] : memref<8x256xf32, #tpu.memory_space<vmem>>, vector<8x255xf32>
    %499 = tpu.iota {dimensions = array<i32: 1>} : vector<1x255xi32>
    %c0_i32_298 = arith.constant 0 : i32
    %500 = vector.broadcast %c0_i32_298 : i32 to vector<1x255xi32>
    %501 = arith.addi %500, %499 : vector<1x255xi32>
    %c16_i32_299 = arith.constant 16 : i32
    %c0_i32_300 = arith.constant 0 : i32
    %502 = arith.cmpi eq, %c16_i32_299, %c0_i32_300 : i32
    %c1_i32_301 = arith.constant 1 : i32
    %503 = arith.select %502, %c1_i32_301, %c16_i32_299 : i32
    %504 = vector.broadcast %503 : i32 to vector<1x255xi32>
    %505 = arith.remsi %501, %504 : vector<1x255xi32>
    %c0_i32_302 = arith.constant 0 : i32
    %506 = vector.broadcast %c0_i32_302 : i32 to vector<1x255xi32>
    %507 = arith.cmpi ne, %505, %506 : vector<1x255xi32>
    %c0_i32_303 = arith.constant 0 : i32
    %508 = vector.broadcast %c0_i32_303 : i32 to vector<1x255xi32>
    %509 = arith.cmpi slt, %505, %508 : vector<1x255xi32>
    %c0_i32_304 = arith.constant 0 : i32
    %510 = arith.cmpi slt, %503, %c0_i32_304 : i32
    %511 = vector.broadcast %510 : i1 to vector<1x255xi1>
    %512 = vector.broadcast %511 : vector<1x255xi1> to vector<1x255xi1>
    %513 = arith.xori %509, %512 : vector<1x255xi1>
    %514 = arith.andi %513, %507 : vector<1x255xi1>
    %515 = vector.broadcast %503 : i32 to vector<1x255xi32>
    %516 = arith.addi %505, %515 : vector<1x255xi32>
    %517 = arith.select %514, %516, %505 : vector<1x255xi1>, vector<1x255xi32>
    %c15_i32_305 = arith.constant 15 : i32
    %518 = vector.broadcast %c15_i32_305 : i32 to vector<1x255xi32>
    %519 = arith.cmpi ne, %517, %518 : vector<1x255xi32>
    %cst_306 = arith.constant 0.000000e+00 : f32
    %520 = vector.shape_cast %519 : vector<1x255xi1> to vector<1x255xi1>
    %521 = vector.broadcast %520 : vector<1x255xi1> to vector<8x255xi1>
    %522 = vector.broadcast %cst_306 : f32 to vector<8x255xf32>
    %523 = arith.select %521, %498, %522 : vector<8x255xi1>, vector<8x255xf32>
    %c40_307 = arith.constant 40 : index
    %c0_308 = arith.constant 0 : index
    %524 = vector.load %arg22[%c40_307, %c0_308] : memref<288x1024xf32, #tpu.memory_space<vmem>>, vector<8x255xf32>
    tpu.vector_store %arg22[%c40_307, %c0_308], %523 {strides = array<i32>} : memref<288x1024xf32, #tpu.memory_space<vmem>>, vector<8x255xf32>,
    %cst_309 = arith.constant 0.000000e+00 : f32
    %525 = vector.broadcast %cst_309 : f32 to vector<8x1xf32>
    %c40_310 = arith.constant 40 : index
    %c255 = arith.constant 255 : index
    %526 = vector.load %arg22[%c40_310, %c255] : memref<288x1024xf32, #tpu.memory_space<vmem>>, vector<8x1xf32>
    tpu.vector_store %arg22[%c40_310, %c255], %525 {strides = array<i32>} : memref<288x1024xf32, #tpu.memory_space<vmem>>, vector<8x1xf32>,
    %c0_311 = arith.constant 0 : index
    %c15_312 = arith.constant 15 : index
    %527 = vector.load %arg25[%c0_311, %c15_312] : memref<8x256xf32, #tpu.memory_space<vmem>>, vector<8x241xf32>
    %528 = tpu.iota {dimensions = array<i32: 1>} : vector<1x241xi32>
    %c0_i32_313 = arith.constant 0 : i32
    %529 = vector.broadcast %c0_i32_313 : i32 to vector<1x241xi32>
    %530 = arith.addi %529, %528 : vector<1x241xi32>
    %c16_i32_314 = arith.constant 16 : i32
    %c0_i32_315 = arith.constant 0 : i32
    %531 = arith.cmpi eq, %c16_i32_314, %c0_i32_315 : i32
    %c1_i32_316 = arith.constant 1 : i32
    %532 = arith.select %531, %c1_i32_316, %c16_i32_314 : i32
    %533 = vector.broadcast %532 : i32 to vector<1x241xi32>
    %534 = arith.remsi %530, %533 : vector<1x241xi32>
    %c0_i32_317 = arith.constant 0 : i32
    %535 = vector.broadcast %c0_i32_317 : i32 to vector<1x241xi32>
    %536 = arith.cmpi ne, %534, %535 : vector<1x241xi32>
    %c0_i32_318 = arith.constant 0 : i32
    %537 = vector.broadcast %c0_i32_318 : i32 to vector<1x241xi32>
    %538 = arith.cmpi slt, %534, %537 : vector<1x241xi32>
    %c0_i32_319 = arith.constant 0 : i32
    %539 = arith.cmpi slt, %532, %c0_i32_319 : i32
    %540 = vector.broadcast %539 : i1 to vector<1x241xi1>
    %541 = vector.broadcast %540 : vector<1x241xi1> to vector<1x241xi1>
    %542 = arith.xori %538, %541 : vector<1x241xi1>
    %543 = arith.andi %542, %536 : vector<1x241xi1>
    %544 = vector.broadcast %532 : i32 to vector<1x241xi32>
    %545 = arith.addi %534, %544 : vector<1x241xi32>
    %546 = arith.select %543, %545, %534 : vector<1x241xi1>, vector<1x241xi32>
    %c0_i32_320 = arith.constant 0 : i32
    %547 = vector.broadcast %c0_i32_320 : i32 to vector<1x241xi32>
    %548 = arith.cmpi ne, %546, %547 : vector<1x241xi32>
    %cst_321 = arith.constant 0.000000e+00 : f32
    %549 = vector.shape_cast %548 : vector<1x241xi1> to vector<1x241xi1>
    %550 = vector.broadcast %549 : vector<1x241xi1> to vector<8x241xi1>
    %551 = vector.broadcast %cst_321 : f32 to vector<8x241xf32>
    %552 = arith.select %550, %527, %551 : vector<8x241xi1>, vector<8x241xf32>
    %c48_322 = arith.constant 48 : index
    %c0_323 = arith.constant 0 : index
    %553 = vector.load %arg22[%c48_322, %c0_323] : memref<288x1024xf32, #tpu.memory_space<vmem>>, vector<8x241xf32>
    tpu.vector_store %arg22[%c48_322, %c0_323], %552 {strides = array<i32>} : memref<288x1024xf32, #tpu.memory_space<vmem>>, vector<8x241xf32>,
    %cst_324 = arith.constant 0.000000e+00 : f32
    %554 = vector.broadcast %cst_324 : f32 to vector<8x15xf32>
    %c48_325 = arith.constant 48 : index
    %c241 = arith.constant 241 : index
    %555 = vector.load %arg22[%c48_325, %c241] : memref<288x1024xf32, #tpu.memory_space<vmem>>, vector<8x15xf32>
    tpu.vector_store %arg22[%c48_325, %c241], %554 {strides = array<i32>} : memref<288x1024xf32, #tpu.memory_space<vmem>>, vector<8x15xf32>,
    %c0_326 = arith.constant 0 : index
    %c16_327 = arith.constant 16 : index
    %556 = vector.load %arg25[%c0_326, %c16_327] : memref<8x256xf32, #tpu.memory_space<vmem>>, vector<8x240xf32>
    %c56_328 = arith.constant 56 : index
    %c0_329 = arith.constant 0 : index
    %557 = vector.load %arg22[%c56_328, %c0_329] : memref<288x1024xf32, #tpu.memory_space<vmem>>, vector<8x240xf32>
    tpu.vector_store %arg22[%c56_328, %c0_329], %556 {strides = array<i32>} : memref<288x1024xf32, #tpu.memory_space<vmem>>, vector<8x240xf32>,
    %cst_330 = arith.constant 0.000000e+00 : f32
    %558 = vector.broadcast %cst_330 : f32 to vector<8x16xf32>
    %c56_331 = arith.constant 56 : index
    %c240 = arith.constant 240 : index
    %559 = vector.load %arg22[%c56_331, %c240] : memref<288x1024xf32, #tpu.memory_space<vmem>>, vector<8x16xf32>
    tpu.vector_store %arg22[%c56_331, %c240], %558 {strides = array<i32>} : memref<288x1024xf32, #tpu.memory_space<vmem>>, vector<8x16xf32>,
    %c0_332 = arith.constant 0 : index
    %c17_333 = arith.constant 17 : index
    %560 = vector.load %arg25[%c0_332, %c17_333] : memref<8x256xf32, #tpu.memory_space<vmem>>, vector<8x239xf32>
    %561 = tpu.iota {dimensions = array<i32: 1>} : vector<1x239xi32>
    %c0_i32_334 = arith.constant 0 : i32
    %562 = vector.broadcast %c0_i32_334 : i32 to vector<1x239xi32>
    %563 = arith.addi %562, %561 : vector<1x239xi32>
    %c16_i32_335 = arith.constant 16 : i32
    %c0_i32_336 = arith.constant 0 : i32
    %564 = arith.cmpi eq, %c16_i32_335, %c0_i32_336 : i32
    %c1_i32_337 = arith.constant 1 : i32
    %565 = arith.select %564, %c1_i32_337, %c16_i32_335 : i32
    %566 = vector.broadcast %565 : i32 to vector<1x239xi32>
    %567 = arith.remsi %563, %566 : vector<1x239xi32>
    %c0_i32_338 = arith.constant 0 : i32
    %568 = vector.broadcast %c0_i32_338 : i32 to vector<1x239xi32>
    %569 = arith.cmpi ne, %567, %568 : vector<1x239xi32>
    %c0_i32_339 = arith.constant 0 : i32
    %570 = vector.broadcast %c0_i32_339 : i32 to vector<1x239xi32>
    %571 = arith.cmpi slt, %567, %570 : vector<1x239xi32>
    %c0_i32_340 = arith.constant 0 : i32
    %572 = arith.cmpi slt, %565, %c0_i32_340 : i32
    %573 = vector.broadcast %572 : i1 to vector<1x239xi1>
    %574 = vector.broadcast %573 : vector<1x239xi1> to vector<1x239xi1>
    %575 = arith.xori %571, %574 : vector<1x239xi1>
    %576 = arith.andi %575, %569 : vector<1x239xi1>
    %577 = vector.broadcast %565 : i32 to vector<1x239xi32>
    %578 = arith.addi %567, %577 : vector<1x239xi32>
    %579 = arith.select %576, %578, %567 : vector<1x239xi1>, vector<1x239xi32>
    %c15_i32_341 = arith.constant 15 : i32
    %580 = vector.broadcast %c15_i32_341 : i32 to vector<1x239xi32>
    %581 = arith.cmpi ne, %579, %580 : vector<1x239xi32>
    %cst_342 = arith.constant 0.000000e+00 : f32
    %582 = vector.shape_cast %581 : vector<1x239xi1> to vector<1x239xi1>
    %583 = vector.broadcast %582 : vector<1x239xi1> to vector<8x239xi1>
    %584 = vector.broadcast %cst_342 : f32 to vector<8x239xf32>
    %585 = arith.select %583, %560, %584 : vector<8x239xi1>, vector<8x239xf32>
    %c64_343 = arith.constant 64 : index
    %c0_344 = arith.constant 0 : index
    %586 = vector.load %arg22[%c64_343, %c0_344] : memref<288x1024xf32, #tpu.memory_space<vmem>>, vector<8x239xf32>
    tpu.vector_store %arg22[%c64_343, %c0_344], %585 {strides = array<i32>} : memref<288x1024xf32, #tpu.memory_space<vmem>>, vector<8x239xf32>,
    %cst_345 = arith.constant 0.000000e+00 : f32
    %587 = vector.broadcast %cst_345 : f32 to vector<8x17xf32>
    %c64_346 = arith.constant 64 : index
    %c239 = arith.constant 239 : index
    %588 = vector.load %arg22[%c64_346, %c239] : memref<288x1024xf32, #tpu.memory_space<vmem>>, vector<8x17xf32>
    tpu.vector_store %arg22[%c64_346, %c239], %587 {strides = array<i32>} : memref<288x1024xf32, #tpu.memory_space<vmem>>, vector<8x17xf32>,
    %c0_347 = arith.constant 0 : index
    %c0_348 = arith.constant 0 : index
    %589 = vector.load %arg22[%c0_347, %c0_348] : memref<288x1024xf32, #tpu.memory_space<vmem>>, vector<72x256xf32>
    %c0_349 = arith.constant 0 : index
    %c0_350 = arith.constant 0 : index
    %590 = vector.load %arg6[%c0_349, %c0_350] : memref<16x72xf32, #tpu.memory_space<vmem>>, vector<16x72xf32>
    %cst_351 = arith.constant dense<0.000000e+00> : vector<16x256xf32>
    %591 = tpu.matmul %590, %589, %cst_351 {dimension_numbers = #tpu.dot_dimension_numbers<[1], [0], [0], [1], [0, 0, 1, 1], [], []>} : vector<16x72xf32>, vector<72x256xf32>, vector<16x256xf32> -> vector<16x256xf32>
    %c0_352 = arith.constant 0 : index
    %c0_353 = arith.constant 0 : index
    %592 = vector.load %arg7[%c0_352, %c0_353] : memref<16x1xf32, #tpu.memory_space<vmem>>, vector<16x1xf32>
    %593 = vector.broadcast %592 : vector<16x1xf32> to vector<16x256xf32>
    %594 = arith.addf %591, %593 : vector<16x256xf32>
    %cst_354 = arith.constant 0.000000e+00 : f32
    %595 = vector.broadcast %cst_354 : f32 to vector<16x256xf32>
    %596 = arith.maximumf %594, %595 : vector<16x256xf32>
    %c0_355 = arith.constant 0 : index
    %c0_356 = arith.constant 0 : index
    %597 = vector.load %arg26[%c0_355, %c0_356] : memref<16x256xf32, #tpu.memory_space<vmem>>, vector<16x256xf32>
    tpu.vector_store %arg26[%c0_355, %c0_356], %596 {strides = array<i32>} : memref<16x256xf32, #tpu.memory_space<vmem>>, vector<16x256xf32>,
    %c0_357 = arith.constant 0 : index
    %c0_358 = arith.constant 0 : index
    %598 = vector.load %arg26[%c0_357, %c0_358] : memref<16x256xf32, #tpu.memory_space<vmem>>, vector<16x239xf32>
    %599 = tpu.iota {dimensions = array<i32: 1>} : vector<1x239xi32>
    %c17_i32_359 = arith.constant 17 : i32
    %600 = vector.broadcast %c17_i32_359 : i32 to vector<1x239xi32>
    %601 = arith.addi %600, %599 : vector<1x239xi32>
    %c16_i32_360 = arith.constant 16 : i32
    %c0_i32_361 = arith.constant 0 : i32
    %602 = arith.cmpi eq, %c16_i32_360, %c0_i32_361 : i32
    %c1_i32_362 = arith.constant 1 : i32
    %603 = arith.select %602, %c1_i32_362, %c16_i32_360 : i32
    %604 = vector.broadcast %603 : i32 to vector<1x239xi32>
    %605 = arith.remsi %601, %604 : vector<1x239xi32>
    %c0_i32_363 = arith.constant 0 : i32
    %606 = vector.broadcast %c0_i32_363 : i32 to vector<1x239xi32>
    %607 = arith.cmpi ne, %605, %606 : vector<1x239xi32>
    %c0_i32_364 = arith.constant 0 : i32
    %608 = vector.broadcast %c0_i32_364 : i32 to vector<1x239xi32>
    %609 = arith.cmpi slt, %605, %608 : vector<1x239xi32>
    %c0_i32_365 = arith.constant 0 : i32
    %610 = arith.cmpi slt, %603, %c0_i32_365 : i32
    %611 = vector.broadcast %610 : i1 to vector<1x239xi1>
    %612 = vector.broadcast %611 : vector<1x239xi1> to vector<1x239xi1>
    %613 = arith.xori %609, %612 : vector<1x239xi1>
    %614 = arith.andi %613, %607 : vector<1x239xi1>
    %615 = vector.broadcast %603 : i32 to vector<1x239xi32>
    %616 = arith.addi %605, %615 : vector<1x239xi32>
    %617 = arith.select %614, %616, %605 : vector<1x239xi1>, vector<1x239xi32>
    %c0_i32_366 = arith.constant 0 : i32
    %618 = vector.broadcast %c0_i32_366 : i32 to vector<1x239xi32>
    %619 = arith.cmpi ne, %617, %618 : vector<1x239xi32>
    %cst_367 = arith.constant 0.000000e+00 : f32
    %620 = vector.shape_cast %619 : vector<1x239xi1> to vector<1x239xi1>
    %621 = vector.broadcast %620 : vector<1x239xi1> to vector<16x239xi1>
    %622 = vector.broadcast %cst_367 : f32 to vector<16x239xf32>
    %623 = arith.select %621, %598, %622 : vector<16x239xi1>, vector<16x239xf32>
    %c0_368 = arith.constant 0 : index
    %c17_369 = arith.constant 17 : index
    %624 = vector.load %arg22[%c0_368, %c17_369] : memref<288x1024xf32, #tpu.memory_space<vmem>>, vector<16x239xf32>
    tpu.vector_store %arg22[%c0_368, %c17_369], %623 {strides = array<i32>} : memref<288x1024xf32, #tpu.memory_space<vmem>>, vector<16x239xf32>,
    %cst_370 = arith.constant 0.000000e+00 : f32
    %625 = vector.broadcast %cst_370 : f32 to vector<16x17xf32>
    %c0_371 = arith.constant 0 : index
    %c0_372 = arith.constant 0 : index
    %626 = vector.load %arg22[%c0_371, %c0_372] : memref<288x1024xf32, #tpu.memory_space<vmem>>, vector<16x17xf32>
    tpu.vector_store %arg22[%c0_371, %c0_372], %625 {strides = array<i32>} : memref<288x1024xf32, #tpu.memory_space<vmem>>, vector<16x17xf32>,
    %c0_373 = arith.constant 0 : index
    %c0_374 = arith.constant 0 : index
    %627 = vector.load %arg26[%c0_373, %c0_374] : memref<16x256xf32, #tpu.memory_space<vmem>>, vector<16x240xf32>
    %c16_375 = arith.constant 16 : index
    %c16_376 = arith.constant 16 : index
    %628 = vector.load %arg22[%c16_375, %c16_376] : memref<288x1024xf32, #tpu.memory_space<vmem>>, vector<16x240xf32>
    tpu.vector_store %arg22[%c16_375, %c16_376], %627 {strides = array<i32>} : memref<288x1024xf32, #tpu.memory_space<vmem>>, vector<16x240xf32>,
    %cst_377 = arith.constant 0.000000e+00 : f32
    %629 = vector.broadcast %cst_377 : f32 to vector<16x16xf32>
    %c16_378 = arith.constant 16 : index
    %c0_379 = arith.constant 0 : index
    %630 = vector.load %arg22[%c16_378, %c0_379] : memref<288x1024xf32, #tpu.memory_space<vmem>>, vector<16x16xf32>
    tpu.vector_store %arg22[%c16_378, %c0_379], %629 {strides = array<i32>} : memref<288x1024xf32, #tpu.memory_space<vmem>>, vector<16x16xf32>,
    %c0_380 = arith.constant 0 : index
    %c0_381 = arith.constant 0 : index
    %631 = vector.load %arg26[%c0_380, %c0_381] : memref<16x256xf32, #tpu.memory_space<vmem>>, vector<16x241xf32>
    %632 = tpu.iota {dimensions = array<i32: 1>} : vector<1x241xi32>
    %c15_i32_382 = arith.constant 15 : i32
    %633 = vector.broadcast %c15_i32_382 : i32 to vector<1x241xi32>
    %634 = arith.addi %633, %632 : vector<1x241xi32>
    %c16_i32_383 = arith.constant 16 : i32
    %c0_i32_384 = arith.constant 0 : i32
    %635 = arith.cmpi eq, %c16_i32_383, %c0_i32_384 : i32
    %c1_i32_385 = arith.constant 1 : i32
    %636 = arith.select %635, %c1_i32_385, %c16_i32_383 : i32
    %637 = vector.broadcast %636 : i32 to vector<1x241xi32>
    %638 = arith.remsi %634, %637 : vector<1x241xi32>
    %c0_i32_386 = arith.constant 0 : i32
    %639 = vector.broadcast %c0_i32_386 : i32 to vector<1x241xi32>
    %640 = arith.cmpi ne, %638, %639 : vector<1x241xi32>
    %c0_i32_387 = arith.constant 0 : i32
    %641 = vector.broadcast %c0_i32_387 : i32 to vector<1x241xi32>
    %642 = arith.cmpi slt, %638, %641 : vector<1x241xi32>
    %c0_i32_388 = arith.constant 0 : i32
    %643 = arith.cmpi slt, %636, %c0_i32_388 : i32
    %644 = vector.broadcast %643 : i1 to vector<1x241xi1>
    %645 = vector.broadcast %644 : vector<1x241xi1> to vector<1x241xi1>
    %646 = arith.xori %642, %645 : vector<1x241xi1>
    %647 = arith.andi %646, %640 : vector<1x241xi1>
    %648 = vector.broadcast %636 : i32 to vector<1x241xi32>
    %649 = arith.addi %638, %648 : vector<1x241xi32>
    %650 = arith.select %647, %649, %638 : vector<1x241xi1>, vector<1x241xi32>
    %c15_i32_389 = arith.constant 15 : i32
    %651 = vector.broadcast %c15_i32_389 : i32 to vector<1x241xi32>
    %652 = arith.cmpi ne, %650, %651 : vector<1x241xi32>
    %cst_390 = arith.constant 0.000000e+00 : f32
    %653 = vector.shape_cast %652 : vector<1x241xi1> to vector<1x241xi1>
    %654 = vector.broadcast %653 : vector<1x241xi1> to vector<16x241xi1>
    %655 = vector.broadcast %cst_390 : f32 to vector<16x241xf32>
    %656 = arith.select %654, %631, %655 : vector<16x241xi1>, vector<16x241xf32>
    %c32_391 = arith.constant 32 : index
    %c15_392 = arith.constant 15 : index
    %657 = vector.load %arg22[%c32_391, %c15_392] : memref<288x1024xf32, #tpu.memory_space<vmem>>, vector<16x241xf32>
    tpu.vector_store %arg22[%c32_391, %c15_392], %656 {strides = array<i32>} : memref<288x1024xf32, #tpu.memory_space<vmem>>, vector<16x241xf32>,
    %cst_393 = arith.constant 0.000000e+00 : f32
    %658 = vector.broadcast %cst_393 : f32 to vector<16x15xf32>
    %c32_394 = arith.constant 32 : index
    %c0_395 = arith.constant 0 : index
    %659 = vector.load %arg22[%c32_394, %c0_395] : memref<288x1024xf32, #tpu.memory_space<vmem>>, vector<16x15xf32>
    tpu.vector_store %arg22[%c32_394, %c0_395], %658 {strides = array<i32>} : memref<288x1024xf32, #tpu.memory_space<vmem>>, vector<16x15xf32>,
    %c0_396 = arith.constant 0 : index
    %c0_397 = arith.constant 0 : index
    %660 = vector.load %arg26[%c0_396, %c0_397] : memref<16x256xf32, #tpu.memory_space<vmem>>, vector<16x255xf32>
    %661 = tpu.iota {dimensions = array<i32: 1>} : vector<1x255xi32>
    %c1_i32_398 = arith.constant 1 : i32
    %662 = vector.broadcast %c1_i32_398 : i32 to vector<1x255xi32>
    %663 = arith.addi %662, %661 : vector<1x255xi32>
    %c16_i32_399 = arith.constant 16 : i32
    %c0_i32_400 = arith.constant 0 : i32
    %664 = arith.cmpi eq, %c16_i32_399, %c0_i32_400 : i32
    %c1_i32_401 = arith.constant 1 : i32
    %665 = arith.select %664, %c1_i32_401, %c16_i32_399 : i32
    %666 = vector.broadcast %665 : i32 to vector<1x255xi32>
    %667 = arith.remsi %663, %666 : vector<1x255xi32>
    %c0_i32_402 = arith.constant 0 : i32
    %668 = vector.broadcast %c0_i32_402 : i32 to vector<1x255xi32>
    %669 = arith.cmpi ne, %667, %668 : vector<1x255xi32>
    %c0_i32_403 = arith.constant 0 : i32
    %670 = vector.broadcast %c0_i32_403 : i32 to vector<1x255xi32>
    %671 = arith.cmpi slt, %667, %670 : vector<1x255xi32>
    %c0_i32_404 = arith.constant 0 : i32
    %672 = arith.cmpi slt, %665, %c0_i32_404 : i32
    %673 = vector.broadcast %672 : i1 to vector<1x255xi1>
    %674 = vector.broadcast %673 : vector<1x255xi1> to vector<1x255xi1>
    %675 = arith.xori %671, %674 : vector<1x255xi1>
    %676 = arith.andi %675, %669 : vector<1x255xi1>
    %677 = vector.broadcast %665 : i32 to vector<1x255xi32>
    %678 = arith.addi %667, %677 : vector<1x255xi32>
    %679 = arith.select %676, %678, %667 : vector<1x255xi1>, vector<1x255xi32>
    %c0_i32_405 = arith.constant 0 : i32
    %680 = vector.broadcast %c0_i32_405 : i32 to vector<1x255xi32>
    %681 = arith.cmpi ne, %679, %680 : vector<1x255xi32>
    %cst_406 = arith.constant 0.000000e+00 : f32
    %682 = vector.shape_cast %681 : vector<1x255xi1> to vector<1x255xi1>
    %683 = vector.broadcast %682 : vector<1x255xi1> to vector<16x255xi1>
    %684 = vector.broadcast %cst_406 : f32 to vector<16x255xf32>
    %685 = arith.select %683, %660, %684 : vector<16x255xi1>, vector<16x255xf32>
    %c48_407 = arith.constant 48 : index
    %c1_408 = arith.constant 1 : index
    %686 = vector.load %arg22[%c48_407, %c1_408] : memref<288x1024xf32, #tpu.memory_space<vmem>>, vector<16x255xf32>
    tpu.vector_store %arg22[%c48_407, %c1_408], %685 {strides = array<i32>} : memref<288x1024xf32, #tpu.memory_space<vmem>>, vector<16x255xf32>,
    %cst_409 = arith.constant 0.000000e+00 : f32
    %687 = vector.broadcast %cst_409 : f32 to vector<16x1xf32>
    %c48_410 = arith.constant 48 : index
    %c0_411 = arith.constant 0 : index
    %688 = vector.load %arg22[%c48_410, %c0_411] : memref<288x1024xf32, #tpu.memory_space<vmem>>, vector<16x1xf32>
    tpu.vector_store %arg22[%c48_410, %c0_411], %687 {strides = array<i32>} : memref<288x1024xf32, #tpu.memory_space<vmem>>, vector<16x1xf32>,
    %c0_412 = arith.constant 0 : index
    %c0_413 = arith.constant 0 : index
    %689 = vector.load %arg26[%c0_412, %c0_413] : memref<16x256xf32, #tpu.memory_space<vmem>>, vector<16x256xf32>
    %c64_414 = arith.constant 64 : index
    %c0_415 = arith.constant 0 : index
    %690 = vector.load %arg22[%c64_414, %c0_415] : memref<288x1024xf32, #tpu.memory_space<vmem>>, vector<16x256xf32>
    tpu.vector_store %arg22[%c64_414, %c0_415], %689 {strides = array<i32>} : memref<288x1024xf32, #tpu.memory_space<vmem>>, vector<16x256xf32>,
    %c0_416 = arith.constant 0 : index
    %c1_417 = arith.constant 1 : index
    %691 = vector.load %arg26[%c0_416, %c1_417] : memref<16x256xf32, #tpu.memory_space<vmem>>, vector<16x255xf32>
    %692 = tpu.iota {dimensions = array<i32: 1>} : vector<1x255xi32>
    %c0_i32_418 = arith.constant 0 : i32
    %693 = vector.broadcast %c0_i32_418 : i32 to vector<1x255xi32>
    %694 = arith.addi %693, %692 : vector<1x255xi32>
    %c16_i32_419 = arith.constant 16 : i32
    %c0_i32_420 = arith.constant 0 : i32
    %695 = arith.cmpi eq, %c16_i32_419, %c0_i32_420 : i32
    %c1_i32_421 = arith.constant 1 : i32
    %696 = arith.select %695, %c1_i32_421, %c16_i32_419 : i32
    %697 = vector.broadcast %696 : i32 to vector<1x255xi32>
    %698 = arith.remsi %694, %697 : vector<1x255xi32>
    %c0_i32_422 = arith.constant 0 : i32
    %699 = vector.broadcast %c0_i32_422 : i32 to vector<1x255xi32>
    %700 = arith.cmpi ne, %698, %699 : vector<1x255xi32>
    %c0_i32_423 = arith.constant 0 : i32
    %701 = vector.broadcast %c0_i32_423 : i32 to vector<1x255xi32>
    %702 = arith.cmpi slt, %698, %701 : vector<1x255xi32>
    %c0_i32_424 = arith.constant 0 : i32
    %703 = arith.cmpi slt, %696, %c0_i32_424 : i32
    %704 = vector.broadcast %703 : i1 to vector<1x255xi1>
    %705 = vector.broadcast %704 : vector<1x255xi1> to vector<1x255xi1>
    %706 = arith.xori %702, %705 : vector<1x255xi1>
    %707 = arith.andi %706, %700 : vector<1x255xi1>
    %708 = vector.broadcast %696 : i32 to vector<1x255xi32>
    %709 = arith.addi %698, %708 : vector<1x255xi32>
    %710 = arith.select %707, %709, %698 : vector<1x255xi1>, vector<1x255xi32>
    %c15_i32_425 = arith.constant 15 : i32
    %711 = vector.broadcast %c15_i32_425 : i32 to vector<1x255xi32>
    %712 = arith.cmpi ne, %710, %711 : vector<1x255xi32>
    %cst_426 = arith.constant 0.000000e+00 : f32
    %713 = vector.shape_cast %712 : vector<1x255xi1> to vector<1x255xi1>
    %714 = vector.broadcast %713 : vector<1x255xi1> to vector<16x255xi1>
    %715 = vector.broadcast %cst_426 : f32 to vector<16x255xf32>
    %716 = arith.select %714, %691, %715 : vector<16x255xi1>, vector<16x255xf32>
    %c80 = arith.constant 80 : index
    %c0_427 = arith.constant 0 : index
    %717 = vector.load %arg22[%c80, %c0_427] : memref<288x1024xf32, #tpu.memory_space<vmem>>, vector<16x255xf32>
    tpu.vector_store %arg22[%c80, %c0_427], %716 {strides = array<i32>} : memref<288x1024xf32, #tpu.memory_space<vmem>>, vector<16x255xf32>,
    %cst_428 = arith.constant 0.000000e+00 : f32
    %718 = vector.broadcast %cst_428 : f32 to vector<16x1xf32>
    %c80_429 = arith.constant 80 : index
    %c255_430 = arith.constant 255 : index
    %719 = vector.load %arg22[%c80_429, %c255_430] : memref<288x1024xf32, #tpu.memory_space<vmem>>, vector<16x1xf32>
    tpu.vector_store %arg22[%c80_429, %c255_430], %718 {strides = array<i32>} : memref<288x1024xf32, #tpu.memory_space<vmem>>, vector<16x1xf32>,
    %c0_431 = arith.constant 0 : index
    %c15_432 = arith.constant 15 : index
    %720 = vector.load %arg26[%c0_431, %c15_432] : memref<16x256xf32, #tpu.memory_space<vmem>>, vector<16x241xf32>
    %721 = tpu.iota {dimensions = array<i32: 1>} : vector<1x241xi32>
    %c0_i32_433 = arith.constant 0 : i32
    %722 = vector.broadcast %c0_i32_433 : i32 to vector<1x241xi32>
    %723 = arith.addi %722, %721 : vector<1x241xi32>
    %c16_i32_434 = arith.constant 16 : i32
    %c0_i32_435 = arith.constant 0 : i32
    %724 = arith.cmpi eq, %c16_i32_434, %c0_i32_435 : i32
    %c1_i32_436 = arith.constant 1 : i32
    %725 = arith.select %724, %c1_i32_436, %c16_i32_434 : i32
    %726 = vector.broadcast %725 : i32 to vector<1x241xi32>
    %727 = arith.remsi %723, %726 : vector<1x241xi32>
    %c0_i32_437 = arith.constant 0 : i32
    %728 = vector.broadcast %c0_i32_437 : i32 to vector<1x241xi32>
    %729 = arith.cmpi ne, %727, %728 : vector<1x241xi32>
    %c0_i32_438 = arith.constant 0 : i32
    %730 = vector.broadcast %c0_i32_438 : i32 to vector<1x241xi32>
    %731 = arith.cmpi slt, %727, %730 : vector<1x241xi32>
    %c0_i32_439 = arith.constant 0 : i32
    %732 = arith.cmpi slt, %725, %c0_i32_439 : i32
    %733 = vector.broadcast %732 : i1 to vector<1x241xi1>
    %734 = vector.broadcast %733 : vector<1x241xi1> to vector<1x241xi1>
    %735 = arith.xori %731, %734 : vector<1x241xi1>
    %736 = arith.andi %735, %729 : vector<1x241xi1>
    %737 = vector.broadcast %725 : i32 to vector<1x241xi32>
    %738 = arith.addi %727, %737 : vector<1x241xi32>
    %739 = arith.select %736, %738, %727 : vector<1x241xi1>, vector<1x241xi32>
    %c0_i32_440 = arith.constant 0 : i32
    %740 = vector.broadcast %c0_i32_440 : i32 to vector<1x241xi32>
    %741 = arith.cmpi ne, %739, %740 : vector<1x241xi32>
    %cst_441 = arith.constant 0.000000e+00 : f32
    %742 = vector.shape_cast %741 : vector<1x241xi1> to vector<1x241xi1>
    %743 = vector.broadcast %742 : vector<1x241xi1> to vector<16x241xi1>
    %744 = vector.broadcast %cst_441 : f32 to vector<16x241xf32>
    %745 = arith.select %743, %720, %744 : vector<16x241xi1>, vector<16x241xf32>
    %c96 = arith.constant 96 : index
    %c0_442 = arith.constant 0 : index
    %746 = vector.load %arg22[%c96, %c0_442] : memref<288x1024xf32, #tpu.memory_space<vmem>>, vector<16x241xf32>
    tpu.vector_store %arg22[%c96, %c0_442], %745 {strides = array<i32>} : memref<288x1024xf32, #tpu.memory_space<vmem>>, vector<16x241xf32>,
    %cst_443 = arith.constant 0.000000e+00 : f32
    %747 = vector.broadcast %cst_443 : f32 to vector<16x15xf32>
    %c96_444 = arith.constant 96 : index
    %c241_445 = arith.constant 241 : index
    %748 = vector.load %arg22[%c96_444, %c241_445] : memref<288x1024xf32, #tpu.memory_space<vmem>>, vector<16x15xf32>
    tpu.vector_store %arg22[%c96_444, %c241_445], %747 {strides = array<i32>} : memref<288x1024xf32, #tpu.memory_space<vmem>>, vector<16x15xf32>,
    %c0_446 = arith.constant 0 : index
    %c16_447 = arith.constant 16 : index
    %749 = vector.load %arg26[%c0_446, %c16_447] : memref<16x256xf32, #tpu.memory_space<vmem>>, vector<16x240xf32>
    %c112 = arith.constant 112 : index
    %c0_448 = arith.constant 0 : index
    %750 = vector.load %arg22[%c112, %c0_448] : memref<288x1024xf32, #tpu.memory_space<vmem>>, vector<16x240xf32>
    tpu.vector_store %arg22[%c112, %c0_448], %749 {strides = array<i32>} : memref<288x1024xf32, #tpu.memory_space<vmem>>, vector<16x240xf32>,
    %cst_449 = arith.constant 0.000000e+00 : f32
    %751 = vector.broadcast %cst_449 : f32 to vector<16x16xf32>
    %c112_450 = arith.constant 112 : index
    %c240_451 = arith.constant 240 : index
    %752 = vector.load %arg22[%c112_450, %c240_451] : memref<288x1024xf32, #tpu.memory_space<vmem>>, vector<16x16xf32>
    tpu.vector_store %arg22[%c112_450, %c240_451], %751 {strides = array<i32>} : memref<288x1024xf32, #tpu.memory_space<vmem>>, vector<16x16xf32>,
    %c0_452 = arith.constant 0 : index
    %c17_453 = arith.constant 17 : index
    %753 = vector.load %arg26[%c0_452, %c17_453] : memref<16x256xf32, #tpu.memory_space<vmem>>, vector<16x239xf32>
    %754 = tpu.iota {dimensions = array<i32: 1>} : vector<1x239xi32>
    %c0_i32_454 = arith.constant 0 : i32
    %755 = vector.broadcast %c0_i32_454 : i32 to vector<1x239xi32>
    %756 = arith.addi %755, %754 : vector<1x239xi32>
    %c16_i32_455 = arith.constant 16 : i32
    %c0_i32_456 = arith.constant 0 : i32
    %757 = arith.cmpi eq, %c16_i32_455, %c0_i32_456 : i32
    %c1_i32_457 = arith.constant 1 : i32
    %758 = arith.select %757, %c1_i32_457, %c16_i32_455 : i32
    %759 = vector.broadcast %758 : i32 to vector<1x239xi32>
    %760 = arith.remsi %756, %759 : vector<1x239xi32>
    %c0_i32_458 = arith.constant 0 : i32
    %761 = vector.broadcast %c0_i32_458 : i32 to vector<1x239xi32>
    %762 = arith.cmpi ne, %760, %761 : vector<1x239xi32>
    %c0_i32_459 = arith.constant 0 : i32
    %763 = vector.broadcast %c0_i32_459 : i32 to vector<1x239xi32>
    %764 = arith.cmpi slt, %760, %763 : vector<1x239xi32>
    %c0_i32_460 = arith.constant 0 : i32
    %765 = arith.cmpi slt, %758, %c0_i32_460 : i32
    %766 = vector.broadcast %765 : i1 to vector<1x239xi1>
    %767 = vector.broadcast %766 : vector<1x239xi1> to vector<1x239xi1>
    %768 = arith.xori %764, %767 : vector<1x239xi1>
    %769 = arith.andi %768, %762 : vector<1x239xi1>
    %770 = vector.broadcast %758 : i32 to vector<1x239xi32>
    %771 = arith.addi %760, %770 : vector<1x239xi32>
    %772 = arith.select %769, %771, %760 : vector<1x239xi1>, vector<1x239xi32>
    %c15_i32_461 = arith.constant 15 : i32
    %773 = vector.broadcast %c15_i32_461 : i32 to vector<1x239xi32>
    %774 = arith.cmpi ne, %772, %773 : vector<1x239xi32>
    %cst_462 = arith.constant 0.000000e+00 : f32
    %775 = vector.shape_cast %774 : vector<1x239xi1> to vector<1x239xi1>
    %776 = vector.broadcast %775 : vector<1x239xi1> to vector<16x239xi1>
    %777 = vector.broadcast %cst_462 : f32 to vector<16x239xf32>
    %778 = arith.select %776, %753, %777 : vector<16x239xi1>, vector<16x239xf32>
    %c128 = arith.constant 128 : index
    %c0_463 = arith.constant 0 : index
    %779 = vector.load %arg22[%c128, %c0_463] : memref<288x1024xf32, #tpu.memory_space<vmem>>, vector<16x239xf32>
    tpu.vector_store %arg22[%c128, %c0_463], %778 {strides = array<i32>} : memref<288x1024xf32, #tpu.memory_space<vmem>>, vector<16x239xf32>,
    %cst_464 = arith.constant 0.000000e+00 : f32
    %780 = vector.broadcast %cst_464 : f32 to vector<16x17xf32>
    %c128_465 = arith.constant 128 : index
    %c239_466 = arith.constant 239 : index
    %781 = vector.load %arg22[%c128_465, %c239_466] : memref<288x1024xf32, #tpu.memory_space<vmem>>, vector<16x17xf32>
    tpu.vector_store %arg22[%c128_465, %c239_466], %780 {strides = array<i32>} : memref<288x1024xf32, #tpu.memory_space<vmem>>, vector<16x17xf32>,
    %c0_467 = arith.constant 0 : index
    %c0_468 = arith.constant 0 : index
    %782 = vector.load %arg22[%c0_467, %c0_468] : memref<288x1024xf32, #tpu.memory_space<vmem>>, vector<144x256xf32>
    %c0_469 = arith.constant 0 : index
    %c0_470 = arith.constant 0 : index
    %783 = vector.load %arg8[%c0_469, %c0_470] : memref<16x144xf32, #tpu.memory_space<vmem>>, vector<16x144xf32>
    %cst_471 = arith.constant dense<0.000000e+00> : vector<16x256xf32>
    %784 = tpu.matmul %783, %782, %cst_471 {dimension_numbers = #tpu.dot_dimension_numbers<[1], [0], [0], [1], [0, 0, 1, 1], [], []>} : vector<16x144xf32>, vector<144x256xf32>, vector<16x256xf32> -> vector<16x256xf32>
    %c0_472 = arith.constant 0 : index
    %c0_473 = arith.constant 0 : index
    %785 = vector.load %arg9[%c0_472, %c0_473] : memref<16x1xf32, #tpu.memory_space<vmem>>, vector<16x1xf32>
    %786 = vector.broadcast %785 : vector<16x1xf32> to vector<16x256xf32>
    %787 = arith.addf %784, %786 : vector<16x256xf32>
    %cst_474 = arith.constant 0.000000e+00 : f32
    %788 = vector.broadcast %cst_474 : f32 to vector<16x256xf32>
    %789 = arith.maximumf %787, %788 : vector<16x256xf32>
    %c0_475 = arith.constant 0 : index
    %c0_476 = arith.constant 0 : index
    %790 = vector.load %arg27[%c0_475, %c0_476] : memref<16x256xf32, #tpu.memory_space<vmem>>, vector<16x256xf32>
    tpu.vector_store %arg27[%c0_475, %c0_476], %789 {strides = array<i32>} : memref<16x256xf32, #tpu.memory_space<vmem>>, vector<16x256xf32>,
    %c0_477 = arith.constant 0 : index
    %c0_478 = arith.constant 0 : index
    %791 = vector.load %arg27[%c0_477, %c0_478] : memref<16x256xf32, #tpu.memory_space<vmem>>, vector<16x239xf32>
    %c0_479 = arith.constant 0 : index
    %c1_480 = arith.constant 1 : index
    %792 = vector.load %arg27[%c0_479, %c1_480] : memref<16x256xf32, #tpu.memory_space<vmem>>, vector<16x239xf32>
    %793 = arith.maximumf %791, %792 : vector<16x239xf32>
    %c0_481 = arith.constant 0 : index
    %c16_482 = arith.constant 16 : index
    %794 = vector.load %arg27[%c0_481, %c16_482] : memref<16x256xf32, #tpu.memory_space<vmem>>, vector<16x239xf32>
    %c0_483 = arith.constant 0 : index
    %c17_484 = arith.constant 17 : index
    %795 = vector.load %arg27[%c0_483, %c17_484] : memref<16x256xf32, #tpu.memory_space<vmem>>, vector<16x239xf32>
    %796 = arith.maximumf %794, %795 : vector<16x239xf32>
    %797 = arith.maximumf %793, %796 : vector<16x239xf32>
    %c0_485 = arith.constant 0 : index
    %c0_486 = arith.constant 0 : index
    %798 = vector.load %arg15[%c0_485, %c0_486] : memref<239x64xf32, #tpu.memory_space<vmem>>, vector<239x64xf32>
    %cst_487 = arith.constant dense<0.000000e+00> : vector<16x64xf32>
    %799 = tpu.matmul %797, %798, %cst_487 {dimension_numbers = #tpu.dot_dimension_numbers<[1], [0], [0], [1], [0, 0, 1, 1], [], []>} : vector<16x239xf32>, vector<239x64xf32>, vector<16x64xf32> -> vector<16x64xf32>
    %c0_488 = arith.constant 0 : index
    %c0_489 = arith.constant 0 : index
    %800 = vector.load %arg28[%c0_488, %c0_489] : memref<16x64xf32, #tpu.memory_space<vmem>>, vector<16x64xf32>
    tpu.vector_store %arg28[%c0_488, %c0_489], %799 {strides = array<i32>} : memref<16x64xf32, #tpu.memory_space<vmem>>, vector<16x64xf32>,
    %c0_490 = arith.constant 0 : index
    %c0_491 = arith.constant 0 : index
    %801 = vector.load %arg28[%c0_490, %c0_491] : memref<16x64xf32, #tpu.memory_space<vmem>>, vector<16x55xf32>
    %802 = tpu.iota {dimensions = array<i32: 1>} : vector<1x55xi32>
    %c9_i32 = arith.constant 9 : i32
    %803 = vector.broadcast %c9_i32 : i32 to vector<1x55xi32>
    %804 = arith.addi %803, %802 : vector<1x55xi32>
    %c8_i32 = arith.constant 8 : i32
    %c0_i32_492 = arith.constant 0 : i32
    %805 = arith.cmpi eq, %c8_i32, %c0_i32_492 : i32
    %c1_i32_493 = arith.constant 1 : i32
    %806 = arith.select %805, %c1_i32_493, %c8_i32 : i32
    %807 = vector.broadcast %806 : i32 to vector<1x55xi32>
    %808 = arith.remsi %804, %807 : vector<1x55xi32>
    %c0_i32_494 = arith.constant 0 : i32
    %809 = vector.broadcast %c0_i32_494 : i32 to vector<1x55xi32>
    %810 = arith.cmpi ne, %808, %809 : vector<1x55xi32>
    %c0_i32_495 = arith.constant 0 : i32
    %811 = vector.broadcast %c0_i32_495 : i32 to vector<1x55xi32>
    %812 = arith.cmpi slt, %808, %811 : vector<1x55xi32>
    %c0_i32_496 = arith.constant 0 : i32
    %813 = arith.cmpi slt, %806, %c0_i32_496 : i32
    %814 = vector.broadcast %813 : i1 to vector<1x55xi1>
    %815 = vector.broadcast %814 : vector<1x55xi1> to vector<1x55xi1>
    %816 = arith.xori %812, %815 : vector<1x55xi1>
    %817 = arith.andi %816, %810 : vector<1x55xi1>
    %818 = vector.broadcast %806 : i32 to vector<1x55xi32>
    %819 = arith.addi %808, %818 : vector<1x55xi32>
    %820 = arith.select %817, %819, %808 : vector<1x55xi1>, vector<1x55xi32>
    %c0_i32_497 = arith.constant 0 : i32
    %821 = vector.broadcast %c0_i32_497 : i32 to vector<1x55xi32>
    %822 = arith.cmpi ne, %820, %821 : vector<1x55xi32>
    %cst_498 = arith.constant 0.000000e+00 : f32
    %823 = vector.shape_cast %822 : vector<1x55xi1> to vector<1x55xi1>
    %824 = vector.broadcast %823 : vector<1x55xi1> to vector<16x55xi1>
    %825 = vector.broadcast %cst_498 : f32 to vector<16x55xf32>
    %826 = arith.select %824, %801, %825 : vector<16x55xi1>, vector<16x55xf32>
    %c0_499 = arith.constant 0 : index
    %c9_500 = arith.constant 9 : index
    %827 = vector.load %arg22[%c0_499, %c9_500] : memref<288x1024xf32, #tpu.memory_space<vmem>>, vector<16x55xf32>
    tpu.vector_store %arg22[%c0_499, %c9_500], %826 {strides = array<i32>} : memref<288x1024xf32, #tpu.memory_space<vmem>>, vector<16x55xf32>,
    %cst_501 = arith.constant 0.000000e+00 : f32
    %828 = vector.broadcast %cst_501 : f32 to vector<16x9xf32>
    %c0_502 = arith.constant 0 : index
    %c0_503 = arith.constant 0 : index
    %829 = vector.load %arg22[%c0_502, %c0_503] : memref<288x1024xf32, #tpu.memory_space<vmem>>, vector<16x9xf32>
    tpu.vector_store %arg22[%c0_502, %c0_503], %828 {strides = array<i32>} : memref<288x1024xf32, #tpu.memory_space<vmem>>, vector<16x9xf32>,
    %c0_504 = arith.constant 0 : index
    %c0_505 = arith.constant 0 : index
    %830 = vector.load %arg28[%c0_504, %c0_505] : memref<16x64xf32, #tpu.memory_space<vmem>>, vector<16x56xf32>
    %c16_506 = arith.constant 16 : index
    %c8_507 = arith.constant 8 : index
    %831 = vector.load %arg22[%c16_506, %c8_507] : memref<288x1024xf32, #tpu.memory_space<vmem>>, vector<16x56xf32>
    tpu.vector_store %arg22[%c16_506, %c8_507], %830 {strides = array<i32>} : memref<288x1024xf32, #tpu.memory_space<vmem>>, vector<16x56xf32>,
    %cst_508 = arith.constant 0.000000e+00 : f32
    %832 = vector.broadcast %cst_508 : f32 to vector<16x8xf32>
    %c16_509 = arith.constant 16 : index
    %c0_510 = arith.constant 0 : index
    %833 = vector.load %arg22[%c16_509, %c0_510] : memref<288x1024xf32, #tpu.memory_space<vmem>>, vector<16x8xf32>
    tpu.vector_store %arg22[%c16_509, %c0_510], %832 {strides = array<i32>} : memref<288x1024xf32, #tpu.memory_space<vmem>>, vector<16x8xf32>,
    %c0_511 = arith.constant 0 : index
    %c0_512 = arith.constant 0 : index
    %834 = vector.load %arg28[%c0_511, %c0_512] : memref<16x64xf32, #tpu.memory_space<vmem>>, vector<16x57xf32>
    %835 = tpu.iota {dimensions = array<i32: 1>} : vector<1x57xi32>
    %c7_i32 = arith.constant 7 : i32
    %836 = vector.broadcast %c7_i32 : i32 to vector<1x57xi32>
    %837 = arith.addi %836, %835 : vector<1x57xi32>
    %c8_i32_513 = arith.constant 8 : i32
    %c0_i32_514 = arith.constant 0 : i32
    %838 = arith.cmpi eq, %c8_i32_513, %c0_i32_514 : i32
    %c1_i32_515 = arith.constant 1 : i32
    %839 = arith.select %838, %c1_i32_515, %c8_i32_513 : i32
    %840 = vector.broadcast %839 : i32 to vector<1x57xi32>
    %841 = arith.remsi %837, %840 : vector<1x57xi32>
    %c0_i32_516 = arith.constant 0 : i32
    %842 = vector.broadcast %c0_i32_516 : i32 to vector<1x57xi32>
    %843 = arith.cmpi ne, %841, %842 : vector<1x57xi32>
    %c0_i32_517 = arith.constant 0 : i32
    %844 = vector.broadcast %c0_i32_517 : i32 to vector<1x57xi32>
    %845 = arith.cmpi slt, %841, %844 : vector<1x57xi32>
    %c0_i32_518 = arith.constant 0 : i32
    %846 = arith.cmpi slt, %839, %c0_i32_518 : i32
    %847 = vector.broadcast %846 : i1 to vector<1x57xi1>
    %848 = vector.broadcast %847 : vector<1x57xi1> to vector<1x57xi1>
    %849 = arith.xori %845, %848 : vector<1x57xi1>
    %850 = arith.andi %849, %843 : vector<1x57xi1>
    %851 = vector.broadcast %839 : i32 to vector<1x57xi32>
    %852 = arith.addi %841, %851 : vector<1x57xi32>
    %853 = arith.select %850, %852, %841 : vector<1x57xi1>, vector<1x57xi32>
    %c7_i32_519 = arith.constant 7 : i32
    %854 = vector.broadcast %c7_i32_519 : i32 to vector<1x57xi32>
    %855 = arith.cmpi ne, %853, %854 : vector<1x57xi32>
    %cst_520 = arith.constant 0.000000e+00 : f32
    %856 = vector.shape_cast %855 : vector<1x57xi1> to vector<1x57xi1>
    %857 = vector.broadcast %856 : vector<1x57xi1> to vector<16x57xi1>
    %858 = vector.broadcast %cst_520 : f32 to vector<16x57xf32>
    %859 = arith.select %857, %834, %858 : vector<16x57xi1>, vector<16x57xf32>
    %c32_521 = arith.constant 32 : index
    %c7 = arith.constant 7 : index
    %860 = vector.load %arg22[%c32_521, %c7] : memref<288x1024xf32, #tpu.memory_space<vmem>>, vector<16x57xf32>
    tpu.vector_store %arg22[%c32_521, %c7], %859 {strides = array<i32>} : memref<288x1024xf32, #tpu.memory_space<vmem>>, vector<16x57xf32>,
    %cst_522 = arith.constant 0.000000e+00 : f32
    %861 = vector.broadcast %cst_522 : f32 to vector<16x7xf32>
    %c32_523 = arith.constant 32 : index
    %c0_524 = arith.constant 0 : index
    %862 = vector.load %arg22[%c32_523, %c0_524] : memref<288x1024xf32, #tpu.memory_space<vmem>>, vector<16x7xf32>
    tpu.vector_store %arg22[%c32_523, %c0_524], %861 {strides = array<i32>} : memref<288x1024xf32, #tpu.memory_space<vmem>>, vector<16x7xf32>,
    %c0_525 = arith.constant 0 : index
    %c0_526 = arith.constant 0 : index
    %863 = vector.load %arg28[%c0_525, %c0_526] : memref<16x64xf32, #tpu.memory_space<vmem>>, vector<16x63xf32>
    %864 = tpu.iota {dimensions = array<i32: 1>} : vector<1x63xi32>
    %c1_i32_527 = arith.constant 1 : i32
    %865 = vector.broadcast %c1_i32_527 : i32 to vector<1x63xi32>
    %866 = arith.addi %865, %864 : vector<1x63xi32>
    %c8_i32_528 = arith.constant 8 : i32
    %c0_i32_529 = arith.constant 0 : i32
    %867 = arith.cmpi eq, %c8_i32_528, %c0_i32_529 : i32
    %c1_i32_530 = arith.constant 1 : i32
    %868 = arith.select %867, %c1_i32_530, %c8_i32_528 : i32
    %869 = vector.broadcast %868 : i32 to vector<1x63xi32>
    %870 = arith.remsi %866, %869 : vector<1x63xi32>
    %c0_i32_531 = arith.constant 0 : i32
    %871 = vector.broadcast %c0_i32_531 : i32 to vector<1x63xi32>
    %872 = arith.cmpi ne, %870, %871 : vector<1x63xi32>
    %c0_i32_532 = arith.constant 0 : i32
    %873 = vector.broadcast %c0_i32_532 : i32 to vector<1x63xi32>
    %874 = arith.cmpi slt, %870, %873 : vector<1x63xi32>
    %c0_i32_533 = arith.constant 0 : i32
    %875 = arith.cmpi slt, %868, %c0_i32_533 : i32
    %876 = vector.broadcast %875 : i1 to vector<1x63xi1>
    %877 = vector.broadcast %876 : vector<1x63xi1> to vector<1x63xi1>
    %878 = arith.xori %874, %877 : vector<1x63xi1>
    %879 = arith.andi %878, %872 : vector<1x63xi1>
    %880 = vector.broadcast %868 : i32 to vector<1x63xi32>
    %881 = arith.addi %870, %880 : vector<1x63xi32>
    %882 = arith.select %879, %881, %870 : vector<1x63xi1>, vector<1x63xi32>
    %c0_i32_534 = arith.constant 0 : i32
    %883 = vector.broadcast %c0_i32_534 : i32 to vector<1x63xi32>
    %884 = arith.cmpi ne, %882, %883 : vector<1x63xi32>
    %cst_535 = arith.constant 0.000000e+00 : f32
    %885 = vector.shape_cast %884 : vector<1x63xi1> to vector<1x63xi1>
    %886 = vector.broadcast %885 : vector<1x63xi1> to vector<16x63xi1>
    %887 = vector.broadcast %cst_535 : f32 to vector<16x63xf32>
    %888 = arith.select %886, %863, %887 : vector<16x63xi1>, vector<16x63xf32>
    %c48_536 = arith.constant 48 : index
    %c1_537 = arith.constant 1 : index
    %889 = vector.load %arg22[%c48_536, %c1_537] : memref<288x1024xf32, #tpu.memory_space<vmem>>, vector<16x63xf32>
    tpu.vector_store %arg22[%c48_536, %c1_537], %888 {strides = array<i32>} : memref<288x1024xf32, #tpu.memory_space<vmem>>, vector<16x63xf32>,
    %cst_538 = arith.constant 0.000000e+00 : f32
    %890 = vector.broadcast %cst_538 : f32 to vector<16x1xf32>
    %c48_539 = arith.constant 48 : index
    %c0_540 = arith.constant 0 : index
    %891 = vector.load %arg22[%c48_539, %c0_540] : memref<288x1024xf32, #tpu.memory_space<vmem>>, vector<16x1xf32>
    tpu.vector_store %arg22[%c48_539, %c0_540], %890 {strides = array<i32>} : memref<288x1024xf32, #tpu.memory_space<vmem>>, vector<16x1xf32>,
    %c0_541 = arith.constant 0 : index
    %c0_542 = arith.constant 0 : index
    %892 = vector.load %arg28[%c0_541, %c0_542] : memref<16x64xf32, #tpu.memory_space<vmem>>, vector<16x64xf32>
    %c64_543 = arith.constant 64 : index
    %c0_544 = arith.constant 0 : index
    %893 = vector.load %arg22[%c64_543, %c0_544] : memref<288x1024xf32, #tpu.memory_space<vmem>>, vector<16x64xf32>
    tpu.vector_store %arg22[%c64_543, %c0_544], %892 {strides = array<i32>} : memref<288x1024xf32, #tpu.memory_space<vmem>>, vector<16x64xf32>,
    %c0_545 = arith.constant 0 : index
    %c1_546 = arith.constant 1 : index
    %894 = vector.load %arg28[%c0_545, %c1_546] : memref<16x64xf32, #tpu.memory_space<vmem>>, vector<16x63xf32>
    %895 = tpu.iota {dimensions = array<i32: 1>} : vector<1x63xi32>
    %c0_i32_547 = arith.constant 0 : i32
    %896 = vector.broadcast %c0_i32_547 : i32 to vector<1x63xi32>
    %897 = arith.addi %896, %895 : vector<1x63xi32>
    %c8_i32_548 = arith.constant 8 : i32
    %c0_i32_549 = arith.constant 0 : i32
    %898 = arith.cmpi eq, %c8_i32_548, %c0_i32_549 : i32
    %c1_i32_550 = arith.constant 1 : i32
    %899 = arith.select %898, %c1_i32_550, %c8_i32_548 : i32
    %900 = vector.broadcast %899 : i32 to vector<1x63xi32>
    %901 = arith.remsi %897, %900 : vector<1x63xi32>
    %c0_i32_551 = arith.constant 0 : i32
    %902 = vector.broadcast %c0_i32_551 : i32 to vector<1x63xi32>
    %903 = arith.cmpi ne, %901, %902 : vector<1x63xi32>
    %c0_i32_552 = arith.constant 0 : i32
    %904 = vector.broadcast %c0_i32_552 : i32 to vector<1x63xi32>
    %905 = arith.cmpi slt, %901, %904 : vector<1x63xi32>
    %c0_i32_553 = arith.constant 0 : i32
    %906 = arith.cmpi slt, %899, %c0_i32_553 : i32
    %907 = vector.broadcast %906 : i1 to vector<1x63xi1>
    %908 = vector.broadcast %907 : vector<1x63xi1> to vector<1x63xi1>
    %909 = arith.xori %905, %908 : vector<1x63xi1>
    %910 = arith.andi %909, %903 : vector<1x63xi1>
    %911 = vector.broadcast %899 : i32 to vector<1x63xi32>
    %912 = arith.addi %901, %911 : vector<1x63xi32>
    %913 = arith.select %910, %912, %901 : vector<1x63xi1>, vector<1x63xi32>
    %c7_i32_554 = arith.constant 7 : i32
    %914 = vector.broadcast %c7_i32_554 : i32 to vector<1x63xi32>
    %915 = arith.cmpi ne, %913, %914 : vector<1x63xi32>
    %cst_555 = arith.constant 0.000000e+00 : f32
    %916 = vector.shape_cast %915 : vector<1x63xi1> to vector<1x63xi1>
    %917 = vector.broadcast %916 : vector<1x63xi1> to vector<16x63xi1>
    %918 = vector.broadcast %cst_555 : f32 to vector<16x63xf32>
    %919 = arith.select %917, %894, %918 : vector<16x63xi1>, vector<16x63xf32>
    %c80_556 = arith.constant 80 : index
    %c0_557 = arith.constant 0 : index
    %920 = vector.load %arg22[%c80_556, %c0_557] : memref<288x1024xf32, #tpu.memory_space<vmem>>, vector<16x63xf32>
    tpu.vector_store %arg22[%c80_556, %c0_557], %919 {strides = array<i32>} : memref<288x1024xf32, #tpu.memory_space<vmem>>, vector<16x63xf32>,
    %cst_558 = arith.constant 0.000000e+00 : f32
    %921 = vector.broadcast %cst_558 : f32 to vector<16x1xf32>
    %c80_559 = arith.constant 80 : index
    %c63 = arith.constant 63 : index
    %922 = vector.load %arg22[%c80_559, %c63] : memref<288x1024xf32, #tpu.memory_space<vmem>>, vector<16x1xf32>
    tpu.vector_store %arg22[%c80_559, %c63], %921 {strides = array<i32>} : memref<288x1024xf32, #tpu.memory_space<vmem>>, vector<16x1xf32>,
    %c0_560 = arith.constant 0 : index
    %c7_561 = arith.constant 7 : index
    %923 = vector.load %arg28[%c0_560, %c7_561] : memref<16x64xf32, #tpu.memory_space<vmem>>, vector<16x57xf32>
    %924 = tpu.iota {dimensions = array<i32: 1>} : vector<1x57xi32>
    %c0_i32_562 = arith.constant 0 : i32
    %925 = vector.broadcast %c0_i32_562 : i32 to vector<1x57xi32>
    %926 = arith.addi %925, %924 : vector<1x57xi32>
    %c8_i32_563 = arith.constant 8 : i32
    %c0_i32_564 = arith.constant 0 : i32
    %927 = arith.cmpi eq, %c8_i32_563, %c0_i32_564 : i32
    %c1_i32_565 = arith.constant 1 : i32
    %928 = arith.select %927, %c1_i32_565, %c8_i32_563 : i32
    %929 = vector.broadcast %928 : i32 to vector<1x57xi32>
    %930 = arith.remsi %926, %929 : vector<1x57xi32>
    %c0_i32_566 = arith.constant 0 : i32
    %931 = vector.broadcast %c0_i32_566 : i32 to vector<1x57xi32>
    %932 = arith.cmpi ne, %930, %931 : vector<1x57xi32>
    %c0_i32_567 = arith.constant 0 : i32
    %933 = vector.broadcast %c0_i32_567 : i32 to vector<1x57xi32>
    %934 = arith.cmpi slt, %930, %933 : vector<1x57xi32>
    %c0_i32_568 = arith.constant 0 : i32
    %935 = arith.cmpi slt, %928, %c0_i32_568 : i32
    %936 = vector.broadcast %935 : i1 to vector<1x57xi1>
    %937 = vector.broadcast %936 : vector<1x57xi1> to vector<1x57xi1>
    %938 = arith.xori %934, %937 : vector<1x57xi1>
    %939 = arith.andi %938, %932 : vector<1x57xi1>
    %940 = vector.broadcast %928 : i32 to vector<1x57xi32>
    %941 = arith.addi %930, %940 : vector<1x57xi32>
    %942 = arith.select %939, %941, %930 : vector<1x57xi1>, vector<1x57xi32>
    %c0_i32_569 = arith.constant 0 : i32
    %943 = vector.broadcast %c0_i32_569 : i32 to vector<1x57xi32>
    %944 = arith.cmpi ne, %942, %943 : vector<1x57xi32>
    %cst_570 = arith.constant 0.000000e+00 : f32
    %945 = vector.shape_cast %944 : vector<1x57xi1> to vector<1x57xi1>
    %946 = vector.broadcast %945 : vector<1x57xi1> to vector<16x57xi1>
    %947 = vector.broadcast %cst_570 : f32 to vector<16x57xf32>
    %948 = arith.select %946, %923, %947 : vector<16x57xi1>, vector<16x57xf32>
    %c96_571 = arith.constant 96 : index
    %c0_572 = arith.constant 0 : index
    %949 = vector.load %arg22[%c96_571, %c0_572] : memref<288x1024xf32, #tpu.memory_space<vmem>>, vector<16x57xf32>
    tpu.vector_store %arg22[%c96_571, %c0_572], %948 {strides = array<i32>} : memref<288x1024xf32, #tpu.memory_space<vmem>>, vector<16x57xf32>,
    %cst_573 = arith.constant 0.000000e+00 : f32
    %950 = vector.broadcast %cst_573 : f32 to vector<16x7xf32>
    %c96_574 = arith.constant 96 : index
    %c57 = arith.constant 57 : index
    %951 = vector.load %arg22[%c96_574, %c57] : memref<288x1024xf32, #tpu.memory_space<vmem>>, vector<16x7xf32>
    tpu.vector_store %arg22[%c96_574, %c57], %950 {strides = array<i32>} : memref<288x1024xf32, #tpu.memory_space<vmem>>, vector<16x7xf32>,
    %c0_575 = arith.constant 0 : index
    %c8_576 = arith.constant 8 : index
    %952 = vector.load %arg28[%c0_575, %c8_576] : memref<16x64xf32, #tpu.memory_space<vmem>>, vector<16x56xf32>
    %c112_577 = arith.constant 112 : index
    %c0_578 = arith.constant 0 : index
    %953 = vector.load %arg22[%c112_577, %c0_578] : memref<288x1024xf32, #tpu.memory_space<vmem>>, vector<16x56xf32>
    tpu.vector_store %arg22[%c112_577, %c0_578], %952 {strides = array<i32>} : memref<288x1024xf32, #tpu.memory_space<vmem>>, vector<16x56xf32>,
    %cst_579 = arith.constant 0.000000e+00 : f32
    %954 = vector.broadcast %cst_579 : f32 to vector<16x8xf32>
    %c112_580 = arith.constant 112 : index
    %c56_581 = arith.constant 56 : index
    %955 = vector.load %arg22[%c112_580, %c56_581] : memref<288x1024xf32, #tpu.memory_space<vmem>>, vector<16x8xf32>
    tpu.vector_store %arg22[%c112_580, %c56_581], %954 {strides = array<i32>} : memref<288x1024xf32, #tpu.memory_space<vmem>>, vector<16x8xf32>,
    %c0_582 = arith.constant 0 : index
    %c9_583 = arith.constant 9 : index
    %956 = vector.load %arg28[%c0_582, %c9_583] : memref<16x64xf32, #tpu.memory_space<vmem>>, vector<16x55xf32>
    %957 = tpu.iota {dimensions = array<i32: 1>} : vector<1x55xi32>
    %c0_i32_584 = arith.constant 0 : i32
    %958 = vector.broadcast %c0_i32_584 : i32 to vector<1x55xi32>
    %959 = arith.addi %958, %957 : vector<1x55xi32>
    %c8_i32_585 = arith.constant 8 : i32
    %c0_i32_586 = arith.constant 0 : i32
    %960 = arith.cmpi eq, %c8_i32_585, %c0_i32_586 : i32
    %c1_i32_587 = arith.constant 1 : i32
    %961 = arith.select %960, %c1_i32_587, %c8_i32_585 : i32
    %962 = vector.broadcast %961 : i32 to vector<1x55xi32>
    %963 = arith.remsi %959, %962 : vector<1x55xi32>
    %c0_i32_588 = arith.constant 0 : i32
    %964 = vector.broadcast %c0_i32_588 : i32 to vector<1x55xi32>
    %965 = arith.cmpi ne, %963, %964 : vector<1x55xi32>
    %c0_i32_589 = arith.constant 0 : i32
    %966 = vector.broadcast %c0_i32_589 : i32 to vector<1x55xi32>
    %967 = arith.cmpi slt, %963, %966 : vector<1x55xi32>
    %c0_i32_590 = arith.constant 0 : i32
    %968 = arith.cmpi slt, %961, %c0_i32_590 : i32
    %969 = vector.broadcast %968 : i1 to vector<1x55xi1>
    %970 = vector.broadcast %969 : vector<1x55xi1> to vector<1x55xi1>
    %971 = arith.xori %967, %970 : vector<1x55xi1>
    %972 = arith.andi %971, %965 : vector<1x55xi1>
    %973 = vector.broadcast %961 : i32 to vector<1x55xi32>
    %974 = arith.addi %963, %973 : vector<1x55xi32>
    %975 = arith.select %972, %974, %963 : vector<1x55xi1>, vector<1x55xi32>
    %c7_i32_591 = arith.constant 7 : i32
    %976 = vector.broadcast %c7_i32_591 : i32 to vector<1x55xi32>
    %977 = arith.cmpi ne, %975, %976 : vector<1x55xi32>
    %cst_592 = arith.constant 0.000000e+00 : f32
    %978 = vector.shape_cast %977 : vector<1x55xi1> to vector<1x55xi1>
    %979 = vector.broadcast %978 : vector<1x55xi1> to vector<16x55xi1>
    %980 = vector.broadcast %cst_592 : f32 to vector<16x55xf32>
    %981 = arith.select %979, %956, %980 : vector<16x55xi1>, vector<16x55xf32>
    %c128_593 = arith.constant 128 : index
    %c0_594 = arith.constant 0 : index
    %982 = vector.load %arg22[%c128_593, %c0_594] : memref<288x1024xf32, #tpu.memory_space<vmem>>, vector<16x55xf32>
    tpu.vector_store %arg22[%c128_593, %c0_594], %981 {strides = array<i32>} : memref<288x1024xf32, #tpu.memory_space<vmem>>, vector<16x55xf32>,
    %cst_595 = arith.constant 0.000000e+00 : f32
    %983 = vector.broadcast %cst_595 : f32 to vector<16x9xf32>
    %c128_596 = arith.constant 128 : index
    %c55 = arith.constant 55 : index
    %984 = vector.load %arg22[%c128_596, %c55] : memref<288x1024xf32, #tpu.memory_space<vmem>>, vector<16x9xf32>
    tpu.vector_store %arg22[%c128_596, %c55], %983 {strides = array<i32>} : memref<288x1024xf32, #tpu.memory_space<vmem>>, vector<16x9xf32>,
    %c0_597 = arith.constant 0 : index
    %c0_598 = arith.constant 0 : index
    %985 = vector.load %arg22[%c0_597, %c0_598] : memref<288x1024xf32, #tpu.memory_space<vmem>>, vector<144x64xf32>
    %c0_599 = arith.constant 0 : index
    %c0_600 = arith.constant 0 : index
    %986 = vector.load %arg10[%c0_599, %c0_600] : memref<32x144xf32, #tpu.memory_space<vmem>>, vector<32x144xf32>
    %cst_601 = arith.constant dense<0.000000e+00> : vector<32x64xf32>
    %987 = tpu.matmul %986, %985, %cst_601 {dimension_numbers = #tpu.dot_dimension_numbers<[1], [0], [0], [1], [0, 0, 1, 1], [], []>} : vector<32x144xf32>, vector<144x64xf32>, vector<32x64xf32> -> vector<32x64xf32>
    %c0_602 = arith.constant 0 : index
    %c0_603 = arith.constant 0 : index
    %988 = vector.load %arg11[%c0_602, %c0_603] : memref<32x1xf32, #tpu.memory_space<vmem>>, vector<32x1xf32>
    %989 = vector.broadcast %988 : vector<32x1xf32> to vector<32x64xf32>
    %990 = arith.addf %987, %989 : vector<32x64xf32>
    %cst_604 = arith.constant 0.000000e+00 : f32
    %991 = vector.broadcast %cst_604 : f32 to vector<32x64xf32>
    %992 = arith.maximumf %990, %991 : vector<32x64xf32>
    %c0_605 = arith.constant 0 : index
    %c0_606 = arith.constant 0 : index
    %993 = vector.load %arg29[%c0_605, %c0_606] : memref<32x64xf32, #tpu.memory_space<vmem>>, vector<32x64xf32>
    tpu.vector_store %arg29[%c0_605, %c0_606], %992 {strides = array<i32>} : memref<32x64xf32, #tpu.memory_space<vmem>>, vector<32x64xf32>,
    %c0_607 = arith.constant 0 : index
    %c0_608 = arith.constant 0 : index
    %994 = vector.load %arg29[%c0_607, %c0_608] : memref<32x64xf32, #tpu.memory_space<vmem>>, vector<32x55xf32>
    %995 = tpu.iota {dimensions = array<i32: 1>} : vector<1x55xi32>
    %c9_i32_609 = arith.constant 9 : i32
    %996 = vector.broadcast %c9_i32_609 : i32 to vector<1x55xi32>
    %997 = arith.addi %996, %995 : vector<1x55xi32>
    %c8_i32_610 = arith.constant 8 : i32
    %c0_i32_611 = arith.constant 0 : i32
    %998 = arith.cmpi eq, %c8_i32_610, %c0_i32_611 : i32
    %c1_i32_612 = arith.constant 1 : i32
    %999 = arith.select %998, %c1_i32_612, %c8_i32_610 : i32
    %1000 = vector.broadcast %999 : i32 to vector<1x55xi32>
    %1001 = arith.remsi %997, %1000 : vector<1x55xi32>
    %c0_i32_613 = arith.constant 0 : i32
    %1002 = vector.broadcast %c0_i32_613 : i32 to vector<1x55xi32>
    %1003 = arith.cmpi ne, %1001, %1002 : vector<1x55xi32>
    %c0_i32_614 = arith.constant 0 : i32
    %1004 = vector.broadcast %c0_i32_614 : i32 to vector<1x55xi32>
    %1005 = arith.cmpi slt, %1001, %1004 : vector<1x55xi32>
    %c0_i32_615 = arith.constant 0 : i32
    %1006 = arith.cmpi slt, %999, %c0_i32_615 : i32
    %1007 = vector.broadcast %1006 : i1 to vector<1x55xi1>
    %1008 = vector.broadcast %1007 : vector<1x55xi1> to vector<1x55xi1>
    %1009 = arith.xori %1005, %1008 : vector<1x55xi1>
    %1010 = arith.andi %1009, %1003 : vector<1x55xi1>
    %1011 = vector.broadcast %999 : i32 to vector<1x55xi32>
    %1012 = arith.addi %1001, %1011 : vector<1x55xi32>
    %1013 = arith.select %1010, %1012, %1001 : vector<1x55xi1>, vector<1x55xi32>
    %c0_i32_616 = arith.constant 0 : i32
    %1014 = vector.broadcast %c0_i32_616 : i32 to vector<1x55xi32>
    %1015 = arith.cmpi ne, %1013, %1014 : vector<1x55xi32>
    %cst_617 = arith.constant 0.000000e+00 : f32
    %1016 = vector.shape_cast %1015 : vector<1x55xi1> to vector<1x55xi1>
    %1017 = vector.broadcast %1016 : vector<1x55xi1> to vector<32x55xi1>
    %1018 = vector.broadcast %cst_617 : f32 to vector<32x55xf32>
    %1019 = arith.select %1017, %994, %1018 : vector<32x55xi1>, vector<32x55xf32>
    %c0_618 = arith.constant 0 : index
    %c9_619 = arith.constant 9 : index
    %1020 = vector.load %arg22[%c0_618, %c9_619] : memref<288x1024xf32, #tpu.memory_space<vmem>>, vector<32x55xf32>
    tpu.vector_store %arg22[%c0_618, %c9_619], %1019 {strides = array<i32>} : memref<288x1024xf32, #tpu.memory_space<vmem>>, vector<32x55xf32>,
    %cst_620 = arith.constant 0.000000e+00 : f32
    %1021 = vector.broadcast %cst_620 : f32 to vector<32x9xf32>
    %c0_621 = arith.constant 0 : index
    %c0_622 = arith.constant 0 : index
    %1022 = vector.load %arg22[%c0_621, %c0_622] : memref<288x1024xf32, #tpu.memory_space<vmem>>, vector<32x9xf32>
    tpu.vector_store %arg22[%c0_621, %c0_622], %1021 {strides = array<i32>} : memref<288x1024xf32, #tpu.memory_space<vmem>>, vector<32x9xf32>,
    %c0_623 = arith.constant 0 : index
    %c0_624 = arith.constant 0 : index
    %1023 = vector.load %arg29[%c0_623, %c0_624] : memref<32x64xf32, #tpu.memory_space<vmem>>, vector<32x56xf32>
    %c32_625 = arith.constant 32 : index
    %c8_626 = arith.constant 8 : index
    %1024 = vector.load %arg22[%c32_625, %c8_626] : memref<288x1024xf32, #tpu.memory_space<vmem>>, vector<32x56xf32>
    tpu.vector_store %arg22[%c32_625, %c8_626], %1023 {strides = array<i32>} : memref<288x1024xf32, #tpu.memory_space<vmem>>, vector<32x56xf32>,
    %cst_627 = arith.constant 0.000000e+00 : f32
    %1025 = vector.broadcast %cst_627 : f32 to vector<32x8xf32>
    %c32_628 = arith.constant 32 : index
    %c0_629 = arith.constant 0 : index
    %1026 = vector.load %arg22[%c32_628, %c0_629] : memref<288x1024xf32, #tpu.memory_space<vmem>>, vector<32x8xf32>
    tpu.vector_store %arg22[%c32_628, %c0_629], %1025 {strides = array<i32>} : memref<288x1024xf32, #tpu.memory_space<vmem>>, vector<32x8xf32>,
    %c0_630 = arith.constant 0 : index
    %c0_631 = arith.constant 0 : index
    %1027 = vector.load %arg29[%c0_630, %c0_631] : memref<32x64xf32, #tpu.memory_space<vmem>>, vector<32x57xf32>
    %1028 = tpu.iota {dimensions = array<i32: 1>} : vector<1x57xi32>
    %c7_i32_632 = arith.constant 7 : i32
    %1029 = vector.broadcast %c7_i32_632 : i32 to vector<1x57xi32>
    %1030 = arith.addi %1029, %1028 : vector<1x57xi32>
    %c8_i32_633 = arith.constant 8 : i32
    %c0_i32_634 = arith.constant 0 : i32
    %1031 = arith.cmpi eq, %c8_i32_633, %c0_i32_634 : i32
    %c1_i32_635 = arith.constant 1 : i32
    %1032 = arith.select %1031, %c1_i32_635, %c8_i32_633 : i32
    %1033 = vector.broadcast %1032 : i32 to vector<1x57xi32>
    %1034 = arith.remsi %1030, %1033 : vector<1x57xi32>
    %c0_i32_636 = arith.constant 0 : i32
    %1035 = vector.broadcast %c0_i32_636 : i32 to vector<1x57xi32>
    %1036 = arith.cmpi ne, %1034, %1035 : vector<1x57xi32>
    %c0_i32_637 = arith.constant 0 : i32
    %1037 = vector.broadcast %c0_i32_637 : i32 to vector<1x57xi32>
    %1038 = arith.cmpi slt, %1034, %1037 : vector<1x57xi32>
    %c0_i32_638 = arith.constant 0 : i32
    %1039 = arith.cmpi slt, %1032, %c0_i32_638 : i32
    %1040 = vector.broadcast %1039 : i1 to vector<1x57xi1>
    %1041 = vector.broadcast %1040 : vector<1x57xi1> to vector<1x57xi1>
    %1042 = arith.xori %1038, %1041 : vector<1x57xi1>
    %1043 = arith.andi %1042, %1036 : vector<1x57xi1>
    %1044 = vector.broadcast %1032 : i32 to vector<1x57xi32>
    %1045 = arith.addi %1034, %1044 : vector<1x57xi32>
    %1046 = arith.select %1043, %1045, %1034 : vector<1x57xi1>, vector<1x57xi32>
    %c7_i32_639 = arith.constant 7 : i32
    %1047 = vector.broadcast %c7_i32_639 : i32 to vector<1x57xi32>
    %1048 = arith.cmpi ne, %1046, %1047 : vector<1x57xi32>
    %cst_640 = arith.constant 0.000000e+00 : f32
    %1049 = vector.shape_cast %1048 : vector<1x57xi1> to vector<1x57xi1>
    %1050 = vector.broadcast %1049 : vector<1x57xi1> to vector<32x57xi1>
    %1051 = vector.broadcast %cst_640 : f32 to vector<32x57xf32>
    %1052 = arith.select %1050, %1027, %1051 : vector<32x57xi1>, vector<32x57xf32>
    %c64_641 = arith.constant 64 : index
    %c7_642 = arith.constant 7 : index
    %1053 = vector.load %arg22[%c64_641, %c7_642] : memref<288x1024xf32, #tpu.memory_space<vmem>>, vector<32x57xf32>
    tpu.vector_store %arg22[%c64_641, %c7_642], %1052 {strides = array<i32>} : memref<288x1024xf32, #tpu.memory_space<vmem>>, vector<32x57xf32>,
    %cst_643 = arith.constant 0.000000e+00 : f32
    %1054 = vector.broadcast %cst_643 : f32 to vector<32x7xf32>
    %c64_644 = arith.constant 64 : index
    %c0_645 = arith.constant 0 : index
    %1055 = vector.load %arg22[%c64_644, %c0_645] : memref<288x1024xf32, #tpu.memory_space<vmem>>, vector<32x7xf32>
    tpu.vector_store %arg22[%c64_644, %c0_645], %1054 {strides = array<i32>} : memref<288x1024xf32, #tpu.memory_space<vmem>>, vector<32x7xf32>,
    %c0_646 = arith.constant 0 : index
    %c0_647 = arith.constant 0 : index
    %1056 = vector.load %arg29[%c0_646, %c0_647] : memref<32x64xf32, #tpu.memory_space<vmem>>, vector<32x63xf32>
    %1057 = tpu.iota {dimensions = array<i32: 1>} : vector<1x63xi32>
    %c1_i32_648 = arith.constant 1 : i32
    %1058 = vector.broadcast %c1_i32_648 : i32 to vector<1x63xi32>
    %1059 = arith.addi %1058, %1057 : vector<1x63xi32>
    %c8_i32_649 = arith.constant 8 : i32
    %c0_i32_650 = arith.constant 0 : i32
    %1060 = arith.cmpi eq, %c8_i32_649, %c0_i32_650 : i32
    %c1_i32_651 = arith.constant 1 : i32
    %1061 = arith.select %1060, %c1_i32_651, %c8_i32_649 : i32
    %1062 = vector.broadcast %1061 : i32 to vector<1x63xi32>
    %1063 = arith.remsi %1059, %1062 : vector<1x63xi32>
    %c0_i32_652 = arith.constant 0 : i32
    %1064 = vector.broadcast %c0_i32_652 : i32 to vector<1x63xi32>
    %1065 = arith.cmpi ne, %1063, %1064 : vector<1x63xi32>
    %c0_i32_653 = arith.constant 0 : i32
    %1066 = vector.broadcast %c0_i32_653 : i32 to vector<1x63xi32>
    %1067 = arith.cmpi slt, %1063, %1066 : vector<1x63xi32>
    %c0_i32_654 = arith.constant 0 : i32
    %1068 = arith.cmpi slt, %1061, %c0_i32_654 : i32
    %1069 = vector.broadcast %1068 : i1 to vector<1x63xi1>
    %1070 = vector.broadcast %1069 : vector<1x63xi1> to vector<1x63xi1>
    %1071 = arith.xori %1067, %1070 : vector<1x63xi1>
    %1072 = arith.andi %1071, %1065 : vector<1x63xi1>
    %1073 = vector.broadcast %1061 : i32 to vector<1x63xi32>
    %1074 = arith.addi %1063, %1073 : vector<1x63xi32>
    %1075 = arith.select %1072, %1074, %1063 : vector<1x63xi1>, vector<1x63xi32>
    %c0_i32_655 = arith.constant 0 : i32
    %1076 = vector.broadcast %c0_i32_655 : i32 to vector<1x63xi32>
    %1077 = arith.cmpi ne, %1075, %1076 : vector<1x63xi32>
    %cst_656 = arith.constant 0.000000e+00 : f32
    %1078 = vector.shape_cast %1077 : vector<1x63xi1> to vector<1x63xi1>
    %1079 = vector.broadcast %1078 : vector<1x63xi1> to vector<32x63xi1>
    %1080 = vector.broadcast %cst_656 : f32 to vector<32x63xf32>
    %1081 = arith.select %1079, %1056, %1080 : vector<32x63xi1>, vector<32x63xf32>
    %c96_657 = arith.constant 96 : index
    %c1_658 = arith.constant 1 : index
    %1082 = vector.load %arg22[%c96_657, %c1_658] : memref<288x1024xf32, #tpu.memory_space<vmem>>, vector<32x63xf32>
    tpu.vector_store %arg22[%c96_657, %c1_658], %1081 {strides = array<i32>} : memref<288x1024xf32, #tpu.memory_space<vmem>>, vector<32x63xf32>,
    %cst_659 = arith.constant 0.000000e+00 : f32
    %1083 = vector.broadcast %cst_659 : f32 to vector<32x1xf32>
    %c96_660 = arith.constant 96 : index
    %c0_661 = arith.constant 0 : index
    %1084 = vector.load %arg22[%c96_660, %c0_661] : memref<288x1024xf32, #tpu.memory_space<vmem>>, vector<32x1xf32>
    tpu.vector_store %arg22[%c96_660, %c0_661], %1083 {strides = array<i32>} : memref<288x1024xf32, #tpu.memory_space<vmem>>, vector<32x1xf32>,
    %c0_662 = arith.constant 0 : index
    %c0_663 = arith.constant 0 : index
    %1085 = vector.load %arg29[%c0_662, %c0_663] : memref<32x64xf32, #tpu.memory_space<vmem>>, vector<32x64xf32>
    %c128_664 = arith.constant 128 : index
    %c0_665 = arith.constant 0 : index
    %1086 = vector.load %arg22[%c128_664, %c0_665] : memref<288x1024xf32, #tpu.memory_space<vmem>>, vector<32x64xf32>
    tpu.vector_store %arg22[%c128_664, %c0_665], %1085 {strides = array<i32>} : memref<288x1024xf32, #tpu.memory_space<vmem>>, vector<32x64xf32>,
    %c0_666 = arith.constant 0 : index
    %c1_667 = arith.constant 1 : index
    %1087 = vector.load %arg29[%c0_666, %c1_667] : memref<32x64xf32, #tpu.memory_space<vmem>>, vector<32x63xf32>
    %1088 = tpu.iota {dimensions = array<i32: 1>} : vector<1x63xi32>
    %c0_i32_668 = arith.constant 0 : i32
    %1089 = vector.broadcast %c0_i32_668 : i32 to vector<1x63xi32>
    %1090 = arith.addi %1089, %1088 : vector<1x63xi32>
    %c8_i32_669 = arith.constant 8 : i32
    %c0_i32_670 = arith.constant 0 : i32
    %1091 = arith.cmpi eq, %c8_i32_669, %c0_i32_670 : i32
    %c1_i32_671 = arith.constant 1 : i32
    %1092 = arith.select %1091, %c1_i32_671, %c8_i32_669 : i32
    %1093 = vector.broadcast %1092 : i32 to vector<1x63xi32>
    %1094 = arith.remsi %1090, %1093 : vector<1x63xi32>
    %c0_i32_672 = arith.constant 0 : i32
    %1095 = vector.broadcast %c0_i32_672 : i32 to vector<1x63xi32>
    %1096 = arith.cmpi ne, %1094, %1095 : vector<1x63xi32>
    %c0_i32_673 = arith.constant 0 : i32
    %1097 = vector.broadcast %c0_i32_673 : i32 to vector<1x63xi32>
    %1098 = arith.cmpi slt, %1094, %1097 : vector<1x63xi32>
    %c0_i32_674 = arith.constant 0 : i32
    %1099 = arith.cmpi slt, %1092, %c0_i32_674 : i32
    %1100 = vector.broadcast %1099 : i1 to vector<1x63xi1>
    %1101 = vector.broadcast %1100 : vector<1x63xi1> to vector<1x63xi1>
    %1102 = arith.xori %1098, %1101 : vector<1x63xi1>
    %1103 = arith.andi %1102, %1096 : vector<1x63xi1>
    %1104 = vector.broadcast %1092 : i32 to vector<1x63xi32>
    %1105 = arith.addi %1094, %1104 : vector<1x63xi32>
    %1106 = arith.select %1103, %1105, %1094 : vector<1x63xi1>, vector<1x63xi32>
    %c7_i32_675 = arith.constant 7 : i32
    %1107 = vector.broadcast %c7_i32_675 : i32 to vector<1x63xi32>
    %1108 = arith.cmpi ne, %1106, %1107 : vector<1x63xi32>
    %cst_676 = arith.constant 0.000000e+00 : f32
    %1109 = vector.shape_cast %1108 : vector<1x63xi1> to vector<1x63xi1>
    %1110 = vector.broadcast %1109 : vector<1x63xi1> to vector<32x63xi1>
    %1111 = vector.broadcast %cst_676 : f32 to vector<32x63xf32>
    %1112 = arith.select %1110, %1087, %1111 : vector<32x63xi1>, vector<32x63xf32>
    %c160 = arith.constant 160 : index
    %c0_677 = arith.constant 0 : index
    %1113 = vector.load %arg22[%c160, %c0_677] : memref<288x1024xf32, #tpu.memory_space<vmem>>, vector<32x63xf32>
    tpu.vector_store %arg22[%c160, %c0_677], %1112 {strides = array<i32>} : memref<288x1024xf32, #tpu.memory_space<vmem>>, vector<32x63xf32>,
    %cst_678 = arith.constant 0.000000e+00 : f32
    %1114 = vector.broadcast %cst_678 : f32 to vector<32x1xf32>
    %c160_679 = arith.constant 160 : index
    %c63_680 = arith.constant 63 : index
    %1115 = vector.load %arg22[%c160_679, %c63_680] : memref<288x1024xf32, #tpu.memory_space<vmem>>, vector<32x1xf32>
    tpu.vector_store %arg22[%c160_679, %c63_680], %1114 {strides = array<i32>} : memref<288x1024xf32, #tpu.memory_space<vmem>>, vector<32x1xf32>,
    %c0_681 = arith.constant 0 : index
    %c7_682 = arith.constant 7 : index
    %1116 = vector.load %arg29[%c0_681, %c7_682] : memref<32x64xf32, #tpu.memory_space<vmem>>, vector<32x57xf32>
    %1117 = tpu.iota {dimensions = array<i32: 1>} : vector<1x57xi32>
    %c0_i32_683 = arith.constant 0 : i32
    %1118 = vector.broadcast %c0_i32_683 : i32 to vector<1x57xi32>
    %1119 = arith.addi %1118, %1117 : vector<1x57xi32>
    %c8_i32_684 = arith.constant 8 : i32
    %c0_i32_685 = arith.constant 0 : i32
    %1120 = arith.cmpi eq, %c8_i32_684, %c0_i32_685 : i32
    %c1_i32_686 = arith.constant 1 : i32
    %1121 = arith.select %1120, %c1_i32_686, %c8_i32_684 : i32
    %1122 = vector.broadcast %1121 : i32 to vector<1x57xi32>
    %1123 = arith.remsi %1119, %1122 : vector<1x57xi32>
    %c0_i32_687 = arith.constant 0 : i32
    %1124 = vector.broadcast %c0_i32_687 : i32 to vector<1x57xi32>
    %1125 = arith.cmpi ne, %1123, %1124 : vector<1x57xi32>
    %c0_i32_688 = arith.constant 0 : i32
    %1126 = vector.broadcast %c0_i32_688 : i32 to vector<1x57xi32>
    %1127 = arith.cmpi slt, %1123, %1126 : vector<1x57xi32>
    %c0_i32_689 = arith.constant 0 : i32
    %1128 = arith.cmpi slt, %1121, %c0_i32_689 : i32
    %1129 = vector.broadcast %1128 : i1 to vector<1x57xi1>
    %1130 = vector.broadcast %1129 : vector<1x57xi1> to vector<1x57xi1>
    %1131 = arith.xori %1127, %1130 : vector<1x57xi1>
    %1132 = arith.andi %1131, %1125 : vector<1x57xi1>
    %1133 = vector.broadcast %1121 : i32 to vector<1x57xi32>
    %1134 = arith.addi %1123, %1133 : vector<1x57xi32>
    %1135 = arith.select %1132, %1134, %1123 : vector<1x57xi1>, vector<1x57xi32>
    %c0_i32_690 = arith.constant 0 : i32
    %1136 = vector.broadcast %c0_i32_690 : i32 to vector<1x57xi32>
    %1137 = arith.cmpi ne, %1135, %1136 : vector<1x57xi32>
    %cst_691 = arith.constant 0.000000e+00 : f32
    %1138 = vector.shape_cast %1137 : vector<1x57xi1> to vector<1x57xi1>
    %1139 = vector.broadcast %1138 : vector<1x57xi1> to vector<32x57xi1>
    %1140 = vector.broadcast %cst_691 : f32 to vector<32x57xf32>
    %1141 = arith.select %1139, %1116, %1140 : vector<32x57xi1>, vector<32x57xf32>
    %c192 = arith.constant 192 : index
    %c0_692 = arith.constant 0 : index
    %1142 = vector.load %arg22[%c192, %c0_692] : memref<288x1024xf32, #tpu.memory_space<vmem>>, vector<32x57xf32>
    tpu.vector_store %arg22[%c192, %c0_692], %1141 {strides = array<i32>} : memref<288x1024xf32, #tpu.memory_space<vmem>>, vector<32x57xf32>,
    %cst_693 = arith.constant 0.000000e+00 : f32
    %1143 = vector.broadcast %cst_693 : f32 to vector<32x7xf32>
    %c192_694 = arith.constant 192 : index
    %c57_695 = arith.constant 57 : index
    %1144 = vector.load %arg22[%c192_694, %c57_695] : memref<288x1024xf32, #tpu.memory_space<vmem>>, vector<32x7xf32>
    tpu.vector_store %arg22[%c192_694, %c57_695], %1143 {strides = array<i32>} : memref<288x1024xf32, #tpu.memory_space<vmem>>, vector<32x7xf32>,
    %c0_696 = arith.constant 0 : index
    %c8_697 = arith.constant 8 : index
    %1145 = vector.load %arg29[%c0_696, %c8_697] : memref<32x64xf32, #tpu.memory_space<vmem>>, vector<32x56xf32>
    %c224 = arith.constant 224 : index
    %c0_698 = arith.constant 0 : index
    %1146 = vector.load %arg22[%c224, %c0_698] : memref<288x1024xf32, #tpu.memory_space<vmem>>, vector<32x56xf32>
    tpu.vector_store %arg22[%c224, %c0_698], %1145 {strides = array<i32>} : memref<288x1024xf32, #tpu.memory_space<vmem>>, vector<32x56xf32>,
    %cst_699 = arith.constant 0.000000e+00 : f32
    %1147 = vector.broadcast %cst_699 : f32 to vector<32x8xf32>
    %c224_700 = arith.constant 224 : index
    %c56_701 = arith.constant 56 : index
    %1148 = vector.load %arg22[%c224_700, %c56_701] : memref<288x1024xf32, #tpu.memory_space<vmem>>, vector<32x8xf32>
    tpu.vector_store %arg22[%c224_700, %c56_701], %1147 {strides = array<i32>} : memref<288x1024xf32, #tpu.memory_space<vmem>>, vector<32x8xf32>,
    %c0_702 = arith.constant 0 : index
    %c9_703 = arith.constant 9 : index
    %1149 = vector.load %arg29[%c0_702, %c9_703] : memref<32x64xf32, #tpu.memory_space<vmem>>, vector<32x55xf32>
    %1150 = tpu.iota {dimensions = array<i32: 1>} : vector<1x55xi32>
    %c0_i32_704 = arith.constant 0 : i32
    %1151 = vector.broadcast %c0_i32_704 : i32 to vector<1x55xi32>
    %1152 = arith.addi %1151, %1150 : vector<1x55xi32>
    %c8_i32_705 = arith.constant 8 : i32
    %c0_i32_706 = arith.constant 0 : i32
    %1153 = arith.cmpi eq, %c8_i32_705, %c0_i32_706 : i32
    %c1_i32_707 = arith.constant 1 : i32
    %1154 = arith.select %1153, %c1_i32_707, %c8_i32_705 : i32
    %1155 = vector.broadcast %1154 : i32 to vector<1x55xi32>
    %1156 = arith.remsi %1152, %1155 : vector<1x55xi32>
    %c0_i32_708 = arith.constant 0 : i32
    %1157 = vector.broadcast %c0_i32_708 : i32 to vector<1x55xi32>
    %1158 = arith.cmpi ne, %1156, %1157 : vector<1x55xi32>
    %c0_i32_709 = arith.constant 0 : i32
    %1159 = vector.broadcast %c0_i32_709 : i32 to vector<1x55xi32>
    %1160 = arith.cmpi slt, %1156, %1159 : vector<1x55xi32>
    %c0_i32_710 = arith.constant 0 : i32
    %1161 = arith.cmpi slt, %1154, %c0_i32_710 : i32
    %1162 = vector.broadcast %1161 : i1 to vector<1x55xi1>
    %1163 = vector.broadcast %1162 : vector<1x55xi1> to vector<1x55xi1>
    %1164 = arith.xori %1160, %1163 : vector<1x55xi1>
    %1165 = arith.andi %1164, %1158 : vector<1x55xi1>
    %1166 = vector.broadcast %1154 : i32 to vector<1x55xi32>
    %1167 = arith.addi %1156, %1166 : vector<1x55xi32>
    %1168 = arith.select %1165, %1167, %1156 : vector<1x55xi1>, vector<1x55xi32>
    %c7_i32_711 = arith.constant 7 : i32
    %1169 = vector.broadcast %c7_i32_711 : i32 to vector<1x55xi32>
    %1170 = arith.cmpi ne, %1168, %1169 : vector<1x55xi32>
    %cst_712 = arith.constant 0.000000e+00 : f32
    %1171 = vector.shape_cast %1170 : vector<1x55xi1> to vector<1x55xi1>
    %1172 = vector.broadcast %1171 : vector<1x55xi1> to vector<32x55xi1>
    %1173 = vector.broadcast %cst_712 : f32 to vector<32x55xf32>
    %1174 = arith.select %1172, %1149, %1173 : vector<32x55xi1>, vector<32x55xf32>
    %c256 = arith.constant 256 : index
    %c0_713 = arith.constant 0 : index
    %1175 = vector.load %arg22[%c256, %c0_713] : memref<288x1024xf32, #tpu.memory_space<vmem>>, vector<32x55xf32>
    tpu.vector_store %arg22[%c256, %c0_713], %1174 {strides = array<i32>} : memref<288x1024xf32, #tpu.memory_space<vmem>>, vector<32x55xf32>,
    %cst_714 = arith.constant 0.000000e+00 : f32
    %1176 = vector.broadcast %cst_714 : f32 to vector<32x9xf32>
    %c256_715 = arith.constant 256 : index
    %c55_716 = arith.constant 55 : index
    %1177 = vector.load %arg22[%c256_715, %c55_716] : memref<288x1024xf32, #tpu.memory_space<vmem>>, vector<32x9xf32>
    tpu.vector_store %arg22[%c256_715, %c55_716], %1176 {strides = array<i32>} : memref<288x1024xf32, #tpu.memory_space<vmem>>, vector<32x9xf32>,
    %c0_717 = arith.constant 0 : index
    %c0_718 = arith.constant 0 : index
    %1178 = vector.load %arg22[%c0_717, %c0_718] : memref<288x1024xf32, #tpu.memory_space<vmem>>, vector<288x64xf32>
    %c0_719 = arith.constant 0 : index
    %c0_720 = arith.constant 0 : index
    %1179 = vector.load %arg12[%c0_719, %c0_720] : memref<32x288xf32, #tpu.memory_space<vmem>>, vector<32x288xf32>
    %cst_721 = arith.constant dense<0.000000e+00> : vector<32x64xf32>
    %1180 = tpu.matmul %1179, %1178, %cst_721 {dimension_numbers = #tpu.dot_dimension_numbers<[1], [0], [0], [1], [0, 0, 1, 1], [], []>} : vector<32x288xf32>, vector<288x64xf32>, vector<32x64xf32> -> vector<32x64xf32>
    %c0_722 = arith.constant 0 : index
    %c0_723 = arith.constant 0 : index
    %1181 = vector.load %arg13[%c0_722, %c0_723] : memref<32x1xf32, #tpu.memory_space<vmem>>, vector<32x1xf32>
    %1182 = vector.broadcast %1181 : vector<32x1xf32> to vector<32x64xf32>
    %1183 = arith.addf %1180, %1182 : vector<32x64xf32>
    %cst_724 = arith.constant 0.000000e+00 : f32
    %1184 = vector.broadcast %cst_724 : f32 to vector<32x64xf32>
    %1185 = arith.maximumf %1183, %1184 : vector<32x64xf32>
    %c0_725 = arith.constant 0 : index
    %c0_726 = arith.constant 0 : index
    %1186 = vector.load %arg30[%c0_725, %c0_726] : memref<32x64xf32, #tpu.memory_space<vmem>>, vector<32x64xf32>
    tpu.vector_store %arg30[%c0_725, %c0_726], %1185 {strides = array<i32>} : memref<32x64xf32, #tpu.memory_space<vmem>>, vector<32x64xf32>,
    %c0_727 = arith.constant 0 : index
    %c0_728 = arith.constant 0 : index
    %1187 = vector.load %arg30[%c0_727, %c0_728] : memref<32x64xf32, #tpu.memory_space<vmem>>, vector<32x55xf32>
    %c0_729 = arith.constant 0 : index
    %c1_730 = arith.constant 1 : index
    %1188 = vector.load %arg30[%c0_729, %c1_730] : memref<32x64xf32, #tpu.memory_space<vmem>>, vector<32x55xf32>
    %1189 = arith.maximumf %1187, %1188 : vector<32x55xf32>
    %c0_731 = arith.constant 0 : index
    %c8_732 = arith.constant 8 : index
    %1190 = vector.load %arg30[%c0_731, %c8_732] : memref<32x64xf32, #tpu.memory_space<vmem>>, vector<32x55xf32>
    %c0_733 = arith.constant 0 : index
    %c9_734 = arith.constant 9 : index
    %1191 = vector.load %arg30[%c0_733, %c9_734] : memref<32x64xf32, #tpu.memory_space<vmem>>, vector<32x55xf32>
    %1192 = arith.maximumf %1190, %1191 : vector<32x55xf32>
    %1193 = arith.maximumf %1189, %1192 : vector<32x55xf32>
    %c0_735 = arith.constant 0 : index
    %c0_736 = arith.constant 0 : index
    %1194 = vector.load %arg16[%c0_735, %c0_736] : memref<55x16xf32, #tpu.memory_space<vmem>>, vector<55x16xf32>
    %cst_737 = arith.constant dense<0.000000e+00> : vector<32x16xf32>
    %1195 = tpu.matmul %1193, %1194, %cst_737 {dimension_numbers = #tpu.dot_dimension_numbers<[1], [0], [0], [1], [0, 0, 1, 1], [], []>} : vector<32x55xf32>, vector<55x16xf32>, vector<32x16xf32> -> vector<32x16xf32>
    %c0_738 = arith.constant 0 : index
    %c0_739 = arith.constant 0 : index
    %1196 = vector.load %arg31[%c0_738, %c0_739] : memref<32x16xf32, #tpu.memory_space<vmem>>, vector<32x16xf32>
    tpu.vector_store %arg31[%c0_738, %c0_739], %1195 {strides = array<i32>} : memref<32x16xf32, #tpu.memory_space<vmem>>, vector<32x16xf32>,
    %c0_740 = arith.constant 0 : index
    %c0_741 = arith.constant 0 : index
    %1197 = vector.load %arg31[%c0_740, %c0_741] : memref<32x16xf32, #tpu.memory_space<vmem>>, vector<1x16xf32>
    %c0_742 = arith.constant 0 : index
    %c0_743 = arith.constant 0 : index
    %1198 = vector.load %arg32[%c0_742, %c0_743] : memref<1x512xf32, #tpu.memory_space<vmem>>, vector<1x16xf32>
    tpu.vector_store %arg32[%c0_742, %c0_743], %1197 {strides = array<i32>} : memref<1x512xf32, #tpu.memory_space<vmem>>, vector<1x16xf32>,
    %c1_744 = arith.constant 1 : index
    %c0_745 = arith.constant 0 : index
    %1199 = vector.load %arg31[%c1_744, %c0_745] : memref<32x16xf32, #tpu.memory_space<vmem>>, vector<1x16xf32>
    %c0_746 = arith.constant 0 : index
    %c16_747 = arith.constant 16 : index
    %1200 = vector.load %arg32[%c0_746, %c16_747] : memref<1x512xf32, #tpu.memory_space<vmem>>, vector<1x16xf32>
    tpu.vector_store %arg32[%c0_746, %c16_747], %1199 {strides = array<i32>} : memref<1x512xf32, #tpu.memory_space<vmem>>, vector<1x16xf32>,
    %c2 = arith.constant 2 : index
    %c0_748 = arith.constant 0 : index
    %1201 = vector.load %arg31[%c2, %c0_748] : memref<32x16xf32, #tpu.memory_space<vmem>>, vector<1x16xf32>
    %c0_749 = arith.constant 0 : index
    %c32_750 = arith.constant 32 : index
    %1202 = vector.load %arg32[%c0_749, %c32_750] : memref<1x512xf32, #tpu.memory_space<vmem>>, vector<1x16xf32>
    tpu.vector_store %arg32[%c0_749, %c32_750], %1201 {strides = array<i32>} : memref<1x512xf32, #tpu.memory_space<vmem>>, vector<1x16xf32>,
    %c3_751 = arith.constant 3 : index
    %c0_752 = arith.constant 0 : index
    %1203 = vector.load %arg31[%c3_751, %c0_752] : memref<32x16xf32, #tpu.memory_space<vmem>>, vector<1x16xf32>
    %c0_753 = arith.constant 0 : index
    %c48_754 = arith.constant 48 : index
    %1204 = vector.load %arg32[%c0_753, %c48_754] : memref<1x512xf32, #tpu.memory_space<vmem>>, vector<1x16xf32>
    tpu.vector_store %arg32[%c0_753, %c48_754], %1203 {strides = array<i32>} : memref<1x512xf32, #tpu.memory_space<vmem>>, vector<1x16xf32>,
    %c4 = arith.constant 4 : index
    %c0_755 = arith.constant 0 : index
    %1205 = vector.load %arg31[%c4, %c0_755] : memref<32x16xf32, #tpu.memory_space<vmem>>, vector<1x16xf32>
    %c0_756 = arith.constant 0 : index
    %c64_757 = arith.constant 64 : index
    %1206 = vector.load %arg32[%c0_756, %c64_757] : memref<1x512xf32, #tpu.memory_space<vmem>>, vector<1x16xf32>
    tpu.vector_store %arg32[%c0_756, %c64_757], %1205 {strides = array<i32>} : memref<1x512xf32, #tpu.memory_space<vmem>>, vector<1x16xf32>,
    %c5 = arith.constant 5 : index
    %c0_758 = arith.constant 0 : index
    %1207 = vector.load %arg31[%c5, %c0_758] : memref<32x16xf32, #tpu.memory_space<vmem>>, vector<1x16xf32>
    %c0_759 = arith.constant 0 : index
    %c80_760 = arith.constant 80 : index
    %1208 = vector.load %arg32[%c0_759, %c80_760] : memref<1x512xf32, #tpu.memory_space<vmem>>, vector<1x16xf32>
    tpu.vector_store %arg32[%c0_759, %c80_760], %1207 {strides = array<i32>} : memref<1x512xf32, #tpu.memory_space<vmem>>, vector<1x16xf32>,
    %c6_761 = arith.constant 6 : index
    %c0_762 = arith.constant 0 : index
    %1209 = vector.load %arg31[%c6_761, %c0_762] : memref<32x16xf32, #tpu.memory_space<vmem>>, vector<1x16xf32>
    %c0_763 = arith.constant 0 : index
    %c96_764 = arith.constant 96 : index
    %1210 = vector.load %arg32[%c0_763, %c96_764] : memref<1x512xf32, #tpu.memory_space<vmem>>, vector<1x16xf32>
    tpu.vector_store %arg32[%c0_763, %c96_764], %1209 {strides = array<i32>} : memref<1x512xf32, #tpu.memory_space<vmem>>, vector<1x16xf32>,
    %c7_765 = arith.constant 7 : index
    %c0_766 = arith.constant 0 : index
    %1211 = vector.load %arg31[%c7_765, %c0_766] : memref<32x16xf32, #tpu.memory_space<vmem>>, vector<1x16xf32>
    %c0_767 = arith.constant 0 : index
    %c112_768 = arith.constant 112 : index
    %1212 = vector.load %arg32[%c0_767, %c112_768] : memref<1x512xf32, #tpu.memory_space<vmem>>, vector<1x16xf32>
    tpu.vector_store %arg32[%c0_767, %c112_768], %1211 {strides = array<i32>} : memref<1x512xf32, #tpu.memory_space<vmem>>, vector<1x16xf32>,
    %c8_769 = arith.constant 8 : index
    %c0_770 = arith.constant 0 : index
    %1213 = vector.load %arg31[%c8_769, %c0_770] : memref<32x16xf32, #tpu.memory_space<vmem>>, vector<1x16xf32>
    %c0_771 = arith.constant 0 : index
    %c128_772 = arith.constant 128 : index
    %1214 = vector.load %arg32[%c0_771, %c128_772] : memref<1x512xf32, #tpu.memory_space<vmem>>, vector<1x16xf32>
    tpu.vector_store %arg32[%c0_771, %c128_772], %1213 {strides = array<i32>} : memref<1x512xf32, #tpu.memory_space<vmem>>, vector<1x16xf32>,
    %c9_773 = arith.constant 9 : index
    %c0_774 = arith.constant 0 : index
    %1215 = vector.load %arg31[%c9_773, %c0_774] : memref<32x16xf32, #tpu.memory_space<vmem>>, vector<1x16xf32>
    %c0_775 = arith.constant 0 : index
    %c144 = arith.constant 144 : index
    %1216 = vector.load %arg32[%c0_775, %c144] : memref<1x512xf32, #tpu.memory_space<vmem>>, vector<1x16xf32>
    tpu.vector_store %arg32[%c0_775, %c144], %1215 {strides = array<i32>} : memref<1x512xf32, #tpu.memory_space<vmem>>, vector<1x16xf32>,
    %c10 = arith.constant 10 : index
    %c0_776 = arith.constant 0 : index
    %1217 = vector.load %arg31[%c10, %c0_776] : memref<32x16xf32, #tpu.memory_space<vmem>>, vector<1x16xf32>
    %c0_777 = arith.constant 0 : index
    %c160_778 = arith.constant 160 : index
    %1218 = vector.load %arg32[%c0_777, %c160_778] : memref<1x512xf32, #tpu.memory_space<vmem>>, vector<1x16xf32>
    tpu.vector_store %arg32[%c0_777, %c160_778], %1217 {strides = array<i32>} : memref<1x512xf32, #tpu.memory_space<vmem>>, vector<1x16xf32>,
    %c11 = arith.constant 11 : index
    %c0_779 = arith.constant 0 : index
    %1219 = vector.load %arg31[%c11, %c0_779] : memref<32x16xf32, #tpu.memory_space<vmem>>, vector<1x16xf32>
    %c0_780 = arith.constant 0 : index
    %c176 = arith.constant 176 : index
    %1220 = vector.load %arg32[%c0_780, %c176] : memref<1x512xf32, #tpu.memory_space<vmem>>, vector<1x16xf32>
    tpu.vector_store %arg32[%c0_780, %c176], %1219 {strides = array<i32>} : memref<1x512xf32, #tpu.memory_space<vmem>>, vector<1x16xf32>,
    %c12_781 = arith.constant 12 : index
    %c0_782 = arith.constant 0 : index
    %1221 = vector.load %arg31[%c12_781, %c0_782] : memref<32x16xf32, #tpu.memory_space<vmem>>, vector<1x16xf32>
    %c0_783 = arith.constant 0 : index
    %c192_784 = arith.constant 192 : index
    %1222 = vector.load %arg32[%c0_783, %c192_784] : memref<1x512xf32, #tpu.memory_space<vmem>>, vector<1x16xf32>
    tpu.vector_store %arg32[%c0_783, %c192_784], %1221 {strides = array<i32>} : memref<1x512xf32, #tpu.memory_space<vmem>>, vector<1x16xf32>,
    %c13 = arith.constant 13 : index
    %c0_785 = arith.constant 0 : index
    %1223 = vector.load %arg31[%c13, %c0_785] : memref<32x16xf32, #tpu.memory_space<vmem>>, vector<1x16xf32>
    %c0_786 = arith.constant 0 : index
    %c208 = arith.constant 208 : index
    %1224 = vector.load %arg32[%c0_786, %c208] : memref<1x512xf32, #tpu.memory_space<vmem>>, vector<1x16xf32>
    tpu.vector_store %arg32[%c0_786, %c208], %1223 {strides = array<i32>} : memref<1x512xf32, #tpu.memory_space<vmem>>, vector<1x16xf32>,
    %c14 = arith.constant 14 : index
    %c0_787 = arith.constant 0 : index
    %1225 = vector.load %arg31[%c14, %c0_787] : memref<32x16xf32, #tpu.memory_space<vmem>>, vector<1x16xf32>
    %c0_788 = arith.constant 0 : index
    %c224_789 = arith.constant 224 : index
    %1226 = vector.load %arg32[%c0_788, %c224_789] : memref<1x512xf32, #tpu.memory_space<vmem>>, vector<1x16xf32>
    tpu.vector_store %arg32[%c0_788, %c224_789], %1225 {strides = array<i32>} : memref<1x512xf32, #tpu.memory_space<vmem>>, vector<1x16xf32>,
    %c15_790 = arith.constant 15 : index
    %c0_791 = arith.constant 0 : index
    %1227 = vector.load %arg31[%c15_790, %c0_791] : memref<32x16xf32, #tpu.memory_space<vmem>>, vector<1x16xf32>
    %c0_792 = arith.constant 0 : index
    %c240_793 = arith.constant 240 : index
    %1228 = vector.load %arg32[%c0_792, %c240_793] : memref<1x512xf32, #tpu.memory_space<vmem>>, vector<1x16xf32>
    tpu.vector_store %arg32[%c0_792, %c240_793], %1227 {strides = array<i32>} : memref<1x512xf32, #tpu.memory_space<vmem>>, vector<1x16xf32>,
    %c16_794 = arith.constant 16 : index
    %c0_795 = arith.constant 0 : index
    %1229 = vector.load %arg31[%c16_794, %c0_795] : memref<32x16xf32, #tpu.memory_space<vmem>>, vector<1x16xf32>
    %c0_796 = arith.constant 0 : index
    %c256_797 = arith.constant 256 : index
    %1230 = vector.load %arg32[%c0_796, %c256_797] : memref<1x512xf32, #tpu.memory_space<vmem>>, vector<1x16xf32>
    tpu.vector_store %arg32[%c0_796, %c256_797], %1229 {strides = array<i32>} : memref<1x512xf32, #tpu.memory_space<vmem>>, vector<1x16xf32>,
    %c17_798 = arith.constant 17 : index
    %c0_799 = arith.constant 0 : index
    %1231 = vector.load %arg31[%c17_798, %c0_799] : memref<32x16xf32, #tpu.memory_space<vmem>>, vector<1x16xf32>
    %c0_800 = arith.constant 0 : index
    %c272 = arith.constant 272 : index
    %1232 = vector.load %arg32[%c0_800, %c272] : memref<1x512xf32, #tpu.memory_space<vmem>>, vector<1x16xf32>
    tpu.vector_store %arg32[%c0_800, %c272], %1231 {strides = array<i32>} : memref<1x512xf32, #tpu.memory_space<vmem>>, vector<1x16xf32>,
    %c18_801 = arith.constant 18 : index
    %c0_802 = arith.constant 0 : index
    %1233 = vector.load %arg31[%c18_801, %c0_802] : memref<32x16xf32, #tpu.memory_space<vmem>>, vector<1x16xf32>
    %c0_803 = arith.constant 0 : index
    %c288 = arith.constant 288 : index
    %1234 = vector.load %arg32[%c0_803, %c288] : memref<1x512xf32, #tpu.memory_space<vmem>>, vector<1x16xf32>
    tpu.vector_store %arg32[%c0_803, %c288], %1233 {strides = array<i32>} : memref<1x512xf32, #tpu.memory_space<vmem>>, vector<1x16xf32>,
    %c19 = arith.constant 19 : index
    %c0_804 = arith.constant 0 : index
    %1235 = vector.load %arg31[%c19, %c0_804] : memref<32x16xf32, #tpu.memory_space<vmem>>, vector<1x16xf32>
    %c0_805 = arith.constant 0 : index
    %c304 = arith.constant 304 : index
    %1236 = vector.load %arg32[%c0_805, %c304] : memref<1x512xf32, #tpu.memory_space<vmem>>, vector<1x16xf32>
    tpu.vector_store %arg32[%c0_805, %c304], %1235 {strides = array<i32>} : memref<1x512xf32, #tpu.memory_space<vmem>>, vector<1x16xf32>,
    %c20 = arith.constant 20 : index
    %c0_806 = arith.constant 0 : index
    %1237 = vector.load %arg31[%c20, %c0_806] : memref<32x16xf32, #tpu.memory_space<vmem>>, vector<1x16xf32>
    %c0_807 = arith.constant 0 : index
    %c320 = arith.constant 320 : index
    %1238 = vector.load %arg32[%c0_807, %c320] : memref<1x512xf32, #tpu.memory_space<vmem>>, vector<1x16xf32>
    tpu.vector_store %arg32[%c0_807, %c320], %1237 {strides = array<i32>} : memref<1x512xf32, #tpu.memory_space<vmem>>, vector<1x16xf32>,
    %c21_808 = arith.constant 21 : index
    %c0_809 = arith.constant 0 : index
    %1239 = vector.load %arg31[%c21_808, %c0_809] : memref<32x16xf32, #tpu.memory_space<vmem>>, vector<1x16xf32>
    %c0_810 = arith.constant 0 : index
    %c336 = arith.constant 336 : index
    %1240 = vector.load %arg32[%c0_810, %c336] : memref<1x512xf32, #tpu.memory_space<vmem>>, vector<1x16xf32>
    tpu.vector_store %arg32[%c0_810, %c336], %1239 {strides = array<i32>} : memref<1x512xf32, #tpu.memory_space<vmem>>, vector<1x16xf32>,
    %c22 = arith.constant 22 : index
    %c0_811 = arith.constant 0 : index
    %1241 = vector.load %arg31[%c22, %c0_811] : memref<32x16xf32, #tpu.memory_space<vmem>>, vector<1x16xf32>
    %c0_812 = arith.constant 0 : index
    %c352 = arith.constant 352 : index
    %1242 = vector.load %arg32[%c0_812, %c352] : memref<1x512xf32, #tpu.memory_space<vmem>>, vector<1x16xf32>
    tpu.vector_store %arg32[%c0_812, %c352], %1241 {strides = array<i32>} : memref<1x512xf32, #tpu.memory_space<vmem>>, vector<1x16xf32>,
    %c23 = arith.constant 23 : index
    %c0_813 = arith.constant 0 : index
    %1243 = vector.load %arg31[%c23, %c0_813] : memref<32x16xf32, #tpu.memory_space<vmem>>, vector<1x16xf32>
    %c0_814 = arith.constant 0 : index
    %c368 = arith.constant 368 : index
    %1244 = vector.load %arg32[%c0_814, %c368] : memref<1x512xf32, #tpu.memory_space<vmem>>, vector<1x16xf32>
    tpu.vector_store %arg32[%c0_814, %c368], %1243 {strides = array<i32>} : memref<1x512xf32, #tpu.memory_space<vmem>>, vector<1x16xf32>,
    %c24_815 = arith.constant 24 : index
    %c0_816 = arith.constant 0 : index
    %1245 = vector.load %arg31[%c24_815, %c0_816] : memref<32x16xf32, #tpu.memory_space<vmem>>, vector<1x16xf32>
    %c0_817 = arith.constant 0 : index
    %c384 = arith.constant 384 : index
    %1246 = vector.load %arg32[%c0_817, %c384] : memref<1x512xf32, #tpu.memory_space<vmem>>, vector<1x16xf32>
    tpu.vector_store %arg32[%c0_817, %c384], %1245 {strides = array<i32>} : memref<1x512xf32, #tpu.memory_space<vmem>>, vector<1x16xf32>,
    %c25 = arith.constant 25 : index
    %c0_818 = arith.constant 0 : index
    %1247 = vector.load %arg31[%c25, %c0_818] : memref<32x16xf32, #tpu.memory_space<vmem>>, vector<1x16xf32>
    %c0_819 = arith.constant 0 : index
    %c400 = arith.constant 400 : index
    %1248 = vector.load %arg32[%c0_819, %c400] : memref<1x512xf32, #tpu.memory_space<vmem>>, vector<1x16xf32>
    tpu.vector_store %arg32[%c0_819, %c400], %1247 {strides = array<i32>} : memref<1x512xf32, #tpu.memory_space<vmem>>, vector<1x16xf32>,
    %c26 = arith.constant 26 : index
    %c0_820 = arith.constant 0 : index
    %1249 = vector.load %arg31[%c26, %c0_820] : memref<32x16xf32, #tpu.memory_space<vmem>>, vector<1x16xf32>
    %c0_821 = arith.constant 0 : index
    %c416 = arith.constant 416 : index
    %1250 = vector.load %arg32[%c0_821, %c416] : memref<1x512xf32, #tpu.memory_space<vmem>>, vector<1x16xf32>
    tpu.vector_store %arg32[%c0_821, %c416], %1249 {strides = array<i32>} : memref<1x512xf32, #tpu.memory_space<vmem>>, vector<1x16xf32>,
    %c27 = arith.constant 27 : index
    %c0_822 = arith.constant 0 : index
    %1251 = vector.load %arg31[%c27, %c0_822] : memref<32x16xf32, #tpu.memory_space<vmem>>, vector<1x16xf32>
    %c0_823 = arith.constant 0 : index
    %c432 = arith.constant 432 : index
    %1252 = vector.load %arg32[%c0_823, %c432] : memref<1x512xf32, #tpu.memory_space<vmem>>, vector<1x16xf32>
    tpu.vector_store %arg32[%c0_823, %c432], %1251 {strides = array<i32>} : memref<1x512xf32, #tpu.memory_space<vmem>>, vector<1x16xf32>,
    %c28 = arith.constant 28 : index
    %c0_824 = arith.constant 0 : index
    %1253 = vector.load %arg31[%c28, %c0_824] : memref<32x16xf32, #tpu.memory_space<vmem>>, vector<1x16xf32>
    %c0_825 = arith.constant 0 : index
    %c448 = arith.constant 448 : index
    %1254 = vector.load %arg32[%c0_825, %c448] : memref<1x512xf32, #tpu.memory_space<vmem>>, vector<1x16xf32>
    tpu.vector_store %arg32[%c0_825, %c448], %1253 {strides = array<i32>} : memref<1x512xf32, #tpu.memory_space<vmem>>, vector<1x16xf32>,
    %c29 = arith.constant 29 : index
    %c0_826 = arith.constant 0 : index
    %1255 = vector.load %arg31[%c29, %c0_826] : memref<32x16xf32, #tpu.memory_space<vmem>>, vector<1x16xf32>
    %c0_827 = arith.constant 0 : index
    %c464 = arith.constant 464 : index
    %1256 = vector.load %arg32[%c0_827, %c464] : memref<1x512xf32, #tpu.memory_space<vmem>>, vector<1x16xf32>
    tpu.vector_store %arg32[%c0_827, %c464], %1255 {strides = array<i32>} : memref<1x512xf32, #tpu.memory_space<vmem>>, vector<1x16xf32>,
    %c30 = arith.constant 30 : index
    %c0_828 = arith.constant 0 : index
    %1257 = vector.load %arg31[%c30, %c0_828] : memref<32x16xf32, #tpu.memory_space<vmem>>, vector<1x16xf32>
    %c0_829 = arith.constant 0 : index
    %c480 = arith.constant 480 : index
    %1258 = vector.load %arg32[%c0_829, %c480] : memref<1x512xf32, #tpu.memory_space<vmem>>, vector<1x16xf32>
    tpu.vector_store %arg32[%c0_829, %c480], %1257 {strides = array<i32>} : memref<1x512xf32, #tpu.memory_space<vmem>>, vector<1x16xf32>,
    %c31_830 = arith.constant 31 : index
    %c0_831 = arith.constant 0 : index
    %1259 = vector.load %arg31[%c31_830, %c0_831] : memref<32x16xf32, #tpu.memory_space<vmem>>, vector<1x16xf32>
    %c0_832 = arith.constant 0 : index
    %c496 = arith.constant 496 : index
    %1260 = vector.load %arg32[%c0_832, %c496] : memref<1x512xf32, #tpu.memory_space<vmem>>, vector<1x16xf32>
    tpu.vector_store %arg32[%c0_832, %c496], %1259 {strides = array<i32>} : memref<1x512xf32, #tpu.memory_space<vmem>>, vector<1x16xf32>,
    %c0_833 = arith.constant 0 : index
    %c0_834 = arith.constant 0 : index
    %1261 = vector.load %arg32[%c0_833, %c0_834] : memref<1x512xf32, #tpu.memory_space<vmem>>, vector<1x512xf32>
    %c0_835 = arith.constant 0 : index
    %c0_836 = arith.constant 0 : index
    %1262 = vector.load %arg17[%c0_835, %c0_836] : memref<512x32xf32, #tpu.memory_space<vmem>>, vector<512x32xf32>
    %cst_837 = arith.constant dense<0.000000e+00> : vector<1x32xf32>
    %1263 = tpu.matmul %1261, %1262, %cst_837 {dimension_numbers = #tpu.dot_dimension_numbers<[1], [0], [0], [1], [0, 0, 1, 1], [], []>} : vector<1x512xf32>, vector<512x32xf32>, vector<1x32xf32> -> vector<1x32xf32>
    %c0_838 = arith.constant 0 : index
    %c0_839 = arith.constant 0 : index
    %1264 = vector.load %arg18[%c0_838, %c0_839] : memref<1x32xf32, #tpu.memory_space<vmem>>, vector<1x32xf32>
    %1265 = arith.addf %1263, %1264 : vector<1x32xf32>
    %cst_840 = arith.constant 0.000000e+00 : f32
    %1266 = vector.broadcast %cst_840 : f32 to vector<1x32xf32>
    %1267 = arith.maximumf %1265, %1266 : vector<1x32xf32>
    %c0_841 = arith.constant 0 : index
    %c0_842 = arith.constant 0 : index
    %1268 = vector.load %arg19[%c0_841, %c0_842] : memref<32x128xf32, #tpu.memory_space<vmem>>, vector<32x128xf32>
    %cst_843 = arith.constant dense<0.000000e+00> : vector<1x128xf32>
    %1269 = tpu.matmul %1267, %1268, %cst_843 {dimension_numbers = #tpu.dot_dimension_numbers<[1], [0], [0], [1], [0, 0, 1, 1], [], []>} : vector<1x32xf32>, vector<32x128xf32>, vector<1x128xf32> -> vector<1x128xf32>
    %c0_844 = arith.constant 0 : index
    %c0_845 = arith.constant 0 : index
    %1270 = vector.load %arg20[%c0_844, %c0_845] : memref<1x128xf32, #tpu.memory_space<vmem>>, vector<1x128xf32>
    %1271 = arith.addf %1269, %1270 : vector<1x128xf32>
    %c0_846 = arith.constant 0 : index
    %c0_847 = arith.constant 0 : index
    %c0_848 = arith.constant 0 : index
    %1272 = vector.load %arg21[%c0_846, %c0_847, %c0_848] : memref<1x1x128xf32, #tpu.memory_space<vmem>>, vector<1x1x128xf32>
    %1273 = vector.shape_cast %1272 : vector<1x1x128xf32> to vector<1x128xf32>
    %1274 = vector.shape_cast %1271 : vector<1x128xf32> to vector<1x1x128xf32>
    tpu.vector_store %arg21[%c0_846, %c0_847, %c0_848], %1274 {strides = array<i32>} : memref<1x1x128xf32, #tpu.memory_space<vmem>>, vector<1x1x128xf32>,
    return
  }
  func.func @transform_0(%arg0: i32) -> (i32, i32, i32) {
    %c0_i32 = arith.constant 0 : i32
    %c0_i32_0 = arith.constant 0 : i32
    %c0_i32_1 = arith.constant 0 : i32
    return %arg0, %c0_i32, %c0_i32_0 : i32, i32, i32
  }
  func.func @transform_1(%arg0: i32) -> (i32, i32) {
    %c0_i32 = arith.constant 0 : i32
    %c0_i32_0 = arith.constant 0 : i32
    %c0_i32_1 = arith.constant 0 : i32
    return %c0_i32, %c0_i32_0 : i32, i32
  }
  func.func @transform_2(%arg0: i32) -> (i32, i32) {
    %c0_i32 = arith.constant 0 : i32
    %c0_i32_0 = arith.constant 0 : i32
    %c0_i32_1 = arith.constant 0 : i32
    return %c0_i32, %c0_i32_0 : i32, i32
  }
  func.func @transform_3(%arg0: i32) -> (i32, i32) {
    %c0_i32 = arith.constant 0 : i32
    %c0_i32_0 = arith.constant 0 : i32
    %c0_i32_1 = arith.constant 0 : i32
    return %c0_i32, %c0_i32_0 : i32, i32
  }
  func.func @transform_4(%arg0: i32) -> (i32, i32) {
    %c0_i32 = arith.constant 0 : i32
    %c0_i32_0 = arith.constant 0 : i32
    %c0_i32_1 = arith.constant 0 : i32
    return %c0_i32, %c0_i32_0 : i32, i32
  }
  func.func @transform_5(%arg0: i32) -> (i32, i32) {
    %c0_i32 = arith.constant 0 : i32
    %c0_i32_0 = arith.constant 0 : i32
    %c0_i32_1 = arith.constant 0 : i32
    return %c0_i32, %c0_i32_0 : i32, i32
  }
  func.func @transform_6(%arg0: i32) -> (i32, i32) {
    %c0_i32 = arith.constant 0 : i32
    %c0_i32_0 = arith.constant 0 : i32
    %c0_i32_1 = arith.constant 0 : i32
    return %c0_i32, %c0_i32_0 : i32, i32
  }
  func.func @transform_7(%arg0: i32) -> (i32, i32) {
    %c0_i32 = arith.constant 0 : i32
    %c0_i32_0 = arith.constant 0 : i32
    %c0_i32_1 = arith.constant 0 : i32
    return %c0_i32, %c0_i32_0 : i32, i32
  }
  func.func @transform_8(%arg0: i32) -> (i32, i32) {
    %c0_i32 = arith.constant 0 : i32
    %c0_i32_0 = arith.constant 0 : i32
    %c0_i32_1 = arith.constant 0 : i32
    return %c0_i32, %c0_i32_0 : i32, i32
  }
  func.func @transform_9(%arg0: i32) -> (i32, i32) {
    %c0_i32 = arith.constant 0 : i32
    %c0_i32_0 = arith.constant 0 : i32
    %c0_i32_1 = arith.constant 0 : i32
    return %c0_i32, %c0_i32_0 : i32, i32
  }
  func.func @transform_10(%arg0: i32) -> (i32, i32) {
    %c0_i32 = arith.constant 0 : i32
    %c0_i32_0 = arith.constant 0 : i32
    %c0_i32_1 = arith.constant 0 : i32
    return %c0_i32, %c0_i32_0 : i32, i32
  }
  func.func @transform_11(%arg0: i32) -> (i32, i32) {
    %c0_i32 = arith.constant 0 : i32
    %c0_i32_0 = arith.constant 0 : i32
    %c0_i32_1 = arith.constant 0 : i32
    return %c0_i32, %c0_i32_0 : i32, i32
  }
  func.func @transform_12(%arg0: i32) -> (i32, i32) {
    %c0_i32 = arith.constant 0 : i32
    %c0_i32_0 = arith.constant 0 : i32
    %c0_i32_1 = arith.constant 0 : i32
    return %c0_i32, %c0_i32_0 : i32, i32
  }
  func.func @transform_13(%arg0: i32) -> (i32, i32) {
    %c0_i32 = arith.constant 0 : i32
    %c0_i32_0 = arith.constant 0 : i32
    %c0_i32_1 = arith.constant 0 : i32
    return %c0_i32, %c0_i32_0 : i32, i32
  }
  func.func @transform_14(%arg0: i32) -> (i32, i32) {
    %c0_i32 = arith.constant 0 : i32
    %c0_i32_0 = arith.constant 0 : i32
    %c0_i32_1 = arith.constant 0 : i32
    return %c0_i32, %c0_i32_0 : i32, i32
  }
  func.func @transform_15(%arg0: i32) -> (i32, i32) {
    %c0_i32 = arith.constant 0 : i32
    %c0_i32_0 = arith.constant 0 : i32
    %c0_i32_1 = arith.constant 0 : i32
    return %c0_i32, %c0_i32_0 : i32, i32
  }
  func.func @transform_16(%arg0: i32) -> (i32, i32) {
    %c0_i32 = arith.constant 0 : i32
    %c0_i32_0 = arith.constant 0 : i32
    %c0_i32_1 = arith.constant 0 : i32
    return %c0_i32, %c0_i32_0 : i32, i32
  }
  func.func @transform_17(%arg0: i32) -> (i32, i32) {
    %c0_i32 = arith.constant 0 : i32
    %c0_i32_0 = arith.constant 0 : i32
    %c0_i32_1 = arith.constant 0 : i32
    return %c0_i32, %c0_i32_0 : i32, i32
  }
  func.func @transform_18(%arg0: i32) -> (i32, i32) {
    %c0_i32 = arith.constant 0 : i32
    %c0_i32_0 = arith.constant 0 : i32
    %c0_i32_1 = arith.constant 0 : i32
    return %c0_i32, %c0_i32_0 : i32, i32
  }
  func.func @transform_19(%arg0: i32) -> (i32, i32) {
    %c0_i32 = arith.constant 0 : i32
    %c0_i32_0 = arith.constant 0 : i32
    %c0_i32_1 = arith.constant 0 : i32
    return %c0_i32, %c0_i32_0 : i32, i32
  }
  func.func @transform_20(%arg0: i32) -> (i32, i32, i32) {
    %c0_i32 = arith.constant 0 : i32
    %c0_i32_0 = arith.constant 0 : i32
    %c0_i32_1 = arith.constant 0 : i32
    return %arg0, %c0_i32, %c0_i32_0 : i32, i32, i32
  }
}

</mosaic_0001>

<llo_original>
// kernel: traffic_sign_forward.1
$region0: #{traffic_sign_forward.1}
  #allocation0 [shape = 'u32[]', space=smem, size = 0x4, offset = 0x4, fixed_abs, tag = 'smem constant byte address 0x4 - core index']
  #allocation1 [shape = 'u32[72,128]{1,0:T(1,128)}', space=vmem, size = 0x9000, scoped, tag = 'internal scratch']
  #allocation2 [shape = 'f32[288,1024]{1,0:T(8,128)}', space=vmem, size = 0x120000, scoped, tag = 'scratch operand']
  #allocation3 [shape = 'f32[8,1024]{1,0:T(8,128)}', space=vmem, size = 0x8000, scoped, tag = 'scratch operand']
  #allocation4 [shape = 'f32[8,1024]{1,0:T(8,128)}', space=vmem, size = 0x8000, scoped, tag = 'scratch operand']
  #allocation5 [shape = 'f32[8,256]{1,0:T(8,128)}', space=vmem, size = 0x2000, scoped, tag = 'scratch operand']
  #allocation6 [shape = 'f32[16,256]{1,0:T(8,128)}', space=vmem, size = 0x4000, scoped, tag = 'scratch operand']
  #allocation7 [shape = 'f32[16,256]{1,0:T(8,128)}', space=vmem, size = 0x4000, scoped, tag = 'scratch operand']
  #allocation8 [shape = 'f32[16,64]{1,0:T(8,128)}', space=vmem, size = 0x2000, scoped, tag = 'scratch operand']
  #allocation9 [shape = 'f32[32,64]{1,0:T(8,128)}', space=vmem, size = 0x4000, scoped, tag = 'scratch operand']
  #allocation10 [shape = 'f32[32,64]{1,0:T(8,128)}', space=vmem, size = 0x4000, scoped, tag = 'scratch operand']
  #allocation11 [shape = 'f32[32,16]{1,0:T(8,128)}', space=vmem, size = 0x4000, scoped, tag = 'scratch operand']
  #allocation12 [shape = 'f32[1,512]{1,0:T(1,128)}', space=vmem, size = 0x800, scoped, tag = 'scratch operand']
  %s0 = inlined_call_operand.vmem [shape: f32[2,3,1024], index: 0, kind: input, shape index: {}]
  %s1 = inlined_call_operand.vmem [shape: f32[8,27], index: 1, kind: input, shape index: {}]
  %s2 = inlined_call_operand.vmem [shape: f32[8,1], index: 2, kind: input, shape index: {}]
  %s3 = inlined_call_operand.vmem [shape: f32[8,72], index: 3, kind: input, shape index: {}]
  %s4 = inlined_call_operand.vmem [shape: f32[8,1], index: 4, kind: input, shape index: {}]
  %s5 = inlined_call_operand.vmem [shape: f32[16,72], index: 5, kind: input, shape index: {}]
  %s6 = inlined_call_operand.vmem [shape: f32[16,1], index: 6, kind: input, shape index: {}]
  %s7 = inlined_call_operand.vmem [shape: f32[16,144], index: 7, kind: input, shape index: {}]
  %s8 = inlined_call_operand.vmem [shape: f32[16,1], index: 8, kind: input, shape index: {}]
  %s9 = inlined_call_operand.vmem [shape: f32[32,144], index: 9, kind: input, shape index: {}]
  %s10 = inlined_call_operand.vmem [shape: f32[32,1], index: 10, kind: input, shape index: {}]
  %s11 = inlined_call_operand.vmem [shape: f32[32,288], index: 11, kind: input, shape index: {}]
  %s12 = inlined_call_operand.vmem [shape: f32[32,1], index: 12, kind: input, shape index: {}]
  %s13 = inlined_call_operand.hbm [shape: f32[991,256], index: 13, kind: input, shape index: {}]
  %s14 = inlined_call_operand.vmem [shape: f32[239,64], index: 14, kind: input, shape index: {}]
  %s15 = inlined_call_operand.vmem [shape: f32[55,16], index: 15, kind: input, shape index: {}]
  %s16 = inlined_call_operand.vmem [shape: f32[512,32], index: 16, kind: input, shape index: {}]
  %s17 = inlined_call_operand.vmem [shape: f32[1,32], index: 17, kind: input, shape index: {}]
  %s18 = inlined_call_operand.vmem [shape: f32[32,128], index: 18, kind: input, shape index: {}]
  %s19 = inlined_call_operand.vmem [shape: f32[1,128], index: 19, kind: input, shape index: {}]
  %s20 = inlined_call_operand.hbm [shape: f32[2,1,128], index: 20, kind: output, shape index: {}]
  %s21 = sld [smem:[#allocation0]]
  $region117: #{traffic_sign_forward.1} parent=0
    _
  %s23 = ssub.s32 1, %s21
  %s24 = scalar_select 0, %s23, %s21
  $region1: #{traffic_sign_forward.1} parent=0
    #allocation13 [shape = 'u8[1015808]{0}', space=vmem, size = 0xf8000, scoped, tag = 'input window, operand 13, single buffered']
    #allocation14 [shape = 's32[2]{0}', space=sflag, size = 0x8, scoped, tag = 'scoped memory for traffic_sign_forward.1']
    #allocation15 [shape = 's32[2]{0}', space=sflag, size = 0x8, scoped, tag = 'scoped memory for traffic_sign_forward.1']
    #allocation16 [shape = 'u8[1024]{0}', space=vmem, size = 0x400, scoped, tag = 'output window, operand 0']
    %25 = vsyncpa [#allocation14], 0
    %26 = vsyncpa [#allocation15], 0
    %s27 = scalar_lea.sflag [#allocation15], 1
    %28 = vsyncpa %s27, 0
    loop: start=0, step=1, limit=4
    $region2: #{traffic_sign_forward.1} parent=1 // loop_pre_header
      _
    $region3: #{traffic_sign_forward.1} parent=1 // loop_header
      %s30 = sphi 0, %s34
      %p31 = scmp.ge.s32.totalorder %s30, 4
      %s40 = sphi 0, %s42
      %s43 = sphi 0, %s40
      %s44 = sphi 0, %s43
      %s60 = sphi 0, %s44
      %s64 = sphi 0, %s64
      %s66 = sphi 0, %s64
      %s67 = sphi 0, %s66
      %s81 = sphi 0, %s67
      %s85 = sphi 0, %s85
      %s87 = sphi 0, %s85
      %s88 = sphi 0, %s87
      %s102 = sphi 0, %s88
      %s106 = sphi 0, %s106
      %s108 = sphi 0, %s106
      %s109 = sphi 0, %s108
      %s123 = sphi 0, %s109
      %s127 = sphi 0, %s127
      %s129 = sphi 0, %s127
      %s130 = sphi 0, %s129
      %s144 = sphi 0, %s130
      %s148 = sphi 0, %s148
      %s150 = sphi 0, %s148
      %s151 = sphi 0, %s150
      %s165 = sphi 0, %s151
      %s169 = sphi 0, %s169
      %s171 = sphi 0, %s169
      %s172 = sphi 0, %s171
      %s186 = sphi 0, %s172
      %s190 = sphi 0, %s190
      %s192 = sphi 0, %s190
      %s193 = sphi 0, %s192
      %s207 = sphi 0, %s193
      %s211 = sphi 0, %s211
      %s213 = sphi 0, %s211
      %s214 = sphi 0, %s213
      %s228 = sphi 0, %s214
      %s232 = sphi 0, %s232
      %s234 = sphi 0, %s232
      %s235 = sphi 0, %s234
      %s249 = sphi 0, %s235
      %s253 = sphi 0, %s253
      %s255 = sphi 0, %s253
      %s256 = sphi 0, %s255
      %s270 = sphi 0, %s256
      %s274 = sphi 0, %s274
      %s276 = sphi 0, %s274
      %s277 = sphi 0, %s276
      %s291 = sphi 0, %s277
      %s295 = sphi 0, %s295
      %s297 = sphi 0, %s295
      %s298 = sphi 0, %s297
      %s312 = sphi 0, %s298
      %s316 = sphi 0, %s316
      %s318 = sphi 0, %s316
      %s319 = sphi 0, %s318
      %s333 = sphi 0, %s319
      %s337 = sphi 0, %s337
      %s339 = sphi 0, %s337
      %s340 = sphi 0, %s339
      %s354 = sphi 0, %s340
      %s358 = sphi 0, %s358
      %s360 = sphi 0, %s358
      %s361 = sphi 0, %s360
      %s375 = sphi 0, %s361
      %s379 = sphi 0, %s379
      %s381 = sphi 0, %s379
      %s382 = sphi 0, %s381
      %s396 = sphi 0, %s382
      %s400 = sphi 0, %s400
      %s402 = sphi 0, %s400
      %s403 = sphi 0, %s402
      %s417 = sphi 0, %s403
      %s421 = sphi 0, %s421
      %s423 = sphi 0, %s421
      %s424 = sphi 0, %s423
      %s438 = sphi 0, %s424
      %s442 = sphi 0, %s442
      %s444 = sphi 0, %s442
      %s445 = sphi 0, %s444
      %s459 = sphi 0, %s445
      %s465 = sphi 0, %s467
      %s468 = sphi 0, %s465
      %s469 = sphi 0, %s468
      %s485 = sphi 0, %s469
    $region4: #{traffic_sign_forward.1} parent=1 // loop_header_branch
      %33 = sbr.rel (%p31) target = $region8
    $region5: #{traffic_sign_forward.1} parent=1 // loop_body
      %s35 = ssub.s32 %s30, 1
      %s36 = ssub.s32 %s30, 2
      %s37 = sadd.s32 %s30, 1
      %s38 = ssub.s32 %s30, %s37
      %p39 = scmp.eq.s32.totalorder %s38, 0
      %s41 = sadd.s32 %s40, 1
      %s42 = scalar_select %p39, %s40, %s41
      %p45 = pneg %p39
      %p46 = scmp.eq.s32.totalorder %s30, 1
      %p47 = por %p45, %p46
      %p48 = scmp.ne.s32.totalorder %s40, %s43
      %p49 = scmp.eq.s32.totalorder %s30, 0
      %p50 = por %p48, %p49
      %p51 = scmp.ne.s32.totalorder %s40, %s43
      %p52 = scmp.eq.s32.totalorder %s35, 1
      %p53 = por %p51, %p52
      %p54 = scmp.ne.s32.totalorder %s43, %s44
      %p55 = scmp.eq.s32.totalorder %s35, 0
      %p56 = por %p54, %p55
      %p57 = scmp.ne.s32.totalorder %s43, %s44
      %p58 = scmp.eq.s32.totalorder %s36, 1
      %p59 = por %p57, %p58
      %p61 = scmp.ne.s32.totalorder %s44, %s60
      %p62 = scmp.eq.s32.totalorder %s36, 0
      %p63 = por %p61, %p62
      %s65 = sadd.s32 %s64, 1
      %p68 = scmp.eq.s32.totalorder %s30, 1
      %p69 = scmp.ne.s32.totalorder %s64, %s66
      %p70 = scmp.eq.s32.totalorder %s30, 0
      %p71 = por %p69, %p70
      %p72 = scmp.ne.s32.totalorder %s64, %s66
      %p73 = scmp.eq.s32.totalorder %s35, 1
      %p74 = por %p72, %p73
      %p75 = scmp.ne.s32.totalorder %s66, %s67
      %p76 = scmp.eq.s32.totalorder %s35, 0
      %p77 = por %p75, %p76
      %p78 = scmp.ne.s32.totalorder %s66, %s67
      %p79 = scmp.eq.s32.totalorder %s36, 1
      %p80 = por %p78, %p79
      %p82 = scmp.ne.s32.totalorder %s67, %s81
      %p83 = scmp.eq.s32.totalorder %s36, 0
      %p84 = por %p82, %p83
      %s86 = sadd.s32 %s85, 1
      %p89 = scmp.eq.s32.totalorder %s30, 1
      %p90 = scmp.ne.s32.totalorder %s85, %s87
      %p91 = scmp.eq.s32.totalorder %s30, 0
      %p92 = por %p90, %p91
      %p93 = scmp.ne.s32.totalorder %s85, %s87
      %p94 = scmp.eq.s32.totalorder %s35, 1
      %p95 = por %p93, %p94
      %p96 = scmp.ne.s32.totalorder %s87, %s88
      %p97 = scmp.eq.s32.totalorder %s35, 0
      %p98 = por %p96, %p97
      %p99 = scmp.ne.s32.totalorder %s87, %s88
      %p100 = scmp.eq.s32.totalorder %s36, 1
      %p101 = por %p99, %p100
      %p103 = scmp.ne.s32.totalorder %s88, %s102
      %p104 = scmp.eq.s32.totalorder %s36, 0
      %p105 = por %p103, %p104
      %s107 = sadd.s32 %s106, 1
      %p110 = scmp.eq.s32.totalorder %s30, 1
      %p111 = scmp.ne.s32.totalorder %s106, %s108
      %p112 = scmp.eq.s32.totalorder %s30, 0
      %p113 = por %p111, %p112
      %p114 = scmp.ne.s32.totalorder %s106, %s108
      %p115 = scmp.eq.s32.totalorder %s35, 1
      %p116 = por %p114, %p115
      %p117 = scmp.ne.s32.totalorder %s108, %s109
      %p118 = scmp.eq.s32.totalorder %s35, 0
      %p119 = por %p117, %p118
      %p120 = scmp.ne.s32.totalorder %s108, %s109
      %p121 = scmp.eq.s32.totalorder %s36, 1
      %p122 = por %p120, %p121
      %p124 = scmp.ne.s32.totalorder %s109, %s123
      %p125 = scmp.eq.s32.totalorder %s36, 0
      %p126 = por %p124, %p125
      %s128 = sadd.s32 %s127, 1
      %p131 = scmp.eq.s32.totalorder %s30, 1
      %p132 = scmp.ne.s32.totalorder %s127, %s129
      %p133 = scmp.eq.s32.totalorder %s30, 0
      %p134 = por %p132, %p133
      %p135 = scmp.ne.s32.totalorder %s127, %s129
      %p136 = scmp.eq.s32.totalorder %s35, 1
      %p137 = por %p135, %p136
      %p138 = scmp.ne.s32.totalorder %s129, %s130
      %p139 = scmp.eq.s32.totalorder %s35, 0
      %p140 = por %p138, %p139
      %p141 = scmp.ne.s32.totalorder %s129, %s130
      %p142 = scmp.eq.s32.totalorder %s36, 1
      %p143 = por %p141, %p142
      %p145 = scmp.ne.s32.totalorder %s130, %s144
      %p146 = scmp.eq.s32.totalorder %s36, 0
      %p147 = por %p145, %p146
      %s149 = sadd.s32 %s148, 1
      %p152 = scmp.eq.s32.totalorder %s30, 1
      %p153 = scmp.ne.s32.totalorder %s148, %s150
      %p154 = scmp.eq.s32.totalorder %s30, 0
      %p155 = por %p153, %p154
      %p156 = scmp.ne.s32.totalorder %s148, %s150
      %p157 = scmp.eq.s32.totalorder %s35, 1
      %p158 = por %p156, %p157
      %p159 = scmp.ne.s32.totalorder %s150, %s151
      %p160 = scmp.eq.s32.totalorder %s35, 0
      %p161 = por %p159, %p160
      %p162 = scmp.ne.s32.totalorder %s150, %s151
      %p163 = scmp.eq.s32.totalorder %s36, 1
      %p164 = por %p162, %p163
      %p166 = scmp.ne.s32.totalorder %s151, %s165
      %p167 = scmp.eq.s32.totalorder %s36, 0
      %p168 = por %p166, %p167
      %s170 = sadd.s32 %s169, 1
      %p173 = scmp.eq.s32.totalorder %s30, 1
      %p174 = scmp.ne.s32.totalorder %s169, %s171
      %p175 = scmp.eq.s32.totalorder %s30, 0
      %p176 = por %p174, %p175
      %p177 = scmp.ne.s32.totalorder %s169, %s171
      %p178 = scmp.eq.s32.totalorder %s35, 1
      %p179 = por %p177, %p178
      %p180 = scmp.ne.s32.totalorder %s171, %s172
      %p181 = scmp.eq.s32.totalorder %s35, 0
      %p182 = por %p180, %p181
      %p183 = scmp.ne.s32.totalorder %s171, %s172
      %p184 = scmp.eq.s32.totalorder %s36, 1
      %p185 = por %p183, %p184
      %p187 = scmp.ne.s32.totalorder %s172, %s186
      %p188 = scmp.eq.s32.totalorder %s36, 0
      %p189 = por %p187, %p188
      %s191 = sadd.s32 %s190, 1
      %p194 = scmp.eq.s32.totalorder %s30, 1
      %p195 = scmp.ne.s32.totalorder %s190, %s192
      %p196 = scmp.eq.s32.totalorder %s30, 0
      %p197 = por %p195, %p196
      %p198 = scmp.ne.s32.totalorder %s190, %s192
      %p199 = scmp.eq.s32.totalorder %s35, 1
      %p200 = por %p198, %p199
      %p201 = scmp.ne.s32.totalorder %s192, %s193
      %p202 = scmp.eq.s32.totalorder %s35, 0
      %p203 = por %p201, %p202
      %p204 = scmp.ne.s32.totalorder %s192, %s193
      %p205 = scmp.eq.s32.totalorder %s36, 1
      %p206 = por %p204, %p205
      %p208 = scmp.ne.s32.totalorder %s193, %s207
      %p209 = scmp.eq.s32.totalorder %s36, 0
      %p210 = por %p208, %p209
      %s212 = sadd.s32 %s211, 1
      %p215 = scmp.eq.s32.totalorder %s30, 1
      %p216 = scmp.ne.s32.totalorder %s211, %s213
      %p217 = scmp.eq.s32.totalorder %s30, 0
      %p218 = por %p216, %p217
      %p219 = scmp.ne.s32.totalorder %s211, %s213
      %p220 = scmp.eq.s32.totalorder %s35, 1
      %p221 = por %p219, %p220
      %p222 = scmp.ne.s32.totalorder %s213, %s214
      %p223 = scmp.eq.s32.totalorder %s35, 0
      %p224 = por %p222, %p223
      %p225 = scmp.ne.s32.totalorder %s213, %s214
      %p226 = scmp.eq.s32.totalorder %s36, 1
      %p227 = por %p225, %p226
      %p229 = scmp.ne.s32.totalorder %s214, %s228
      %p230 = scmp.eq.s32.totalorder %s36, 0
      %p231 = por %p229, %p230
      %s233 = sadd.s32 %s232, 1
      %p236 = scmp.eq.s32.totalorder %s30, 1
      %p237 = scmp.ne.s32.totalorder %s232, %s234
      %p238 = scmp.eq.s32.totalorder %s30, 0
      %p239 = por %p237, %p238
      %p240 = scmp.ne.s32.totalorder %s232, %s234
      %p241 = scmp.eq.s32.totalorder %s35, 1
      %p242 = por %p240, %p241
      %p243 = scmp.ne.s32.totalorder %s234, %s235
      %p244 = scmp.eq.s32.totalorder %s35, 0
      %p245 = por %p243, %p244
      %p246 = scmp.ne.s32.totalorder %s234, %s235
      %p247 = scmp.eq.s32.totalorder %s36, 1
      %p248 = por %p246, %p247
      %p250 = scmp.ne.s32.totalorder %s235, %s249
      %p251 = scmp.eq.s32.totalorder %s36, 0
      %p252 = por %p250, %p251
      %s254 = sadd.s32 %s253, 1
      %p257 = scmp.eq.s32.totalorder %s30, 1
      %p258 = scmp.ne.s32.totalorder %s253, %s255
      %p259 = scmp.eq.s32.totalorder %s30, 0
      %p260 = por %p258, %p259
      %p261 = scmp.ne.s32.totalorder %s253, %s255
      %p262 = scmp.eq.s32.totalorder %s35, 1
      %p263 = por %p261, %p262
      %p264 = scmp.ne.s32.totalorder %s255, %s256
      %p265 = scmp.eq.s32.totalorder %s35, 0
      %p266 = por %p264, %p265
      %p267 = scmp.ne.s32.totalorder %s255, %s256
      %p268 = scmp.eq.s32.totalorder %s36, 1
      %p269 = por %p267, %p268
      %p271 = scmp.ne.s32.totalorder %s256, %s270
      %p272 = scmp.eq.s32.totalorder %s36, 0
      %p273 = por %p271, %p272
      %s275 = sadd.s32 %s274, 1
      %p278 = scmp.eq.s32.totalorder %s30, 1
      %p279 = scmp.ne.s32.totalorder %s274, %s276
      %p280 = scmp.eq.s32.totalorder %s30, 0
      %p281 = por %p279, %p280
      %p282 = scmp.ne.s32.totalorder %s274, %s276
      %p283 = scmp.eq.s32.totalorder %s35, 1
      %p284 = por %p282, %p283
      %p285 = scmp.ne.s32.totalorder %s276, %s277
      %p286 = scmp.eq.s32.totalorder %s35, 0
      %p287 = por %p285, %p286
      %p288 = scmp.ne.s32.totalorder %s276, %s277
      %p289 = scmp.eq.s32.totalorder %s36, 1
      %p290 = por %p288, %p289
      %p292 = scmp.ne.s32.totalorder %s277, %s291
      %p293 = scmp.eq.s32.totalorder %s36, 0
      %p294 = por %p292, %p293
      %s296 = sadd.s32 %s295, 1
      %p299 = scmp.eq.s32.totalorder %s30, 1
      %p300 = scmp.ne.s32.totalorder %s295, %s297
      %p301 = scmp.eq.s32.totalorder %s30, 0
      %p302 = por %p300, %p301
      %p303 = scmp.ne.s32.totalorder %s295, %s297
      %p304 = scmp.eq.s32.totalorder %s35, 1
      %p305 = por %p303, %p304
      %p306 = scmp.ne.s32.totalorder %s297, %s298
      %p307 = scmp.eq.s32.totalorder %s35, 0
      %p308 = por %p306, %p307
      %p309 = scmp.ne.s32.totalorder %s297, %s298
      %p310 = scmp.eq.s32.totalorder %s36, 1
      %p311 = por %p309, %p310
      %p313 = scmp.ne.s32.totalorder %s298, %s312
      %p314 = scmp.eq.s32.totalorder %s36, 0
      %p315 = por %p313, %p314
      %s317 = sadd.s32 %s316, 1
      %p320 = scmp.eq.s32.totalorder %s30, 1
      %p321 = scmp.ne.s32.totalorder %s316, %s318
      %p322 = scmp.eq.s32.totalorder %s30, 0
      %p323 = por %p321, %p322
      %p324 = scmp.ne.s32.totalorder %s316, %s318
      %p325 = scmp.eq.s32.totalorder %s35, 1
      %p326 = por %p324, %p325
      %p327 = scmp.ne.s32.totalorder %s318, %s319
      %p328 = scmp.eq.s32.totalorder %s35, 0
      %p329 = por %p327, %p328
      %p330 = scmp.ne.s32.totalorder %s318, %s319
      %p331 = scmp.eq.s32.totalorder %s36, 1
      %p332 = por %p330, %p331
      %p334 = scmp.ne.s32.totalorder %s319, %s333
      %p335 = scmp.eq.s32.totalorder %s36, 0
      %p336 = por %p334, %p335
      %s338 = sadd.s32 %s337, 1
      %p341 = scmp.eq.s32.totalorder %s30, 1
      %p342 = scmp.ne.s32.totalorder %s337, %s339
      %p343 = scmp.eq.s32.totalorder %s30, 0
      %p344 = por %p342, %p343
      %p345 = scmp.ne.s32.totalorder %s337, %s339
      %p346 = scmp.eq.s32.totalorder %s35, 1
      %p347 = por %p345, %p346
      %p348 = scmp.ne.s32.totalorder %s339, %s340
      %p349 = scmp.eq.s32.totalorder %s35, 0
      %p350 = por %p348, %p349
      %p351 = scmp.ne.s32.totalorder %s339, %s340
      %p352 = scmp.eq.s32.totalorder %s36, 1
      %p353 = por %p351, %p352
      %p355 = scmp.ne.s32.totalorder %s340, %s354
      %p356 = scmp.eq.s32.totalorder %s36, 0
      %p357 = por %p355, %p356
      %s359 = sadd.s32 %s358, 1
      %p362 = scmp.eq.s32.totalorder %s30, 1
      %p363 = scmp.ne.s32.totalorder %s358, %s360
      %p364 = scmp.eq.s32.totalorder %s30, 0
      %p365 = por %p363, %p364
      %p366 = scmp.ne.s32.totalorder %s358, %s360
      %p367 = scmp.eq.s32.totalorder %s35, 1
      %p368 = por %p366, %p367
      %p369 = scmp.ne.s32.totalorder %s360, %s361
      %p370 = scmp.eq.s32.totalorder %s35, 0
      %p371 = por %p369, %p370
      %p372 = scmp.ne.s32.totalorder %s360, %s361
      %p373 = scmp.eq.s32.totalorder %s36, 1
      %p374 = por %p372, %p373
      %p376 = scmp.ne.s32.totalorder %s361, %s375
      %p377 = scmp.eq.s32.totalorder %s36, 0
      %p378 = por %p376, %p377
      %s380 = sadd.s32 %s379, 1
      %p383 = scmp.eq.s32.totalorder %s30, 1
      %p384 = scmp.ne.s32.totalorder %s379, %s381
      %p385 = scmp.eq.s32.totalorder %s30, 0
      %p386 = por %p384, %p385
      %p387 = scmp.ne.s32.totalorder %s379, %s381
      %p388 = scmp.eq.s32.totalorder %s35, 1
      %p389 = por %p387, %p388
      %p390 = scmp.ne.s32.totalorder %s381, %s382
      %p391 = scmp.eq.s32.totalorder %s35, 0
      %p392 = por %p390, %p391
      %p393 = scmp.ne.s32.totalorder %s381, %s382
      %p394 = scmp.eq.s32.totalorder %s36, 1
      %p395 = por %p393, %p394
      %p397 = scmp.ne.s32.totalorder %s382, %s396
      %p398 = scmp.eq.s32.totalorder %s36, 0
      %p399 = por %p397, %p398
      %s401 = sadd.s32 %s400, 1
      %p404 = scmp.eq.s32.totalorder %s30, 1
      %p405 = scmp.ne.s32.totalorder %s400, %s402
      %p406 = scmp.eq.s32.totalorder %s30, 0
      %p407 = por %p405, %p406
      %p408 = scmp.ne.s32.totalorder %s400, %s402
      %p409 = scmp.eq.s32.totalorder %s35, 1
      %p410 = por %p408, %p409
      %p411 = scmp.ne.s32.totalorder %s402, %s403
      %p412 = scmp.eq.s32.totalorder %s35, 0
      %p413 = por %p411, %p412
      %p414 = scmp.ne.s32.totalorder %s402, %s403
      %p415 = scmp.eq.s32.totalorder %s36, 1
      %p416 = por %p414, %p415
      %p418 = scmp.ne.s32.totalorder %s403, %s417
      %p419 = scmp.eq.s32.totalorder %s36, 0
      %p420 = por %p418, %p419
      %s422 = sadd.s32 %s421, 1
      %p425 = scmp.eq.s32.totalorder %s30, 1
      %p426 = scmp.ne.s32.totalorder %s421, %s423
      %p427 = scmp.eq.s32.totalorder %s30, 0
      %p428 = por %p426, %p427
      %p429 = scmp.ne.s32.totalorder %s421, %s423
      %p430 = scmp.eq.s32.totalorder %s35, 1
      %p431 = por %p429, %p430
      %p432 = scmp.ne.s32.totalorder %s423, %s424
      %p433 = scmp.eq.s32.totalorder %s35, 0
      %p434 = por %p432, %p433
      %p435 = scmp.ne.s32.totalorder %s423, %s424
      %p436 = scmp.eq.s32.totalorder %s36, 1
      %p437 = por %p435, %p436
      %p439 = scmp.ne.s32.totalorder %s424, %s438
      %p440 = scmp.eq.s32.totalorder %s36, 0
      %p441 = por %p439, %p440
      %s443 = sadd.s32 %s442, 1
      %p446 = scmp.eq.s32.totalorder %s30, 1
      %p447 = scmp.ne.s32.totalorder %s442, %s444
      %p448 = scmp.eq.s32.totalorder %s30, 0
      %p449 = por %p447, %p448
      %p450 = scmp.ne.s32.totalorder %s442, %s444
      %p451 = scmp.eq.s32.totalorder %s35, 1
      %p452 = por %p450, %p451
      %p453 = scmp.ne.s32.totalorder %s444, %s445
      %p454 = scmp.eq.s32.totalorder %s35, 0
      %p455 = por %p453, %p454
      %p456 = scmp.ne.s32.totalorder %s444, %s445
      %p457 = scmp.eq.s32.totalorder %s36, 1
      %p458 = por %p456, %p457
      %p460 = scmp.ne.s32.totalorder %s445, %s459
      %p461 = scmp.eq.s32.totalorder %s36, 0
      %p462 = por %p460, %p461
      %s463 = ssub.s32 %s30, %s37
      %p464 = scmp.eq.s32.totalorder %s463, 0
      %s466 = sadd.s32 %s465, 1
      %s467 = scalar_select %p464, %s465, %s466
      %p470 = pneg %p464
      %p471 = scmp.eq.s32.totalorder %s30, 1
      %p472 = por %p470, %p471
      %p473 = scmp.ne.s32.totalorder %s465, %s468
      %p474 = scmp.eq.s32.totalorder %s30, 0
      %p475 = por %p473, %p474
      %p476 = scmp.ne.s32.totalorder %s465, %s468
      %p477 = scmp.eq.s32.totalorder %s35, 1
      %p478 = por %p476, %p477
      %p479 = scmp.ne.s32.totalorder %s468, %s469
      %p480 = scmp.eq.s32.totalorder %s35, 0
      %p481 = por %p479, %p480
      %p482 = scmp.ne.s32.totalorder %s468, %s469
      %p483 = scmp.eq.s32.totalorder %s36, 1
      %p484 = por %p482, %p483
      %p486 = scmp.ne.s32.totalorder %s469, %s485
      %p487 = scmp.eq.s32.totalorder %s36, 0
      %p488 = por %p486, %p487
      %p489 = scmp.le.s32.totalorder 1, %s30
      %p490 = scmp.lt.s32.totalorder %s30, 3
      %p491 = pnand %p489, %p490
      %p492 = pneg %p491
      // Predicated region
      $region9: #{traffic_sign_forward.1} parent=5 // pred_check
        _
      $region10: #{traffic_sign_forward.1} parent=5 // pred_check_branch
        %494 = sbr.rel (%p491) target = $region12
      $region11: #{traffic_sign_forward.1} parent=5 // pred_region
        %s495 = ssub.s32 %s30, 1
        // Predicated region
        $region13: #{traffic_sign_forward.1} parent=11 // pred_check
          %p496 = pneg %p77
        $region14: #{traffic_sign_forward.1} parent=11 // pred_check_branch
          %498 = sbr.rel (%p496) target = $region16
        $region15: #{traffic_sign_forward.1} parent=11 // pred_region
          _
        $region16: #{traffic_sign_forward.1} parent=11 // pred_fallthru
          _
        // Predicated region
        $region17: #{traffic_sign_forward.1} parent=11 // pred_check
          %p499 = pneg %p98
        $region18: #{traffic_sign_forward.1} parent=11 // pred_check_branch
          %501 = sbr.rel (%p499) target = $region20
        $region19: #{traffic_sign_forward.1} parent=11 // pred_region
          _
        $region20: #{traffic_sign_forward.1} parent=11 // pred_fallthru
          _
        // Predicated region
        $region21: #{traffic_sign_forward.1} parent=11 // pred_check
          %p502 = pneg %p119
        $region22: #{traffic_sign_forward.1} parent=11 // pred_check_branch
          %504 = sbr.rel (%p502) target = $region24
        $region23: #{traffic_sign_forward.1} parent=11 // pred_region
          _
        $region24: #{traffic_sign_forward.1} parent=11 // pred_fallthru
          _
        // Predicated region
        $region25: #{traffic_sign_forward.1} parent=11 // pred_check
          %p505 = pneg %p140
        $region26: #{traffic_sign_forward.1} parent=11 // pred_check_branch
          %507 = sbr.rel (%p505) target = $region28
        $region27: #{traffic_sign_forward.1} parent=11 // pred_region
          _
        $region28: #{traffic_sign_forward.1} parent=11 // pred_fallthru
          _
        // Predicated region
        $region29: #{traffic_sign_forward.1} parent=11 // pred_check
          %p508 = pneg %p161
        $region30: #{traffic_sign_forward.1} parent=11 // pred_check_branch
          %510 = sbr.rel (%p508) target = $region32
        $region31: #{traffic_sign_forward.1} parent=11 // pred_region
          _
        $region32: #{traffic_sign_forward.1} parent=11 // pred_fallthru
          _
        // Predicated region
        $region33: #{traffic_sign_forward.1} parent=11 // pred_check
          %p511 = pneg %p182
        $region34: #{traffic_sign_forward.1} parent=11 // pred_check_branch
          %513 = sbr.rel (%p511) target = $region36
        $region35: #{traffic_sign_forward.1} parent=11 // pred_region
          _
        $region36: #{traffic_sign_forward.1} parent=11 // pred_fallthru
          _
        // Predicated region
        $region37: #{traffic_sign_forward.1} parent=11 // pred_check
          %p514 = pneg %p203
        $region38: #{traffic_sign_forward.1} parent=11 // pred_check_branch
          %516 = sbr.rel (%p514) target = $region40
        $region39: #{traffic_sign_forward.1} parent=11 // pred_region
          _
        $region40: #{traffic_sign_forward.1} parent=11 // pred_fallthru
          _
        // Predicated region
        $region41: #{traffic_sign_forward.1} parent=11 // pred_check
          %p517 = pneg %p224
        $region42: #{traffic_sign_forward.1} parent=11 // pred_check_branch
          %519 = sbr.rel (%p517) target = $region44
        $region43: #{traffic_sign_forward.1} parent=11 // pred_region
          _
        $region44: #{traffic_sign_forward.1} parent=11 // pred_fallthru
          _
        // Predicated region
        $region45: #{traffic_sign_forward.1} parent=11 // pred_check
          %p520 = pneg %p245
        $region46: #{traffic_sign_forward.1} parent=11 // pred_check_branch
          %522 = sbr.rel (%p520) target = $region48
        $region47: #{traffic_sign_forward.1} parent=11 // pred_region
          _
        $region48: #{traffic_sign_forward.1} parent=11 // pred_fallthru
          _
        // Predicated region
        $region49: #{traffic_sign_forward.1} parent=11 // pred_check
          %p523 = pneg %p266
        $region50: #{traffic_sign_forward.1} parent=11 // pred_check_branch
          %525 = sbr.rel (%p523) target = $region52
        $region51: #{traffic_sign_forward.1} parent=11 // pred_region
          _
        $region52: #{traffic_sign_forward.1} parent=11 // pred_fallthru
          _
        // Predicated region
        $region53: #{traffic_sign_forward.1} parent=11 // pred_check
          %p526 = pneg %p287
        $region54: #{traffic_sign_forward.1} parent=11 // pred_check_branch
          %528 = sbr.rel (%p526) target = $region56
        $region55: #{traffic_sign_forward.1} parent=11 // pred_region
          _
        $region56: #{traffic_sign_forward.1} parent=11 // pred_fallthru
          _
        // Predicated region
        $region57: #{traffic_sign_forward.1} parent=11 // pred_check
          %p529 = pneg %p308
        $region58: #{traffic_sign_forward.1} parent=11 // pred_check_branch
          %531 = sbr.rel (%p529) target = $region60
        $region59: #{traffic_sign_forward.1} parent=11 // pred_region
          _
        $region60: #{traffic_sign_forward.1} parent=11 // pred_fallthru
          _
        // Predicated region
        $region61: #{traffic_sign_forward.1} parent=11 // pred_check
          %p532 = pneg %p329
        $region62: #{traffic_sign_forward.1} parent=11 // pred_check_branch
          %534 = sbr.rel (%p532) target = $region64
        $region63: #{traffic_sign_forward.1} parent=11 // pred_region
          %536 = vsyncadd [#allocation14], 0
          %s537 = sshll.u32 %s13, 4
          %s538 = int_to_ptr.hbm [resolvable:$true] %s537
          %s539 = sshll.u32 [#allocation13], 4
          %s540 = int_to_ptr.vmem [resolvable:$true] %s539
          %545 = dma.hbm_to_vmem [thread:$0]  %s538, 31744, %s540, [#allocation14], 256, 256, 16
        $region64: #{traffic_sign_forward.1} parent=11 // pred_fallthru
          _
        // Predicated region
        $region65: #{traffic_sign_forward.1} parent=11 // pred_check
          %p546 = pneg %p350
        $region66: #{traffic_sign_forward.1} parent=11 // pred_check_branch
          %548 = sbr.rel (%p546) target = $region68
        $region67: #{traffic_sign_forward.1} parent=11 // pred_region
          _
        $region68: #{traffic_sign_forward.1} parent=11 // pred_fallthru
          _
        // Predicated region
        $region69: #{traffic_sign_forward.1} parent=11 // pred_check
          %p549 = pneg %p371
        $region70: #{traffic_sign_forward.1} parent=11 // pred_check_branch
          %551 = sbr.rel (%p549) target = $region72
        $region71: #{traffic_sign_forward.1} parent=11 // pred_region
          _
        $region72: #{traffic_sign_forward.1} parent=11 // pred_fallthru
          _
        // Predicated region
        $region73: #{traffic_sign_forward.1} parent=11 // pred_check
          %p552 = pneg %p392
        $region74: #{traffic_sign_forward.1} parent=11 // pred_check_branch
          %554 = sbr.rel (%p552) target = $region76
        $region75: #{traffic_sign_forward.1} parent=11 // pred_region
          _
        $region76: #{traffic_sign_forward.1} parent=11 // pred_fallthru
          _
        // Predicated region
        $region77: #{traffic_sign_forward.1} parent=11 // pred_check
          %p555 = pneg %p413
        $region78: #{traffic_sign_forward.1} parent=11 // pred_check_branch
          %557 = sbr.rel (%p555) target = $region80
        $region79: #{traffic_sign_forward.1} parent=11 // pred_region
          _
        $region80: #{traffic_sign_forward.1} parent=11 // pred_fallthru
          _
        // Predicated region
        $region81: #{traffic_sign_forward.1} parent=11 // pred_check
          %p558 = pneg %p434
        $region82: #{traffic_sign_forward.1} parent=11 // pred_check_branch
          %560 = sbr.rel (%p558) target = $region84
        $region83: #{traffic_sign_forward.1} parent=11 // pred_region
          _
        $region84: #{traffic_sign_forward.1} parent=11 // pred_fallthru
          _
        // Predicated region
        $region85: #{traffic_sign_forward.1} parent=11 // pred_check
          %p561 = pneg %p455
        $region86: #{traffic_sign_forward.1} parent=11 // pred_check_branch
          %563 = sbr.rel (%p561) target = $region88
        $region87: #{traffic_sign_forward.1} parent=11 // pred_region
          _
        $region88: #{traffic_sign_forward.1} parent=11 // pred_fallthru
          _
      $region12: #{traffic_sign_forward.1} parent=5 // pred_fallthru
        _
      %p564 = scmp.lt.s32.totalorder %s30, 2
      // Predicated region
      $region89: #{traffic_sign_forward.1} parent=5 // pred_check
        %p565 = pneg %p564
      $region90: #{traffic_sign_forward.1} parent=5 // pred_check_branch
        %567 = sbr.rel (%p565) target = $region92
      $region91: #{traffic_sign_forward.1} parent=5 // pred_region
        // Predicated region
        $region93: #{traffic_sign_forward.1} parent=91 // pred_check
          %p568 = pneg %p50
        $region94: #{traffic_sign_forward.1} parent=91 // pred_check_branch
          %570 = sbr.rel (%p568) target = $region96
        $region95: #{traffic_sign_forward.1} parent=91 // pred_region
          %p571 = scmp.lt.s32.totalorder %s30, 1
          %s572 = scalar_select %p571, %s30, 1
          %s573 = smul.addr %s572, 8
          %s574 = smul.addr %s573, 4
          %s575 = scalar_lea.vmem %s0, %s574
        $region96: #{traffic_sign_forward.1} parent=91 // pred_fallthru
          _
      $region92: #{traffic_sign_forward.1} parent=5 // pred_fallthru
        _
      %p576 = scmp.le.s32.totalorder 1, %s30
      %p577 = scmp.lt.s32.totalorder %s30, 3
      %p578 = pnand %p576, %p577
      %p579 = pneg %p578
      // Predicated region
      $region97: #{traffic_sign_forward.1} parent=5 // pred_check
        _
      $region98: #{traffic_sign_forward.1} parent=5 // pred_check_branch
        %581 = sbr.rel (%p578) target = $region100
      $region99: #{traffic_sign_forward.1} parent=5 // pred_region
        %s582 = ssub.s32 %s30, 1
        // Predicated region
        $region101: #{traffic_sign_forward.1} parent=99 // pred_check
          %p583 = pneg %p329
        $region102: #{traffic_sign_forward.1} parent=99 // pred_check_branch
          %585 = sbr.rel (%p583) target = $region104
        $region103: #{traffic_sign_forward.1} parent=99 // pred_region
          %587 = dma.done [#allocation14], 31744
        $region104: #{traffic_sign_forward.1} parent=99 // pred_fallthru
          _
        %p588 = scmp.lt.s32.totalorder %s35, 1
        %s589 = scalar_select %p588, %s35, 1
        %s590 = smul.addr %s589, 8
        %s591 = smul.addr %s590, 4
        %s592 = scalar_lea.vmem %s0, %s591
        %p593 = pneg %p56
        %p594 = pneg %p53
        %p595 = pneg %p77
        %p596 = pneg %p74
        %p597 = pneg %p98
        %p598 = pneg %p95
        %p599 = pneg %p119
        %p600 = pneg %p116
        %p601 = pneg %p140
        %p602 = pneg %p137
        %p603 = pneg %p161
        %p604 = pneg %p158
        %p605 = pneg %p182
        %p606 = pneg %p179
        %p607 = pneg %p203
        %p608 = pneg %p200
        %p609 = pneg %p224
        %p610 = pneg %p221
        %p611 = pneg %p245
        %p612 = pneg %p242
        %p613 = pneg %p266
        %p614 = pneg %p263
        %p615 = pneg %p287
        %p616 = pneg %p284
        %p617 = pneg %p308
        %p618 = pneg %p305
        %p619 = pneg %p329
        %p620 = pneg %p326
        %p621 = pneg %p350
        %p622 = pneg %p347
        %p623 = pneg %p371
        %p624 = pneg %p368
        %p625 = pneg %p392
        %p626 = pneg %p389
        %p627 = pneg %p413
        %p628 = pneg %p410
        %p629 = pneg %p434
        %p630 = pneg %p431
        %p631 = pneg %p455
        %p632 = pneg %p452
        %p633 = pneg %p481
        %p634 = pneg %p478
        %s635 = sand.u32 %s468, 1
        %s636 = scalar_lea.sflag [#allocation15], %s635
        %s637 = sand.u32 %s468, 1
        %s638 = scalar_lea.vmem [#allocation16], %s637
        %p639 = scmp.lt.s32.totalorder %s35, 1
        %s640 = scalar_select %p639, %s35, 1
        %s641 = smul.addr %s640, 8
        %s642 = smul.addr %s641, 4
        %s643 = scalar_lea.vmem %s0, %s642
        %v644 = vld [vmem:[%s643] sm:$0x77]
        %v645 = vld [vmem:[%s643 + $0x8] sm:$0x77]
        %v646 = vld [vmem:[%s643 + $0x10] sm:$0x77]
        %v647 = vld [vmem:[%s643 + $0x18] sm:$0x77]
        %v648 = vlaneseq
        %v649 = vand.u32 %v648, 127
        %v650 = vadd.s32 %v649, 128
        %v651 = vadd.s32 %v649, 256
        %v652 = vadd.s32 %v649, 384
        %v653 = vadd.s32 %v649, 512
        %v654 = vadd.s32 %v649, 640
        %v655 = vadd.s32 %v649, 768
        %v656 = vadd.s32 %v649, 896
        %v657 = vadd.s32 %v649, 33
        %v658 = vadd.s32 %v650, 33
        %v659 = vadd.s32 %v651, 33
        %v660 = vadd.s32 %v652, 33
        %v661 = vadd.s32 %v653, 33
        %v662 = vadd.s32 %v654, 33
        %v663 = vadd.s32 %v655, 33
        %v664 = vadd.s32 %v656, 33
        %vm665 = vcmp.lt.s32.totalorder %v657, 0
        %v666 = vsub.s32 0, %v657
        %v667 = vsel %vm665, %v666, %v657
        %v668 = vshrl.u32 %v667, 5
        %v669 = vand.u32 %v667, 31
        %v670 = vsub.s32 0, %v669
        %v671 = vsel %vm665, %v670, %v669
        %vm672 = vcmp.lt.s32.totalorder %v658, 0
        %v673 = vsub.s32 0, %v658
        %v674 = vsel %vm672, %v673, %v658
        %v675 = vshrl.u32 %v674, 5
        %v676 = vand.u32 %v674, 31
        %v677 = vsub.s32 0, %v676
        %v678 = vsel %vm672, %v677, %v676
        %vm679 = vcmp.lt.s32.totalorder %v659, 0
        %v680 = vsub.s32 0, %v659
        %v681 = vsel %vm679, %v680, %v659
        %v682 = vshrl.u32 %v681, 5
        %v683 = vand.u32 %v681, 31
        %v684 = vsub.s32 0, %v683
        %v685 = vsel %vm679, %v684, %v683
        %vm686 = vcmp.lt.s32.totalorder %v660, 0
        %v687 = vsub.s32 0, %v660
        %v688 = vsel %vm686, %v687, %v660
        %v689 = vshrl.u32 %v688, 5
        %v690 = vand.u32 %v688, 31
        %v691 = vsub.s32 0, %v690
        %v692 = vsel %vm686, %v691, %v690
        %vm693 = vcmp.lt.s32.totalorder %v661, 0
        %v694 = vsub.s32 0, %v661
        %v695 = vsel %vm693, %v694, %v661
        %v696 = vshrl.u32 %v695, 5
        %v697 = vand.u32 %v695, 31
        %v698 = vsub.s32 0, %v697
        %v699 = vsel %vm693, %v698, %v697
        %vm700 = vcmp.lt.s32.totalorder %v662, 0
        %v701 = vsub.s32 0, %v662
        %v702 = vsel %vm700, %v701, %v662
        %v703 = vshrl.u32 %v702, 5
        %v704 = vand.u32 %v702, 31
        %v705 = vsub.s32 0, %v704
        %v706 = vsel %vm700, %v705, %v704
        %vm707 = vcmp.lt.s32.totalorder %v663, 0
        %v708 = vsub.s32 0, %v663
        %v709 = vsel %vm707, %v708, %v663
        %v710 = vshrl.u32 %v709, 5
        %v711 = vand.u32 %v709, 31
        %v712 = vsub.s32 0, %v711
        %v713 = vsel %vm707, %v712, %v711
        %vm714 = vcmp.lt.s32.totalorder %v664, 0
        %v715 = vsub.s32 0, %v664
        %v716 = vsel %vm714, %v715, %v664
        %v717 = vshrl.u32 %v716, 5
        %v718 = vand.u32 %v716, 31
        %v719 = vsub.s32 0, %v718
        %v720 = vsel %vm714, %v719, %v718
        %vm721 = vcmp.ne.s32.totalorder %v671, 0
        %vm722 = vcmp.ne.s32.totalorder %v678, 0
        %vm723 = vcmp.ne.s32.totalorder %v685, 0
        %vm724 = vcmp.ne.s32.totalorder %v692, 0
        %vm725 = vcmp.ne.s32.totalorder %v699, 0
        %vm726 = vcmp.ne.s32.totalorder %v706, 0
        %vm727 = vcmp.ne.s32.totalorder %v713, 0
        %vm728 = vcmp.ne.s32.totalorder %v720, 0
        %vm729 = vcmp.lt.s32.totalorder %v671, 0
        %vm730 = vcmp.lt.s32.totalorder %v678, 0
        %vm731 = vcmp.lt.s32.totalorder %v685, 0
        %vm732 = vcmp.lt.s32.totalorder %v692, 0
        %vm733 = vcmp.lt.s32.totalorder %v699, 0
        %vm734 = vcmp.lt.s32.totalorder %v706, 0
        %vm735 = vcmp.lt.s32.totalorder %v713, 0
        %vm736 = vcmp.lt.s32.totalorder %v720, 0
        %vm737 = vmand %vm729, %vm721
        %vm738 = vmand %vm730, %vm722
        %vm739 = vmand %vm731, %vm723
        %vm740 = vmand %vm732, %vm724
        %vm741 = vmand %vm733, %vm725
        %vm742 = vmand %vm734, %vm726
        %vm743 = vmand %vm735, %vm727
        %vm744 = vmand %vm736, %vm728
        %v745 = vadd.s32 %v671, 32
        %v746 = vadd.s32 %v678, 32
        %v747 = vadd.s32 %v685, 32
        %v748 = vadd.s32 %v692, 32
        %v749 = vadd.s32 %v699, 32
        %v750 = vadd.s32 %v706, 32
        %v751 = vadd.s32 %v713, 32
        %v752 = vadd.s32 %v720, 32
        %v753 = vsel %vm737, %v745, %v671
        %v754 = vsel %vm738, %v746, %v678
        %v755 = vsel %vm739, %v747, %v685
        %v756 = vsel %vm740, %v748, %v692
        %v757 = vsel %vm741, %v749, %v699
        %v758 = vsel %vm742, %v750, %v706
        %v759 = vsel %vm743, %v751, %v713
        %v760 = vsel %vm744, %v752, %v720
        %vm761 = vcmp.ne.s32.totalorder %v753, 0
        %vm762 = vcmp.ne.s32.totalorder %v754, 0
        %vm763 = vcmp.ne.s32.totalorder %v755, 0
        %vm764 = vcmp.ne.s32.totalorder %v756, 0
        %vm765 = vcmp.ne.s32.totalorder %v757, 0
        %vm766 = vcmp.ne.s32.totalorder %v758, 0
        %vm767 = vcmp.ne.s32.totalorder %v759, 0
        %vm768 = vcmp.ne.s32.totalorder %v760, 0
        %v769 = vsel %vm761, 1, 0
        %v770 = vsel %vm762, 1, 0
        %v771 = vsel %vm763, 1, 0
        %v772 = vsel %vm764, 1, 0
        %v773 = vsel %vm765, 1, 0
        %v774 = vsel %vm766, 1, 0
        %v775 = vsel %vm767, 1, 0
        %v776 = vsel %vm768, 1, 0
        %vm777 = vcmp.eq.s32.totalorder %v769, 1
        %vm778 = vcmp.eq.s32.totalorder %v770, 1
        %vm779 = vcmp.eq.s32.totalorder %v771, 1
        %vm780 = vcmp.eq.s32.totalorder %v772, 1
        %vm781 = vcmp.eq.s32.totalorder %v773, 1
        %vm782 = vcmp.eq.s32.totalorder %v774, 1
        %vm783 = vcmp.eq.s32.totalorder %v775, 1
        %vm784 = vcmp.eq.s32.totalorder %v776, 1
        %789 = vst [vmem:[#allocation1] ss:$2 sm:$0xff] %v644
        %s790 = scalar_lea.vmem [#allocation1], 16
        %791 = vst [vmem:[%s790] ss:$2 sm:$0xff] %v645
        %s792 = scalar_lea.vmem [#allocation1], 32
        %793 = vst [vmem:[%s792] ss:$2 sm:$0xff] %v646
        %s794 = scalar_lea.vmem [#allocation1], 48
        %795 = vst [vmem:[%s794] ss:$2 sm:$0xff] %v647
        %v796 = vld.sshfl [vmem:[#allocation1] sm:$0xff pattern:$0x75316420]
        %v797 = vld.sshfl [vmem:[#allocation1 + $0x8] sm:$0xff pattern:$0x75316420]
        %v798 = vld.sshfl [vmem:[#allocation1 + $0x10] sm:$0xff pattern:$0x75316420]
        %v799 = vld.sshfl [vmem:[#allocation1 + $0x18] sm:$0xff pattern:$0x75316420]
        %v800 = vld.sshfl [vmem:[#allocation1 + $0x20] sm:$0xff pattern:$0x75316420]
        %v801 = vld.sshfl [vmem:[#allocation1 + $0x28] sm:$0xff pattern:$0x75316420]
        %v802 = vld.sshfl [vmem:[#allocation1 + $0x30] sm:$0xff pattern:$0x75316420]
        %v803 = vld.sshfl [vmem:[#allocation1 + $0x38] sm:$0xff pattern:$0x75316420]
        %v812 = vsel %vm777, %v796, 0.0
        %v813 = vsel %vm778, %v797, 0.0
        %v814 = vsel %vm779, %v798, 0.0
        %v815 = vsel %vm780, %v799, 0.0
        %v816 = vsel %vm781, %v800, 0.0
        %v817 = vsel %vm782, %v801, 0.0
        %v818 = vsel %vm783, %v802, 0.0
        %v819 = vsel %vm784, %v803, 0.0
        %828 = vrot.lane.b32.xlu0 %v812, 33
        %v829 = vpop.permute.xlu0 %828
        %830 = vrot.lane.b32.xlu0 %v813, 33
        %v831 = vpop.permute.xlu0 %830
        %832 = vrot.lane.b32.xlu0 %v814, 33
        %v833 = vpop.permute.xlu0 %832
        %834 = vrot.lane.b32.xlu0 %v815, 33
        %v835 = vpop.permute.xlu0 %834
        %836 = vrot.lane.b32.xlu0 %v816, 33
        %v837 = vpop.permute.xlu0 %836
        %838 = vrot.lane.b32.xlu0 %v817, 33
        %v839 = vpop.permute.xlu0 %838
        %840 = vrot.lane.b32.xlu0 %v818, 33
        %v841 = vpop.permute.xlu0 %840
        %842 = vrot.lane.b32.xlu0 %v819, 33
        %v843 = vpop.permute.xlu0 %842
        %vm844 = vcmask 269312
        %v845 = vsel %vm844, %v829, %v831
        %v846 = vsel %vm844, %v831, %v833
        %v847 = vsel %vm844, %v833, %v835
        %v848 = vsel %vm844, %v835, %v837
        %v849 = vsel %vm844, %v837, %v839
        %v850 = vsel %vm844, %v839, %v841
        %v851 = vsel %vm844, %v841, %v843
        %vm860 = vcmask 1042696
        %861 = vst.msk [vmem:[#allocation2] sm:$0x7] %vm860, %v829
        %862 = vst [vmem:[#allocation2 + $0x8] sm:$0x7] %v845
        %863 = vst [vmem:[#allocation2 + $0x10] sm:$0x7] %v846
        %864 = vst [vmem:[#allocation2 + $0x18] sm:$0x7] %v847
        %865 = vst [vmem:[#allocation2 + $0x20] sm:$0x7] %v848
        %866 = vst [vmem:[#allocation2 + $0x28] sm:$0x7] %v849
        %867 = vst [vmem:[#allocation2 + $0x30] sm:$0x7] %v850
        %868 = vst [vmem:[#allocation2 + $0x38] sm:$0x7] %v851
        %vm869 = vcmask 264192
        %870 = vst.msk [vmem:[#allocation2] sm:$0x7] %vm869, 0.0
        %v871 = vld [vmem:[%s643] sm:$0x77]
        %v872 = vld [vmem:[%s643 + $0x8] sm:$0x77]
        %v873 = vld [vmem:[%s643 + $0x10] sm:$0x77]
        %v874 = vld [vmem:[%s643 + $0x18] sm:$0x77]
        %879 = vst [vmem:[#allocation1] ss:$2 sm:$0xff] %v871
        %s880 = scalar_lea.vmem [#allocation1], 16
        %881 = vst [vmem:[%s880] ss:$2 sm:$0xff] %v872
        %s882 = scalar_lea.vmem [#allocation1], 32
        %883 = vst [vmem:[%s882] ss:$2 sm:$0xff] %v873
        %s884 = scalar_lea.vmem [#allocation1], 48
        %885 = vst [vmem:[%s884] ss:$2 sm:$0xff] %v874
        %v886 = vld.sshfl [vmem:[#allocation1] sm:$0xff pattern:$0x75316420]
        %v887 = vld.sshfl [vmem:[#allocation1 + $0x8] sm:$0xff pattern:$0x75316420]
        %v888 = vld.sshfl [vmem:[#allocation1 + $0x10] sm:$0xff pattern:$0x75316420]
        %v889 = vld.sshfl [vmem:[#allocation1 + $0x18] sm:$0xff pattern:$0x75316420]
        %v890 = vld.sshfl [vmem:[#allocation1 + $0x20] sm:$0xff pattern:$0x75316420]
        %v891 = vld.sshfl [vmem:[#allocation1 + $0x28] sm:$0xff pattern:$0x75316420]
        %v892 = vld.sshfl [vmem:[#allocation1 + $0x30] sm:$0xff pattern:$0x75316420]
        %v893 = vld.sshfl [vmem:[#allocation1 + $0x38] sm:$0xff pattern:$0x75316420]
        %v894 = vrot.slane %v886, 5
        %v895 = vrot.slane %v887, 5
        %v896 = vrot.slane %v888, 5
        %v897 = vrot.slane %v889, 5
        %v898 = vrot.slane %v890, 5
        %v899 = vrot.slane %v891, 5
        %v900 = vrot.slane %v892, 5
        %v901 = vrot.slane %v893, 5
        %902 = vrot.lane.b32.xlu0 %v894, 32
        %v903 = vpop.permute.xlu0 %902
        %904 = vrot.lane.b32.xlu0 %v895, 32
        %v905 = vpop.permute.xlu0 %904
        %906 = vrot.lane.b32.xlu0 %v896, 32
        %v907 = vpop.permute.xlu0 %906
        %908 = vrot.lane.b32.xlu0 %v897, 32
        %v909 = vpop.permute.xlu0 %908
        %910 = vrot.lane.b32.xlu0 %v898, 32
        %v911 = vpop.permute.xlu0 %910
        %912 = vrot.lane.b32.xlu0 %v899, 32
        %v913 = vpop.permute.xlu0 %912
        %914 = vrot.lane.b32.xlu0 %v900, 32
        %v915 = vpop.permute.xlu0 %914
        %916 = vrot.lane.b32.xlu0 %v901, 32
        %v917 = vpop.permute.xlu0 %916
        %vm918 = vcmask 261120
        %v919 = vsel %vm918, %v903, %v905
        %v920 = vsel %vm918, %v905, %v907
        %v921 = vsel %vm918, %v907, %v909
        %v922 = vsel %vm918, %v909, %v911
        %v923 = vsel %vm918, %v911, %v913
        %v924 = vsel %vm918, %v913, %v915
        %v925 = vsel %vm918, %v915, %v917
        %vm934 = vcmask 1045763
        %935 = vst.msk [vmem:[#allocation2] sm:$0x38] %vm934, %v903
        %936 = vst [vmem:[#allocation2 + $0x8] sm:$0x38] %v919
        %937 = vst [vmem:[#allocation2 + $0x10] sm:$0x38] %v920
        %938 = vst [vmem:[#allocation2 + $0x18] sm:$0x38] %v921
        %939 = vst [vmem:[#allocation2 + $0x20] sm:$0x38] %v922
        %940 = vst [vmem:[#allocation2 + $0x28] sm:$0x38] %v923
        %941 = vst [vmem:[#allocation2 + $0x30] sm:$0x38] %v924
        %942 = vst [vmem:[#allocation2 + $0x38] sm:$0x38] %v925
        %vm943 = vcmask 259075
        %944 = vst.msk [vmem:[#allocation2] sm:$0x38] %vm943, 0.0
        %v945 = vld [vmem:[%s643] sm:$0x77]
        %v946 = vld [vmem:[%s643 + $0x8] sm:$0x77]
        %v947 = vld [vmem:[%s643 + $0x10] sm:$0x77]
        %v948 = vld [vmem:[%s643 + $0x18] sm:$0x77]
        %v949 = vadd.s32 %v649, 31
        %v950 = vadd.s32 %v650, 31
        %v951 = vadd.s32 %v651, 31
        %v952 = vadd.s32 %v652, 31
        %v953 = vadd.s32 %v653, 31
        %v954 = vadd.s32 %v654, 31
        %v955 = vadd.s32 %v655, 31
        %v956 = vadd.s32 %v656, 31
        %vm957 = vcmp.lt.s32.totalorder %v949, 0
        %v958 = vsub.s32 0, %v949
        %v959 = vsel %vm957, %v958, %v949
        %v960 = vshrl.u32 %v959, 5
        %v961 = vand.u32 %v959, 31
        %v962 = vsub.s32 0, %v961
        %v963 = vsel %vm957, %v962, %v961
        %vm964 = vcmp.lt.s32.totalorder %v950, 0
        %v965 = vsub.s32 0, %v950
        %v966 = vsel %vm964, %v965, %v950
        %v967 = vshrl.u32 %v966, 5
        %v968 = vand.u32 %v966, 31
        %v969 = vsub.s32 0, %v968
        %v970 = vsel %vm964, %v969, %v968
        %vm971 = vcmp.lt.s32.totalorder %v951, 0
        %v972 = vsub.s32 0, %v951
        %v973 = vsel %vm971, %v972, %v951
        %v974 = vshrl.u32 %v973, 5
        %v975 = vand.u32 %v973, 31
        %v976 = vsub.s32 0, %v975
        %v977 = vsel %vm971, %v976, %v975
        %vm978 = vcmp.lt.s32.totalorder %v952, 0
        %v979 = vsub.s32 0, %v952
        %v980 = vsel %vm978, %v979, %v952
        %v981 = vshrl.u32 %v980, 5
        %v982 = vand.u32 %v980, 31
        %v983 = vsub.s32 0, %v982
        %v984 = vsel %vm978, %v983, %v982
        %vm985 = vcmp.lt.s32.totalorder %v953, 0
        %v986 = vsub.s32 0, %v953
        %v987 = vsel %vm985, %v986, %v953
        %v988 = vshrl.u32 %v987, 5
        %v989 = vand.u32 %v987, 31
        %v990 = vsub.s32 0, %v989
        %v991 = vsel %vm985, %v990, %v989
        %vm992 = vcmp.lt.s32.totalorder %v954, 0
        %v993 = vsub.s32 0, %v954
        %v994 = vsel %vm992, %v993, %v954
        %v995 = vshrl.u32 %v994, 5
        %v996 = vand.u32 %v994, 31
        %v997 = vsub.s32 0, %v996
        %v998 = vsel %vm992, %v997, %v996
        %vm999 = vcmp.lt.s32.totalorder %v955, 0
        %v1000 = vsub.s32 0, %v955
        %v1001 = vsel %vm999, %v1000, %v955
        %v1002 = vshrl.u32 %v1001, 5
        %v1003 = vand.u32 %v1001, 31
        %v1004 = vsub.s32 0, %v1003
        %v1005 = vsel %vm999, %v1004, %v1003
        %vm1006 = vcmp.lt.s32.totalorder %v956, 0
        %v1007 = vsub.s32 0, %v956
        %v1008 = vsel %vm1006, %v1007, %v956
        %v1009 = vshrl.u32 %v1008, 5
        %v1010 = vand.u32 %v1008, 31
        %v1011 = vsub.s32 0, %v1010
        %v1012 = vsel %vm1006, %v1011, %v1010
        %vm1013 = vcmp.ne.s32.totalorder %v963, 0
        %vm1014 = vcmp.ne.s32.totalorder %v970, 0
        %vm1015 = vcmp.ne.s32.totalorder %v977, 0
        %vm1016 = vcmp.ne.s32.totalorder %v984, 0
        %vm1017 = vcmp.ne.s32.totalorder %v991, 0
        %vm1018 = vcmp.ne.s32.totalorder %v998, 0
        %vm1019 = vcmp.ne.s32.totalorder %v1005, 0
        %vm1020 = vcmp.ne.s32.totalorder %v1012, 0
        %vm1021 = vcmp.lt.s32.totalorder %v963, 0
        %vm1022 = vcmp.lt.s32.totalorder %v970, 0
        %vm1023 = vcmp.lt.s32.totalorder %v977, 0
        %vm1024 = vcmp.lt.s32.totalorder %v984, 0
        %vm1025 = vcmp.lt.s32.totalorder %v991, 0
        %vm1026 = vcmp.lt.s32.totalorder %v998, 0
        %vm1027 = vcmp.lt.s32.totalorder %v1005, 0
        %vm1028 = vcmp.lt.s32.totalorder %v1012, 0
        %vm1029 = vmand %vm1021, %vm1013
        %vm1030 = vmand %vm1022, %vm1014
        %vm1031 = vmand %vm1023, %vm1015
        %vm1032 = vmand %vm1024, %vm1016
        %vm1033 = vmand %vm1025, %vm1017
        %vm1034 = vmand %vm1026, %vm1018
        %vm1035 = vmand %vm1027, %vm1019
        %vm1036 = vmand %vm1028, %vm1020
        %v1037 = vadd.s32 %v963, 32
        %v1038 = vadd.s32 %v970, 32
        %v1039 = vadd.s32 %v977, 32
        %v1040 = vadd.s32 %v984, 32
        %v1041 = vadd.s32 %v991, 32
        %v1042 = vadd.s32 %v998, 32
        %v1043 = vadd.s32 %v1005, 32
        %v1044 = vadd.s32 %v1012, 32
        %v1045 = vsel %vm1029, %v1037, %v963
        %v1046 = vsel %vm1030, %v1038, %v970
        %v1047 = vsel %vm1031, %v1039, %v977
        %v1048 = vsel %vm1032, %v1040, %v984
        %v1049 = vsel %vm1033, %v1041, %v991
        %v1050 = vsel %vm1034, %v1042, %v998
        %v1051 = vsel %vm1035, %v1043, %v1005
        %v1052 = vsel %vm1036, %v1044, %v1012
        %vm1053 = vcmp.ne.s32.totalorder %v1045, 31
        %vm1054 = vcmp.ne.s32.totalorder %v1046, 31
        %vm1055 = vcmp.ne.s32.totalorder %v1047, 31
        %vm1056 = vcmp.ne.s32.totalorder %v1048, 31
        %vm1057 = vcmp.ne.s32.totalorder %v1049, 31
        %vm1058 = vcmp.ne.s32.totalorder %v1050, 31
        %vm1059 = vcmp.ne.s32.totalorder %v1051, 31
        %vm1060 = vcmp.ne.s32.totalorder %v1052, 31
        %v1061 = vsel %vm1053, 1, 0
        %v1062 = vsel %vm1054, 1, 0
        %v1063 = vsel %vm1055, 1, 0
        %v1064 = vsel %vm1056, 1, 0
        %v1065 = vsel %vm1057, 1, 0
        %v1066 = vsel %vm1058, 1, 0
        %v1067 = vsel %vm1059, 1, 0
        %v1068 = vsel %vm1060, 1, 0
        %vm1069 = vcmp.eq.s32.totalorder %v1061, 1
        %vm1070 = vcmp.eq.s32.totalorder %v1062, 1
        %vm1071 = vcmp.eq.s32.totalorder %v1063, 1
        %vm1072 = vcmp.eq.s32.totalorder %v1064, 1
        %vm1073 = vcmp.eq.s32.totalorder %v1065, 1
        %vm1074 = vcmp.eq.s32.totalorder %v1066, 1
        %vm1075 = vcmp.eq.s32.totalorder %v1067, 1
        %vm1076 = vcmp.eq.s32.totalorder %v1068, 1
        %1081 = vst [vmem:[#allocation1] ss:$2 sm:$0xff] %v945
        %s1082 = scalar_lea.vmem [#allocation1], 16
        %1083 = vst [vmem:[%s1082] ss:$2 sm:$0xff] %v946
        %s1084 = scalar_lea.vmem [#allocation1], 32
        %1085 = vst [vmem:[%s1084] ss:$2 sm:$0xff] %v947
        %s1086 = scalar_lea.vmem [#allocation1], 48
        %1087 = vst [vmem:[%s1086] ss:$2 sm:$0xff] %v948
        %v1088 = vld.sshfl [vmem:[#allocation1] sm:$0xff pattern:$0x75316420]
        %v1089 = vld.sshfl [vmem:[#allocation1 + $0x8] sm:$0xff pattern:$0x75316420]
        %v1090 = vld.sshfl [vmem:[#allocation1 + $0x10] sm:$0xff pattern:$0x75316420]
        %v1091 = vld.sshfl [vmem:[#allocation1 + $0x18] sm:$0xff pattern:$0x75316420]
        %v1092 = vld.sshfl [vmem:[#allocation1 + $0x20] sm:$0xff pattern:$0x75316420]
        %v1093 = vld.sshfl [vmem:[#allocation1 + $0x28] sm:$0xff pattern:$0x75316420]
        %v1094 = vld.sshfl [vmem:[#allocation1 + $0x30] sm:$0xff pattern:$0x75316420]
        %v1095 = vld.sshfl [vmem:[#allocation1 + $0x38] sm:$0xff pattern:$0x75316420]
        %v1104 = vsel %vm1069, %v1088, 0.0
        %v1105 = vsel %vm1070, %v1089, 0.0
        %v1106 = vsel %vm1071, %v1090, 0.0
        %v1107 = vsel %vm1072, %v1091, 0.0
        %v1108 = vsel %vm1073, %v1092, 0.0
        %v1109 = vsel %vm1074, %v1093, 0.0
        %v1110 = vsel %vm1075, %v1094, 0.0
        %v1111 = vsel %vm1076, %v1095, 0.0
        %v1120 = vrot.slane %v1104, 2
        %v1121 = vrot.slane %v1105, 2
        %v1122 = vrot.slane %v1106, 2
        %v1123 = vrot.slane %v1107, 2
        %v1124 = vrot.slane %v1108, 2
        %v1125 = vrot.slane %v1109, 2
        %v1126 = vrot.slane %v1110, 2
        %v1127 = vrot.slane %v1111, 2
        %1128 = vrot.lane.b32.xlu0 %v1120, 31
        %v1129 = vpop.permute.xlu0 %1128
        %1130 = vrot.lane.b32.xlu0 %v1121, 31
        %v1131 = vpop.permute.xlu0 %1130
        %1132 = vrot.lane.b32.xlu0 %v1122, 31
        %v1133 = vpop.permute.xlu0 %1132
        %1134 = vrot.lane.b32.xlu0 %v1123, 31
        %v1135 = vpop.permute.xlu0 %1134
        %1136 = vrot.lane.b32.xlu0 %v1124, 31
        %v1137 = vpop.permute.xlu0 %1136
        %1138 = vrot.lane.b32.xlu0 %v1125, 31
        %v1139 = vpop.permute.xlu0 %1138
        %1140 = vrot.lane.b32.xlu0 %v1126, 31
        %v1141 = vpop.permute.xlu0 %1140
        %1142 = vrot.lane.b32.xlu0 %v1127, 31
        %v1143 = vpop.permute.xlu0 %1142
        %vm1144 = vcmask 252928
        %v1145 = vsel %vm1144, %v1129, %v1131
        %v1146 = vsel %vm1144, %v1131, %v1133
        %v1147 = vsel %vm1144, %v1133, %v1135
        %v1148 = vsel %vm1144, %v1135, %v1137
        %v1149 = vsel %vm1144, %v1137, %v1139
        %v1150 = vsel %vm1144, %v1139, %v1141
        %v1151 = vsel %vm1144, %v1141, %v1143
        %vm1160 = vcmask 1047806
        %1161 = vst.msk [vmem:[#allocation2] sm:$0xc0] %vm1160, %v1129
        %1162 = vst [vmem:[#allocation2 + $0x8] sm:$0xc0] %v1145
        %1163 = vst [vmem:[#allocation2 + $0x10] sm:$0xc0] %v1146
        %1164 = vst [vmem:[#allocation2 + $0x18] sm:$0xc0] %v1147
        %1165 = vst [vmem:[#allocation2 + $0x20] sm:$0xc0] %v1148
        %1166 = vst [vmem:[#allocation2 + $0x28] sm:$0xc0] %v1149
        %1167 = vst [vmem:[#allocation2 + $0x30] sm:$0xc0] %v1150
        %1168 = vst [vmem:[#allocation2 + $0x38] sm:$0xc0] %v1151
        %vm1169 = vcmask 1040632
        %1170 = vst.msk [vmem:[#allocation2 + $0x40] sm:$0x1] %vm1169, %v1129
        %1171 = vst [vmem:[#allocation2 + $0x48] sm:$0x1] %v1145
        %1172 = vst [vmem:[#allocation2 + $0x50] sm:$0x1] %v1146
        %1173 = vst [vmem:[#allocation2 + $0x58] sm:$0x1] %v1147
        %1174 = vst [vmem:[#allocation2 + $0x60] sm:$0x1] %v1148
        %1175 = vst [vmem:[#allocation2 + $0x68] sm:$0x1] %v1149
        %1176 = vst [vmem:[#allocation2 + $0x70] sm:$0x1] %v1150
        %1177 = vst [vmem:[#allocation2 + $0x78] sm:$0x1] %v1151
        %vm1178 = vcmask 252934
        %1179 = vst.msk [vmem:[#allocation2] sm:$0xc0] %vm1178, 0.0
        %vm1180 = vcmask 245760
        %1181 = vst.msk [vmem:[#allocation2 + $0x40] sm:$0x1] %vm1180, 0.0
        %v1182 = vld [vmem:[%s643] sm:$0x77]
        %v1183 = vld [vmem:[%s643 + $0x8] sm:$0x77]
        %v1184 = vld [vmem:[%s643 + $0x10] sm:$0x77]
        %v1185 = vld [vmem:[%s643 + $0x18] sm:$0x77]
        %v1186 = vadd.s32 %v649, 1
        %v1187 = vadd.s32 %v650, 1
        %v1188 = vadd.s32 %v651, 1
        %v1189 = vadd.s32 %v652, 1
        %v1190 = vadd.s32 %v653, 1
        %v1191 = vadd.s32 %v654, 1
        %v1192 = vadd.s32 %v655, 1
        %v1193 = vadd.s32 %v656, 1
        %vm1194 = vcmp.lt.s32.totalorder %v1186, 0
        %v1195 = vsub.s32 0, %v1186
        %v1196 = vsel %vm1194, %v1195, %v1186
        %v1197 = vshrl.u32 %v1196, 5
        %v1198 = vand.u32 %v1196, 31
        %v1199 = vsub.s32 0, %v1198
        %v1200 = vsel %vm1194, %v1199, %v1198
        %vm1201 = vcmp.lt.s32.totalorder %v1187, 0
        %v1202 = vsub.s32 0, %v1187
        %v1203 = vsel %vm1201, %v1202, %v1187
        %v1204 = vshrl.u32 %v1203, 5
        %v1205 = vand.u32 %v1203, 31
        %v1206 = vsub.s32 0, %v1205
        %v1207 = vsel %vm1201, %v1206, %v1205
        %vm1208 = vcmp.lt.s32.totalorder %v1188, 0
        %v1209 = vsub.s32 0, %v1188
        %v1210 = vsel %vm1208, %v1209, %v1188
        %v1211 = vshrl.u32 %v1210, 5
        %v1212 = vand.u32 %v1210, 31
        %v1213 = vsub.s32 0, %v1212
        %v1214 = vsel %vm1208, %v1213, %v1212
        %vm1215 = vcmp.lt.s32.totalorder %v1189, 0
        %v1216 = vsub.s32 0, %v1189
        %v1217 = vsel %vm1215, %v1216, %v1189
        %v1218 = vshrl.u32 %v1217, 5
        %v1219 = vand.u32 %v1217, 31
        %v1220 = vsub.s32 0, %v1219
        %v1221 = vsel %vm1215, %v1220, %v1219
        %vm1222 = vcmp.lt.s32.totalorder %v1190, 0
        %v1223 = vsub.s32 0, %v1190
        %v1224 = vsel %vm1222, %v1223, %v1190
        %v1225 = vshrl.u32 %v1224, 5
        %v1226 = vand.u32 %v1224, 31
        %v1227 = vsub.s32 0, %v1226
        %v1228 = vsel %vm1222, %v1227, %v1226
        %vm1229 = vcmp.lt.s32.totalorder %v1191, 0
        %v1230 = vsub.s32 0, %v1191
        %v1231 = vsel %vm1229, %v1230, %v1191
        %v1232 = vshrl.u32 %v1231, 5
        %v1233 = vand.u32 %v1231, 31
        %v1234 = vsub.s32 0, %v1233
        %v1235 = vsel %vm1229, %v1234, %v1233
        %vm1236 = vcmp.lt.s32.totalorder %v1192, 0
        %v1237 = vsub.s32 0, %v1192
        %v1238 = vsel %vm1236, %v1237, %v1192
        %v1239 = vshrl.u32 %v1238, 5
        %v1240 = vand.u32 %v1238, 31
        %v1241 = vsub.s32 0, %v1240
        %v1242 = vsel %vm1236, %v1241, %v1240
        %vm1243 = vcmp.lt.s32.totalorder %v1193, 0
        %v1244 = vsub.s32 0, %v1193
        %v1245 = vsel %vm1243, %v1244, %v1193
        %v1246 = vshrl.u32 %v1245, 5
        %v1247 = vand.u32 %v1245, 31
        %v1248 = vsub.s32 0, %v1247
        %v1249 = vsel %vm1243, %v1248, %v1247
        %vm1250 = vcmp.ne.s32.totalorder %v1200, 0
        %vm1251 = vcmp.ne.s32.totalorder %v1207, 0
        %vm1252 = vcmp.ne.s32.totalorder %v1214, 0
        %vm1253 = vcmp.ne.s32.totalorder %v1221, 0
        %vm1254 = vcmp.ne.s32.totalorder %v1228, 0
        %vm1255 = vcmp.ne.s32.totalorder %v1235, 0
        %vm1256 = vcmp.ne.s32.totalorder %v1242, 0
        %vm1257 = vcmp.ne.s32.totalorder %v1249, 0
        %vm1258 = vcmp.lt.s32.totalorder %v1200, 0
        %vm1259 = vcmp.lt.s32.totalorder %v1207, 0
        %vm1260 = vcmp.lt.s32.totalorder %v1214, 0
        %vm1261 = vcmp.lt.s32.totalorder %v1221, 0
        %vm1262 = vcmp.lt.s32.totalorder %v1228, 0
        %vm1263 = vcmp.lt.s32.totalorder %v1235, 0
        %vm1264 = vcmp.lt.s32.totalorder %v1242, 0
        %vm1265 = vcmp.lt.s32.totalorder %v1249, 0
        %vm1266 = vmand %vm1258, %vm1250
        %vm1267 = vmand %vm1259, %vm1251
        %vm1268 = vmand %vm1260, %vm1252
        %vm1269 = vmand %vm1261, %vm1253
        %vm1270 = vmand %vm1262, %vm1254
        %vm1271 = vmand %vm1263, %vm1255
        %vm1272 = vmand %vm1264, %vm1256
        %vm1273 = vmand %vm1265, %vm1257
        %v1274 = vadd.s32 %v1200, 32
        %v1275 = vadd.s32 %v1207, 32
        %v1276 = vadd.s32 %v1214, 32
        %v1277 = vadd.s32 %v1221, 32
        %v1278 = vadd.s32 %v1228, 32
        %v1279 = vadd.s32 %v1235, 32
        %v1280 = vadd.s32 %v1242, 32
        %v1281 = vadd.s32 %v1249, 32
        %v1282 = vsel %vm1266, %v1274, %v1200
        %v1283 = vsel %vm1267, %v1275, %v1207
        %v1284 = vsel %vm1268, %v1276, %v1214
        %v1285 = vsel %vm1269, %v1277, %v1221
        %v1286 = vsel %vm1270, %v1278, %v1228
        %v1287 = vsel %vm1271, %v1279, %v1235
        %v1288 = vsel %vm1272, %v1280, %v1242
        %v1289 = vsel %vm1273, %v1281, %v1249
        %vm1290 = vcmp.ne.s32.totalorder %v1282, 0
        %vm1291 = vcmp.ne.s32.totalorder %v1283, 0
        %vm1292 = vcmp.ne.s32.totalorder %v1284, 0
        %vm1293 = vcmp.ne.s32.totalorder %v1285, 0
        %vm1294 = vcmp.ne.s32.totalorder %v1286, 0
        %vm1295 = vcmp.ne.s32.totalorder %v1287, 0
        %vm1296 = vcmp.ne.s32.totalorder %v1288, 0
        %vm1297 = vcmp.ne.s32.totalorder %v1289, 0
        %v1298 = vsel %vm1290, 1, 0
        %v1299 = vsel %vm1291, 1, 0
        %v1300 = vsel %vm1292, 1, 0
        %v1301 = vsel %vm1293, 1, 0
        %v1302 = vsel %vm1294, 1, 0
        %v1303 = vsel %vm1295, 1, 0
        %v1304 = vsel %vm1296, 1, 0
        %v1305 = vsel %vm1297, 1, 0
        %vm1306 = vcmp.eq.s32.totalorder %v1298, 1
        %vm1307 = vcmp.eq.s32.totalorder %v1299, 1
        %vm1308 = vcmp.eq.s32.totalorder %v1300, 1
        %vm1309 = vcmp.eq.s32.totalorder %v1301, 1
        %vm1310 = vcmp.eq.s32.totalorder %v1302, 1
        %vm1311 = vcmp.eq.s32.totalorder %v1303, 1
        %vm1312 = vcmp.eq.s32.totalorder %v1304, 1
        %vm1313 = vcmp.eq.s32.totalorder %v1305, 1
        %1318 = vst [vmem:[#allocation1] ss:$2 sm:$0xff] %v1182
        %s1319 = scalar_lea.vmem [#allocation1], 16
        %1320 = vst [vmem:[%s1319] ss:$2 sm:$0xff] %v1183
        %s1321 = scalar_lea.vmem [#allocation1], 32
        %1322 = vst [vmem:[%s1321] ss:$2 sm:$0xff] %v1184
        %s1323 = scalar_lea.vmem [#allocation1], 48
        %1324 = vst [vmem:[%s1323] ss:$2 sm:$0xff] %v1185
        %v1325 = vld.sshfl [vmem:[#allocation1] sm:$0xff pattern:$0x75316420]
        %v1326 = vld.sshfl [vmem:[#allocation1 + $0x8] sm:$0xff pattern:$0x75316420]
        %v1327 = vld.sshfl [vmem:[#allocation1 + $0x10] sm:$0xff pattern:$0x75316420]
        %v1328 = vld.sshfl [vmem:[#allocation1 + $0x18] sm:$0xff pattern:$0x75316420]
        %v1329 = vld.sshfl [vmem:[#allocation1 + $0x20] sm:$0xff pattern:$0x75316420]
        %v1330 = vld.sshfl [vmem:[#allocation1 + $0x28] sm:$0xff pattern:$0x75316420]
        %v1331 = vld.sshfl [vmem:[#allocation1 + $0x30] sm:$0xff pattern:$0x75316420]
        %v1332 = vld.sshfl [vmem:[#allocation1 + $0x38] sm:$0xff pattern:$0x75316420]
        %v1341 = vsel %vm1306, %v1325, 0.0
        %v1342 = vsel %vm1307, %v1326, 0.0
        %v1343 = vsel %vm1308, %v1327, 0.0
        %v1344 = vsel %vm1309, %v1328, 0.0
        %v1345 = vsel %vm1310, %v1329, 0.0
        %v1346 = vsel %vm1311, %v1330, 0.0
        %v1347 = vsel %vm1312, %v1331, 0.0
        %v1348 = vsel %vm1313, %v1332, 0.0
        %v1357 = vrot.slane %v1341, 7
        %v1358 = vrot.slane %v1342, 7
        %v1359 = vrot.slane %v1343, 7
        %v1360 = vrot.slane %v1344, 7
        %v1361 = vrot.slane %v1345, 7
        %v1362 = vrot.slane %v1346, 7
        %v1363 = vrot.slane %v1347, 7
        %v1364 = vrot.slane %v1348, 7
        %1365 = vrot.lane.b32.xlu0 %v1357, 1
        %v1366 = vpop.permute.xlu0 %1365
        %1367 = vrot.lane.b32.xlu0 %v1358, 1
        %v1368 = vpop.permute.xlu0 %1367
        %1369 = vrot.lane.b32.xlu0 %v1359, 1
        %v1370 = vpop.permute.xlu0 %1369
        %1371 = vrot.lane.b32.xlu0 %v1360, 1
        %v1372 = vpop.permute.xlu0 %1371
        %1373 = vrot.lane.b32.xlu0 %v1361, 1
        %v1374 = vpop.permute.xlu0 %1373
        %1375 = vrot.lane.b32.xlu0 %v1362, 1
        %v1376 = vpop.permute.xlu0 %1375
        %1377 = vrot.lane.b32.xlu0 %v1363, 1
        %v1378 = vpop.permute.xlu0 %1377
        %1379 = vrot.lane.b32.xlu0 %v1364, 1
        %v1380 = vpop.permute.xlu0 %1379
        %vm1381 = vcmask 7168
        %v1382 = vsel %vm1381, %v1366, %v1368
        %v1383 = vsel %vm1381, %v1368, %v1370
        %v1384 = vsel %vm1381, %v1370, %v1372
        %v1385 = vsel %vm1381, %v1372, %v1374
        %v1386 = vsel %vm1381, %v1374, %v1376
        %v1387 = vsel %vm1381, %v1376, %v1378
        %v1388 = vsel %vm1381, %v1378, %v1380
        %vm1397 = vcmask 1043465
        %1398 = vst.msk [vmem:[#allocation2 + $0x40] sm:$0xe] %vm1397, %v1366
        %1399 = vst [vmem:[#allocation2 + $0x48] sm:$0xe] %v1382
        %1400 = vst [vmem:[#allocation2 + $0x50] sm:$0xe] %v1383
        %1401 = vst [vmem:[#allocation2 + $0x58] sm:$0xe] %v1384
        %1402 = vst [vmem:[#allocation2 + $0x60] sm:$0xe] %v1385
        %1403 = vst [vmem:[#allocation2 + $0x68] sm:$0xe] %v1386
        %1404 = vst [vmem:[#allocation2 + $0x70] sm:$0xe] %v1387
        %1405 = vst [vmem:[#allocation2 + $0x78] sm:$0xe] %v1388
        %vm1406 = vcmask 3073
        %1407 = vst.msk [vmem:[#allocation2 + $0x40] sm:$0xe] %vm1406, 0.0
        %v1408 = vld [vmem:[%s643] sm:$0x77]
        %v1409 = vld [vmem:[%s643 + $0x8] sm:$0x77]
        %v1410 = vld [vmem:[%s643 + $0x10] sm:$0x77]
        %v1411 = vld [vmem:[%s643 + $0x18] sm:$0x77]
        %s1416 = scalar_lea.vmem [#allocation1], 1
        %1417 = vst [vmem:[%s1416] ss:$2 sm:$0xff] %v1408
        %s1418 = scalar_lea.vmem [#allocation1], 17
        %1419 = vst [vmem:[%s1418] ss:$2 sm:$0xff] %v1409
        %s1420 = scalar_lea.vmem [#allocation1], 33
        %1421 = vst [vmem:[%s1420] ss:$2 sm:$0xff] %v1410
        %s1422 = scalar_lea.vmem [#allocation1], 49
        %1423 = vst [vmem:[%s1422] ss:$2 sm:$0xff] %v1411
        %v1424 = vld.sshfl [vmem:[#allocation1] sm:$0xff pattern:$0x75316420]
        %v1425 = vld.sshfl [vmem:[#allocation1 + $0x8] sm:$0xff pattern:$0x75316420]
        %v1426 = vld.sshfl [vmem:[#allocation1 + $0x10] sm:$0xff pattern:$0x75316420]
        %v1427 = vld.sshfl [vmem:[#allocation1 + $0x18] sm:$0xff pattern:$0x75316420]
        %v1428 = vld.sshfl [vmem:[#allocation1 + $0x20] sm:$0xff pattern:$0x75316420]
        %v1429 = vld.sshfl [vmem:[#allocation1 + $0x28] sm:$0xff pattern:$0x75316420]
        %v1430 = vld.sshfl [vmem:[#allocation1 + $0x30] sm:$0xff pattern:$0x75316420]
        %v1431 = vld.sshfl [vmem:[#allocation1 + $0x38] sm:$0xff pattern:$0x75316420]
        %1440 = vst [vmem:[#allocation2 + $0x40] sm:$0x70] %v1424
        %1441 = vst [vmem:[#allocation2 + $0x48] sm:$0x70] %v1425
        %1442 = vst [vmem:[#allocation2 + $0x50] sm:$0x70] %v1426
        %1443 = vst [vmem:[#allocation2 + $0x58] sm:$0x70] %v1427
        %1444 = vst [vmem:[#allocation2 + $0x60] sm:$0x70] %v1428
        %1445 = vst [vmem:[#allocation2 + $0x68] sm:$0x70] %v1429
        %1446 = vst [vmem:[#allocation2 + $0x70] sm:$0x70] %v1430
        %1447 = vst [vmem:[#allocation2 + $0x78] sm:$0x70] %v1431
        %v1448 = vld [vmem:[%s643] sm:$0x77]
        %v1449 = vld [vmem:[%s643 + $0x8] sm:$0x77]
        %v1450 = vld [vmem:[%s643 + $0x10] sm:$0x77]
        %v1451 = vld [vmem:[%s643 + $0x18] sm:$0x77]
        %vm1452 = vcmp.lt.s32.totalorder %v649, 0
        %v1453 = vsub.s32 0, %v649
        %v1454 = vsel %vm1452, %v1453, %v649
        %v1455 = vshrl.u32 %v1454, 5
        %v1456 = vand.u32 %v1454, 31
        %v1457 = vsub.s32 0, %v1456
        %v1458 = vsel %vm1452, %v1457, %v1456
        %vm1459 = vcmp.lt.s32.totalorder %v650, 0
        %v1460 = vsub.s32 0, %v650
        %v1461 = vsel %vm1459, %v1460, %v650
        %v1462 = vshrl.u32 %v1461, 5
        %v1463 = vand.u32 %v1461, 31
        %v1464 = vsub.s32 0, %v1463
        %v1465 = vsel %vm1459, %v1464, %v1463
        %vm1466 = vcmp.lt.s32.totalorder %v651, 0
        %v1467 = vsub.s32 0, %v651
        %v1468 = vsel %vm1466, %v1467, %v651
        %v1469 = vshrl.u32 %v1468, 5
        %v1470 = vand.u32 %v1468, 31
        %v1471 = vsub.s32 0, %v1470
        %v1472 = vsel %vm1466, %v1471, %v1470
        %vm1473 = vcmp.lt.s32.totalorder %v652, 0
        %v1474 = vsub.s32 0, %v652
        %v1475 = vsel %vm1473, %v1474, %v652
        %v1476 = vshrl.u32 %v1475, 5
        %v1477 = vand.u32 %v1475, 31
        %v1478 = vsub.s32 0, %v1477
        %v1479 = vsel %vm1473, %v1478, %v1477
        %vm1480 = vcmp.lt.s32.totalorder %v653, 0
        %v1481 = vsub.s32 0, %v653
        %v1482 = vsel %vm1480, %v1481, %v653
        %v1483 = vshrl.u32 %v1482, 5
        %v1484 = vand.u32 %v1482, 31
        %v1485 = vsub.s32 0, %v1484
        %v1486 = vsel %vm1480, %v1485, %v1484
        %vm1487 = vcmp.lt.s32.totalorder %v654, 0
        %v1488 = vsub.s32 0, %v654
        %v1489 = vsel %vm1487, %v1488, %v654
        %v1490 = vshrl.u32 %v1489, 5
        %v1491 = vand.u32 %v1489, 31
        %v1492 = vsub.s32 0, %v1491
        %v1493 = vsel %vm1487, %v1492, %v1491
        %vm1494 = vcmp.lt.s32.totalorder %v655, 0
        %v1495 = vsub.s32 0, %v655
        %v1496 = vsel %vm1494, %v1495, %v655
        %v1497 = vshrl.u32 %v1496, 5
        %v1498 = vand.u32 %v1496, 31
        %v1499 = vsub.s32 0, %v1498
        %v1500 = vsel %vm1494, %v1499, %v1498
        %vm1501 = vcmp.lt.s32.totalorder %v656, 0
        %v1502 = vsub.s32 0, %v656
        %v1503 = vsel %vm1501, %v1502, %v656
        %v1504 = vshrl.u32 %v1503, 5
        %v1505 = vand.u32 %v1503, 31
        %v1506 = vsub.s32 0, %v1505
        %v1507 = vsel %vm1501, %v1506, %v1505
        %vm1508 = vcmp.ne.s32.totalorder %v1458, 0
        %vm1509 = vcmp.ne.s32.totalorder %v1465, 0
        %vm1510 = vcmp.ne.s32.totalorder %v1472, 0
        %vm1511 = vcmp.ne.s32.totalorder %v1479, 0
        %vm1512 = vcmp.ne.s32.totalorder %v1486, 0
        %vm1513 = vcmp.ne.s32.totalorder %v1493, 0
        %vm1514 = vcmp.ne.s32.totalorder %v1500, 0
        %vm1515 = vcmp.ne.s32.totalorder %v1507, 0
        %vm1516 = vcmp.lt.s32.totalorder %v1458, 0
        %vm1517 = vcmp.lt.s32.totalorder %v1465, 0
        %vm1518 = vcmp.lt.s32.totalorder %v1472, 0
        %vm1519 = vcmp.lt.s32.totalorder %v1479, 0
        %vm1520 = vcmp.lt.s32.totalorder %v1486, 0
        %vm1521 = vcmp.lt.s32.totalorder %v1493, 0
        %vm1522 = vcmp.lt.s32.totalorder %v1500, 0
        %vm1523 = vcmp.lt.s32.totalorder %v1507, 0
        %vm1524 = vmand %vm1516, %vm1508
        %vm1525 = vmand %vm1517, %vm1509
        %vm1526 = vmand %vm1518, %vm1510
        %vm1527 = vmand %vm1519, %vm1511
        %vm1528 = vmand %vm1520, %vm1512
        %vm1529 = vmand %vm1521, %vm1513
        %vm1530 = vmand %vm1522, %vm1514
        %vm1531 = vmand %vm1523, %vm1515
        %v1532 = vadd.s32 %v1458, 32
        %v1533 = vadd.s32 %v1465, 32
        %v1534 = vadd.s32 %v1472, 32
        %v1535 = vadd.s32 %v1479, 32
        %v1536 = vadd.s32 %v1486, 32
        %v1537 = vadd.s32 %v1493, 32
        %v1538 = vadd.s32 %v1500, 32
        %v1539 = vadd.s32 %v1507, 32
        %v1540 = vsel %vm1524, %v1532, %v1458
        %v1541 = vsel %vm1525, %v1533, %v1465
        %v1542 = vsel %vm1526, %v1534, %v1472
        %v1543 = vsel %vm1527, %v1535, %v1479
        %v1544 = vsel %vm1528, %v1536, %v1486
        %v1545 = vsel %vm1529, %v1537, %v1493
        %v1546 = vsel %vm1530, %v1538, %v1500
        %v1547 = vsel %vm1531, %v1539, %v1507
        %vm1548 = vcmp.ne.s32.totalorder %v1540, 31
        %vm1549 = vcmp.ne.s32.totalorder %v1541, 31
        %vm1550 = vcmp.ne.s32.totalorder %v1542, 31
        %vm1551 = vcmp.ne.s32.totalorder %v1543, 31
        %vm1552 = vcmp.ne.s32.totalorder %v1544, 31
        %vm1553 = vcmp.ne.s32.totalorder %v1545, 31
        %vm1554 = vcmp.ne.s32.totalorder %v1546, 31
        %vm1555 = vcmp.ne.s32.totalorder %v1547, 31
        %v1556 = vsel %vm1548, 1, 0
        %v1557 = vsel %vm1549, 1, 0
        %v1558 = vsel %vm1550, 1, 0
        %v1559 = vsel %vm1551, 1, 0
        %v1560 = vsel %vm1552, 1, 0
        %v1561 = vsel %vm1553, 1, 0
        %v1562 = vsel %vm1554, 1, 0
        %v1563 = vsel %vm1555, 1, 0
        %vm1564 = vcmp.eq.s32.totalorder %v1556, 1
        %vm1565 = vcmp.eq.s32.totalorder %v1557, 1
        %vm1566 = vcmp.eq.s32.totalorder %v1558, 1
        %vm1567 = vcmp.eq.s32.totalorder %v1559, 1
        %vm1568 = vcmp.eq.s32.totalorder %v1560, 1
        %vm1569 = vcmp.eq.s32.totalorder %v1561, 1
        %vm1570 = vcmp.eq.s32.totalorder %v1562, 1
        %vm1571 = vcmp.eq.s32.totalorder %v1563, 1
        %1576 = vst [vmem:[#allocation1] ss:$2 sm:$0xff] %v1448
        %s1577 = scalar_lea.vmem [#allocation1], 16
        %1578 = vst [vmem:[%s1577] ss:$2 sm:$0xff] %v1449
        %s1579 = scalar_lea.vmem [#allocation1], 32
        %1580 = vst [vmem:[%s1579] ss:$2 sm:$0xff] %v1450
        %s1581 = scalar_lea.vmem [#allocation1], 48
        %1582 = vst [vmem:[%s1581] ss:$2 sm:$0xff] %v1451
        %v1583 = vld.sshfl [vmem:[#allocation1] sm:$0xff pattern:$0x75316420]
        %v1584 = vld.sshfl [vmem:[#allocation1 + $0x8] sm:$0xff pattern:$0x75316420]
        %v1585 = vld.sshfl [vmem:[#allocation1 + $0x10] sm:$0xff pattern:$0x75316420]
        %v1586 = vld.sshfl [vmem:[#allocation1 + $0x18] sm:$0xff pattern:$0x75316420]
        %v1587 = vld.sshfl [vmem:[#allocation1 + $0x20] sm:$0xff pattern:$0x75316420]
        %v1588 = vld.sshfl [vmem:[#allocation1 + $0x28] sm:$0xff pattern:$0x75316420]
        %v1589 = vld.sshfl [vmem:[#allocation1 + $0x30] sm:$0xff pattern:$0x75316420]
        %v1590 = vld.sshfl [vmem:[#allocation1 + $0x38] sm:$0xff pattern:$0x75316420]
        %1591 = vrot.lane.b32.xlu0 %v1583, 127
        %v1592 = vpop.permute.xlu0 %1591
        %1593 = vrot.lane.b32.xlu0 %v1584, 127
        %v1594 = vpop.permute.xlu0 %1593
        %1595 = vrot.lane.b32.xlu0 %v1585, 127
        %v1596 = vpop.permute.xlu0 %1595
        %1597 = vrot.lane.b32.xlu0 %v1586, 127
        %v1598 = vpop.permute.xlu0 %1597
        %1599 = vrot.lane.b32.xlu0 %v1587, 127
        %v1600 = vpop.permute.xlu0 %1599
        %1601 = vrot.lane.b32.xlu0 %v1588, 127
        %v1602 = vpop.permute.xlu0 %1601
        %1603 = vrot.lane.b32.xlu0 %v1589, 127
        %v1604 = vpop.permute.xlu0 %1603
        %1605 = vrot.lane.b32.xlu0 %v1590, 127
        %v1606 = vpop.permute.xlu0 %1605
        %vm1607 = vcmask 1039360
        %v1608 = vsel %vm1607, %v1592, %v1594
        %v1609 = vsel %vm1607, %v1594, %v1596
        %v1610 = vsel %vm1607, %v1596, %v1598
        %v1611 = vsel %vm1607, %v1598, %v1600
        %v1612 = vsel %vm1607, %v1600, %v1602
        %v1613 = vsel %vm1607, %v1602, %v1604
        %v1614 = vsel %vm1607, %v1604, %v1606
        %v1623 = vsel %vm1564, %v1608, 0.0
        %v1624 = vsel %vm1565, %v1609, 0.0
        %v1625 = vsel %vm1566, %v1610, 0.0
        %v1626 = vsel %vm1567, %v1611, 0.0
        %v1627 = vsel %vm1568, %v1612, 0.0
        %v1628 = vsel %vm1569, %v1613, 0.0
        %v1629 = vsel %vm1570, %v1614, 0.0
        %v1630 = vsel %vm1571, %v1606, 0.0
        %v1639 = vrot.slane %v1623, 1
        %v1640 = vrot.slane %v1624, 1
        %v1641 = vrot.slane %v1625, 1
        %v1642 = vrot.slane %v1626, 1
        %v1643 = vrot.slane %v1627, 1
        %v1644 = vrot.slane %v1628, 1
        %v1645 = vrot.slane %v1629, 1
        %v1646 = vrot.slane %v1630, 1
        %1655 = vst [vmem:[#allocation2 + $0x40] sm:$0x80] %v1639
        %1656 = vst [vmem:[#allocation2 + $0x48] sm:$0x80] %v1640
        %1657 = vst [vmem:[#allocation2 + $0x50] sm:$0x80] %v1641
        %1658 = vst [vmem:[#allocation2 + $0x58] sm:$0x80] %v1642
        %1659 = vst [vmem:[#allocation2 + $0x60] sm:$0x80] %v1643
        %1660 = vst [vmem:[#allocation2 + $0x68] sm:$0x80] %v1644
        %1661 = vst [vmem:[#allocation2 + $0x70] sm:$0x80] %v1645
        %vm1662 = vcmask 1039367
        %1663 = vst.msk [vmem:[#allocation2 + $0x78] sm:$0x80] %vm1662, %v1646
        %1664 = vst [vmem:[#allocation2 + $0x80] sm:$0x3] %v1639
        %1665 = vst [vmem:[#allocation2 + $0x88] sm:$0x3] %v1640
        %1666 = vst [vmem:[#allocation2 + $0x90] sm:$0x3] %v1641
        %1667 = vst [vmem:[#allocation2 + $0x98] sm:$0x3] %v1642
        %1668 = vst [vmem:[#allocation2 + $0xa0] sm:$0x3] %v1643
        %1669 = vst [vmem:[#allocation2 + $0xa8] sm:$0x3] %v1644
        %1670 = vst [vmem:[#allocation2 + $0xb0] sm:$0x3] %v1645
        %vm1671 = vcmask 1033216
        %1672 = vst.msk [vmem:[#allocation2 + $0xb8] sm:$0x3] %vm1671, %v1646
        %vm1673 = vcmask 1048575
        %1674 = vst.msk [vmem:[#allocation2 + $0x78] sm:$0x80] %vm1673, 0.0
        %vm1675 = vcmask 1042424
        %1676 = vst.msk [vmem:[#allocation2 + $0xb8] sm:$0x3] %vm1675, 0.0
        %v1677 = vld [vmem:[%s643] sm:$0x77]
        %v1678 = vld [vmem:[%s643 + $0x8] sm:$0x77]
        %v1679 = vld [vmem:[%s643 + $0x10] sm:$0x77]
        %v1680 = vld [vmem:[%s643 + $0x18] sm:$0x77]
        %vm1681 = vcmp.ne.s32.totalorder %v1540, 0
        %vm1682 = vcmp.ne.s32.totalorder %v1541, 0
        %vm1683 = vcmp.ne.s32.totalorder %v1542, 0
        %vm1684 = vcmp.ne.s32.totalorder %v1543, 0
        %vm1685 = vcmp.ne.s32.totalorder %v1544, 0
        %vm1686 = vcmp.ne.s32.totalorder %v1545, 0
        %vm1687 = vcmp.ne.s32.totalorder %v1546, 0
        %vm1688 = vcmp.ne.s32.totalorder %v1547, 0
        %v1689 = vsel %vm1681, 1, 0
        %v1690 = vsel %vm1682, 1, 0
        %v1691 = vsel %vm1683, 1, 0
        %v1692 = vsel %vm1684, 1, 0
        %v1693 = vsel %vm1685, 1, 0
        %v1694 = vsel %vm1686, 1, 0
        %v1695 = vsel %vm1687, 1, 0
        %v1696 = vsel %vm1688, 1, 0
        %vm1697 = vcmp.eq.s32.totalorder %v1689, 1
        %vm1698 = vcmp.eq.s32.totalorder %v1690, 1
        %vm1699 = vcmp.eq.s32.totalorder %v1691, 1
        %vm1700 = vcmp.eq.s32.totalorder %v1692, 1
        %vm1701 = vcmp.eq.s32.totalorder %v1693, 1
        %vm1702 = vcmp.eq.s32.totalorder %v1694, 1
        %vm1703 = vcmp.eq.s32.totalorder %v1695, 1
        %vm1704 = vcmp.eq.s32.totalorder %v1696, 1
        %1709 = vst [vmem:[#allocation1] ss:$2 sm:$0xff] %v1677
        %s1710 = scalar_lea.vmem [#allocation1], 16
        %1711 = vst [vmem:[%s1710] ss:$2 sm:$0xff] %v1678
        %s1712 = scalar_lea.vmem [#allocation1], 32
        %1713 = vst [vmem:[%s1712] ss:$2 sm:$0xff] %v1679
        %s1714 = scalar_lea.vmem [#allocation1], 48
        %1715 = vst [vmem:[%s1714] ss:$2 sm:$0xff] %v1680
        %v1716 = vld.sshfl [vmem:[#allocation1] sm:$0xff pattern:$0x75316420]
        %v1717 = vld.sshfl [vmem:[#allocation1 + $0x8] sm:$0xff pattern:$0x75316420]
        %v1718 = vld.sshfl [vmem:[#allocation1 + $0x10] sm:$0xff pattern:$0x75316420]
        %v1719 = vld.sshfl [vmem:[#allocation1 + $0x18] sm:$0xff pattern:$0x75316420]
        %v1720 = vld.sshfl [vmem:[#allocation1 + $0x20] sm:$0xff pattern:$0x75316420]
        %v1721 = vld.sshfl [vmem:[#allocation1 + $0x28] sm:$0xff pattern:$0x75316420]
        %v1722 = vld.sshfl [vmem:[#allocation1 + $0x30] sm:$0xff pattern:$0x75316420]
        %v1723 = vld.sshfl [vmem:[#allocation1 + $0x38] sm:$0xff pattern:$0x75316420]
        %1724 = vrot.lane.b32.xlu0 %v1716, 97
        %v1725 = vpop.permute.xlu0 %1724
        %1726 = vrot.lane.b32.xlu0 %v1717, 97
        %v1727 = vpop.permute.xlu0 %1726
        %1728 = vrot.lane.b32.xlu0 %v1718, 97
        %v1729 = vpop.permute.xlu0 %1728
        %1730 = vrot.lane.b32.xlu0 %v1719, 97
        %v1731 = vpop.permute.xlu0 %1730
        %1732 = vrot.lane.b32.xlu0 %v1720, 97
        %v1733 = vpop.permute.xlu0 %1732
        %1734 = vrot.lane.b32.xlu0 %v1721, 97
        %v1735 = vpop.permute.xlu0 %1734
        %1736 = vrot.lane.b32.xlu0 %v1722, 97
        %v1737 = vpop.permute.xlu0 %1736
        %1738 = vrot.lane.b32.xlu0 %v1723, 97
        %v1739 = vpop.permute.xlu0 %1738
        %vm1740 = vcmask 793600
        %v1741 = vsel %vm1740, %v1725, %v1727
        %v1742 = vsel %vm1740, %v1727, %v1729
        %v1743 = vsel %vm1740, %v1729, %v1731
        %v1744 = vsel %vm1740, %v1731, %v1733
        %v1745 = vsel %vm1740, %v1733, %v1735
        %v1746 = vsel %vm1740, %v1735, %v1737
        %v1747 = vsel %vm1740, %v1737, %v1739
        %v1756 = vsel %vm1697, %v1741, 0.0
        %v1757 = vsel %vm1698, %v1742, 0.0
        %v1758 = vsel %vm1699, %v1743, 0.0
        %v1759 = vsel %vm1700, %v1744, 0.0
        %v1760 = vsel %vm1701, %v1745, 0.0
        %v1761 = vsel %vm1702, %v1746, 0.0
        %v1762 = vsel %vm1703, %v1747, 0.0
        %v1763 = vsel %vm1704, %v1739, 0.0
        %v1772 = vrot.slane %v1756, 6
        %v1773 = vrot.slane %v1757, 6
        %v1774 = vrot.slane %v1758, 6
        %v1775 = vrot.slane %v1759, 6
        %v1776 = vrot.slane %v1760, 6
        %v1777 = vrot.slane %v1761, 6
        %v1778 = vrot.slane %v1762, 6
        %v1779 = vrot.slane %v1763, 6
        %1788 = vst [vmem:[#allocation2 + $0x80] sm:$0x1c] %v1772
        %1789 = vst [vmem:[#allocation2 + $0x88] sm:$0x1c] %v1773
        %1790 = vst [vmem:[#allocation2 + $0x90] sm:$0x1c] %v1774
        %1791 = vst [vmem:[#allocation2 + $0x98] sm:$0x1c] %v1775
        %1792 = vst [vmem:[#allocation2 + $0xa0] sm:$0x1c] %v1776
        %1793 = vst [vmem:[#allocation2 + $0xa8] sm:$0x1c] %v1777
        %1794 = vst [vmem:[#allocation2 + $0xb0] sm:$0x1c] %v1778
        %vm1795 = vcmask 790530
        %1796 = vst.msk [vmem:[#allocation2 + $0xb8] sm:$0x1c] %vm1795, %v1779
        %vm1797 = vcmask 1045258
        %1798 = vst.msk [vmem:[#allocation2 + $0xb8] sm:$0x1c] %vm1797, 0.0
        %v1799 = vld [vmem:[%s643] sm:$0x77]
        %v1800 = vld [vmem:[%s643 + $0x8] sm:$0x77]
        %v1801 = vld [vmem:[%s643 + $0x10] sm:$0x77]
        %v1802 = vld [vmem:[%s643 + $0x18] sm:$0x77]
        %1807 = vst [vmem:[#allocation1] ss:$2 sm:$0xff] %v1799
        %s1808 = scalar_lea.vmem [#allocation1], 16
        %1809 = vst [vmem:[%s1808] ss:$2 sm:$0xff] %v1800
        %s1810 = scalar_lea.vmem [#allocation1], 32
        %1811 = vst [vmem:[%s1810] ss:$2 sm:$0xff] %v1801
        %s1812 = scalar_lea.vmem [#allocation1], 48
        %1813 = vst [vmem:[%s1812] ss:$2 sm:$0xff] %v1802
        %v1814 = vld.sshfl [vmem:[#allocation1] sm:$0xff pattern:$0x75316420]
        %v1815 = vld.sshfl [vmem:[#allocation1 + $0x8] sm:$0xff pattern:$0x75316420]
        %v1816 = vld.sshfl [vmem:[#allocation1 + $0x10] sm:$0xff pattern:$0x75316420]
        %v1817 = vld.sshfl [vmem:[#allocation1 + $0x18] sm:$0xff pattern:$0x75316420]
        %v1818 = vld.sshfl [vmem:[#allocation1 + $0x20] sm:$0xff pattern:$0x75316420]
        %v1819 = vld.sshfl [vmem:[#allocation1 + $0x28] sm:$0xff pattern:$0x75316420]
        %v1820 = vld.sshfl [vmem:[#allocation1 + $0x30] sm:$0xff pattern:$0x75316420]
        %v1821 = vld.sshfl [vmem:[#allocation1 + $0x38] sm:$0xff pattern:$0x75316420]
        %v1822 = vrot.slane %v1814, 3
        %v1823 = vrot.slane %v1815, 3
        %v1824 = vrot.slane %v1816, 3
        %v1825 = vrot.slane %v1817, 3
        %v1826 = vrot.slane %v1818, 3
        %v1827 = vrot.slane %v1819, 3
        %v1828 = vrot.slane %v1820, 3
        %v1829 = vrot.slane %v1821, 3
        %1830 = vrot.lane.b32.xlu0 %v1822, 96
        %v1831 = vpop.permute.xlu0 %1830
        %1832 = vrot.lane.b32.xlu0 %v1823, 96
        %v1833 = vpop.permute.xlu0 %1832
        %1834 = vrot.lane.b32.xlu0 %v1824, 96
        %v1835 = vpop.permute.xlu0 %1834
        %1836 = vrot.lane.b32.xlu0 %v1825, 96
        %v1837 = vpop.permute.xlu0 %1836
        %1838 = vrot.lane.b32.xlu0 %v1826, 96
        %v1839 = vpop.permute.xlu0 %1838
        %1840 = vrot.lane.b32.xlu0 %v1827, 96
        %v1841 = vpop.permute.xlu0 %1840
        %1842 = vrot.lane.b32.xlu0 %v1828, 96
        %v1843 = vpop.permute.xlu0 %1842
        %1844 = vrot.lane.b32.xlu0 %v1829, 96
        %v1845 = vpop.permute.xlu0 %1844
        %vm1846 = vcmask 785408
        %v1847 = vsel %vm1846, %v1831, %v1833
        %v1848 = vsel %vm1846, %v1833, %v1835
        %v1849 = vsel %vm1846, %v1835, %v1837
        %v1850 = vsel %vm1846, %v1837, %v1839
        %v1851 = vsel %vm1846, %v1839, %v1841
        %v1852 = vsel %vm1846, %v1841, %v1843
        %v1853 = vsel %vm1846, %v1843, %v1845
        %1862 = vst [vmem:[#allocation2 + $0x80] sm:$0xe0] %v1847
        %1863 = vst [vmem:[#allocation2 + $0x88] sm:$0xe0] %v1848
        %1864 = vst [vmem:[#allocation2 + $0x90] sm:$0xe0] %v1849
        %1865 = vst [vmem:[#allocation2 + $0x98] sm:$0xe0] %v1850
        %1866 = vst [vmem:[#allocation2 + $0xa0] sm:$0xe0] %v1851
        %1867 = vst [vmem:[#allocation2 + $0xa8] sm:$0xe0] %v1852
        %1868 = vst [vmem:[#allocation2 + $0xb0] sm:$0xe0] %v1853
        %vm1869 = vcmask 785413
        %1870 = vst.msk [vmem:[#allocation2 + $0xb8] sm:$0xe0] %vm1869, %v1845
        %vm1871 = vcmask 1048325
        %1872 = vst.msk [vmem:[#allocation2 + $0xb8] sm:$0xe0] %vm1871, 0.0
        %v1873 = vld [vmem:[%s643] sm:$0x77]
        %v1874 = vld [vmem:[%s643 + $0x8] sm:$0x77]
        %v1875 = vld [vmem:[%s643 + $0x10] sm:$0x77]
        %v1876 = vld [vmem:[%s643 + $0x18] sm:$0x77]
        %1881 = vst [vmem:[#allocation1] ss:$2 sm:$0xff] %v1873
        %s1882 = scalar_lea.vmem [#allocation1], 16
        %1883 = vst [vmem:[%s1882] ss:$2 sm:$0xff] %v1874
        %s1884 = scalar_lea.vmem [#allocation1], 32
        %1885 = vst [vmem:[%s1884] ss:$2 sm:$0xff] %v1875
        %s1886 = scalar_lea.vmem [#allocation1], 48
        %1887 = vst [vmem:[%s1886] ss:$2 sm:$0xff] %v1876
        %v1888 = vld.sshfl [vmem:[#allocation1] sm:$0xff pattern:$0x75316420]
        %v1889 = vld.sshfl [vmem:[#allocation1 + $0x8] sm:$0xff pattern:$0x75316420]
        %v1890 = vld.sshfl [vmem:[#allocation1 + $0x10] sm:$0xff pattern:$0x75316420]
        %v1891 = vld.sshfl [vmem:[#allocation1 + $0x18] sm:$0xff pattern:$0x75316420]
        %v1892 = vld.sshfl [vmem:[#allocation1 + $0x20] sm:$0xff pattern:$0x75316420]
        %v1893 = vld.sshfl [vmem:[#allocation1 + $0x28] sm:$0xff pattern:$0x75316420]
        %v1894 = vld.sshfl [vmem:[#allocation1 + $0x30] sm:$0xff pattern:$0x75316420]
        %v1895 = vld.sshfl [vmem:[#allocation1 + $0x38] sm:$0xff pattern:$0x75316420]
        %1896 = vrot.lane.b32.xlu0 %v1888, 95
        %v1897 = vpop.permute.xlu0 %1896
        %1898 = vrot.lane.b32.xlu0 %v1889, 95
        %v1899 = vpop.permute.xlu0 %1898
        %1900 = vrot.lane.b32.xlu0 %v1890, 95
        %v1901 = vpop.permute.xlu0 %1900
        %1902 = vrot.lane.b32.xlu0 %v1891, 95
        %v1903 = vpop.permute.xlu0 %1902
        %1904 = vrot.lane.b32.xlu0 %v1892, 95
        %v1905 = vpop.permute.xlu0 %1904
        %1906 = vrot.lane.b32.xlu0 %v1893, 95
        %v1907 = vpop.permute.xlu0 %1906
        %1908 = vrot.lane.b32.xlu0 %v1894, 95
        %v1909 = vpop.permute.xlu0 %1908
        %1910 = vrot.lane.b32.xlu0 %v1895, 95
        %v1911 = vpop.permute.xlu0 %1910
        %vm1912 = vcmask 777216
        %v1913 = vsel %vm1912, %v1897, %v1899
        %v1914 = vsel %vm1912, %v1899, %v1901
        %v1915 = vsel %vm1912, %v1901, %v1903
        %v1916 = vsel %vm1912, %v1903, %v1905
        %v1917 = vsel %vm1912, %v1905, %v1907
        %v1918 = vsel %vm1912, %v1907, %v1909
        %v1919 = vsel %vm1912, %v1909, %v1911
        %v1928 = vsel %vm1564, %v1913, 0.0
        %v1929 = vsel %vm1565, %v1914, 0.0
        %v1930 = vsel %vm1566, %v1915, 0.0
        %v1931 = vsel %vm1567, %v1916, 0.0
        %v1932 = vsel %vm1568, %v1917, 0.0
        %v1933 = vsel %vm1569, %v1918, 0.0
        %v1934 = vsel %vm1570, %v1919, 0.0
        %v1935 = vsel %vm1571, %v1911, 0.0
        %1936 = vst [vmem:[#allocation2 + $0xc0] sm:$0x7] %v1928
        %1937 = vst [vmem:[#allocation2 + $0xc8] sm:$0x7] %v1929
        %1938 = vst [vmem:[#allocation2 + $0xd0] sm:$0x7] %v1930
        %1939 = vst [vmem:[#allocation2 + $0xd8] sm:$0x7] %v1931
        %1940 = vst [vmem:[#allocation2 + $0xe0] sm:$0x7] %v1932
        %1941 = vst [vmem:[#allocation2 + $0xe8] sm:$0x7] %v1933
        %1942 = vst [vmem:[#allocation2 + $0xf0] sm:$0x7] %v1934
        %vm1943 = vcmask 772096
        %1944 = vst.msk [vmem:[#allocation2 + $0xf8] sm:$0x7] %vm1943, %v1935
        %vm1945 = vcmask 1043192
        %1946 = vst.msk [vmem:[#allocation2 + $0xf8] sm:$0x7] %vm1945, 0.0
        %v1947 = vld [vmem:[#allocation2] sm:$0xff]
        %v1948 = vld [vmem:[#allocation2 + $0x8] sm:$0xff]
        %v1949 = vld [vmem:[#allocation2 + $0x10] sm:$0xff]
        %v1950 = vld [vmem:[#allocation2 + $0x18] sm:$0xff]
        %v1951 = vld [vmem:[#allocation2 + $0x20] sm:$0xff]
        %v1952 = vld [vmem:[#allocation2 + $0x28] sm:$0xff]
        %v1953 = vld [vmem:[#allocation2 + $0x30] sm:$0xff]
        %v1954 = vld [vmem:[#allocation2 + $0x38] sm:$0xff]
        %v1955 = vld [vmem:[#allocation2 + $0x40] sm:$0xff]
        %v1956 = vld [vmem:[#allocation2 + $0x48] sm:$0xff]
        %v1957 = vld [vmem:[#allocation2 + $0x50] sm:$0xff]
        %v1958 = vld [vmem:[#allocation2 + $0x58] sm:$0xff]
        %v1959 = vld [vmem:[#allocation2 + $0x60] sm:$0xff]
        %v1960 = vld [vmem:[#allocation2 + $0x68] sm:$0xff]
        %v1961 = vld [vmem:[#allocation2 + $0x70] sm:$0xff]
        %v1962 = vld [vmem:[#allocation2 + $0x78] sm:$0xff]
        %v1963 = vld [vmem:[#allocation2 + $0x80] sm:$0xff]
        %v1964 = vld [vmem:[#allocation2 + $0x88] sm:$0xff]
        %v1965 = vld [vmem:[#allocation2 + $0x90] sm:$0xff]
        %v1966 = vld [vmem:[#allocation2 + $0x98] sm:$0xff]
        %v1967 = vld [vmem:[#allocation2 + $0xa0] sm:$0xff]
        %v1968 = vld [vmem:[#allocation2 + $0xa8] sm:$0xff]
        %v1969 = vld [vmem:[#allocation2 + $0xb0] sm:$0xff]
        %v1970 = vld [vmem:[#allocation2 + $0xb8] sm:$0xff]
        %v1971 = vld [vmem:[#allocation2 + $0xc0] sm:$0x7]
        %v1972 = vld [vmem:[#allocation2 + $0xc8] sm:$0x7]
        %v1973 = vld [vmem:[#allocation2 + $0xd0] sm:$0x7]
        %v1974 = vld [vmem:[#allocation2 + $0xd8] sm:$0x7]
        %v1975 = vld [vmem:[#allocation2 + $0xe0] sm:$0x7]
        %v1976 = vld [vmem:[#allocation2 + $0xe8] sm:$0x7]
        %v1977 = vld [vmem:[#allocation2 + $0xf0] sm:$0x7]
        %v1978 = vld [vmem:[#allocation2 + $0xf8] sm:$0x7]
        %v1979 = vld [vmem:[%s1] sm:$0xff]
        %v1980 = vld [vmem:[%s2] sm:$0xff]
        %1982 = vset.pattern.permute.xlu0 0
        %1983 = vperm.xlu0 %1982, %v1980
        %v1984 = vpop.permute.xlu0 %1983
        %vm1986 = vcmask 220160
        %v1988 = vsel %vm1986, %v1979, 0
        %vm1990 = vcmask 1042432
        %v1992 = vsel %vm1990, %v1971, 0
        %v1995 = vsel %vm1990, %v1972, 0
        %v1998 = vsel %vm1990, %v1973, 0
        %v2001 = vsel %vm1990, %v1974, 0
        %v2004 = vsel %vm1990, %v1975, 0
        %v2007 = vsel %vm1990, %v1976, 0
        %v2010 = vsel %vm1990, %v1977, 0
        %v2013 = vsel %vm1990, %v1978, 0
        %2015 = vmatpush.msra.mxu0 0.0
        %2016 = vmatpush.msra.mxu0 0.0
        %2017 = vmatpush.msra.mxu0 0.0
        %2018 = vmatpush.msra.mxu0 0.0
        %2019 = vmatpush.msra.mxu0 0.0
        %2020 = vmatpush.msra.mxu0 0.0
        %2021 = vmatpush.msra.mxu0 0.0
        %2022 = vmatpush.msra.mxu0 0.0
        %2023 = vmatpush.msra.mxu0 0.0
        %2024 = vmatpush.msra.mxu0 0.0
        %2025 = vmatpush.msra.mxu0 0.0
        %2026 = vmatpush.msra.mxu0 0.0
        %2027 = vmatpush.msra.mxu0 %v1992
        %2028 = vmatpush.msra.mxu0 %v1963
        %2029 = vmatpush.msra.mxu0 %v1955
        %2030 = vmatpush.msra.mxu0 %v1947
        %2031 = vmatmul.f32.gmra.mxu0 %v1988
        %v2032 = vpop.f32.mrf.mxu0
        %v2033 = vadd.f32 %v1984, %v2032
        %2034 = vdwg.mxu0
        %2035 = vmatpush.msra.mxu0 0.0
        %2036 = vmatpush.msra.mxu0 0.0
        %2037 = vmatpush.msra.mxu0 0.0
        %2038 = vmatpush.msra.mxu0 0.0
        %2039 = vmatpush.msra.mxu0 0.0
        %2040 = vmatpush.msra.mxu0 0.0
        %2041 = vmatpush.msra.mxu0 0.0
        %2042 = vmatpush.msra.mxu0 0.0
        %2043 = vmatpush.msra.mxu0 0.0
        %2044 = vmatpush.msra.mxu0 0.0
        %2045 = vmatpush.msra.mxu0 0.0
        %2046 = vmatpush.msra.mxu0 0.0
        %2047 = vmatpush.msra.mxu0 %v1995
        %2048 = vmatpush.msra.mxu0 %v1964
        %2049 = vmatpush.msra.mxu0 %v1956
        %2050 = vmatpush.msra.mxu0 %v1948
        %2051 = vmatmul.f32.gmra.mxu0 %v1988
        %v2052 = vpop.f32.mrf.mxu0
        %v2053 = vadd.f32 %v1984, %v2052
        %2054 = vdwg.mxu0
        %2055 = vmatpush.msra.mxu0 0.0
        %2056 = vmatpush.msra.mxu0 0.0
        %2057 = vmatpush.msra.mxu0 0.0
        %2058 = vmatpush.msra.mxu0 0.0
        %2059 = vmatpush.msra.mxu0 0.0
        %2060 = vmatpush.msra.mxu0 0.0
        %2061 = vmatpush.msra.mxu0 0.0
        %2062 = vmatpush.msra.mxu0 0.0
        %2063 = vmatpush.msra.mxu0 0.0
        %2064 = vmatpush.msra.mxu0 0.0
        %2065 = vmatpush.msra.mxu0 0.0
        %2066 = vmatpush.msra.mxu0 0.0
        %2067 = vmatpush.msra.mxu0 %v1998
        %2068 = vmatpush.msra.mxu0 %v1965
        %2069 = vmatpush.msra.mxu0 %v1957
        %2070 = vmatpush.msra.mxu0 %v1949
        %2071 = vmatmul.f32.gmra.mxu0 %v1988
        %v2072 = vpop.f32.mrf.mxu0
        %v2073 = vadd.f32 %v1984, %v2072
        %2074 = vdwg.mxu0
        %2075 = vmatpush.msra.mxu0 0.0
        %2076 = vmatpush.msra.mxu0 0.0
        %2077 = vmatpush.msra.mxu0 0.0
        %2078 = vmatpush.msra.mxu0 0.0
        %2079 = vmatpush.msra.mxu0 0.0
        %2080 = vmatpush.msra.mxu0 0.0
        %2081 = vmatpush.msra.mxu0 0.0
        %2082 = vmatpush.msra.mxu0 0.0
        %2083 = vmatpush.msra.mxu0 0.0
        %2084 = vmatpush.msra.mxu0 0.0
        %2085 = vmatpush.msra.mxu0 0.0
        %2086 = vmatpush.msra.mxu0 0.0
        %2087 = vmatpush.msra.mxu0 %v2001
        %2088 = vmatpush.msra.mxu0 %v1966
        %2089 = vmatpush.msra.mxu0 %v1958
        %2090 = vmatpush.msra.mxu0 %v1950
        %2091 = vmatmul.f32.gmra.mxu0 %v1988
        %v2092 = vpop.f32.mrf.mxu0
        %v2093 = vadd.f32 %v1984, %v2092
        %2094 = vdwg.mxu0
        %2095 = vmatpush.msra.mxu0 0.0
        %2096 = vmatpush.msra.mxu0 0.0
        %2097 = vmatpush.msra.mxu0 0.0
        %2098 = vmatpush.msra.mxu0 0.0
        %2099 = vmatpush.msra.mxu0 0.0
        %2100 = vmatpush.msra.mxu0 0.0
        %2101 = vmatpush.msra.mxu0 0.0
        %2102 = vmatpush.msra.mxu0 0.0
        %2103 = vmatpush.msra.mxu0 0.0
        %2104 = vmatpush.msra.mxu0 0.0
        %2105 = vmatpush.msra.mxu0 0.0
        %2106 = vmatpush.msra.mxu0 0.0
        %2107 = vmatpush.msra.mxu0 %v2004
        %2108 = vmatpush.msra.mxu0 %v1967
        %2109 = vmatpush.msra.mxu0 %v1959
        %2110 = vmatpush.msra.mxu0 %v1951
        %2111 = vmatmul.f32.gmra.mxu0 %v1988
        %v2112 = vpop.f32.mrf.mxu0
        %v2113 = vadd.f32 %v1984, %v2112
        %2114 = vdwg.mxu0
        %2115 = vmatpush.msra.mxu0 0.0
        %2116 = vmatpush.msra.mxu0 0.0
        %2117 = vmatpush.msra.mxu0 0.0
        %2118 = vmatpush.msra.mxu0 0.0
        %2119 = vmatpush.msra.mxu0 0.0
        %2120 = vmatpush.msra.mxu0 0.0
        %2121 = vmatpush.msra.mxu0 0.0
        %2122 = vmatpush.msra.mxu0 0.0
        %2123 = vmatpush.msra.mxu0 0.0
        %2124 = vmatpush.msra.mxu0 0.0
        %2125 = vmatpush.msra.mxu0 0.0
        %2126 = vmatpush.msra.mxu0 0.0
        %2127 = vmatpush.msra.mxu0 %v2007
        %2128 = vmatpush.msra.mxu0 %v1968
        %2129 = vmatpush.msra.mxu0 %v1960
        %2130 = vmatpush.msra.mxu0 %v1952
        %2131 = vmatmul.f32.gmra.mxu0 %v1988
        %v2132 = vpop.f32.mrf.mxu0
        %v2133 = vadd.f32 %v1984, %v2132
        %2134 = vdwg.mxu0
        %2135 = vmatpush.msra.mxu0 0.0
        %2136 = vmatpush.msra.mxu0 0.0
        %2137 = vmatpush.msra.mxu0 0.0
        %2138 = vmatpush.msra.mxu0 0.0
        %2139 = vmatpush.msra.mxu0 0.0
        %2140 = vmatpush.msra.mxu0 0.0
        %2141 = vmatpush.msra.mxu0 0.0
        %2142 = vmatpush.msra.mxu0 0.0
        %2143 = vmatpush.msra.mxu0 0.0
        %2144 = vmatpush.msra.mxu0 0.0
        %2145 = vmatpush.msra.mxu0 0.0
        %2146 = vmatpush.msra.mxu0 0.0
        %2147 = vmatpush.msra.mxu0 %v2010
        %2148 = vmatpush.msra.mxu0 %v1969
        %2149 = vmatpush.msra.mxu0 %v1961
        %2150 = vmatpush.msra.mxu0 %v1953
        %2151 = vmatmul.f32.gmra.mxu0 %v1988
        %v2152 = vpop.f32.mrf.mxu0
        %v2153 = vadd.f32 %v1984, %v2152
        %2154 = vdwg.mxu0
        %2155 = vmatpush.msra.mxu0 0.0
        %2156 = vmatpush.msra.mxu0 0.0
        %2157 = vmatpush.msra.mxu0 0.0
        %2158 = vmatpush.msra.mxu0 0.0
        %2159 = vmatpush.msra.mxu0 0.0
        %2160 = vmatpush.msra.mxu0 0.0
        %2161 = vmatpush.msra.mxu0 0.0
        %2162 = vmatpush.msra.mxu0 0.0
        %2163 = vmatpush.msra.mxu0 0.0
        %2164 = vmatpush.msra.mxu0 0.0
        %2165 = vmatpush.msra.mxu0 0.0
        %2166 = vmatpush.msra.mxu0 0.0
        %2167 = vmatpush.msra.mxu0 %v2013
        %2168 = vmatpush.msra.mxu0 %v1970
        %2169 = vmatpush.msra.mxu0 %v1962
        %2170 = vmatpush.msra.mxu0 %v1954
        %2171 = vmatmul.f32.gmra.mxu0 %v1988
        %v2172 = vpop.f32.mrf.mxu0
        %v2173 = vadd.f32 %v1984, %v2172
        %2174 = vdwg.mxu0
        %v2175 = vmax.f32 %v2033, 0.0
        %v2176 = vmax.f32 %v2053, 0.0
        %v2177 = vmax.f32 %v2073, 0.0
        %v2178 = vmax.f32 %v2093, 0.0
        %v2179 = vmax.f32 %v2113, 0.0
        %v2180 = vmax.f32 %v2133, 0.0
        %v2181 = vmax.f32 %v2153, 0.0
        %v2182 = vmax.f32 %v2173, 0.0
        %2183 = vst [vmem:[#allocation3] sm:$0xff] %v2175
        %2184 = vst [vmem:[#allocation3 + $0x8] sm:$0xff] %v2176
        %2185 = vst [vmem:[#allocation3 + $0x10] sm:$0xff] %v2177
        %2186 = vst [vmem:[#allocation3 + $0x18] sm:$0xff] %v2178
        %2187 = vst [vmem:[#allocation3 + $0x20] sm:$0xff] %v2179
        %2188 = vst [vmem:[#allocation3 + $0x28] sm:$0xff] %v2180
        %2189 = vst [vmem:[#allocation3 + $0x30] sm:$0xff] %v2181
        %2190 = vst [vmem:[#allocation3 + $0x38] sm:$0xff] %v2182
        %v2191 = vld [vmem:[#allocation3] sm:$0xff]
        %v2192 = vld [vmem:[#allocation3 + $0x8] sm:$0xff]
        %v2193 = vld [vmem:[#allocation3 + $0x10] sm:$0xff]
        %v2194 = vld [vmem:[#allocation3 + $0x18] sm:$0xff]
        %v2195 = vld [vmem:[#allocation3 + $0x20] sm:$0xff]
        %v2196 = vld [vmem:[#allocation3 + $0x28] sm:$0xff]
        %v2197 = vld [vmem:[#allocation3 + $0x30] sm:$0xff]
        %v2198 = vld [vmem:[#allocation3 + $0x38] sm:$0xff]
        %v2199 = vsel %vm777, %v2191, 0.0
        %v2200 = vsel %vm778, %v2192, 0.0
        %v2201 = vsel %vm779, %v2193, 0.0
        %v2202 = vsel %vm780, %v2194, 0.0
        %v2203 = vsel %vm781, %v2195, 0.0
        %v2204 = vsel %vm782, %v2196, 0.0
        %v2205 = vsel %vm783, %v2197, 0.0
        %v2206 = vsel %vm784, %v2198, 0.0
        %2215 = vrot.lane.b32.xlu0 %v2199, 33
        %v2216 = vpop.permute.xlu0 %2215
        %2217 = vrot.lane.b32.xlu0 %v2200, 33
        %v2218 = vpop.permute.xlu0 %2217
        %2219 = vrot.lane.b32.xlu0 %v2201, 33
        %v2220 = vpop.permute.xlu0 %2219
        %2221 = vrot.lane.b32.xlu0 %v2202, 33
        %v2222 = vpop.permute.xlu0 %2221
        %2223 = vrot.lane.b32.xlu0 %v2203, 33
        %v2224 = vpop.permute.xlu0 %2223
        %2225 = vrot.lane.b32.xlu0 %v2204, 33
        %v2226 = vpop.permute.xlu0 %2225
        %2227 = vrot.lane.b32.xlu0 %v2205, 33
        %v2228 = vpop.permute.xlu0 %2227
        %2229 = vrot.lane.b32.xlu0 %v2206, 33
        %v2230 = vpop.permute.xlu0 %2229
        %v2231 = vsel %vm844, %v2216, %v2218
        %v2232 = vsel %vm844, %v2218, %v2220
        %v2233 = vsel %vm844, %v2220, %v2222
        %v2234 = vsel %vm844, %v2222, %v2224
        %v2235 = vsel %vm844, %v2224, %v2226
        %v2236 = vsel %vm844, %v2226, %v2228
        %v2237 = vsel %vm844, %v2228, %v2230
        %vm2246 = vcmask 1047816
        %2247 = vst.msk [vmem:[#allocation2] sm:$0xff] %vm2246, %v2216
        %2248 = vst [vmem:[#allocation2 + $0x8] sm:$0xff] %v2231
        %2249 = vst [vmem:[#allocation2 + $0x10] sm:$0xff] %v2232
        %2250 = vst [vmem:[#allocation2 + $0x18] sm:$0xff] %v2233
        %2251 = vst [vmem:[#allocation2 + $0x20] sm:$0xff] %v2234
        %2252 = vst [vmem:[#allocation2 + $0x28] sm:$0xff] %v2235
        %2253 = vst [vmem:[#allocation2 + $0x30] sm:$0xff] %v2236
        %2254 = vst [vmem:[#allocation2 + $0x38] sm:$0xff] %v2237
        %2255 = vst.msk [vmem:[#allocation2] sm:$0xff] %vm844, 0.0
        %v2256 = vld [vmem:[#allocation3] sm:$0xff]
        %v2257 = vld [vmem:[#allocation3 + $0x8] sm:$0xff]
        %v2258 = vld [vmem:[#allocation3 + $0x10] sm:$0xff]
        %v2259 = vld [vmem:[#allocation3 + $0x18] sm:$0xff]
        %v2260 = vld [vmem:[#allocation3 + $0x20] sm:$0xff]
        %v2261 = vld [vmem:[#allocation3 + $0x28] sm:$0xff]
        %v2262 = vld [vmem:[#allocation3 + $0x30] sm:$0xff]
        %v2263 = vld [vmem:[#allocation3 + $0x38] sm:$0xff]
        %2272 = vrot.lane.b32.xlu0 %v2256, 32
        %v2273 = vpop.permute.xlu0 %2272
        %2274 = vrot.lane.b32.xlu0 %v2257, 32
        %v2275 = vpop.permute.xlu0 %2274
        %2276 = vrot.lane.b32.xlu0 %v2258, 32
        %v2277 = vpop.permute.xlu0 %2276
        %2278 = vrot.lane.b32.xlu0 %v2259, 32
        %v2279 = vpop.permute.xlu0 %2278
        %2280 = vrot.lane.b32.xlu0 %v2260, 32
        %v2281 = vpop.permute.xlu0 %2280
        %2282 = vrot.lane.b32.xlu0 %v2261, 32
        %v2283 = vpop.permute.xlu0 %2282
        %2284 = vrot.lane.b32.xlu0 %v2262, 32
        %v2285 = vpop.permute.xlu0 %2284
        %2286 = vrot.lane.b32.xlu0 %v2263, 32
        %v2287 = vpop.permute.xlu0 %2286
        %v2288 = vsel %vm918, %v2273, %v2275
        %v2289 = vsel %vm918, %v2275, %v2277
        %v2290 = vsel %vm918, %v2277, %v2279
        %v2291 = vsel %vm918, %v2279, %v2281
        %v2292 = vsel %vm918, %v2281, %v2283
        %v2293 = vsel %vm918, %v2283, %v2285
        %v2294 = vsel %vm918, %v2285, %v2287
        %vm2303 = vcmask 1047808
        %2304 = vst.msk [vmem:[#allocation2 + $0x40] sm:$0xff] %vm2303, %v2273
        %2305 = vst [vmem:[#allocation2 + $0x48] sm:$0xff] %v2288
        %2306 = vst [vmem:[#allocation2 + $0x50] sm:$0xff] %v2289
        %2307 = vst [vmem:[#allocation2 + $0x58] sm:$0xff] %v2290
        %2308 = vst [vmem:[#allocation2 + $0x60] sm:$0xff] %v2291
        %2309 = vst [vmem:[#allocation2 + $0x68] sm:$0xff] %v2292
        %2310 = vst [vmem:[#allocation2 + $0x70] sm:$0xff] %v2293
        %2311 = vst [vmem:[#allocation2 + $0x78] sm:$0xff] %v2294
        %2312 = vst.msk [vmem:[#allocation2 + $0x40] sm:$0xff] %vm918, 0.0
        %v2313 = vld [vmem:[#allocation3] sm:$0xff]
        %v2314 = vld [vmem:[#allocation3 + $0x8] sm:$0xff]
        %v2315 = vld [vmem:[#allocation3 + $0x10] sm:$0xff]
        %v2316 = vld [vmem:[#allocation3 + $0x18] sm:$0xff]
        %v2317 = vld [vmem:[#allocation3 + $0x20] sm:$0xff]
        %v2318 = vld [vmem:[#allocation3 + $0x28] sm:$0xff]
        %v2319 = vld [vmem:[#allocation3 + $0x30] sm:$0xff]
        %v2320 = vld [vmem:[#allocation3 + $0x38] sm:$0xff]
        %v2321 = vsel %vm1069, %v2313, 0.0
        %v2322 = vsel %vm1070, %v2314, 0.0
        %v2323 = vsel %vm1071, %v2315, 0.0
        %v2324 = vsel %vm1072, %v2316, 0.0
        %v2325 = vsel %vm1073, %v2317, 0.0
        %v2326 = vsel %vm1074, %v2318, 0.0
        %v2327 = vsel %vm1075, %v2319, 0.0
        %v2328 = vsel %vm1076, %v2320, 0.0
        %2337 = vrot.lane.b32.xlu0 %v2321, 31
        %v2338 = vpop.permute.xlu0 %2337
        %2339 = vrot.lane.b32.xlu0 %v2322, 31
        %v2340 = vpop.permute.xlu0 %2339
        %2341 = vrot.lane.b32.xlu0 %v2323, 31
        %v2342 = vpop.permute.xlu0 %2341
        %2343 = vrot.lane.b32.xlu0 %v2324, 31
        %v2344 = vpop.permute.xlu0 %2343
        %2345 = vrot.lane.b32.xlu0 %v2325, 31
        %v2346 = vpop.permute.xlu0 %2345
        %2347 = vrot.lane.b32.xlu0 %v2326, 31
        %v2348 = vpop.permute.xlu0 %2347
        %2349 = vrot.lane.b32.xlu0 %v2327, 31
        %v2350 = vpop.permute.xlu0 %2349
        %2351 = vrot.lane.b32.xlu0 %v2328, 31
        %v2352 = vpop.permute.xlu0 %2351
        %v2353 = vsel %vm1144, %v2338, %v2340
        %v2354 = vsel %vm1144, %v2340, %v2342
        %v2355 = vsel %vm1144, %v2342, %v2344
        %v2356 = vsel %vm1144, %v2344, %v2346
        %v2357 = vsel %vm1144, %v2346, %v2348
        %v2358 = vsel %vm1144, %v2348, %v2350
        %v2359 = vsel %vm1144, %v2350, %v2352
        %vm2368 = vcmask 1047800
        %2369 = vst.msk [vmem:[#allocation2 + $0x80] sm:$0xff] %vm2368, %v2338
        %2370 = vst [vmem:[#allocation2 + $0x88] sm:$0xff] %v2353
        %2371 = vst [vmem:[#allocation2 + $0x90] sm:$0xff] %v2354
        %2372 = vst [vmem:[#allocation2 + $0x98] sm:$0xff] %v2355
        %2373 = vst [vmem:[#allocation2 + $0xa0] sm:$0xff] %v2356
        %2374 = vst [vmem:[#allocation2 + $0xa8] sm:$0xff] %v2357
        %2375 = vst [vmem:[#allocation2 + $0xb0] sm:$0xff] %v2358
        %2376 = vst [vmem:[#allocation2 + $0xb8] sm:$0xff] %v2359
        %2377 = vst.msk [vmem:[#allocation2 + $0x80] sm:$0xff] %vm1144, 0.0
        %v2378 = vld [vmem:[#allocation3] sm:$0xff]
        %v2379 = vld [vmem:[#allocation3 + $0x8] sm:$0xff]
        %v2380 = vld [vmem:[#allocation3 + $0x10] sm:$0xff]
        %v2381 = vld [vmem:[#allocation3 + $0x18] sm:$0xff]
        %v2382 = vld [vmem:[#allocation3 + $0x20] sm:$0xff]
        %v2383 = vld [vmem:[#allocation3 + $0x28] sm:$0xff]
        %v2384 = vld [vmem:[#allocation3 + $0x30] sm:$0xff]
        %v2385 = vld [vmem:[#allocation3 + $0x38] sm:$0xff]
        %v2386 = vsel %vm1306, %v2378, 0.0
        %v2387 = vsel %vm1307, %v2379, 0.0
        %v2388 = vsel %vm1308, %v2380, 0.0
        %v2389 = vsel %vm1309, %v2381, 0.0
        %v2390 = vsel %vm1310, %v2382, 0.0
        %v2391 = vsel %vm1311, %v2383, 0.0
        %v2392 = vsel %vm1312, %v2384, 0.0
        %v2393 = vsel %vm1313, %v2385, 0.0
        %2402 = vrot.lane.b32.xlu0 %v2386, 1
        %v2403 = vpop.permute.xlu0 %2402
        %2404 = vrot.lane.b32.xlu0 %v2387, 1
        %v2405 = vpop.permute.xlu0 %2404
        %2406 = vrot.lane.b32.xlu0 %v2388, 1
        %v2407 = vpop.permute.xlu0 %2406
        %2408 = vrot.lane.b32.xlu0 %v2389, 1
        %v2409 = vpop.permute.xlu0 %2408
        %2410 = vrot.lane.b32.xlu0 %v2390, 1
        %v2411 = vpop.permute.xlu0 %2410
        %2412 = vrot.lane.b32.xlu0 %v2391, 1
        %v2413 = vpop.permute.xlu0 %2412
        %2414 = vrot.lane.b32.xlu0 %v2392, 1
        %v2415 = vpop.permute.xlu0 %2414
        %2416 = vrot.lane.b32.xlu0 %v2393, 1
        %v2417 = vpop.permute.xlu0 %2416
        %v2418 = vsel %vm1381, %v2403, %v2405
        %v2419 = vsel %vm1381, %v2405, %v2407
        %v2420 = vsel %vm1381, %v2407, %v2409
        %v2421 = vsel %vm1381, %v2409, %v2411
        %v2422 = vsel %vm1381, %v2411, %v2413
        %v2423 = vsel %vm1381, %v2413, %v2415
        %v2424 = vsel %vm1381, %v2415, %v2417
        %vm2433 = vcmask 1047560
        %2434 = vst.msk [vmem:[#allocation2 + $0xc0] sm:$0xff] %vm2433, %v2403
        %2435 = vst [vmem:[#allocation2 + $0xc8] sm:$0xff] %v2418
        %2436 = vst [vmem:[#allocation2 + $0xd0] sm:$0xff] %v2419
        %2437 = vst [vmem:[#allocation2 + $0xd8] sm:$0xff] %v2420
        %2438 = vst [vmem:[#allocation2 + $0xe0] sm:$0xff] %v2421
        %2439 = vst [vmem:[#allocation2 + $0xe8] sm:$0xff] %v2422
        %2440 = vst [vmem:[#allocation2 + $0xf0] sm:$0xff] %v2423
        %2441 = vst [vmem:[#allocation2 + $0xf8] sm:$0xff] %v2424
        %2442 = vst.msk [vmem:[#allocation2 + $0xc0] sm:$0xff] %vm1381, 0.0
        %v2443 = vld [vmem:[#allocation3] sm:$0xff]
        %v2444 = vld [vmem:[#allocation3 + $0x8] sm:$0xff]
        %v2445 = vld [vmem:[#allocation3 + $0x10] sm:$0xff]
        %v2446 = vld [vmem:[#allocation3 + $0x18] sm:$0xff]
        %v2447 = vld [vmem:[#allocation3 + $0x20] sm:$0xff]
        %v2448 = vld [vmem:[#allocation3 + $0x28] sm:$0xff]
        %v2449 = vld [vmem:[#allocation3 + $0x30] sm:$0xff]
        %v2450 = vld [vmem:[#allocation3 + $0x38] sm:$0xff]
        %2451 = vst [vmem:[#allocation2 + $0x100] sm:$0xff] %v2443
        %2452 = vst [vmem:[#allocation2 + $0x108] sm:$0xff] %v2444
        %2453 = vst [vmem:[#allocation2 + $0x110] sm:$0xff] %v2445
        %2454 = vst [vmem:[#allocation2 + $0x118] sm:$0xff] %v2446
        %2455 = vst [vmem:[#allocation2 + $0x120] sm:$0xff] %v2447
        %2456 = vst [vmem:[#allocation2 + $0x128] sm:$0xff] %v2448
        %2457 = vst [vmem:[#allocation2 + $0x130] sm:$0xff] %v2449
        %2458 = vst [vmem:[#allocation2 + $0x138] sm:$0xff] %v2450
        %v2459 = vld [vmem:[#allocation3] sm:$0xff]
        %v2460 = vld [vmem:[#allocation3 + $0x8] sm:$0xff]
        %v2461 = vld [vmem:[#allocation3 + $0x10] sm:$0xff]
        %v2462 = vld [vmem:[#allocation3 + $0x18] sm:$0xff]
        %v2463 = vld [vmem:[#allocation3 + $0x20] sm:$0xff]
        %v2464 = vld [vmem:[#allocation3 + $0x28] sm:$0xff]
        %v2465 = vld [vmem:[#allocation3 + $0x30] sm:$0xff]
        %v2466 = vld [vmem:[#allocation3 + $0x38] sm:$0xff]
        %2475 = vrot.lane.b32.xlu0 %v2459, 127
        %v2476 = vpop.permute.xlu0 %2475
        %2477 = vrot.lane.b32.xlu0 %v2460, 127
        %v2478 = vpop.permute.xlu0 %2477
        %2479 = vrot.lane.b32.xlu0 %v2461, 127
        %v2480 = vpop.permute.xlu0 %2479
        %2481 = vrot.lane.b32.xlu0 %v2462, 127
        %v2482 = vpop.permute.xlu0 %2481
        %2483 = vrot.lane.b32.xlu0 %v2463, 127
        %v2484 = vpop.permute.xlu0 %2483
        %2485 = vrot.lane.b32.xlu0 %v2464, 127
        %v2486 = vpop.permute.xlu0 %2485
        %2487 = vrot.lane.b32.xlu0 %v2465, 127
        %v2488 = vpop.permute.xlu0 %2487
        %2489 = vrot.lane.b32.xlu0 %v2466, 127
        %v2490 = vpop.permute.xlu0 %2489
        %v2491 = vsel %vm1607, %v2476, %v2478
        %v2492 = vsel %vm1607, %v2478, %v2480
        %v2493 = vsel %vm1607, %v2480, %v2482
        %v2494 = vsel %vm1607, %v2482, %v2484
        %v2495 = vsel %vm1607, %v2484, %v2486
        %v2496 = vsel %vm1607, %v2486, %v2488
        %v2497 = vsel %vm1607, %v2488, %v2490
        %v2506 = vsel %vm1564, %v2491, 0.0
        %v2507 = vsel %vm1565, %v2492, 0.0
        %v2508 = vsel %vm1566, %v2493, 0.0
        %v2509 = vsel %vm1567, %v2494, 0.0
        %v2510 = vsel %vm1568, %v2495, 0.0
        %v2511 = vsel %vm1569, %v2496, 0.0
        %v2512 = vsel %vm1570, %v2497, 0.0
        %v2513 = vsel %vm1571, %v2490, 0.0
        %2514 = vst [vmem:[#allocation2 + $0x140] sm:$0xff] %v2506
        %2515 = vst [vmem:[#allocation2 + $0x148] sm:$0xff] %v2507
        %2516 = vst [vmem:[#allocation2 + $0x150] sm:$0xff] %v2508
        %2517 = vst [vmem:[#allocation2 + $0x158] sm:$0xff] %v2509
        %2518 = vst [vmem:[#allocation2 + $0x160] sm:$0xff] %v2510
        %2519 = vst [vmem:[#allocation2 + $0x168] sm:$0xff] %v2511
        %2520 = vst [vmem:[#allocation2 + $0x170] sm:$0xff] %v2512
        %2521 = vst.msk [vmem:[#allocation2 + $0x178] sm:$0xff] %vm1607, %v2513
        %vm2522 = vcmask 1048568
        %2523 = vst.msk [vmem:[#allocation2 + $0x178] sm:$0xff] %vm2522, 0.0
        %v2524 = vld [vmem:[#allocation3] sm:$0xff]
        %v2525 = vld [vmem:[#allocation3 + $0x8] sm:$0xff]
        %v2526 = vld [vmem:[#allocation3 + $0x10] sm:$0xff]
        %v2527 = vld [vmem:[#allocation3 + $0x18] sm:$0xff]
        %v2528 = vld [vmem:[#allocation3 + $0x20] sm:$0xff]
        %v2529 = vld [vmem:[#allocation3 + $0x28] sm:$0xff]
        %v2530 = vld [vmem:[#allocation3 + $0x30] sm:$0xff]
        %v2531 = vld [vmem:[#allocation3 + $0x38] sm:$0xff]
        %2540 = vrot.lane.b32.xlu0 %v2524, 97
        %v2541 = vpop.permute.xlu0 %2540
        %2542 = vrot.lane.b32.xlu0 %v2525, 97
        %v2543 = vpop.permute.xlu0 %2542
        %2544 = vrot.lane.b32.xlu0 %v2526, 97
        %v2545 = vpop.permute.xlu0 %2544
        %2546 = vrot.lane.b32.xlu0 %v2527, 97
        %v2547 = vpop.permute.xlu0 %2546
        %2548 = vrot.lane.b32.xlu0 %v2528, 97
        %v2549 = vpop.permute.xlu0 %2548
        %2550 = vrot.lane.b32.xlu0 %v2529, 97
        %v2551 = vpop.permute.xlu0 %2550
        %2552 = vrot.lane.b32.xlu0 %v2530, 97
        %v2553 = vpop.permute.xlu0 %2552
        %2554 = vrot.lane.b32.xlu0 %v2531, 97
        %v2555 = vpop.permute.xlu0 %2554
        %v2556 = vsel %vm1740, %v2541, %v2543
        %v2557 = vsel %vm1740, %v2543, %v2545
        %v2558 = vsel %vm1740, %v2545, %v2547
        %v2559 = vsel %vm1740, %v2547, %v2549
        %v2560 = vsel %vm1740, %v2549, %v2551
        %v2561 = vsel %vm1740, %v2551, %v2553
        %v2562 = vsel %vm1740, %v2553, %v2555
        %v2571 = vsel %vm1697, %v2556, 0.0
        %v2572 = vsel %vm1698, %v2557, 0.0
        %v2573 = vsel %vm1699, %v2558, 0.0
        %v2574 = vsel %vm1700, %v2559, 0.0
        %v2575 = vsel %vm1701, %v2560, 0.0
        %v2576 = vsel %vm1702, %v2561, 0.0
        %v2577 = vsel %vm1703, %v2562, 0.0
        %v2578 = vsel %vm1704, %v2555, 0.0
        %2579 = vst [vmem:[#allocation2 + $0x180] sm:$0xff] %v2571
        %2580 = vst [vmem:[#allocation2 + $0x188] sm:$0xff] %v2572
        %2581 = vst [vmem:[#allocation2 + $0x190] sm:$0xff] %v2573
        %2582 = vst [vmem:[#allocation2 + $0x198] sm:$0xff] %v2574
        %2583 = vst [vmem:[#allocation2 + $0x1a0] sm:$0xff] %v2575
        %2584 = vst [vmem:[#allocation2 + $0x1a8] sm:$0xff] %v2576
        %2585 = vst [vmem:[#allocation2 + $0x1b0] sm:$0xff] %v2577
        %2586 = vst.msk [vmem:[#allocation2 + $0x1b8] sm:$0xff] %vm1740, %v2578
        %vm2587 = vcmask 1048328
        %2588 = vst.msk [vmem:[#allocation2 + $0x1b8] sm:$0xff] %vm2587, 0.0
        %v2589 = vld [vmem:[#allocation3] sm:$0xff]
        %v2590 = vld [vmem:[#allocation3 + $0x8] sm:$0xff]
        %v2591 = vld [vmem:[#allocation3 + $0x10] sm:$0xff]
        %v2592 = vld [vmem:[#allocation3 + $0x18] sm:$0xff]
        %v2593 = vld [vmem:[#allocation3 + $0x20] sm:$0xff]
        %v2594 = vld [vmem:[#allocation3 + $0x28] sm:$0xff]
        %v2595 = vld [vmem:[#allocation3 + $0x30] sm:$0xff]
        %v2596 = vld [vmem:[#allocation3 + $0x38] sm:$0xff]
        %2605 = vrot.lane.b32.xlu0 %v2589, 96
        %v2606 = vpop.permute.xlu0 %2605
        %2607 = vrot.lane.b32.xlu0 %v2590, 96
        %v2608 = vpop.permute.xlu0 %2607
        %2609 = vrot.lane.b32.xlu0 %v2591, 96
        %v2610 = vpop.permute.xlu0 %2609
        %2611 = vrot.lane.b32.xlu0 %v2592, 96
        %v2612 = vpop.permute.xlu0 %2611
        %2613 = vrot.lane.b32.xlu0 %v2593, 96
        %v2614 = vpop.permute.xlu0 %2613
        %2615 = vrot.lane.b32.xlu0 %v2594, 96
        %v2616 = vpop.permute.xlu0 %2615
        %2617 = vrot.lane.b32.xlu0 %v2595, 96
        %v2618 = vpop.permute.xlu0 %2617
        %2619 = vrot.lane.b32.xlu0 %v2596, 96
        %v2620 = vpop.permute.xlu0 %2619
        %v2621 = vsel %vm1846, %v2606, %v2608
        %v2622 = vsel %vm1846, %v2608, %v2610
        %v2623 = vsel %vm1846, %v2610, %v2612
        %v2624 = vsel %vm1846, %v2612, %v2614
        %v2625 = vsel %vm1846, %v2614, %v2616
        %v2626 = vsel %vm1846, %v2616, %v2618
        %v2627 = vsel %vm1846, %v2618, %v2620
        %2636 = vst [vmem:[#allocation2 + $0x1c0] sm:$0xff] %v2621
        %2637 = vst [vmem:[#allocation2 + $0x1c8] sm:$0xff] %v2622
        %2638 = vst [vmem:[#allocation2 + $0x1d0] sm:$0xff] %v2623
        %2639 = vst [vmem:[#allocation2 + $0x1d8] sm:$0xff] %v2624
        %2640 = vst [vmem:[#allocation2 + $0x1e0] sm:$0xff] %v2625
        %2641 = vst [vmem:[#allocation2 + $0x1e8] sm:$0xff] %v2626
        %2642 = vst [vmem:[#allocation2 + $0x1f0] sm:$0xff] %v2627
        %2643 = vst.msk [vmem:[#allocation2 + $0x1f8] sm:$0xff] %vm1846, %v2620
        %vm2644 = vcmask 1048320
        %2645 = vst.msk [vmem:[#allocation2 + $0x1f8] sm:$0xff] %vm2644, 0.0
        %v2646 = vld [vmem:[#allocation3] sm:$0xff]
        %v2647 = vld [vmem:[#allocation3 + $0x8] sm:$0xff]
        %v2648 = vld [vmem:[#allocation3 + $0x10] sm:$0xff]
        %v2649 = vld [vmem:[#allocation3 + $0x18] sm:$0xff]
        %v2650 = vld [vmem:[#allocation3 + $0x20] sm:$0xff]
        %v2651 = vld [vmem:[#allocation3 + $0x28] sm:$0xff]
        %v2652 = vld [vmem:[#allocation3 + $0x30] sm:$0xff]
        %v2653 = vld [vmem:[#allocation3 + $0x38] sm:$0xff]
        %2662 = vrot.lane.b32.xlu0 %v2646, 95
        %v2663 = vpop.permute.xlu0 %2662
        %2664 = vrot.lane.b32.xlu0 %v2647, 95
        %v2665 = vpop.permute.xlu0 %2664
        %2666 = vrot.lane.b32.xlu0 %v2648, 95
        %v2667 = vpop.permute.xlu0 %2666
        %2668 = vrot.lane.b32.xlu0 %v2649, 95
        %v2669 = vpop.permute.xlu0 %2668
        %2670 = vrot.lane.b32.xlu0 %v2650, 95
        %v2671 = vpop.permute.xlu0 %2670
        %2672 = vrot.lane.b32.xlu0 %v2651, 95
        %v2673 = vpop.permute.xlu0 %2672
        %2674 = vrot.lane.b32.xlu0 %v2652, 95
        %v2675 = vpop.permute.xlu0 %2674
        %2676 = vrot.lane.b32.xlu0 %v2653, 95
        %v2677 = vpop.permute.xlu0 %2676
        %v2678 = vsel %vm1912, %v2663, %v2665
        %v2679 = vsel %vm1912, %v2665, %v2667
        %v2680 = vsel %vm1912, %v2667, %v2669
        %v2681 = vsel %vm1912, %v2669, %v2671
        %v2682 = vsel %vm1912, %v2671, %v2673
        %v2683 = vsel %vm1912, %v2673, %v2675
        %v2684 = vsel %vm1912, %v2675, %v2677
        %v2693 = vsel %vm1564, %v2678, 0.0
        %v2694 = vsel %vm1565, %v2679, 0.0
        %v2695 = vsel %vm1566, %v2680, 0.0
        %v2696 = vsel %vm1567, %v2681, 0.0
        %v2697 = vsel %vm1568, %v2682, 0.0
        %v2698 = vsel %vm1569, %v2683, 0.0
        %v2699 = vsel %vm1570, %v2684, 0.0
        %v2700 = vsel %vm1571, %v2677, 0.0
        %2701 = vst [vmem:[#allocation2 + $0x200] sm:$0xff] %v2693
        %2702 = vst [vmem:[#allocation2 + $0x208] sm:$0xff] %v2694
        %2703 = vst [vmem:[#allocation2 + $0x210] sm:$0xff] %v2695
        %2704 = vst [vmem:[#allocation2 + $0x218] sm:$0xff] %v2696
        %2705 = vst [vmem:[#allocation2 + $0x220] sm:$0xff] %v2697
        %2706 = vst [vmem:[#allocation2 + $0x228] sm:$0xff] %v2698
        %2707 = vst [vmem:[#allocation2 + $0x230] sm:$0xff] %v2699
        %2708 = vst.msk [vmem:[#allocation2 + $0x238] sm:$0xff] %vm1912, %v2700
        %vm2709 = vcmask 1048312
        %2710 = vst.msk [vmem:[#allocation2 + $0x238] sm:$0xff] %vm2709, 0.0
        %v2711 = vld [vmem:[#allocation2] sm:$0xff]
        %v2712 = vld [vmem:[#allocation2 + $0x8] sm:$0xff]
        %v2713 = vld [vmem:[#allocation2 + $0x10] sm:$0xff]
        %v2714 = vld [vmem:[#allocation2 + $0x18] sm:$0xff]
        %v2715 = vld [vmem:[#allocation2 + $0x20] sm:$0xff]
        %v2716 = vld [vmem:[#allocation2 + $0x28] sm:$0xff]
        %v2717 = vld [vmem:[#allocation2 + $0x30] sm:$0xff]
        %v2718 = vld [vmem:[#allocation2 + $0x38] sm:$0xff]
        %v2719 = vld [vmem:[#allocation2 + $0x40] sm:$0xff]
        %v2720 = vld [vmem:[#allocation2 + $0x48] sm:$0xff]
        %v2721 = vld [vmem:[#allocation2 + $0x50] sm:$0xff]
        %v2722 = vld [vmem:[#allocation2 + $0x58] sm:$0xff]
        %v2723 = vld [vmem:[#allocation2 + $0x60] sm:$0xff]
        %v2724 = vld [vmem:[#allocation2 + $0x68] sm:$0xff]
        %v2725 = vld [vmem:[#allocation2 + $0x70] sm:$0xff]
        %v2726 = vld [vmem:[#allocation2 + $0x78] sm:$0xff]
        %v2727 = vld [vmem:[#allocation2 + $0x80] sm:$0xff]
        %v2728 = vld [vmem:[#allocation2 + $0x88] sm:$0xff]
        %v2729 = vld [vmem:[#allocation2 + $0x90] sm:$0xff]
        %v2730 = vld [vmem:[#allocation2 + $0x98] sm:$0xff]
        %v2731 = vld [vmem:[#allocation2 + $0xa0] sm:$0xff]
        %v2732 = vld [vmem:[#allocation2 + $0xa8] sm:$0xff]
        %v2733 = vld [vmem:[#allocation2 + $0xb0] sm:$0xff]
        %v2734 = vld [vmem:[#allocation2 + $0xb8] sm:$0xff]
        %v2735 = vld [vmem:[#allocation2 + $0xc0] sm:$0xff]
        %v2736 = vld [vmem:[#allocation2 + $0xc8] sm:$0xff]
        %v2737 = vld [vmem:[#allocation2 + $0xd0] sm:$0xff]
        %v2738 = vld [vmem:[#allocation2 + $0xd8] sm:$0xff]
        %v2739 = vld [vmem:[#allocation2 + $0xe0] sm:$0xff]
        %v2740 = vld [vmem:[#allocation2 + $0xe8] sm:$0xff]
        %v2741 = vld [vmem:[#allocation2 + $0xf0] sm:$0xff]
        %v2742 = vld [vmem:[#allocation2 + $0xf8] sm:$0xff]
        %v2743 = vld [vmem:[#allocation2 + $0x100] sm:$0xff]
        %v2744 = vld [vmem:[#allocation2 + $0x108] sm:$0xff]
        %v2745 = vld [vmem:[#allocation2 + $0x110] sm:$0xff]
        %v2746 = vld [vmem:[#allocation2 + $0x118] sm:$0xff]
        %v2747 = vld [vmem:[#allocation2 + $0x120] sm:$0xff]
        %v2748 = vld [vmem:[#allocation2 + $0x128] sm:$0xff]
        %v2749 = vld [vmem:[#allocation2 + $0x130] sm:$0xff]
        %v2750 = vld [vmem:[#allocation2 + $0x138] sm:$0xff]
        %v2751 = vld [vmem:[#allocation2 + $0x140] sm:$0xff]
        %v2752 = vld [vmem:[#allocation2 + $0x148] sm:$0xff]
        %v2753 = vld [vmem:[#allocation2 + $0x150] sm:$0xff]
        %v2754 = vld [vmem:[#allocation2 + $0x158] sm:$0xff]
        %v2755 = vld [vmem:[#allocation2 + $0x160] sm:$0xff]
        %v2756 = vld [vmem:[#allocation2 + $0x168] sm:$0xff]
        %v2757 = vld [vmem:[#allocation2 + $0x170] sm:$0xff]
        %v2758 = vld [vmem:[#allocation2 + $0x178] sm:$0xff]
        %v2759 = vld [vmem:[#allocation2 + $0x180] sm:$0xff]
        %v2760 = vld [vmem:[#allocation2 + $0x188] sm:$0xff]
        %v2761 = vld [vmem:[#allocation2 + $0x190] sm:$0xff]
        %v2762 = vld [vmem:[#allocation2 + $0x198] sm:$0xff]
        %v2763 = vld [vmem:[#allocation2 + $0x1a0] sm:$0xff]
        %v2764 = vld [vmem:[#allocation2 + $0x1a8] sm:$0xff]
        %v2765 = vld [vmem:[#allocation2 + $0x1b0] sm:$0xff]
        %v2766 = vld [vmem:[#allocation2 + $0x1b8] sm:$0xff]
        %v2767 = vld [vmem:[#allocation2 + $0x1c0] sm:$0xff]
        %v2768 = vld [vmem:[#allocation2 + $0x1c8] sm:$0xff]
        %v2769 = vld [vmem:[#allocation2 + $0x1d0] sm:$0xff]
        %v2770 = vld [vmem:[#allocation2 + $0x1d8] sm:$0xff]
        %v2771 = vld [vmem:[#allocation2 + $0x1e0] sm:$0xff]
        %v2772 = vld [vmem:[#allocation2 + $0x1e8] sm:$0xff]
        %v2773 = vld [vmem:[#allocation2 + $0x1f0] sm:$0xff]
        %v2774 = vld [vmem:[#allocation2 + $0x1f8] sm:$0xff]
        %v2775 = vld [vmem:[#allocation2 + $0x200] sm:$0xff]
        %v2776 = vld [vmem:[#allocation2 + $0x208] sm:$0xff]
        %v2777 = vld [vmem:[#allocation2 + $0x210] sm:$0xff]
        %v2778 = vld [vmem:[#allocation2 + $0x218] sm:$0xff]
        %v2779 = vld [vmem:[#allocation2 + $0x220] sm:$0xff]
        %v2780 = vld [vmem:[#allocation2 + $0x228] sm:$0xff]
        %v2781 = vld [vmem:[#allocation2 + $0x230] sm:$0xff]
        %v2782 = vld [vmem:[#allocation2 + $0x238] sm:$0xff]
        %v2783 = vld [vmem:[%s3] sm:$0xff]
        %v2784 = vld [vmem:[%s4] sm:$0xff]
        %2786 = vset.pattern.permute.xlu0 0
        %2787 = vperm.xlu0 %2786, %v2784
        %v2788 = vpop.permute.xlu0 %2787
        %vm2790 = vcmask 588800
        %v2792 = vsel %vm2790, %v2783, 0
        %2794 = vmatpush.msra.mxu0 0.0
        %2795 = vmatpush.msra.mxu0 0.0
        %2796 = vmatpush.msra.mxu0 0.0
        %2797 = vmatpush.msra.mxu0 0.0
        %2798 = vmatpush.msra.mxu0 0.0
        %2799 = vmatpush.msra.mxu0 0.0
        %2800 = vmatpush.msra.mxu0 0.0
        %2801 = vmatpush.msra.mxu0 %v2775
        %2802 = vmatpush.msra.mxu0 %v2767
        %2803 = vmatpush.msra.mxu0 %v2759
        %2804 = vmatpush.msra.mxu0 %v2751
        %2805 = vmatpush.msra.mxu0 %v2743
        %2806 = vmatpush.msra.mxu0 %v2735
        %2807 = vmatpush.msra.mxu0 %v2727
        %2808 = vmatpush.msra.mxu0 %v2719
        %2809 = vmatpush.msra.mxu0 %v2711
        %2810 = vmatmul.f32.gmra.mxu0 %v2792
        %v2811 = vpop.f32.mrf.mxu0
        %v2812 = vadd.f32 %v2788, %v2811
        %2813 = vdwg.mxu0
        %2814 = vmatpush.msra.mxu0 0.0
        %2815 = vmatpush.msra.mxu0 0.0
        %2816 = vmatpush.msra.mxu0 0.0
        %2817 = vmatpush.msra.mxu0 0.0
        %2818 = vmatpush.msra.mxu0 0.0
        %2819 = vmatpush.msra.mxu0 0.0
        %2820 = vmatpush.msra.mxu0 0.0
        %2821 = vmatpush.msra.mxu0 %v2776
        %2822 = vmatpush.msra.mxu0 %v2768
        %2823 = vmatpush.msra.mxu0 %v2760
        %2824 = vmatpush.msra.mxu0 %v2752
        %2825 = vmatpush.msra.mxu0 %v2744
        %2826 = vmatpush.msra.mxu0 %v2736
        %2827 = vmatpush.msra.mxu0 %v2728
        %2828 = vmatpush.msra.mxu0 %v2720
        %2829 = vmatpush.msra.mxu0 %v2712
        %2830 = vmatmul.f32.gmra.mxu0 %v2792
        %v2831 = vpop.f32.mrf.mxu0
        %v2832 = vadd.f32 %v2788, %v2831
        %2833 = vdwg.mxu0
        %2834 = vmatpush.msra.mxu0 0.0
        %2835 = vmatpush.msra.mxu0 0.0
        %2836 = vmatpush.msra.mxu0 0.0
        %2837 = vmatpush.msra.mxu0 0.0
        %2838 = vmatpush.msra.mxu0 0.0
        %2839 = vmatpush.msra.mxu0 0.0
        %2840 = vmatpush.msra.mxu0 0.0
        %2841 = vmatpush.msra.mxu0 %v2777
        %2842 = vmatpush.msra.mxu0 %v2769
        %2843 = vmatpush.msra.mxu0 %v2761
        %2844 = vmatpush.msra.mxu0 %v2753
        %2845 = vmatpush.msra.mxu0 %v2745
        %2846 = vmatpush.msra.mxu0 %v2737
        %2847 = vmatpush.msra.mxu0 %v2729
        %2848 = vmatpush.msra.mxu0 %v2721
        %2849 = vmatpush.msra.mxu0 %v2713
        %2850 = vmatmul.f32.gmra.mxu0 %v2792
        %v2851 = vpop.f32.mrf.mxu0
        %v2852 = vadd.f32 %v2788, %v2851
        %2853 = vdwg.mxu0
        %2854 = vmatpush.msra.mxu0 0.0
        %2855 = vmatpush.msra.mxu0 0.0
        %2856 = vmatpush.msra.mxu0 0.0
        %2857 = vmatpush.msra.mxu0 0.0
        %2858 = vmatpush.msra.mxu0 0.0
        %2859 = vmatpush.msra.mxu0 0.0
        %2860 = vmatpush.msra.mxu0 0.0
        %2861 = vmatpush.msra.mxu0 %v2778
        %2862 = vmatpush.msra.mxu0 %v2770
        %2863 = vmatpush.msra.mxu0 %v2762
        %2864 = vmatpush.msra.mxu0 %v2754
        %2865 = vmatpush.msra.mxu0 %v2746
        %2866 = vmatpush.msra.mxu0 %v2738
        %2867 = vmatpush.msra.mxu0 %v2730
        %2868 = vmatpush.msra.mxu0 %v2722
        %2869 = vmatpush.msra.mxu0 %v2714
        %2870 = vmatmul.f32.gmra.mxu0 %v2792
        %v2871 = vpop.f32.mrf.mxu0
        %v2872 = vadd.f32 %v2788, %v2871
        %2873 = vdwg.mxu0
        %2874 = vmatpush.msra.mxu0 0.0
        %2875 = vmatpush.msra.mxu0 0.0
        %2876 = vmatpush.msra.mxu0 0.0
        %2877 = vmatpush.msra.mxu0 0.0
        %2878 = vmatpush.msra.mxu0 0.0
        %2879 = vmatpush.msra.mxu0 0.0
        %2880 = vmatpush.msra.mxu0 0.0
        %2881 = vmatpush.msra.mxu0 %v2779
        %2882 = vmatpush.msra.mxu0 %v2771
        %2883 = vmatpush.msra.mxu0 %v2763
        %2884 = vmatpush.msra.mxu0 %v2755
        %2885 = vmatpush.msra.mxu0 %v2747
        %2886 = vmatpush.msra.mxu0 %v2739
        %2887 = vmatpush.msra.mxu0 %v2731
        %2888 = vmatpush.msra.mxu0 %v2723
        %2889 = vmatpush.msra.mxu0 %v2715
        %2890 = vmatmul.f32.gmra.mxu0 %v2792
        %v2891 = vpop.f32.mrf.mxu0
        %v2892 = vadd.f32 %v2788, %v2891
        %2893 = vdwg.mxu0
        %2894 = vmatpush.msra.mxu0 0.0
        %2895 = vmatpush.msra.mxu0 0.0
        %2896 = vmatpush.msra.mxu0 0.0
        %2897 = vmatpush.msra.mxu0 0.0
        %2898 = vmatpush.msra.mxu0 0.0
        %2899 = vmatpush.msra.mxu0 0.0
        %2900 = vmatpush.msra.mxu0 0.0
        %2901 = vmatpush.msra.mxu0 %v2780
        %2902 = vmatpush.msra.mxu0 %v2772
        %2903 = vmatpush.msra.mxu0 %v2764
        %2904 = vmatpush.msra.mxu0 %v2756
        %2905 = vmatpush.msra.mxu0 %v2748
        %2906 = vmatpush.msra.mxu0 %v2740
        %2907 = vmatpush.msra.mxu0 %v2732
        %2908 = vmatpush.msra.mxu0 %v2724
        %2909 = vmatpush.msra.mxu0 %v2716
        %2910 = vmatmul.f32.gmra.mxu0 %v2792
        %v2911 = vpop.f32.mrf.mxu0
        %v2912 = vadd.f32 %v2788, %v2911
        %2913 = vdwg.mxu0
        %2914 = vmatpush.msra.mxu0 0.0
        %2915 = vmatpush.msra.mxu0 0.0
        %2916 = vmatpush.msra.mxu0 0.0
        %2917 = vmatpush.msra.mxu0 0.0
        %2918 = vmatpush.msra.mxu0 0.0
        %2919 = vmatpush.msra.mxu0 0.0
        %2920 = vmatpush.msra.mxu0 0.0
        %2921 = vmatpush.msra.mxu0 %v2781
        %2922 = vmatpush.msra.mxu0 %v2773
        %2923 = vmatpush.msra.mxu0 %v2765
        %2924 = vmatpush.msra.mxu0 %v2757
        %2925 = vmatpush.msra.mxu0 %v2749
        %2926 = vmatpush.msra.mxu0 %v2741
        %2927 = vmatpush.msra.mxu0 %v2733
        %2928 = vmatpush.msra.mxu0 %v2725
        %2929 = vmatpush.msra.mxu0 %v2717
        %2930 = vmatmul.f32.gmra.mxu0 %v2792
        %v2931 = vpop.f32.mrf.mxu0
        %v2932 = vadd.f32 %v2788, %v2931
        %2933 = vdwg.mxu0
        %2934 = vmatpush.msra.mxu0 0.0
        %2935 = vmatpush.msra.mxu0 0.0
        %2936 = vmatpush.msra.mxu0 0.0
        %2937 = vmatpush.msra.mxu0 0.0
        %2938 = vmatpush.msra.mxu0 0.0
        %2939 = vmatpush.msra.mxu0 0.0
        %2940 = vmatpush.msra.mxu0 0.0
        %2941 = vmatpush.msra.mxu0 %v2782
        %2942 = vmatpush.msra.mxu0 %v2774
        %2943 = vmatpush.msra.mxu0 %v2766
        %2944 = vmatpush.msra.mxu0 %v2758
        %2945 = vmatpush.msra.mxu0 %v2750
        %2946 = vmatpush.msra.mxu0 %v2742
        %2947 = vmatpush.msra.mxu0 %v2734
        %2948 = vmatpush.msra.mxu0 %v2726
        %2949 = vmatpush.msra.mxu0 %v2718
        %2950 = vmatmul.f32.gmra.mxu0 %v2792
        %v2951 = vpop.f32.mrf.mxu0
        %v2952 = vadd.f32 %v2788, %v2951
        %2953 = vdwg.mxu0
        %v2954 = vmax.f32 %v2812, 0.0
        %v2955 = vmax.f32 %v2832, 0.0
        %v2956 = vmax.f32 %v2852, 0.0
        %v2957 = vmax.f32 %v2872, 0.0
        %v2958 = vmax.f32 %v2892, 0.0
        %v2959 = vmax.f32 %v2912, 0.0
        %v2960 = vmax.f32 %v2932, 0.0
        %v2961 = vmax.f32 %v2952, 0.0
        %2962 = vst [vmem:[#allocation4] sm:$0xff] %v2954
        %2963 = vst [vmem:[#allocation4 + $0x8] sm:$0xff] %v2955
        %2964 = vst [vmem:[#allocation4 + $0x10] sm:$0xff] %v2956
        %2965 = vst [vmem:[#allocation4 + $0x18] sm:$0xff] %v2957
        %2966 = vst [vmem:[#allocation4 + $0x20] sm:$0xff] %v2958
        %2967 = vst [vmem:[#allocation4 + $0x28] sm:$0xff] %v2959
        %2968 = vst [vmem:[#allocation4 + $0x30] sm:$0xff] %v2960
        %2969 = vst [vmem:[#allocation4 + $0x38] sm:$0xff] %v2961
        %v2970 = vld [vmem:[#allocation4] sm:$0xff]
        %v2971 = vld [vmem:[#allocation4 + $0x8] sm:$0xff]
        %v2972 = vld [vmem:[#allocation4 + $0x10] sm:$0xff]
        %v2973 = vld [vmem:[#allocation4 + $0x18] sm:$0xff]
        %v2974 = vld [vmem:[#allocation4 + $0x20] sm:$0xff]
        %v2975 = vld [vmem:[#allocation4 + $0x28] sm:$0xff]
        %v2976 = vld [vmem:[#allocation4 + $0x30] sm:$0xff]
        %v2977 = vld [vmem:[#allocation4 + $0x38] sm:$0xff]
        %2986 = vrot.lane.b32.xlu0 %v2970, 127
        %v2987 = vpop.permute.xlu0 %2986
        %2988 = vrot.lane.b32.xlu0 %v2971, 127
        %v2989 = vpop.permute.xlu0 %2988
        %2990 = vrot.lane.b32.xlu0 %v2972, 127
        %v2991 = vpop.permute.xlu0 %2990
        %2992 = vrot.lane.b32.xlu0 %v2973, 127
        %v2993 = vpop.permute.xlu0 %2992
        %2994 = vrot.lane.b32.xlu0 %v2974, 127
        %v2995 = vpop.permute.xlu0 %2994
        %2996 = vrot.lane.b32.xlu0 %v2975, 127
        %v2997 = vpop.permute.xlu0 %2996
        %2998 = vrot.lane.b32.xlu0 %v2976, 127
        %v2999 = vpop.permute.xlu0 %2998
        %3000 = vrot.lane.b32.xlu0 %v2977, 127
        %v3001 = vpop.permute.xlu0 %3000
        %v3002 = vsel %vm1607, %v2987, %v2989
        %v3003 = vsel %vm1607, %v2989, %v2991
        %v3004 = vsel %vm1607, %v2991, %v2993
        %v3005 = vsel %vm1607, %v2993, %v2995
        %v3006 = vsel %vm1607, %v2995, %v2997
        %v3007 = vsel %vm1607, %v2997, %v2999
        %v3008 = vsel %vm1607, %v2999, %v3001
        %v3017 = vmax.f32 %v2970, %v3002
        %v3018 = vmax.f32 %v2971, %v3003
        %v3019 = vmax.f32 %v2972, %v3004
        %v3020 = vmax.f32 %v2973, %v3005
        %v3021 = vmax.f32 %v2974, %v3006
        %v3022 = vmax.f32 %v2975, %v3007
        %v3023 = vmax.f32 %v2976, %v3008
        %v3024 = vmax.f32 %v2977, %v3001
        %3033 = vrot.lane.b32.xlu0 %v3017, 96
        %v3034 = vpop.permute.xlu0 %3033
        %3035 = vrot.lane.b32.xlu0 %v3018, 96
        %v3036 = vpop.permute.xlu0 %3035
        %3037 = vrot.lane.b32.xlu0 %v3019, 96
        %v3038 = vpop.permute.xlu0 %3037
        %3039 = vrot.lane.b32.xlu0 %v3020, 96
        %v3040 = vpop.permute.xlu0 %3039
        %3041 = vrot.lane.b32.xlu0 %v3021, 96
        %v3042 = vpop.permute.xlu0 %3041
        %3043 = vrot.lane.b32.xlu0 %v3022, 96
        %v3044 = vpop.permute.xlu0 %3043
        %3045 = vrot.lane.b32.xlu0 %v3023, 96
        %v3046 = vpop.permute.xlu0 %3045
        %3047 = vrot.lane.b32.xlu0 %v3024, 96
        %v3048 = vpop.permute.xlu0 %3047
        %v3049 = vsel %vm1846, %v3034, %v3036
        %v3050 = vsel %vm1846, %v3036, %v3038
        %v3051 = vsel %vm1846, %v3038, %v3040
        %v3052 = vsel %vm1846, %v3040, %v3042
        %v3053 = vsel %vm1846, %v3042, %v3044
        %v3054 = vsel %vm1846, %v3044, %v3046
        %v3055 = vsel %vm1846, %v3046, %v3048
        %v3064 = vmax.f32 %v3017, %v3049
        %v3065 = vmax.f32 %v3018, %v3050
        %v3066 = vmax.f32 %v3019, %v3051
        %v3067 = vmax.f32 %v3020, %v3052
        %v3068 = vmax.f32 %v3021, %v3053
        %v3069 = vmax.f32 %v3022, %v3054
        %v3070 = vmax.f32 %v3023, %v3055
        %v3071 = vmax.f32 %v3024, %v3048
        %v3072 = vld [vmem:[#allocation13] sm:$0xff]
        %v3073 = vld [vmem:[#allocation13 + $0x8] sm:$0xff]
        %v3074 = vld [vmem:[#allocation13 + $0x10] sm:$0xff]
        %v3075 = vld [vmem:[#allocation13 + $0x18] sm:$0xff]
        %v3076 = vld [vmem:[#allocation13 + $0x20] sm:$0xff]
        %v3077 = vld [vmem:[#allocation13 + $0x28] sm:$0xff]
        %v3078 = vld [vmem:[#allocation13 + $0x30] sm:$0xff]
        %v3079 = vld [vmem:[#allocation13 + $0x38] sm:$0xff]
        %v3080 = vld [vmem:[#allocation13 + $0x40] sm:$0xff]
        %v3081 = vld [vmem:[#allocation13 + $0x48] sm:$0xff]
        %v3082 = vld [vmem:[#allocation13 + $0x50] sm:$0xff]
        %v3083 = vld [vmem:[#allocation13 + $0x58] sm:$0xff]
        %v3084 = vld [vmem:[#allocation13 + $0x60] sm:$0xff]
        %v3085 = vld [vmem:[#allocation13 + $0x68] sm:$0xff]
        %v3086 = vld [vmem:[#allocation13 + $0x70] sm:$0xff]
        %v3087 = vld [vmem:[#allocation13 + $0x78] sm:$0xff]
        %v3088 = vld [vmem:[#allocation13 + $0x80] sm:$0xff]
        %v3089 = vld [vmem:[#allocation13 + $0x88] sm:$0xff]
        %v3090 = vld [vmem:[#allocation13 + $0x90] sm:$0xff]
        %v3091 = vld [vmem:[#allocation13 + $0x98] sm:$0xff]
        %v3092 = vld [vmem:[#allocation13 + $0xa0] sm:$0xff]
        %v3093 = vld [vmem:[#allocation13 + $0xa8] sm:$0xff]
        %v3094 = vld [vmem:[#allocation13 + $0xb0] sm:$0xff]
        %v3095 = vld [vmem:[#allocation13 + $0xb8] sm:$0xff]
        %v3096 = vld [vmem:[#allocation13 + $0xc0] sm:$0xff]
        %v3097 = vld [vmem:[#allocation13 + $0xc8] sm:$0xff]
        %v3098 = vld [vmem:[#allocation13 + $0xd0] sm:$0xff]
        %v3099 = vld [vmem:[#allocation13 + $0xd8] sm:$0xff]
        %v3100 = vld [vmem:[#allocation13 + $0xe0] sm:$0xff]
        %v3101 = vld [vmem:[#allocation13 + $0xe8] sm:$0xff]
        %v3102 = vld [vmem:[#allocation13 + $0xf0] sm:$0xff]
        %v3103 = vld [vmem:[#allocation13 + $0xf8] sm:$0xff]
        %v3104 = vld [vmem:[#allocation13 + $0x100] sm:$0xff]
        %v3105 = vld [vmem:[#allocation13 + $0x108] sm:$0xff]
        %v3106 = vld [vmem:[#allocation13 + $0x110] sm:$0xff]
        %v3107 = vld [vmem:[#allocation13 + $0x118] sm:$0xff]
        %v3108 = vld [vmem:[#allocation13 + $0x120] sm:$0xff]
        %v3109 = vld [vmem:[#allocation13 + $0x128] sm:$0xff]
        %v3110 = vld [vmem:[#allocation13 + $0x130] sm:$0xff]
        %v3111 = vld [vmem:[#allocation13 + $0x138] sm:$0xff]
        %v3112 = vld [vmem:[#allocation13 + $0x140] sm:$0xff]
        %v3113 = vld [vmem:[#allocation13 + $0x148] sm:$0xff]
        %v3114 = vld [vmem:[#allocation13 + $0x150] sm:$0xff]
        %v3115 = vld [vmem:[#allocation13 + $0x158] sm:$0xff]
        %v3116 = vld [vmem:[#allocation13 + $0x160] sm:$0xff]
        %v3117 = vld [vmem:[#allocation13 + $0x168] sm:$0xff]
        %v3118 = vld [vmem:[#allocation13 + $0x170] sm:$0xff]
        %v3119 = vld [vmem:[#allocation13 + $0x178] sm:$0xff]
        %v3120 = vld [vmem:[#allocation13 + $0x180] sm:$0xff]
        %v3121 = vld [vmem:[#allocation13 + $0x188] sm:$0xff]
        %v3122 = vld [vmem:[#allocation13 + $0x190] sm:$0xff]
        %v3123 = vld [vmem:[#allocation13 + $0x198] sm:$0xff]
        %v3124 = vld [vmem:[#allocation13 + $0x1a0] sm:$0xff]
        %v3125 = vld [vmem:[#allocation13 + $0x1a8] sm:$0xff]
        %v3126 = vld [vmem:[#allocation13 + $0x1b0] sm:$0xff]
        %v3127 = vld [vmem:[#allocation13 + $0x1b8] sm:$0xff]
        %v3128 = vld [vmem:[#allocation13 + $0x1c0] sm:$0xff]
        %v3129 = vld [vmem:[#allocation13 + $0x1c8] sm:$0xff]
        %v3130 = vld [vmem:[#allocation13 + $0x1d0] sm:$0xff]
        %v3131 = vld [vmem:[#allocation13 + $0x1d8] sm:$0xff]
        %v3132 = vld [vmem:[#allocation13 + $0x1e0] sm:$0xff]
        %v3133 = vld [vmem:[#allocation13 + $0x1e8] sm:$0xff]
        %v3134 = vld [vmem:[#allocation13 + $0x1f0] sm:$0xff]
        %v3135 = vld [vmem:[#allocation13 + $0x1f8] sm:$0xff]
        %v3136 = vld [vmem:[#allocation13 + $0x200] sm:$0xff]
        %v3137 = vld [vmem:[#allocation13 + $0x208] sm:$0xff]
        %v3138 = vld [vmem:[#allocation13 + $0x210] sm:$0xff]
        %v3139 = vld [vmem:[#allocation13 + $0x218] sm:$0xff]
        %v3140 = vld [vmem:[#allocation13 + $0x220] sm:$0xff]
        %v3141 = vld [vmem:[#allocation13 + $0x228] sm:$0xff]
        %v3142 = vld [vmem:[#allocation13 + $0x230] sm:$0xff]
        %v3143 = vld [vmem:[#allocation13 + $0x238] sm:$0xff]
        %v3144 = vld [vmem:[#allocation13 + $0x240] sm:$0xff]
        %v3145 = vld [vmem:[#allocation13 + $0x248] sm:$0xff]
        %v3146 = vld [vmem:[#allocation13 + $0x250] sm:$0xff]
        %v3147 = vld [vmem:[#allocation13 + $0x258] sm:$0xff]
        %v3148 = vld [vmem:[#allocation13 + $0x260] sm:$0xff]
        %v3149 = vld [vmem:[#allocation13 + $0x268] sm:$0xff]
        %v3150 = vld [vmem:[#allocation13 + $0x270] sm:$0xff]
        %v3151 = vld [vmem:[#allocation13 + $0x278] sm:$0xff]
        %v3152 = vld [vmem:[#allocation13 + $0x280] sm:$0xff]
        %v3153 = vld [vmem:[#allocation13 + $0x288] sm:$0xff]
        %v3154 = vld [vmem:[#allocation13 + $0x290] sm:$0xff]
        %v3155 = vld [vmem:[#allocation13 + $0x298] sm:$0xff]
        %v3156 = vld [vmem:[#allocation13 + $0x2a0] sm:$0xff]
        %v3157 = vld [vmem:[#allocation13 + $0x2a8] sm:$0xff]
        %v3158 = vld [vmem:[#allocation13 + $0x2b0] sm:$0xff]
        %v3159 = vld [vmem:[#allocation13 + $0x2b8] sm:$0xff]
        %v3160 = vld [vmem:[#allocation13 + $0x2c0] sm:$0xff]
        %v3161 = vld [vmem:[#allocation13 + $0x2c8] sm:$0xff]
        %v3162 = vld [vmem:[#allocation13 + $0x2d0] sm:$0xff]
        %v3163 = vld [vmem:[#allocation13 + $0x2d8] sm:$0xff]
        %v3164 = vld [vmem:[#allocation13 + $0x2e0] sm:$0xff]
        %v3165 = vld [vmem:[#allocation13 + $0x2e8] sm:$0xff]
        %v3166 = vld [vmem:[#allocation13 + $0x2f0] sm:$0xff]
        %v3167 = vld [vmem:[#allocation13 + $0x2f8] sm:$0xff]
        %v3168 = vld [vmem:[#allocation13 + $0x300] sm:$0xff]
        %v3169 = vld [vmem:[#allocation13 + $0x308] sm:$0xff]
        %v3170 = vld [vmem:[#allocation13 + $0x310] sm:$0xff]
        %v3171 = vld [vmem:[#allocation13 + $0x318] sm:$0xff]
        %v3172 = vld [vmem:[#allocation13 + $0x320] sm:$0xff]
        %v3173 = vld [vmem:[#allocation13 + $0x328] sm:$0xff]
        %v3174 = vld [vmem:[#allocation13 + $0x330] sm:$0xff]
        %v3175 = vld [vmem:[#allocation13 + $0x338] sm:$0xff]
        %v3176 = vld [vmem:[#allocation13 + $0x340] sm:$0xff]
        %v3177 = vld [vmem:[#allocation13 + $0x348] sm:$0xff]
        %v3178 = vld [vmem:[#allocation13 + $0x350] sm:$0xff]
        %v3179 = vld [vmem:[#allocation13 + $0x358] sm:$0xff]
        %v3180 = vld [vmem:[#allocation13 + $0x360] sm:$0xff]
        %v3181 = vld [vmem:[#allocation13 + $0x368] sm:$0xff]
        %v3182 = vld [vmem:[#allocation13 + $0x370] sm:$0xff]
        %v3183 = vld [vmem:[#allocation13 + $0x378] sm:$0xff]
        %v3184 = vld [vmem:[#allocation13 + $0x380] sm:$0xff]
        %v3185 = vld [vmem:[#allocation13 + $0x388] sm:$0xff]
        %v3186 = vld [vmem:[#allocation13 + $0x390] sm:$0xff]
        %v3187 = vld [vmem:[#allocation13 + $0x398] sm:$0xff]
        %v3188 = vld [vmem:[#allocation13 + $0x3a0] sm:$0xff]
        %v3189 = vld [vmem:[#allocation13 + $0x3a8] sm:$0xff]
        %v3190 = vld [vmem:[#allocation13 + $0x3b0] sm:$0xff]
        %v3191 = vld [vmem:[#allocation13 + $0x3b8] sm:$0xff]
        %v3192 = vld [vmem:[#allocation13 + $0x3c0] sm:$0xff]
        %v3193 = vld [vmem:[#allocation13 + $0x3c8] sm:$0xff]
        %v3194 = vld [vmem:[#allocation13 + $0x3d0] sm:$0xff]
        %v3195 = vld [vmem:[#allocation13 + $0x3d8] sm:$0xff]
        %v3196 = vld [vmem:[#allocation13 + $0x3e0] sm:$0xff]
        %v3197 = vld [vmem:[#allocation13 + $0x3e8] sm:$0xff]
        %v3198 = vld [vmem:[#allocation13 + $0x3f0] sm:$0xff]
        %v3199 = vld [vmem:[#allocation13 + $0x3f8] sm:$0xff]
        %v3200 = vld [vmem:[#allocation13 + $0x400] sm:$0xff]
        %v3201 = vld [vmem:[#allocation13 + $0x408] sm:$0xff]
        %v3202 = vld [vmem:[#allocation13 + $0x410] sm:$0xff]
        %v3203 = vld [vmem:[#allocation13 + $0x418] sm:$0xff]
        %v3204 = vld [vmem:[#allocation13 + $0x420] sm:$0xff]
        %v3205 = vld [vmem:[#allocation13 + $0x428] sm:$0xff]
        %v3206 = vld [vmem:[#allocation13 + $0x430] sm:$0xff]
        %v3207 = vld [vmem:[#allocation13 + $0x438] sm:$0xff]
        %v3208 = vld [vmem:[#allocation13 + $0x440] sm:$0xff]
        %v3209 = vld [vmem:[#allocation13 + $0x448] sm:$0xff]
        %v3210 = vld [vmem:[#allocation13 + $0x450] sm:$0xff]
        %v3211 = vld [vmem:[#allocation13 + $0x458] sm:$0xff]
        %v3212 = vld [vmem:[#allocation13 + $0x460] sm:$0xff]
        %v3213 = vld [vmem:[#allocation13 + $0x468] sm:$0xff]
        %v3214 = vld [vmem:[#allocation13 + $0x470] sm:$0xff]
        %v3215 = vld [vmem:[#allocation13 + $0x478] sm:$0xff]
        %v3216 = vld [vmem:[#allocation13 + $0x480] sm:$0xff]
        %v3217 = vld [vmem:[#allocation13 + $0x488] sm:$0xff]
        %v3218 = vld [vmem:[#allocation13 + $0x490] sm:$0xff]
        %v3219 = vld [vmem:[#allocation13 + $0x498] sm:$0xff]
        %v3220 = vld [vmem:[#allocation13 + $0x4a0] sm:$0xff]
        %v3221 = vld [vmem:[#allocation13 + $0x4a8] sm:$0xff]
        %v3222 = vld [vmem:[#allocation13 + $0x4b0] sm:$0xff]
        %v3223 = vld [vmem:[#allocation13 + $0x4b8] sm:$0xff]
        %v3224 = vld [vmem:[#allocation13 + $0x4c0] sm:$0xff]
        %v3225 = vld [vmem:[#allocation13 + $0x4c8] sm:$0xff]
        %v3226 = vld [vmem:[#allocation13 + $0x4d0] sm:$0xff]
        %v3227 = vld [vmem:[#allocation13 + $0x4d8] sm:$0xff]
        %v3228 = vld [vmem:[#allocation13 + $0x4e0] sm:$0xff]
        %v3229 = vld [vmem:[#allocation13 + $0x4e8] sm:$0xff]
        %v3230 = vld [vmem:[#allocation13 + $0x4f0] sm:$0xff]
        %v3231 = vld [vmem:[#allocation13 + $0x4f8] sm:$0xff]
        %v3232 = vld [vmem:[#allocation13 + $0x500] sm:$0xff]
        %v3233 = vld [vmem:[#allocation13 + $0x508] sm:$0xff]
        %v3234 = vld [vmem:[#allocation13 + $0x510] sm:$0xff]
        %v3235 = vld [vmem:[#allocation13 + $0x518] sm:$0xff]
        %v3236 = vld [vmem:[#allocation13 + $0x520] sm:$0xff]
        %v3237 = vld [vmem:[#allocation13 + $0x528] sm:$0xff]
        %v3238 = vld [vmem:[#allocation13 + $0x530] sm:$0xff]
        %v3239 = vld [vmem:[#allocation13 + $0x538] sm:$0xff]
        %v3240 = vld [vmem:[#allocation13 + $0x540] sm:$0xff]
        %v3241 = vld [vmem:[#allocation13 + $0x548] sm:$0xff]
        %v3242 = vld [vmem:[#allocation13 + $0x550] sm:$0xff]
        %v3243 = vld [vmem:[#allocation13 + $0x558] sm:$0xff]
        %v3244 = vld [vmem:[#allocation13 + $0x560] sm:$0xff]
        %v3245 = vld [vmem:[#allocation13 + $0x568] sm:$0xff]
        %v3246 = vld [vmem:[#allocation13 + $0x570] sm:$0xff]
        %v3247 = vld [vmem:[#allocation13 + $0x578] sm:$0xff]
        %v3248 = vld [vmem:[#allocation13 + $0x580] sm:$0xff]
        %v3249 = vld [vmem:[#allocation13 + $0x588] sm:$0xff]
        %v3250 = vld [vmem:[#allocation13 + $0x590] sm:$0xff]
        %v3251 = vld [vmem:[#allocation13 + $0x598] sm:$0xff]
        %v3252 = vld [vmem:[#allocation13 + $0x5a0] sm:$0xff]
        %v3253 = vld [vmem:[#allocation13 + $0x5a8] sm:$0xff]
        %v3254 = vld [vmem:[#allocation13 + $0x5b0] sm:$0xff]
        %v3255 = vld [vmem:[#allocation13 + $0x5b8] sm:$0xff]
        %v3256 = vld [vmem:[#allocation13 + $0x5c0] sm:$0xff]
        %v3257 = vld [vmem:[#allocation13 + $0x5c8] sm:$0xff]
        %v3258 = vld [vmem:[#allocation13 + $0x5d0] sm:$0xff]
        %v3259 = vld [vmem:[#allocation13 + $0x5d8] sm:$0xff]
        %v3260 = vld [vmem:[#allocation13 + $0x5e0] sm:$0xff]
        %v3261 = vld [vmem:[#allocation13 + $0x5e8] sm:$0xff]
        %v3262 = vld [vmem:[#allocation13 + $0x5f0] sm:$0xff]
        %v3263 = vld [vmem:[#allocation13 + $0x5f8] sm:$0xff]
        %v3264 = vld [vmem:[#allocation13 + $0x600] sm:$0xff]
        %v3265 = vld [vmem:[#allocation13 + $0x608] sm:$0xff]
        %v3266 = vld [vmem:[#allocation13 + $0x610] sm:$0xff]
        %v3267 = vld [vmem:[#allocation13 + $0x618] sm:$0xff]
        %v3268 = vld [vmem:[#allocation13 + $0x620] sm:$0xff]
        %v3269 = vld [vmem:[#allocation13 + $0x628] sm:$0xff]
        %v3270 = vld [vmem:[#allocation13 + $0x630] sm:$0xff]
        %v3271 = vld [vmem:[#allocation13 + $0x638] sm:$0xff]
        %v3272 = vld [vmem:[#allocation13 + $0x640] sm:$0xff]
        %v3273 = vld [vmem:[#allocation13 + $0x648] sm:$0xff]
        %v3274 = vld [vmem:[#allocation13 + $0x650] sm:$0xff]
        %v3275 = vld [vmem:[#allocation13 + $0x658] sm:$0xff]
        %v3276 = vld [vmem:[#allocation13 + $0x660] sm:$0xff]
        %v3277 = vld [vmem:[#allocation13 + $0x668] sm:$0xff]
        %v3278 = vld [vmem:[#allocation13 + $0x670] sm:$0xff]
        %v3279 = vld [vmem:[#allocation13 + $0x678] sm:$0xff]
        %v3280 = vld [vmem:[#allocation13 + $0x680] sm:$0xff]
        %v3281 = vld [vmem:[#allocation13 + $0x688] sm:$0xff]
        %v3282 = vld [vmem:[#allocation13 + $0x690] sm:$0xff]
        %v3283 = vld [vmem:[#allocation13 + $0x698] sm:$0xff]
        %v3284 = vld [vmem:[#allocation13 + $0x6a0] sm:$0xff]
        %v3285 = vld [vmem:[#allocation13 + $0x6a8] sm:$0xff]
        %v3286 = vld [vmem:[#allocation13 + $0x6b0] sm:$0xff]
        %v3287 = vld [vmem:[#allocation13 + $0x6b8] sm:$0xff]
        %v3288 = vld [vmem:[#allocation13 + $0x6c0] sm:$0xff]
        %v3289 = vld [vmem:[#allocation13 + $0x6c8] sm:$0xff]
        %v3290 = vld [vmem:[#allocation13 + $0x6d0] sm:$0xff]
        %v3291 = vld [vmem:[#allocation13 + $0x6d8] sm:$0xff]
        %v3292 = vld [vmem:[#allocation13 + $0x6e0] sm:$0xff]
        %v3293 = vld [vmem:[#allocation13 + $0x6e8] sm:$0xff]
        %v3294 = vld [vmem:[#allocation13 + $0x6f0] sm:$0xff]
        %v3295 = vld [vmem:[#allocation13 + $0x6f8] sm:$0xff]
        %v3296 = vld [vmem:[#allocation13 + $0x700] sm:$0xff]
        %v3297 = vld [vmem:[#allocation13 + $0x708] sm:$0xff]
        %v3298 = vld [vmem:[#allocation13 + $0x710] sm:$0xff]
        %v3299 = vld [vmem:[#allocation13 + $0x718] sm:$0xff]
        %v3300 = vld [vmem:[#allocation13 + $0x720] sm:$0xff]
        %v3301 = vld [vmem:[#allocation13 + $0x728] sm:$0xff]
        %v3302 = vld [vmem:[#allocation13 + $0x730] sm:$0xff]
        %v3303 = vld [vmem:[#allocation13 + $0x738] sm:$0xff]
        %v3304 = vld [vmem:[#allocation13 + $0x740] sm:$0xff]
        %v3305 = vld [vmem:[#allocation13 + $0x748] sm:$0xff]
        %v3306 = vld [vmem:[#allocation13 + $0x750] sm:$0xff]
        %v3307 = vld [vmem:[#allocation13 + $0x758] sm:$0xff]
        %v3308 = vld [vmem:[#allocation13 + $0x760] sm:$0xff]
        %v3309 = vld [vmem:[#allocation13 + $0x768] sm:$0xff]
        %v3310 = vld [vmem:[#allocation13 + $0x770] sm:$0xff]
        %v3311 = vld [vmem:[#allocation13 + $0x778] sm:$0xff]
        %v3312 = vld [vmem:[#allocation13 + $0x780] sm:$0xff]
        %v3313 = vld [vmem:[#allocation13 + $0x788] sm:$0xff]
        %v3314 = vld [vmem:[#allocation13 + $0x790] sm:$0xff]
        %v3315 = vld [vmem:[#allocation13 + $0x798] sm:$0xff]
        %v3316 = vld [vmem:[#allocation13 + $0x7a0] sm:$0xff]
        %v3317 = vld [vmem:[#allocation13 + $0x7a8] sm:$0xff]
        %v3318 = vld [vmem:[#allocation13 + $0x7b0] sm:$0x7f]
        %v3319 = vld [vmem:[#allocation13 + $0x7b8] sm:$0x7f]
        %v3321 = vsel %vm1912, %v3071, 0
        %vm3323 = vcmask 1046528
        %v3325 = vsel %vm3323, %v3318, 0
        %v3328 = vsel %vm3323, %v3319, 0
        %3330 = vmatpush.msra.mxu0 %v3102
        %3331 = vmatpush.msra.mxu0 %v3100
        %3332 = vmatpush.msra.mxu0 %v3098
        %3333 = vmatpush.msra.mxu0 %v3096
        %3334 = vmatpush.msra.mxu0 %v3094
        %3335 = vmatpush.msra.mxu0 %v3092
        %3336 = vmatpush.msra.mxu0 %v3090
        %3337 = vmatpush.msra.mxu0 %v3088
        %3338 = vmatpush.msra.mxu0 %v3086
        %3339 = vmatpush.msra.mxu0 %v3084
        %3340 = vmatpush.msra.mxu0 %v3082
        %3341 = vmatpush.msra.mxu0 %v3080
        %3342 = vmatpush.msra.mxu0 %v3078
        %3343 = vmatpush.msra.mxu0 %v3076
        %3344 = vmatpush.msra.mxu0 %v3074
        %3345 = vmatpush.msra.mxu0 %v3072
        %3346 = vmatmul.f32.gmra.mxu0 %v3064
        %v3347 = vpop.f32.mrf.mxu0
        %v3348 = vadd.f32 0.0, %v3347
        %3349 = vdwg.mxu0
        %3350 = vmatpush.msra.mxu0 %v3134
        %3351 = vmatpush.msra.mxu0 %v3132
        %3352 = vmatpush.msra.mxu0 %v3130
        %3353 = vmatpush.msra.mxu0 %v3128
        %3354 = vmatpush.msra.mxu0 %v3126
        %3355 = vmatpush.msra.mxu0 %v3124
        %3356 = vmatpush.msra.mxu0 %v3122
        %3357 = vmatpush.msra.mxu0 %v3120
        %3358 = vmatpush.msra.mxu0 %v3118
        %3359 = vmatpush.msra.mxu0 %v3116
        %3360 = vmatpush.msra.mxu0 %v3114
        %3361 = vmatpush.msra.mxu0 %v3112
        %3362 = vmatpush.msra.mxu0 %v3110
        %3363 = vmatpush.msra.mxu0 %v3108
        %3364 = vmatpush.msra.mxu0 %v3106
        %3365 = vmatpush.msra.mxu0 %v3104
        %3366 = vmatmul.f32.gmra.mxu0 %v3065
        %v3367 = vpop.f32.mrf.mxu0
        %v3368 = vadd.f32 %v3348, %v3367
        %3369 = vdwg.mxu0
        %3370 = vmatpush.msra.mxu0 %v3166
        %3371 = vmatpush.msra.mxu0 %v3164
        %3372 = vmatpush.msra.mxu0 %v3162
        %3373 = vmatpush.msra.mxu0 %v3160
        %3374 = vmatpush.msra.mxu0 %v3158
        %3375 = vmatpush.msra.mxu0 %v3156
        %3376 = vmatpush.msra.mxu0 %v3154
        %3377 = vmatpush.msra.mxu0 %v3152
        %3378 = vmatpush.msra.mxu0 %v3150
        %3379 = vmatpush.msra.mxu0 %v3148
        %3380 = vmatpush.msra.mxu0 %v3146
        %3381 = vmatpush.msra.mxu0 %v3144
        %3382 = vmatpush.msra.mxu0 %v3142
        %3383 = vmatpush.msra.mxu0 %v3140
        %3384 = vmatpush.msra.mxu0 %v3138
        %3385 = vmatpush.msra.mxu0 %v3136
        %3386 = vmatmul.f32.gmra.mxu0 %v3066
        %v3387 = vpop.f32.mrf.mxu0
        %v3388 = vadd.f32 %v3368, %v3387
        %3389 = vdwg.mxu0
        %3390 = vmatpush.msra.mxu0 %v3198
        %3391 = vmatpush.msra.mxu0 %v3196
        %3392 = vmatpush.msra.mxu0 %v3194
        %3393 = vmatpush.msra.mxu0 %v3192
        %3394 = vmatpush.msra.mxu0 %v3190
        %3395 = vmatpush.msra.mxu0 %v3188
        %3396 = vmatpush.msra.mxu0 %v3186
        %3397 = vmatpush.msra.mxu0 %v3184
        %3398 = vmatpush.msra.mxu0 %v3182
        %3399 = vmatpush.msra.mxu0 %v3180
        %3400 = vmatpush.msra.mxu0 %v3178
        %3401 = vmatpush.msra.mxu0 %v3176
        %3402 = vmatpush.msra.mxu0 %v3174
        %3403 = vmatpush.msra.mxu0 %v3172
        %3404 = vmatpush.msra.mxu0 %v3170
        %3405 = vmatpush.msra.mxu0 %v3168
        %3406 = vmatmul.f32.gmra.mxu0 %v3067
        %v3407 = vpop.f32.mrf.mxu0
        %v3408 = vadd.f32 %v3388, %v3407
        %3409 = vdwg.mxu0
        %3410 = vmatpush.msra.mxu0 %v3230
        %3411 = vmatpush.msra.mxu0 %v3228
        %3412 = vmatpush.msra.mxu0 %v3226
        %3413 = vmatpush.msra.mxu0 %v3224
        %3414 = vmatpush.msra.mxu0 %v3222
        %3415 = vmatpush.msra.mxu0 %v3220
        %3416 = vmatpush.msra.mxu0 %v3218
        %3417 = vmatpush.msra.mxu0 %v3216
        %3418 = vmatpush.msra.mxu0 %v3214
        %3419 = vmatpush.msra.mxu0 %v3212
        %3420 = vmatpush.msra.mxu0 %v3210
        %3421 = vmatpush.msra.mxu0 %v3208
        %3422 = vmatpush.msra.mxu0 %v3206
        %3423 = vmatpush.msra.mxu0 %v3204
        %3424 = vmatpush.msra.mxu0 %v3202
        %3425 = vmatpush.msra.mxu0 %v3200
        %3426 = vmatmul.f32.gmra.mxu0 %v3068
        %v3427 = vpop.f32.mrf.mxu0
        %v3428 = vadd.f32 %v3408, %v3427
        %3429 = vdwg.mxu0
        %3430 = vmatpush.msra.mxu0 %v3262
        %3431 = vmatpush.msra.mxu0 %v3260
        %3432 = vmatpush.msra.mxu0 %v3258
        %3433 = vmatpush.msra.mxu0 %v3256
        %3434 = vmatpush.msra.mxu0 %v3254
        %3435 = vmatpush.msra.mxu0 %v3252
        %3436 = vmatpush.msra.mxu0 %v3250
        %3437 = vmatpush.msra.mxu0 %v3248
        %3438 = vmatpush.msra.mxu0 %v3246
        %3439 = vmatpush.msra.mxu0 %v3244
        %3440 = vmatpush.msra.mxu0 %v3242
        %3441 = vmatpush.msra.mxu0 %v3240
        %3442 = vmatpush.msra.mxu0 %v3238
        %3443 = vmatpush.msra.mxu0 %v3236
        %3444 = vmatpush.msra.mxu0 %v3234
        %3445 = vmatpush.msra.mxu0 %v3232
        %3446 = vmatmul.f32.gmra.mxu0 %v3069
        %v3447 = vpop.f32.mrf.mxu0
        %v3448 = vadd.f32 %v3428, %v3447
        %3449 = vdwg.mxu0
        %3450 = vmatpush.msra.mxu0 %v3294
        %3451 = vmatpush.msra.mxu0 %v3292
        %3452 = vmatpush.msra.mxu0 %v3290
        %3453 = vmatpush.msra.mxu0 %v3288
        %3454 = vmatpush.msra.mxu0 %v3286
        %3455 = vmatpush.msra.mxu0 %v3284
        %3456 = vmatpush.msra.mxu0 %v3282
        %3457 = vmatpush.msra.mxu0 %v3280
        %3458 = vmatpush.msra.mxu0 %v3278
        %3459 = vmatpush.msra.mxu0 %v3276
        %3460 = vmatpush.msra.mxu0 %v3274
        %3461 = vmatpush.msra.mxu0 %v3272
        %3462 = vmatpush.msra.mxu0 %v3270
        %3463 = vmatpush.msra.mxu0 %v3268
        %3464 = vmatpush.msra.mxu0 %v3266
        %3465 = vmatpush.msra.mxu0 %v3264
        %3466 = vmatmul.f32.gmra.mxu0 %v3070
        %v3467 = vpop.f32.mrf.mxu0
        %v3468 = vadd.f32 %v3448, %v3467
        %3469 = vdwg.mxu0
        %3470 = vmatpush.msra.mxu0 0.0
        %3471 = vmatpush.msra.mxu0 0.0
        %3472 = vmatpush.msra.mxu0 0.0
        %3473 = vmatpush.msra.mxu0 0.0
        %3474 = vmatpush.msra.mxu0 %v3325
        %3475 = vmatpush.msra.mxu0 %v3316
        %3476 = vmatpush.msra.mxu0 %v3314
        %3477 = vmatpush.msra.mxu0 %v3312
        %3478 = vmatpush.msra.mxu0 %v3310
        %3479 = vmatpush.msra.mxu0 %v3308
        %3480 = vmatpush.msra.mxu0 %v3306
        %3481 = vmatpush.msra.mxu0 %v3304
        %3482 = vmatpush.msra.mxu0 %v3302
        %3483 = vmatpush.msra.mxu0 %v3300
        %3484 = vmatpush.msra.mxu0 %v3298
        %3485 = vmatpush.msra.mxu0 %v3296
        %3486 = vmatmul.f32.gmra.mxu0 %v3321
        %v3487 = vpop.f32.mrf.mxu0
        %v3488 = vadd.f32 %v3468, %v3487
        %3489 = vdwg.mxu0
        %3490 = vmatpush.msra.mxu0 %v3103
        %3491 = vmatpush.msra.mxu0 %v3101
        %3492 = vmatpush.msra.mxu0 %v3099
        %3493 = vmatpush.msra.mxu0 %v3097
        %3494 = vmatpush.msra.mxu0 %v3095
        %3495 = vmatpush.msra.mxu0 %v3093
        %3496 = vmatpush.msra.mxu0 %v3091
        %3497 = vmatpush.msra.mxu0 %v3089
        %3498 = vmatpush.msra.mxu0 %v3087
        %3499 = vmatpush.msra.mxu0 %v3085
        %3500 = vmatpush.msra.mxu0 %v3083
        %3501 = vmatpush.msra.mxu0 %v3081
        %3502 = vmatpush.msra.mxu0 %v3079
        %3503 = vmatpush.msra.mxu0 %v3077
        %3504 = vmatpush.msra.mxu0 %v3075
        %3505 = vmatpush.msra.mxu0 %v3073
        %3506 = vmatmul.f32.gmra.mxu0 %v3064
        %v3507 = vpop.f32.mrf.mxu0
        %v3508 = vadd.f32 0.0, %v3507
        %3509 = vdwg.mxu0
        %3510 = vmatpush.msra.mxu0 %v3135
        %3511 = vmatpush.msra.mxu0 %v3133
        %3512 = vmatpush.msra.mxu0 %v3131
        %3513 = vmatpush.msra.mxu0 %v3129
        %3514 = vmatpush.msra.mxu0 %v3127
        %3515 = vmatpush.msra.mxu0 %v3125
        %3516 = vmatpush.msra.mxu0 %v3123
        %3517 = vmatpush.msra.mxu0 %v3121
        %3518 = vmatpush.msra.mxu0 %v3119
        %3519 = vmatpush.msra.mxu0 %v3117
        %3520 = vmatpush.msra.mxu0 %v3115
        %3521 = vmatpush.msra.mxu0 %v3113
        %3522 = vmatpush.msra.mxu0 %v3111
        %3523 = vmatpush.msra.mxu0 %v3109
        %3524 = vmatpush.msra.mxu0 %v3107
        %3525 = vmatpush.msra.mxu0 %v3105
        %3526 = vmatmul.f32.gmra.mxu0 %v3065
        %v3527 = vpop.f32.mrf.mxu0
        %v3528 = vadd.f32 %v3508, %v3527
        %3529 = vdwg.mxu0
        %3530 = vmatpush.msra.mxu0 %v3167
        %3531 = vmatpush.msra.mxu0 %v3165
        %3532 = vmatpush.msra.mxu0 %v3163
        %3533 = vmatpush.msra.mxu0 %v3161
        %3534 = vmatpush.msra.mxu0 %v3159
        %3535 = vmatpush.msra.mxu0 %v3157
        %3536 = vmatpush.msra.mxu0 %v3155
        %3537 = vmatpush.msra.mxu0 %v3153
        %3538 = vmatpush.msra.mxu0 %v3151
        %3539 = vmatpush.msra.mxu0 %v3149
        %3540 = vmatpush.msra.mxu0 %v3147
        %3541 = vmatpush.msra.mxu0 %v3145
        %3542 = vmatpush.msra.mxu0 %v3143
        %3543 = vmatpush.msra.mxu0 %v3141
        %3544 = vmatpush.msra.mxu0 %v3139
        %3545 = vmatpush.msra.mxu0 %v3137
        %3546 = vmatmul.f32.gmra.mxu0 %v3066
        %v3547 = vpop.f32.mrf.mxu0
        %v3548 = vadd.f32 %v3528, %v3547
        %3549 = vdwg.mxu0
        %3550 = vmatpush.msra.mxu0 %v3199
        %3551 = vmatpush.msra.mxu0 %v3197
        %3552 = vmatpush.msra.mxu0 %v3195
        %3553 = vmatpush.msra.mxu0 %v3193
        %3554 = vmatpush.msra.mxu0 %v3191
        %3555 = vmatpush.msra.mxu0 %v3189
        %3556 = vmatpush.msra.mxu0 %v3187
        %3557 = vmatpush.msra.mxu0 %v3185
        %3558 = vmatpush.msra.mxu0 %v3183
        %3559 = vmatpush.msra.mxu0 %v3181
        %3560 = vmatpush.msra.mxu0 %v3179
        %3561 = vmatpush.msra.mxu0 %v3177
        %3562 = vmatpush.msra.mxu0 %v3175
        %3563 = vmatpush.msra.mxu0 %v3173
        %3564 = vmatpush.msra.mxu0 %v3171
        %3565 = vmatpush.msra.mxu0 %v3169
        %3566 = vmatmul.f32.gmra.mxu0 %v3067
        %v3567 = vpop.f32.mrf.mxu0
        %v3568 = vadd.f32 %v3548, %v3567
        %3569 = vdwg.mxu0
        %3570 = vmatpush.msra.mxu0 %v3231
        %3571 = vmatpush.msra.mxu0 %v3229
        %3572 = vmatpush.msra.mxu0 %v3227
        %3573 = vmatpush.msra.mxu0 %v3225
        %3574 = vmatpush.msra.mxu0 %v3223
        %3575 = vmatpush.msra.mxu0 %v3221
        %3576 = vmatpush.msra.mxu0 %v3219
        %3577 = vmatpush.msra.mxu0 %v3217
        %3578 = vmatpush.msra.mxu0 %v3215
        %3579 = vmatpush.msra.mxu0 %v3213
        %3580 = vmatpush.msra.mxu0 %v3211
        %3581 = vmatpush.msra.mxu0 %v3209
        %3582 = vmatpush.msra.mxu0 %v3207
        %3583 = vmatpush.msra.mxu0 %v3205
        %3584 = vmatpush.msra.mxu0 %v3203
        %3585 = vmatpush.msra.mxu0 %v3201
        %3586 = vmatmul.f32.gmra.mxu0 %v3068
        %v3587 = vpop.f32.mrf.mxu0
        %v3588 = vadd.f32 %v3568, %v3587
        %3589 = vdwg.mxu0
        %3590 = vmatpush.msra.mxu0 %v3263
        %3591 = vmatpush.msra.mxu0 %v3261
        %3592 = vmatpush.msra.mxu0 %v3259
        %3593 = vmatpush.msra.mxu0 %v3257
        %3594 = vmatpush.msra.mxu0 %v3255
        %3595 = vmatpush.msra.mxu0 %v3253
        %3596 = vmatpush.msra.mxu0 %v3251
        %3597 = vmatpush.msra.mxu0 %v3249
        %3598 = vmatpush.msra.mxu0 %v3247
        %3599 = vmatpush.msra.mxu0 %v3245
        %3600 = vmatpush.msra.mxu0 %v3243
        %3601 = vmatpush.msra.mxu0 %v3241
        %3602 = vmatpush.msra.mxu0 %v3239
        %3603 = vmatpush.msra.mxu0 %v3237
        %3604 = vmatpush.msra.mxu0 %v3235
        %3605 = vmatpush.msra.mxu0 %v3233
        %3606 = vmatmul.f32.gmra.mxu0 %v3069
        %v3607 = vpop.f32.mrf.mxu0
        %v3608 = vadd.f32 %v3588, %v3607
        %3609 = vdwg.mxu0
        %3610 = vmatpush.msra.mxu0 %v3295
        %3611 = vmatpush.msra.mxu0 %v3293
        %3612 = vmatpush.msra.mxu0 %v3291
        %3613 = vmatpush.msra.mxu0 %v3289
        %3614 = vmatpush.msra.mxu0 %v3287
        %3615 = vmatpush.msra.mxu0 %v3285
        %3616 = vmatpush.msra.mxu0 %v3283
        %3617 = vmatpush.msra.mxu0 %v3281
        %3618 = vmatpush.msra.mxu0 %v3279
        %3619 = vmatpush.msra.mxu0 %v3277
        %3620 = vmatpush.msra.mxu0 %v3275
        %3621 = vmatpush.msra.mxu0 %v3273
        %3622 = vmatpush.msra.mxu0 %v3271
        %3623 = vmatpush.msra.mxu0 %v3269
        %3624 = vmatpush.msra.mxu0 %v3267
        %3625 = vmatpush.msra.mxu0 %v3265
        %3626 = vmatmul.f32.gmra.mxu0 %v3070
        %v3627 = vpop.f32.mrf.mxu0
        %v3628 = vadd.f32 %v3608, %v3627
        %3629 = vdwg.mxu0
        %3630 = vmatpush.msra.mxu0 0.0
        %3631 = vmatpush.msra.mxu0 0.0
        %3632 = vmatpush.msra.mxu0 0.0
        %3633 = vmatpush.msra.mxu0 0.0
        %3634 = vmatpush.msra.mxu0 %v3328
        %3635 = vmatpush.msra.mxu0 %v3317
        %3636 = vmatpush.msra.mxu0 %v3315
        %3637 = vmatpush.msra.mxu0 %v3313
        %3638 = vmatpush.msra.mxu0 %v3311
        %3639 = vmatpush.msra.mxu0 %v3309
        %3640 = vmatpush.msra.mxu0 %v3307
        %3641 = vmatpush.msra.mxu0 %v3305
        %3642 = vmatpush.msra.mxu0 %v3303
        %3643 = vmatpush.msra.mxu0 %v3301
        %3644 = vmatpush.msra.mxu0 %v3299
        %3645 = vmatpush.msra.mxu0 %v3297
        %3646 = vmatmul.f32.gmra.mxu0 %v3321
        %v3647 = vpop.f32.mrf.mxu0
        %v3648 = vadd.f32 %v3628, %v3647
        %3649 = vdwg.mxu0
        %3650 = vst [vmem:[#allocation5] sm:$0xff] %v3488
        %3651 = vst [vmem:[#allocation5 + $0x8] sm:$0xff] %v3648
        %v3652 = vld [vmem:[#allocation5] sm:$0xff]
        %v3653 = vld [vmem:[#allocation5 + $0x8] sm:$0xff]
        %v3654 = vadd.s32 %v649, 17
        %v3655 = vadd.s32 %v650, 17
        %vm3656 = vcmp.lt.s32.totalorder %v3654, 0
        %v3657 = vsub.s32 0, %v3654
        %v3658 = vsel %vm3656, %v3657, %v3654
        %v3659 = vshrl.u32 %v3658, 4
        %v3660 = vand.u32 %v3658, 15
        %v3661 = vsub.s32 0, %v3660
        %v3662 = vsel %vm3656, %v3661, %v3660
        %vm3663 = vcmp.lt.s32.totalorder %v3655, 0
        %v3664 = vsub.s32 0, %v3655
        %v3665 = vsel %vm3663, %v3664, %v3655
        %v3666 = vshrl.u32 %v3665, 4
        %v3667 = vand.u32 %v3665, 15
        %v3668 = vsub.s32 0, %v3667
        %v3669 = vsel %vm3663, %v3668, %v3667
        %vm3670 = vcmp.ne.s32.totalorder %v3662, 0
        %vm3671 = vcmp.ne.s32.totalorder %v3669, 0
        %vm3672 = vcmp.lt.s32.totalorder %v3662, 0
        %vm3673 = vcmp.lt.s32.totalorder %v3669, 0
        %vm3674 = vmand %vm3672, %vm3670
        %vm3675 = vmand %vm3673, %vm3671
        %v3676 = vadd.s32 %v3662, 16
        %v3677 = vadd.s32 %v3669, 16
        %v3678 = vsel %vm3674, %v3676, %v3662
        %v3679 = vsel %vm3675, %v3677, %v3669
        %vm3680 = vcmp.ne.s32.totalorder %v3678, 0
        %vm3681 = vcmp.ne.s32.totalorder %v3679, 0
        %v3682 = vsel %vm3680, 1, 0
        %v3683 = vsel %vm3681, 1, 0
        %vm3684 = vcmp.eq.s32.totalorder %v3682, 1
        %vm3685 = vcmp.eq.s32.totalorder %v3683, 1
        %v3686 = vsel %vm3684, %v3652, 0.0
        %v3687 = vsel %vm3685, %v3653, 0.0
        %3690 = vrot.lane.b32.xlu0 %v3686, 17
        %v3691 = vpop.permute.xlu0 %3690
        %3692 = vrot.lane.b32.xlu0 %v3687, 17
        %v3693 = vpop.permute.xlu0 %3692
        %vm3694 = vcmask 138240
        %v3695 = vsel %vm3694, %v3691, %v3693
        %vm3698 = vcmask 1047688
        %3699 = vst.msk [vmem:[#allocation2] sm:$0xff] %vm3698, %v3691
        %3700 = vst [vmem:[#allocation2 + $0x8] sm:$0xff] %v3695
        %3701 = vst.msk [vmem:[#allocation2] sm:$0xff] %vm3694, 0.0
        %v3702 = vld [vmem:[#allocation5] sm:$0xff]
        %v3703 = vld [vmem:[#allocation5 + $0x8] sm:$0xff]
        %3706 = vrot.lane.b32.xlu0 %v3702, 16
        %v3707 = vpop.permute.xlu0 %3706
        %3708 = vrot.lane.b32.xlu0 %v3703, 16
        %v3709 = vpop.permute.xlu0 %3708
        %vm3710 = vcmask 130048
        %v3711 = vsel %vm3710, %v3707, %v3709
        %vm3714 = vcmask 1047680
        %3715 = vst.msk [vmem:[#allocation2 + $0x40] sm:$0xff] %vm3714, %v3707
        %3716 = vst [vmem:[#allocation2 + $0x48] sm:$0xff] %v3711
        %3717 = vst.msk [vmem:[#allocation2 + $0x40] sm:$0xff] %vm3710, 0.0
        %v3718 = vld [vmem:[#allocation5] sm:$0xff]
        %v3719 = vld [vmem:[#allocation5 + $0x8] sm:$0xff]
        %v3720 = vadd.s32 %v649, 15
        %v3721 = vadd.s32 %v650, 15
        %vm3722 = vcmp.lt.s32.totalorder %v3720, 0
        %v3723 = vsub.s32 0, %v3720
        %v3724 = vsel %vm3722, %v3723, %v3720
        %v3725 = vshrl.u32 %v3724, 4
        %v3726 = vand.u32 %v3724, 15
        %v3727 = vsub.s32 0, %v3726
        %v3728 = vsel %vm3722, %v3727, %v3726
        %vm3729 = vcmp.lt.s32.totalorder %v3721, 0
        %v3730 = vsub.s32 0, %v3721
        %v3731 = vsel %vm3729, %v3730, %v3721
        %v3732 = vshrl.u32 %v3731, 4
        %v3733 = vand.u32 %v3731, 15
        %v3734 = vsub.s32 0, %v3733
        %v3735 = vsel %vm3729, %v3734, %v3733
        %vm3736 = vcmp.ne.s32.totalorder %v3728, 0
        %vm3737 = vcmp.ne.s32.totalorder %v3735, 0
        %vm3738 = vcmp.lt.s32.totalorder %v3728, 0
        %vm3739 = vcmp.lt.s32.totalorder %v3735, 0
        %vm3740 = vmand %vm3738, %vm3736
        %vm3741 = vmand %vm3739, %vm3737
        %v3742 = vadd.s32 %v3728, 16
        %v3743 = vadd.s32 %v3735, 16
        %v3744 = vsel %vm3740, %v3742, %v3728
        %v3745 = vsel %vm3741, %v3743, %v3735
        %vm3746 = vcmp.ne.s32.totalorder %v3744, 15
        %vm3747 = vcmp.ne.s32.totalorder %v3745, 15
        %v3748 = vsel %vm3746, 1, 0
        %v3749 = vsel %vm3747, 1, 0
        %vm3750 = vcmp.eq.s32.totalorder %v3748, 1
        %vm3751 = vcmp.eq.s32.totalorder %v3749, 1
        %v3752 = vsel %vm3750, %v3718, 0.0
        %v3753 = vsel %vm3751, %v3719, 0.0
        %3756 = vrot.lane.b32.xlu0 %v3752, 15
        %v3757 = vpop.permute.xlu0 %3756
        %3758 = vrot.lane.b32.xlu0 %v3753, 15
        %v3759 = vpop.permute.xlu0 %3758
        %vm3760 = vcmask 121856
        %v3761 = vsel %vm3760, %v3757, %v3759
        %vm3764 = vcmask 1047672
        %3765 = vst.msk [vmem:[#allocation2 + $0x80] sm:$0xff] %vm3764, %v3757
        %3766 = vst [vmem:[#allocation2 + $0x88] sm:$0xff] %v3761
        %3767 = vst.msk [vmem:[#allocation2 + $0x80] sm:$0xff] %vm3760, 0.0
        %v3768 = vld [vmem:[#allocation5] sm:$0xff]
        %v3769 = vld [vmem:[#allocation5 + $0x8] sm:$0xff]
        %vm3770 = vcmp.lt.s32.totalorder %v1186, 0
        %v3771 = vsub.s32 0, %v1186
        %v3772 = vsel %vm3770, %v3771, %v1186
        %v3773 = vshrl.u32 %v3772, 4
        %v3774 = vand.u32 %v3772, 15
        %v3775 = vsub.s32 0, %v3774
        %v3776 = vsel %vm3770, %v3775, %v3774
        %vm3777 = vcmp.lt.s32.totalorder %v1187, 0
        %v3778 = vsub.s32 0, %v1187
        %v3779 = vsel %vm3777, %v3778, %v1187
        %v3780 = vshrl.u32 %v3779, 4
        %v3781 = vand.u32 %v3779, 15
        %v3782 = vsub.s32 0, %v3781
        %v3783 = vsel %vm3777, %v3782, %v3781
        %vm3784 = vcmp.ne.s32.totalorder %v3776, 0
        %vm3785 = vcmp.ne.s32.totalorder %v3783, 0
        %vm3786 = vcmp.lt.s32.totalorder %v3776, 0
        %vm3787 = vcmp.lt.s32.totalorder %v3783, 0
        %vm3788 = vmand %vm3786, %vm3784
        %vm3789 = vmand %vm3787, %vm3785
        %v3790 = vadd.s32 %v3776, 16
        %v3791 = vadd.s32 %v3783, 16
        %v3792 = vsel %vm3788, %v3790, %v3776
        %v3793 = vsel %vm3789, %v3791, %v3783
        %vm3794 = vcmp.ne.s32.totalorder %v3792, 0
        %vm3795 = vcmp.ne.s32.totalorder %v3793, 0
        %v3796 = vsel %vm3794, 1, 0
        %v3797 = vsel %vm3795, 1, 0
        %vm3798 = vcmp.eq.s32.totalorder %v3796, 1
        %vm3799 = vcmp.eq.s32.totalorder %v3797, 1
        %v3800 = vsel %vm3798, %v3768, 0.0
        %v3801 = vsel %vm3799, %v3769, 0.0
        %3804 = vrot.lane.b32.xlu0 %v3800, 1
        %v3805 = vpop.permute.xlu0 %3804
        %3806 = vrot.lane.b32.xlu0 %v3801, 1
        %v3807 = vpop.permute.xlu0 %3806
        %v3808 = vsel %vm1381, %v3805, %v3807
        %3811 = vst.msk [vmem:[#allocation2 + $0xc0] sm:$0xff] %vm2433, %v3805
        %3812 = vst [vmem:[#allocation2 + $0xc8] sm:$0xff] %v3808
        %3813 = vst.msk [vmem:[#allocation2 + $0xc0] sm:$0xff] %vm1381, 0.0
        %v3814 = vld [vmem:[#allocation5] sm:$0xff]
        %v3815 = vld [vmem:[#allocation5 + $0x8] sm:$0xff]
        %3816 = vst [vmem:[#allocation2 + $0x100] sm:$0xff] %v3814
        %3817 = vst [vmem:[#allocation2 + $0x108] sm:$0xff] %v3815
        %v3818 = vld [vmem:[#allocation5] sm:$0xff]
        %v3819 = vld [vmem:[#allocation5 + $0x8] sm:$0xff]
        %vm3820 = vcmp.lt.s32.totalorder %v649, 0
        %v3821 = vsub.s32 0, %v649
        %v3822 = vsel %vm3820, %v3821, %v649
        %v3823 = vshrl.u32 %v3822, 4
        %v3824 = vand.u32 %v3822, 15
        %v3825 = vsub.s32 0, %v3824
        %v3826 = vsel %vm3820, %v3825, %v3824
        %vm3827 = vcmp.lt.s32.totalorder %v650, 0
        %v3828 = vsub.s32 0, %v650
        %v3829 = vsel %vm3827, %v3828, %v650
        %v3830 = vshrl.u32 %v3829, 4
        %v3831 = vand.u32 %v3829, 15
        %v3832 = vsub.s32 0, %v3831
        %v3833 = vsel %vm3827, %v3832, %v3831
        %vm3834 = vcmp.ne.s32.totalorder %v3826, 0
        %vm3835 = vcmp.ne.s32.totalorder %v3833, 0
        %vm3836 = vcmp.lt.s32.totalorder %v3826, 0
        %vm3837 = vcmp.lt.s32.totalorder %v3833, 0
        %vm3838 = vmand %vm3836, %vm3834
        %vm3839 = vmand %vm3837, %vm3835
        %v3840 = vadd.s32 %v3826, 16
        %v3841 = vadd.s32 %v3833, 16
        %v3842 = vsel %vm3838, %v3840, %v3826
        %v3843 = vsel %vm3839, %v3841, %v3833
        %vm3844 = vcmp.ne.s32.totalorder %v3842, 15
        %vm3845 = vcmp.ne.s32.totalorder %v3843, 15
        %v3846 = vsel %vm3844, 1, 0
        %v3847 = vsel %vm3845, 1, 0
        %vm3848 = vcmp.eq.s32.totalorder %v3846, 1
        %vm3849 = vcmp.eq.s32.totalorder %v3847, 1
        %3852 = vrot.lane.b32.xlu0 %v3818, 127
        %v3853 = vpop.permute.xlu0 %3852
        %3854 = vrot.lane.b32.xlu0 %v3819, 127
        %v3855 = vpop.permute.xlu0 %3854
        %v3856 = vsel %vm1607, %v3853, %v3855
        %v3859 = vsel %vm3848, %v3856, 0.0
        %v3860 = vsel %vm3849, %v3855, 0.0
        %3861 = vst [vmem:[#allocation2 + $0x140] sm:$0xff] %v3859
        %3862 = vst.msk [vmem:[#allocation2 + $0x148] sm:$0xff] %vm1607, %v3860
        %3863 = vst.msk [vmem:[#allocation2 + $0x148] sm:$0xff] %vm2522, 0.0
        %v3864 = vld [vmem:[#allocation5] sm:$0xff]
        %v3865 = vld [vmem:[#allocation5 + $0x8] sm:$0xff]
        %vm3866 = vcmp.ne.s32.totalorder %v3842, 0
        %vm3867 = vcmp.ne.s32.totalorder %v3843, 0
        %v3868 = vsel %vm3866, 1, 0
        %v3869 = vsel %vm3867, 1, 0
        %vm3870 = vcmp.eq.s32.totalorder %v3868, 1
        %vm3871 = vcmp.eq.s32.totalorder %v3869, 1
        %3874 = vrot.lane.b32.xlu0 %v3864, 113
        %v3875 = vpop.permute.xlu0 %3874
        %3876 = vrot.lane.b32.xlu0 %v3865, 113
        %v3877 = vpop.permute.xlu0 %3876
        %vm3878 = vcmask 924672
        %v3879 = vsel %vm3878, %v3875, %v3877
        %v3882 = vsel %vm3870, %v3879, 0.0
        %v3883 = vsel %vm3871, %v3877, 0.0
        %3884 = vst [vmem:[#allocation2 + $0x180] sm:$0xff] %v3882
        %3885 = vst.msk [vmem:[#allocation2 + $0x188] sm:$0xff] %vm3878, %v3883
        %vm3886 = vcmask 1048456
        %3887 = vst.msk [vmem:[#allocation2 + $0x188] sm:$0xff] %vm3886, 0.0
        %v3888 = vld [vmem:[#allocation5] sm:$0xff]
        %v3889 = vld [vmem:[#allocation5 + $0x8] sm:$0xff]
        %3892 = vrot.lane.b32.xlu0 %v3888, 112
        %v3893 = vpop.permute.xlu0 %3892
        %3894 = vrot.lane.b32.xlu0 %v3889, 112
        %v3895 = vpop.permute.xlu0 %3894
        %vm3896 = vcmask 916480
        %v3897 = vsel %vm3896, %v3893, %v3895
        %3900 = vst [vmem:[#allocation2 + $0x1c0] sm:$0xff] %v3897
        %3901 = vst.msk [vmem:[#allocation2 + $0x1c8] sm:$0xff] %vm3896, %v3895
        %vm3902 = vcmask 1048448
        %3903 = vst.msk [vmem:[#allocation2 + $0x1c8] sm:$0xff] %vm3902, 0.0
        %v3904 = vld [vmem:[#allocation5] sm:$0xff]
        %v3905 = vld [vmem:[#allocation5 + $0x8] sm:$0xff]
        %3908 = vrot.lane.b32.xlu0 %v3904, 111
        %v3909 = vpop.permute.xlu0 %3908
        %3910 = vrot.lane.b32.xlu0 %v3905, 111
        %v3911 = vpop.permute.xlu0 %3910
        %vm3912 = vcmask 908288
        %v3913 = vsel %vm3912, %v3909, %v3911
        %v3916 = vsel %vm3848, %v3913, 0.0
        %v3917 = vsel %vm3849, %v3911, 0.0
        %3918 = vst [vmem:[#allocation2 + $0x200] sm:$0xff] %v3916
        %3919 = vst.msk [vmem:[#allocation2 + $0x208] sm:$0xff] %vm3912, %v3917
        %vm3920 = vcmask 1048440
        %3921 = vst.msk [vmem:[#allocation2 + $0x208] sm:$0xff] %vm3920, 0.0
        %v3922 = vld [vmem:[#allocation2] sm:$0xff]
        %v3923 = vld [vmem:[#allocation2 + $0x8] sm:$0xff]
        %v3924 = vld [vmem:[#allocation2 + $0x40] sm:$0xff]
        %v3925 = vld [vmem:[#allocation2 + $0x48] sm:$0xff]
        %v3926 = vld [vmem:[#allocation2 + $0x80] sm:$0xff]
        %v3927 = vld [vmem:[#allocation2 + $0x88] sm:$0xff]
        %v3928 = vld [vmem:[#allocation2 + $0xc0] sm:$0xff]
        %v3929 = vld [vmem:[#allocation2 + $0xc8] sm:$0xff]
        %v3930 = vld [vmem:[#allocation2 + $0x100] sm:$0xff]
        %v3931 = vld [vmem:[#allocation2 + $0x108] sm:$0xff]
        %v3932 = vld [vmem:[#allocation2 + $0x140] sm:$0xff]
        %v3933 = vld [vmem:[#allocation2 + $0x148] sm:$0xff]
        %v3934 = vld [vmem:[#allocation2 + $0x180] sm:$0xff]
        %v3935 = vld [vmem:[#allocation2 + $0x188] sm:$0xff]
        %v3936 = vld [vmem:[#allocation2 + $0x1c0] sm:$0xff]
        %v3937 = vld [vmem:[#allocation2 + $0x1c8] sm:$0xff]
        %v3938 = vld [vmem:[#allocation2 + $0x200] sm:$0xff]
        %v3939 = vld [vmem:[#allocation2 + $0x208] sm:$0xff]
        %v3940 = vld [vmem:[%s5] sm:$0xff]
        %v3941 = vld [vmem:[%s5 + $0x8] sm:$0xff]
        %v3942 = vld [vmem:[%s6] sm:$0xff]
        %v3943 = vld [vmem:[%s6 + $0x8] sm:$0xff]
        %3945 = vset.pattern.permute.xlu0 0
        %3946 = vperm.xlu0 %3945, %v3942
        %v3947 = vpop.permute.xlu0 %3946
        %3950 = vset.pattern.permute.xlu0 0
        %3951 = vperm.xlu0 %3950, %v3943
        %v3952 = vpop.permute.xlu0 %3951
        %v3955 = vsel %vm2790, %v3940, 0
        %v3958 = vsel %vm2790, %v3941, 0
        %3960 = vmatpush.msra.mxu0 0.0
        %3961 = vmatpush.msra.mxu0 0.0
        %3962 = vmatpush.msra.mxu0 0.0
        %3963 = vmatpush.msra.mxu0 0.0
        %3964 = vmatpush.msra.mxu0 0.0
        %3965 = vmatpush.msra.mxu0 0.0
        %3966 = vmatpush.msra.mxu0 0.0
        %3967 = vmatpush.msra.mxu0 %v3938
        %3968 = vmatpush.msra.mxu0 %v3936
        %3969 = vmatpush.msra.mxu0 %v3934
        %3970 = vmatpush.msra.mxu0 %v3932
        %3971 = vmatpush.msra.mxu0 %v3930
        %3972 = vmatpush.msra.mxu0 %v3928
        %3973 = vmatpush.msra.mxu0 %v3926
        %3974 = vmatpush.msra.mxu0 %v3924
        %3975 = vmatpush.msra.mxu0 %v3922
        %3976 = vmatmul.f32.gmra.mxu0 %v3955
        %v3977 = vpop.f32.mrf.mxu0
        %v3978 = vadd.f32 %v3947, %v3977
        %3979 = vmatmul.f32.gmra.mxu0 %v3958
        %v3980 = vpop.f32.mrf.mxu0
        %v3981 = vadd.f32 %v3952, %v3980
        %3982 = vdwg.mxu0
        %3983 = vmatpush.msra.mxu0 0.0
        %3984 = vmatpush.msra.mxu0 0.0
        %3985 = vmatpush.msra.mxu0 0.0
        %3986 = vmatpush.msra.mxu0 0.0
        %3987 = vmatpush.msra.mxu0 0.0
        %3988 = vmatpush.msra.mxu0 0.0
        %3989 = vmatpush.msra.mxu0 0.0
        %3990 = vmatpush.msra.mxu0 %v3939
        %3991 = vmatpush.msra.mxu0 %v3937
        %3992 = vmatpush.msra.mxu0 %v3935
        %3993 = vmatpush.msra.mxu0 %v3933
        %3994 = vmatpush.msra.mxu0 %v3931
        %3995 = vmatpush.msra.mxu0 %v3929
        %3996 = vmatpush.msra.mxu0 %v3927
        %3997 = vmatpush.msra.mxu0 %v3925
        %3998 = vmatpush.msra.mxu0 %v3923
        %3999 = vmatmul.f32.gmra.mxu0 %v3955
        %v4000 = vpop.f32.mrf.mxu0
        %v4001 = vadd.f32 %v3947, %v4000
        %4002 = vmatmul.f32.gmra.mxu0 %v3958
        %v4003 = vpop.f32.mrf.mxu0
        %v4004 = vadd.f32 %v3952, %v4003
        %4005 = vdwg.mxu0
        %v4006 = vmax.f32 %v3978, 0.0
        %v4007 = vmax.f32 %v4001, 0.0
        %v4008 = vmax.f32 %v3981, 0.0
        %v4009 = vmax.f32 %v4004, 0.0
        %4010 = vst [vmem:[#allocation6] sm:$0xff] %v4006
        %4011 = vst [vmem:[#allocation6 + $0x8] sm:$0xff] %v4007
        %4012 = vst [vmem:[#allocation6 + $0x10] sm:$0xff] %v4008
        %4013 = vst [vmem:[#allocation6 + $0x18] sm:$0xff] %v4009
        %v4014 = vld [vmem:[#allocation6] sm:$0xff]
        %v4015 = vld [vmem:[#allocation6 + $0x8] sm:$0xff]
        %v4016 = vld [vmem:[#allocation6 + $0x10] sm:$0xff]
        %v4017 = vld [vmem:[#allocation6 + $0x18] sm:$0xff]
        %v4018 = vsel %vm3684, %v4014, 0.0
        %v4019 = vsel %vm3685, %v4015, 0.0
        %v4020 = vsel %vm3684, %v4016, 0.0
        %v4021 = vsel %vm3685, %v4017, 0.0
        %4026 = vrot.lane.b32.xlu0 %v4018, 17
        %v4027 = vpop.permute.xlu0 %4026
        %4028 = vrot.lane.b32.xlu0 %v4019, 17
        %v4029 = vpop.permute.xlu0 %4028
        %4030 = vrot.lane.b32.xlu0 %v4020, 17
        %v4031 = vpop.permute.xlu0 %4030
        %4032 = vrot.lane.b32.xlu0 %v4021, 17
        %v4033 = vpop.permute.xlu0 %4032
        %v4034 = vsel %vm3694, %v4027, %v4029
        %v4035 = vsel %vm3694, %v4031, %v4033
        %4040 = vst.msk [vmem:[#allocation2] sm:$0xff] %vm3698, %v4027
        %4041 = vst [vmem:[#allocation2 + $0x8] sm:$0xff] %v4034
        %4042 = vst.msk [vmem:[#allocation2 + $0x40] sm:$0xff] %vm3698, %v4031
        %4043 = vst [vmem:[#allocation2 + $0x48] sm:$0xff] %v4035
        %4044 = vst.msk [vmem:[#allocation2] sm:$0xff] %vm3694, 0.0
        %4045 = vst.msk [vmem:[#allocation2 + $0x40] sm:$0xff] %vm3694, 0.0
        %v4046 = vld [vmem:[#allocation6] sm:$0xff]
        %v4047 = vld [vmem:[#allocation6 + $0x8] sm:$0xff]
        %v4048 = vld [vmem:[#allocation6 + $0x10] sm:$0xff]
        %v4049 = vld [vmem:[#allocation6 + $0x18] sm:$0xff]
        %4054 = vrot.lane.b32.xlu0 %v4046, 16
        %v4055 = vpop.permute.xlu0 %4054
        %4056 = vrot.lane.b32.xlu0 %v4047, 16
        %v4057 = vpop.permute.xlu0 %4056
        %4058 = vrot.lane.b32.xlu0 %v4048, 16
        %v4059 = vpop.permute.xlu0 %4058
        %4060 = vrot.lane.b32.xlu0 %v4049, 16
        %v4061 = vpop.permute.xlu0 %4060
        %v4062 = vsel %vm3710, %v4055, %v4057
        %v4063 = vsel %vm3710, %v4059, %v4061
        %4068 = vst.msk [vmem:[#allocation2 + $0x80] sm:$0xff] %vm3714, %v4055
        %4069 = vst [vmem:[#allocation2 + $0x88] sm:$0xff] %v4062
        %4070 = vst.msk [vmem:[#allocation2 + $0xc0] sm:$0xff] %vm3714, %v4059
        %4071 = vst [vmem:[#allocation2 + $0xc8] sm:$0xff] %v4063
        %4072 = vst.msk [vmem:[#allocation2 + $0x80] sm:$0xff] %vm3710, 0.0
        %4073 = vst.msk [vmem:[#allocation2 + $0xc0] sm:$0xff] %vm3710, 0.0
        %v4074 = vld [vmem:[#allocation6] sm:$0xff]
        %v4075 = vld [vmem:[#allocation6 + $0x8] sm:$0xff]
        %v4076 = vld [vmem:[#allocation6 + $0x10] sm:$0xff]
        %v4077 = vld [vmem:[#allocation6 + $0x18] sm:$0xff]
        %v4078 = vsel %vm3750, %v4074, 0.0
        %v4079 = vsel %vm3751, %v4075, 0.0
        %v4080 = vsel %vm3750, %v4076, 0.0
        %v4081 = vsel %vm3751, %v4077, 0.0
        %4086 = vrot.lane.b32.xlu0 %v4078, 15
        %v4087 = vpop.permute.xlu0 %4086
        %4088 = vrot.lane.b32.xlu0 %v4079, 15
        %v4089 = vpop.permute.xlu0 %4088
        %4090 = vrot.lane.b32.xlu0 %v4080, 15
        %v4091 = vpop.permute.xlu0 %4090
        %4092 = vrot.lane.b32.xlu0 %v4081, 15
        %v4093 = vpop.permute.xlu0 %4092
        %v4094 = vsel %vm3760, %v4087, %v4089
        %v4095 = vsel %vm3760, %v4091, %v4093
        %4100 = vst.msk [vmem:[#allocation2 + $0x100] sm:$0xff] %vm3764, %v4087
        %4101 = vst [vmem:[#allocation2 + $0x108] sm:$0xff] %v4094
        %4102 = vst.msk [vmem:[#allocation2 + $0x140] sm:$0xff] %vm3764, %v4091
        %4103 = vst [vmem:[#allocation2 + $0x148] sm:$0xff] %v4095
        %4104 = vst.msk [vmem:[#allocation2 + $0x100] sm:$0xff] %vm3760, 0.0
        %4105 = vst.msk [vmem:[#allocation2 + $0x140] sm:$0xff] %vm3760, 0.0
        %v4106 = vld [vmem:[#allocation6] sm:$0xff]
        %v4107 = vld [vmem:[#allocation6 + $0x8] sm:$0xff]
        %v4108 = vld [vmem:[#allocation6 + $0x10] sm:$0xff]
        %v4109 = vld [vmem:[#allocation6 + $0x18] sm:$0xff]
        %v4110 = vsel %vm3798, %v4106, 0.0
        %v4111 = vsel %vm3799, %v4107, 0.0
        %v4112 = vsel %vm3798, %v4108, 0.0
        %v4113 = vsel %vm3799, %v4109, 0.0
        %4118 = vrot.lane.b32.xlu0 %v4110, 1
        %v4119 = vpop.permute.xlu0 %4118
        %4120 = vrot.lane.b32.xlu0 %v4111, 1
        %v4121 = vpop.permute.xlu0 %4120
        %4122 = vrot.lane.b32.xlu0 %v4112, 1
        %v4123 = vpop.permute.xlu0 %4122
        %4124 = vrot.lane.b32.xlu0 %v4113, 1
        %v4125 = vpop.permute.xlu0 %4124
        %v4126 = vsel %vm1381, %v4119, %v4121
        %v4127 = vsel %vm1381, %v4123, %v4125
        %4132 = vst.msk [vmem:[#allocation2 + $0x180] sm:$0xff] %vm2433, %v4119
        %4133 = vst [vmem:[#allocation2 + $0x188] sm:$0xff] %v4126
        %4134 = vst.msk [vmem:[#allocation2 + $0x1c0] sm:$0xff] %vm2433, %v4123
        %4135 = vst [vmem:[#allocation2 + $0x1c8] sm:$0xff] %v4127
        %4136 = vst.msk [vmem:[#allocation2 + $0x180] sm:$0xff] %vm1381, 0.0
        %4137 = vst.msk [vmem:[#allocation2 + $0x1c0] sm:$0xff] %vm1381, 0.0
        %v4138 = vld [vmem:[#allocation6] sm:$0xff]
        %v4139 = vld [vmem:[#allocation6 + $0x8] sm:$0xff]
        %v4140 = vld [vmem:[#allocation6 + $0x10] sm:$0xff]
        %v4141 = vld [vmem:[#allocation6 + $0x18] sm:$0xff]
        %4142 = vst [vmem:[#allocation2 + $0x200] sm:$0xff] %v4138
        %4143 = vst [vmem:[#allocation2 + $0x208] sm:$0xff] %v4139
        %4144 = vst [vmem:[#allocation2 + $0x240] sm:$0xff] %v4140
        %4145 = vst [vmem:[#allocation2 + $0x248] sm:$0xff] %v4141
        %v4146 = vld [vmem:[#allocation6] sm:$0xff]
        %v4147 = vld [vmem:[#allocation6 + $0x8] sm:$0xff]
        %v4148 = vld [vmem:[#allocation6 + $0x10] sm:$0xff]
        %v4149 = vld [vmem:[#allocation6 + $0x18] sm:$0xff]
        %4154 = vrot.lane.b32.xlu0 %v4146, 127
        %v4155 = vpop.permute.xlu0 %4154
        %4156 = vrot.lane.b32.xlu0 %v4147, 127
        %v4157 = vpop.permute.xlu0 %4156
        %4158 = vrot.lane.b32.xlu0 %v4148, 127
        %v4159 = vpop.permute.xlu0 %4158
        %4160 = vrot.lane.b32.xlu0 %v4149, 127
        %v4161 = vpop.permute.xlu0 %4160
        %v4162 = vsel %vm1607, %v4155, %v4157
        %v4163 = vsel %vm1607, %v4159, %v4161
        %v4168 = vsel %vm3848, %v4162, 0.0
        %v4169 = vsel %vm3849, %v4157, 0.0
        %v4170 = vsel %vm3848, %v4163, 0.0
        %v4171 = vsel %vm3849, %v4161, 0.0
        %4172 = vst [vmem:[#allocation2 + $0x280] sm:$0xff] %v4168
        %4173 = vst.msk [vmem:[#allocation2 + $0x288] sm:$0xff] %vm1607, %v4169
        %4174 = vst [vmem:[#allocation2 + $0x2c0] sm:$0xff] %v4170
        %4175 = vst.msk [vmem:[#allocation2 + $0x2c8] sm:$0xff] %vm1607, %v4171
        %4176 = vst.msk [vmem:[#allocation2 + $0x288] sm:$0xff] %vm2522, 0.0
        %4177 = vst.msk [vmem:[#allocation2 + $0x2c8] sm:$0xff] %vm2522, 0.0
        %v4178 = vld [vmem:[#allocation6] sm:$0xff]
        %v4179 = vld [vmem:[#allocation6 + $0x8] sm:$0xff]
        %v4180 = vld [vmem:[#allocation6 + $0x10] sm:$0xff]
        %v4181 = vld [vmem:[#allocation6 + $0x18] sm:$0xff]
        %4186 = vrot.lane.b32.xlu0 %v4178, 113
        %v4187 = vpop.permute.xlu0 %4186
        %4188 = vrot.lane.b32.xlu0 %v4179, 113
        %v4189 = vpop.permute.xlu0 %4188
        %4190 = vrot.lane.b32.xlu0 %v4180, 113
        %v4191 = vpop.permute.xlu0 %4190
        %4192 = vrot.lane.b32.xlu0 %v4181, 113
        %v4193 = vpop.permute.xlu0 %4192
        %v4194 = vsel %vm3878, %v4187, %v4189
        %v4195 = vsel %vm3878, %v4191, %v4193
        %v4200 = vsel %vm3870, %v4194, 0.0
        %v4201 = vsel %vm3871, %v4189, 0.0
        %v4202 = vsel %vm3870, %v4195, 0.0
        %v4203 = vsel %vm3871, %v4193, 0.0
        %4204 = vst [vmem:[#allocation2 + $0x300] sm:$0xff] %v4200
        %4205 = vst.msk [vmem:[#allocation2 + $0x308] sm:$0xff] %vm3878, %v4201
        %4206 = vst [vmem:[#allocation2 + $0x340] sm:$0xff] %v4202
        %4207 = vst.msk [vmem:[#allocation2 + $0x348] sm:$0xff] %vm3878, %v4203
        %4208 = vst.msk [vmem:[#allocation2 + $0x308] sm:$0xff] %vm3886, 0.0
        %4209 = vst.msk [vmem:[#allocation2 + $0x348] sm:$0xff] %vm3886, 0.0
        %v4210 = vld [vmem:[#allocation6] sm:$0xff]
        %v4211 = vld [vmem:[#allocation6 + $0x8] sm:$0xff]
        %v4212 = vld [vmem:[#allocation6 + $0x10] sm:$0xff]
        %v4213 = vld [vmem:[#allocation6 + $0x18] sm:$0xff]
        %4218 = vrot.lane.b32.xlu0 %v4210, 112
        %v4219 = vpop.permute.xlu0 %4218
        %4220 = vrot.lane.b32.xlu0 %v4211, 112
        %v4221 = vpop.permute.xlu0 %4220
        %4222 = vrot.lane.b32.xlu0 %v4212, 112
        %v4223 = vpop.permute.xlu0 %4222
        %4224 = vrot.lane.b32.xlu0 %v4213, 112
        %v4225 = vpop.permute.xlu0 %4224
        %v4226 = vsel %vm3896, %v4219, %v4221
        %v4227 = vsel %vm3896, %v4223, %v4225
        %4232 = vst [vmem:[#allocation2 + $0x380] sm:$0xff] %v4226
        %4233 = vst.msk [vmem:[#allocation2 + $0x388] sm:$0xff] %vm3896, %v4221
        %4234 = vst [vmem:[#allocation2 + $0x3c0] sm:$0xff] %v4227
        %4235 = vst.msk [vmem:[#allocation2 + $0x3c8] sm:$0xff] %vm3896, %v4225
        %4236 = vst.msk [vmem:[#allocation2 + $0x388] sm:$0xff] %vm3902, 0.0
        %4237 = vst.msk [vmem:[#allocation2 + $0x3c8] sm:$0xff] %vm3902, 0.0
        %v4238 = vld [vmem:[#allocation6] sm:$0xff]
        %v4239 = vld [vmem:[#allocation6 + $0x8] sm:$0xff]
        %v4240 = vld [vmem:[#allocation6 + $0x10] sm:$0xff]
        %v4241 = vld [vmem:[#allocation6 + $0x18] sm:$0xff]
        %4246 = vrot.lane.b32.xlu0 %v4238, 111
        %v4247 = vpop.permute.xlu0 %4246
        %4248 = vrot.lane.b32.xlu0 %v4239, 111
        %v4249 = vpop.permute.xlu0 %4248
        %4250 = vrot.lane.b32.xlu0 %v4240, 111
        %v4251 = vpop.permute.xlu0 %4250
        %4252 = vrot.lane.b32.xlu0 %v4241, 111
        %v4253 = vpop.permute.xlu0 %4252
        %v4254 = vsel %vm3912, %v4247, %v4249
        %v4255 = vsel %vm3912, %v4251, %v4253
        %v4260 = vsel %vm3848, %v4254, 0.0
        %v4261 = vsel %vm3849, %v4249, 0.0
        %v4262 = vsel %vm3848, %v4255, 0.0
        %v4263 = vsel %vm3849, %v4253, 0.0
        %4264 = vst [vmem:[#allocation2 + $0x400] sm:$0xff] %v4260
        %4265 = vst.msk [vmem:[#allocation2 + $0x408] sm:$0xff] %vm3912, %v4261
        %4266 = vst [vmem:[#allocation2 + $0x440] sm:$0xff] %v4262
        %4267 = vst.msk [vmem:[#allocation2 + $0x448] sm:$0xff] %vm3912, %v4263
        %4268 = vst.msk [vmem:[#allocation2 + $0x408] sm:$0xff] %vm3920, 0.0
        %4269 = vst.msk [vmem:[#allocation2 + $0x448] sm:$0xff] %vm3920, 0.0
        %v4270 = vld [vmem:[#allocation2] sm:$0xff]
        %v4271 = vld [vmem:[#allocation2 + $0x8] sm:$0xff]
        %v4272 = vld [vmem:[#allocation2 + $0x40] sm:$0xff]
        %v4273 = vld [vmem:[#allocation2 + $0x48] sm:$0xff]
        %v4274 = vld [vmem:[#allocation2 + $0x80] sm:$0xff]
        %v4275 = vld [vmem:[#allocation2 + $0x88] sm:$0xff]
        %v4276 = vld [vmem:[#allocation2 + $0xc0] sm:$0xff]
        %v4277 = vld [vmem:[#allocation2 + $0xc8] sm:$0xff]
        %v4278 = vld [vmem:[#allocation2 + $0x100] sm:$0xff]
        %v4279 = vld [vmem:[#allocation2 + $0x108] sm:$0xff]
        %v4280 = vld [vmem:[#allocation2 + $0x140] sm:$0xff]
        %v4281 = vld [vmem:[#allocation2 + $0x148] sm:$0xff]
        %v4282 = vld [vmem:[#allocation2 + $0x180] sm:$0xff]
        %v4283 = vld [vmem:[#allocation2 + $0x188] sm:$0xff]
        %v4284 = vld [vmem:[#allocation2 + $0x1c0] sm:$0xff]
        %v4285 = vld [vmem:[#allocation2 + $0x1c8] sm:$0xff]
        %v4286 = vld [vmem:[#allocation2 + $0x200] sm:$0xff]
        %v4287 = vld [vmem:[#allocation2 + $0x208] sm:$0xff]
        %v4288 = vld [vmem:[#allocation2 + $0x240] sm:$0xff]
        %v4289 = vld [vmem:[#allocation2 + $0x248] sm:$0xff]
        %v4290 = vld [vmem:[#allocation2 + $0x280] sm:$0xff]
        %v4291 = vld [vmem:[#allocation2 + $0x288] sm:$0xff]
        %v4292 = vld [vmem:[#allocation2 + $0x2c0] sm:$0xff]
        %v4293 = vld [vmem:[#allocation2 + $0x2c8] sm:$0xff]
        %v4294 = vld [vmem:[#allocation2 + $0x300] sm:$0xff]
        %v4295 = vld [vmem:[#allocation2 + $0x308] sm:$0xff]
        %v4296 = vld [vmem:[#allocation2 + $0x340] sm:$0xff]
        %v4297 = vld [vmem:[#allocation2 + $0x348] sm:$0xff]
        %v4298 = vld [vmem:[#allocation2 + $0x380] sm:$0xff]
        %v4299 = vld [vmem:[#allocation2 + $0x388] sm:$0xff]
        %v4300 = vld [vmem:[#allocation2 + $0x3c0] sm:$0xff]
        %v4301 = vld [vmem:[#allocation2 + $0x3c8] sm:$0xff]
        %v4302 = vld [vmem:[#allocation2 + $0x400] sm:$0xff]
        %v4303 = vld [vmem:[#allocation2 + $0x408] sm:$0xff]
        %v4304 = vld [vmem:[#allocation2 + $0x440] sm:$0xff]
        %v4305 = vld [vmem:[#allocation2 + $0x448] sm:$0xff]
        %v4306 = vld [vmem:[%s7] sm:$0xff]
        %v4307 = vld [vmem:[%s7 + $0x8] sm:$0xff]
        %v4308 = vld [vmem:[%s7 + $0x10] sm:$0xff]
        %v4309 = vld [vmem:[%s7 + $0x18] sm:$0xff]
        %v4310 = vld [vmem:[%s8] sm:$0xff]
        %v4311 = vld [vmem:[%s8 + $0x8] sm:$0xff]
        %4313 = vset.pattern.permute.xlu0 0
        %4314 = vperm.xlu0 %4313, %v4310
        %v4315 = vpop.permute.xlu0 %4314
        %4318 = vset.pattern.permute.xlu0 0
        %4319 = vperm.xlu0 %4318, %v4311
        %v4320 = vpop.permute.xlu0 %4319
        %v4323 = vsel %vm3710, %v4307, 0
        %v4326 = vsel %vm3710, %v4309, 0
        %4328 = vmatpush.msra.mxu0 %v4300
        %4329 = vmatpush.msra.mxu0 %v4298
        %4330 = vmatpush.msra.mxu0 %v4296
        %4331 = vmatpush.msra.mxu0 %v4294
        %4332 = vmatpush.msra.mxu0 %v4292
        %4333 = vmatpush.msra.mxu0 %v4290
        %4334 = vmatpush.msra.mxu0 %v4288
        %4335 = vmatpush.msra.mxu0 %v4286
        %4336 = vmatpush.msra.mxu0 %v4284
        %4337 = vmatpush.msra.mxu0 %v4282
        %4338 = vmatpush.msra.mxu0 %v4280
        %4339 = vmatpush.msra.mxu0 %v4278
        %4340 = vmatpush.msra.mxu0 %v4276
        %4341 = vmatpush.msra.mxu0 %v4274
        %4342 = vmatpush.msra.mxu0 %v4272
        %4343 = vmatpush.msra.mxu0 %v4270
        %4344 = vmatmul.f32.gmra.mxu0 %v4306
        %v4345 = vpop.f32.mrf.mxu0
        %v4346 = vadd.f32 %v4315, %v4345
        %4347 = vmatmul.f32.gmra.mxu0 %v4308
        %v4348 = vpop.f32.mrf.mxu0
        %v4349 = vadd.f32 %v4320, %v4348
        %4350 = vdwg.mxu0
        %4351 = vmatpush.msra.mxu0 0.0
        %4352 = vmatpush.msra.mxu0 0.0
        %4353 = vmatpush.msra.mxu0 0.0
        %4354 = vmatpush.msra.mxu0 0.0
        %4355 = vmatpush.msra.mxu0 0.0
        %4356 = vmatpush.msra.mxu0 0.0
        %4357 = vmatpush.msra.mxu0 0.0
        %4358 = vmatpush.msra.mxu0 0.0
        %4359 = vmatpush.msra.mxu0 0.0
        %4360 = vmatpush.msra.mxu0 0.0
        %4361 = vmatpush.msra.mxu0 0.0
        %4362 = vmatpush.msra.mxu0 0.0
        %4363 = vmatpush.msra.mxu0 0.0
        %4364 = vmatpush.msra.mxu0 0.0
        %4365 = vmatpush.msra.mxu0 %v4304
        %4366 = vmatpush.msra.mxu0 %v4302
        %4367 = vmatmul.f32.gmra.mxu0 %v4323
        %v4368 = vpop.f32.mrf.mxu0
        %v4369 = vadd.f32 %v4346, %v4368
        %4370 = vmatmul.f32.gmra.mxu0 %v4326
        %v4371 = vpop.f32.mrf.mxu0
        %v4372 = vadd.f32 %v4349, %v4371
        %4373 = vdwg.mxu0
        %4374 = vmatpush.msra.mxu0 %v4301
        %4375 = vmatpush.msra.mxu0 %v4299
        %4376 = vmatpush.msra.mxu0 %v4297
        %4377 = vmatpush.msra.mxu0 %v4295
        %4378 = vmatpush.msra.mxu0 %v4293
        %4379 = vmatpush.msra.mxu0 %v4291
        %4380 = vmatpush.msra.mxu0 %v4289
        %4381 = vmatpush.msra.mxu0 %v4287
        %4382 = vmatpush.msra.mxu0 %v4285
        %4383 = vmatpush.msra.mxu0 %v4283
        %4384 = vmatpush.msra.mxu0 %v4281
        %4385 = vmatpush.msra.mxu0 %v4279
        %4386 = vmatpush.msra.mxu0 %v4277
        %4387 = vmatpush.msra.mxu0 %v4275
        %4388 = vmatpush.msra.mxu0 %v4273
        %4389 = vmatpush.msra.mxu0 %v4271
        %4390 = vmatmul.f32.gmra.mxu0 %v4306
        %v4391 = vpop.f32.mrf.mxu0
        %v4392 = vadd.f32 %v4315, %v4391
        %4393 = vmatmul.f32.gmra.mxu0 %v4308
        %v4394 = vpop.f32.mrf.mxu0
        %v4395 = vadd.f32 %v4320, %v4394
        %4396 = vdwg.mxu0
        %4397 = vmatpush.msra.mxu0 0.0
        %4398 = vmatpush.msra.mxu0 0.0
        %4399 = vmatpush.msra.mxu0 0.0
        %4400 = vmatpush.msra.mxu0 0.0
        %4401 = vmatpush.msra.mxu0 0.0
        %4402 = vmatpush.msra.mxu0 0.0
        %4403 = vmatpush.msra.mxu0 0.0
        %4404 = vmatpush.msra.mxu0 0.0
        %4405 = vmatpush.msra.mxu0 0.0
        %4406 = vmatpush.msra.mxu0 0.0
        %4407 = vmatpush.msra.mxu0 0.0
        %4408 = vmatpush.msra.mxu0 0.0
        %4409 = vmatpush.msra.mxu0 0.0
        %4410 = vmatpush.msra.mxu0 0.0
        %4411 = vmatpush.msra.mxu0 %v4305
        %4412 = vmatpush.msra.mxu0 %v4303
        %4413 = vmatmul.f32.gmra.mxu0 %v4323
        %v4414 = vpop.f32.mrf.mxu0
        %v4415 = vadd.f32 %v4392, %v4414
        %4416 = vmatmul.f32.gmra.mxu0 %v4326
        %v4417 = vpop.f32.mrf.mxu0
        %v4418 = vadd.f32 %v4395, %v4417
        %4419 = vdwg.mxu0
        %v4420 = vmax.f32 %v4369, 0.0
        %v4421 = vmax.f32 %v4415, 0.0
        %v4422 = vmax.f32 %v4372, 0.0
        %v4423 = vmax.f32 %v4418, 0.0
        %4424 = vst [vmem:[#allocation7] sm:$0xff] %v4420
        %4425 = vst [vmem:[#allocation7 + $0x8] sm:$0xff] %v4421
        %4426 = vst [vmem:[#allocation7 + $0x10] sm:$0xff] %v4422
        %4427 = vst [vmem:[#allocation7 + $0x18] sm:$0xff] %v4423
        %v4428 = vld [vmem:[#allocation7] sm:$0xff]
        %v4429 = vld [vmem:[#allocation7 + $0x8] sm:$0xff]
        %v4430 = vld [vmem:[#allocation7 + $0x10] sm:$0xff]
        %v4431 = vld [vmem:[#allocation7 + $0x18] sm:$0xff]
        %4436 = vrot.lane.b32.xlu0 %v4428, 127
        %v4437 = vpop.permute.xlu0 %4436
        %4438 = vrot.lane.b32.xlu0 %v4429, 127
        %v4439 = vpop.permute.xlu0 %4438
        %4440 = vrot.lane.b32.xlu0 %v4430, 127
        %v4441 = vpop.permute.xlu0 %4440
        %4442 = vrot.lane.b32.xlu0 %v4431, 127
        %v4443 = vpop.permute.xlu0 %4442
        %v4444 = vsel %vm1607, %v4437, %v4439
        %v4445 = vsel %vm1607, %v4441, %v4443
        %v4450 = vmax.f32 %v4428, %v4444
        %v4451 = vmax.f32 %v4429, %v4439
        %v4452 = vmax.f32 %v4430, %v4445
        %v4453 = vmax.f32 %v4431, %v4443
        %4458 = vrot.lane.b32.xlu0 %v4450, 112
        %v4459 = vpop.permute.xlu0 %4458
        %4460 = vrot.lane.b32.xlu0 %v4451, 112
        %v4461 = vpop.permute.xlu0 %4460
        %4462 = vrot.lane.b32.xlu0 %v4452, 112
        %v4463 = vpop.permute.xlu0 %4462
        %4464 = vrot.lane.b32.xlu0 %v4453, 112
        %v4465 = vpop.permute.xlu0 %4464
        %v4466 = vsel %vm3896, %v4459, %v4461
        %v4467 = vsel %vm3896, %v4463, %v4465
        %v4472 = vmax.f32 %v4450, %v4466
        %v4473 = vmax.f32 %v4451, %v4461
        %v4474 = vmax.f32 %v4452, %v4467
        %v4475 = vmax.f32 %v4453, %v4465
        %v4476 = vld [vmem:[%s14] sm:$0xff]
        %v4477 = vld [vmem:[%s14 + $0x8] sm:$0xff]
        %v4478 = vld [vmem:[%s14 + $0x10] sm:$0xff]
        %v4479 = vld [vmem:[%s14 + $0x18] sm:$0xff]
        %v4480 = vld [vmem:[%s14 + $0x20] sm:$0xff]
        %v4481 = vld [vmem:[%s14 + $0x28] sm:$0xff]
        %v4482 = vld [vmem:[%s14 + $0x30] sm:$0xff]
        %v4483 = vld [vmem:[%s14 + $0x38] sm:$0xff]
        %v4484 = vld [vmem:[%s14 + $0x40] sm:$0xff]
        %v4485 = vld [vmem:[%s14 + $0x48] sm:$0xff]
        %v4486 = vld [vmem:[%s14 + $0x50] sm:$0xff]
        %v4487 = vld [vmem:[%s14 + $0x58] sm:$0xff]
        %v4488 = vld [vmem:[%s14 + $0x60] sm:$0xff]
        %v4489 = vld [vmem:[%s14 + $0x68] sm:$0xff]
        %v4490 = vld [vmem:[%s14 + $0x70] sm:$0xff]
        %v4491 = vld [vmem:[%s14 + $0x78] sm:$0xff]
        %v4492 = vld [vmem:[%s14 + $0x80] sm:$0xff]
        %v4493 = vld [vmem:[%s14 + $0x88] sm:$0xff]
        %v4494 = vld [vmem:[%s14 + $0x90] sm:$0xff]
        %v4495 = vld [vmem:[%s14 + $0x98] sm:$0xff]
        %v4496 = vld [vmem:[%s14 + $0xa0] sm:$0xff]
        %v4497 = vld [vmem:[%s14 + $0xa8] sm:$0xff]
        %v4498 = vld [vmem:[%s14 + $0xb0] sm:$0xff]
        %v4499 = vld [vmem:[%s14 + $0xb8] sm:$0xff]
        %v4500 = vld [vmem:[%s14 + $0xc0] sm:$0xff]
        %v4501 = vld [vmem:[%s14 + $0xc8] sm:$0xff]
        %v4502 = vld [vmem:[%s14 + $0xd0] sm:$0xff]
        %v4503 = vld [vmem:[%s14 + $0xd8] sm:$0xff]
        %v4504 = vld [vmem:[%s14 + $0xe0] sm:$0xff]
        %v4505 = vld [vmem:[%s14 + $0xe8] sm:$0x7f]
        %v4507 = vsel %vm3912, %v4473, 0
        %v4510 = vsel %vm3912, %v4475, 0
        %v4513 = vsel %vm3323, %v4505, 0
        %4515 = vmatpush.msra.mxu0 %v4491
        %4516 = vmatpush.msra.mxu0 %v4490
        %4517 = vmatpush.msra.mxu0 %v4489
        %4518 = vmatpush.msra.mxu0 %v4488
        %4519 = vmatpush.msra.mxu0 %v4487
        %4520 = vmatpush.msra.mxu0 %v4486
        %4521 = vmatpush.msra.mxu0 %v4485
        %4522 = vmatpush.msra.mxu0 %v4484
        %4523 = vmatpush.msra.mxu0 %v4483
        %4524 = vmatpush.msra.mxu0 %v4482
        %4525 = vmatpush.msra.mxu0 %v4481
        %4526 = vmatpush.msra.mxu0 %v4480
        %4527 = vmatpush.msra.mxu0 %v4479
        %4528 = vmatpush.msra.mxu0 %v4478
        %4529 = vmatpush.msra.mxu0 %v4477
        %4530 = vmatpush.msra.mxu0 %v4476
        %4531 = vmatmul.f32.gmra.mxu0 %v4472
        %v4532 = vpop.f32.mrf.mxu0
        %v4533 = vadd.f32 0.0, %v4532
        %4534 = vmatmul.f32.gmra.mxu0 %v4474
        %v4535 = vpop.f32.mrf.mxu0
        %v4536 = vadd.f32 0.0, %v4535
        %4537 = vdwg.mxu0
        %4538 = vmatpush.msra.mxu0 0.0
        %4539 = vmatpush.msra.mxu0 0.0
        %4540 = vmatpush.msra.mxu0 %v4513
        %4541 = vmatpush.msra.mxu0 %v4504
        %4542 = vmatpush.msra.mxu0 %v4503
        %4543 = vmatpush.msra.mxu0 %v4502
        %4544 = vmatpush.msra.mxu0 %v4501
        %4545 = vmatpush.msra.mxu0 %v4500
        %4546 = vmatpush.msra.mxu0 %v4499
        %4547 = vmatpush.msra.mxu0 %v4498
        %4548 = vmatpush.msra.mxu0 %v4497
        %4549 = vmatpush.msra.mxu0 %v4496
        %4550 = vmatpush.msra.mxu0 %v4495
        %4551 = vmatpush.msra.mxu0 %v4494
        %4552 = vmatpush.msra.mxu0 %v4493
        %4553 = vmatpush.msra.mxu0 %v4492
        %4554 = vmatmul.f32.gmra.mxu0 %v4507
        %v4555 = vpop.f32.mrf.mxu0
        %v4556 = vadd.f32 %v4533, %v4555
        %4557 = vmatmul.f32.gmra.mxu0 %v4510
        %v4558 = vpop.f32.mrf.mxu0
        %v4559 = vadd.f32 %v4536, %v4558
        %4560 = vdwg.mxu0
        %vm4561 = vcmask 523264
        %4562 = vst.msk [vmem:[#allocation8] sm:$0xff] %vm4561, %v4556
        %4563 = vst.msk [vmem:[#allocation8 + $0x8] sm:$0xff] %vm4561, %v4559
        %v4564 = vld [vmem:[#allocation8] sm:$0xff]
        %v4565 = vld [vmem:[#allocation8 + $0x8] sm:$0xff]
        %v4566 = vadd.s32 %v649, 9
        %vm4567 = vcmp.lt.s32.totalorder %v4566, 0
        %v4568 = vsub.s32 0, %v4566
        %v4569 = vsel %vm4567, %v4568, %v4566
        %v4570 = vshrl.u32 %v4569, 3
        %v4571 = vand.u32 %v4569, 7
        %v4572 = vsub.s32 0, %v4571
        %v4573 = vsel %vm4567, %v4572, %v4571
        %vm4574 = vcmp.ne.s32.totalorder %v4573, 0
        %vm4575 = vcmp.lt.s32.totalorder %v4573, 0
        %vm4576 = vmand %vm4575, %vm4574
        %v4577 = vadd.s32 %v4573, 8
        %v4578 = vsel %vm4576, %v4577, %v4573
        %vm4579 = vcmp.ne.s32.totalorder %v4578, 0
        %v4580 = vsel %vm4579, 1, 0
        %vm4581 = vcmp.eq.s32.totalorder %v4580, 1
        %v4582 = vsel %vm4581, %v4564, 0.0
        %v4583 = vsel %vm4581, %v4565, 0.0
        %4586 = vrot.lane.b32.xlu0 %v4582, 9
        %v4587 = vpop.permute.xlu0 %4586
        %4588 = vrot.lane.b32.xlu0 %v4583, 9
        %v4589 = vpop.permute.xlu0 %4588
        %vm4592 = vcmask 523336
        %4593 = vst.msk [vmem:[#allocation2] sm:$0xff] %vm4592, %v4587
        %4594 = vst.msk [vmem:[#allocation2 + $0x40] sm:$0xff] %vm4592, %v4589
        %vm4595 = vcmask 72704
        %4596 = vst.msk [vmem:[#allocation2] sm:$0xff] %vm4595, 0.0
        %4597 = vst.msk [vmem:[#allocation2 + $0x40] sm:$0xff] %vm4595, 0.0
        %v4598 = vld [vmem:[#allocation8] sm:$0xff]
        %v4599 = vld [vmem:[#allocation8 + $0x8] sm:$0xff]
        %4602 = vrot.lane.b32.xlu0 %v4598, 8
        %v4603 = vpop.permute.xlu0 %4602
        %4604 = vrot.lane.b32.xlu0 %v4599, 8
        %v4605 = vpop.permute.xlu0 %4604
        %vm4608 = vcmask 523328
        %4609 = vst.msk [vmem:[#allocation2 + $0x80] sm:$0xff] %vm4608, %v4603
        %4610 = vst.msk [vmem:[#allocation2 + $0xc0] sm:$0xff] %vm4608, %v4605
        %vm4611 = vcmask 64512
        %4612 = vst.msk [vmem:[#allocation2 + $0x80] sm:$0xff] %vm4611, 0.0
        %4613 = vst.msk [vmem:[#allocation2 + $0xc0] sm:$0xff] %vm4611, 0.0
        %v4614 = vld [vmem:[#allocation8] sm:$0xff]
        %v4615 = vld [vmem:[#allocation8 + $0x8] sm:$0xff]
        %v4616 = vadd.s32 %v649, 7
        %vm4617 = vcmp.lt.s32.totalorder %v4616, 0
        %v4618 = vsub.s32 0, %v4616
        %v4619 = vsel %vm4617, %v4618, %v4616
        %v4620 = vshrl.u32 %v4619, 3
        %v4621 = vand.u32 %v4619, 7
        %v4622 = vsub.s32 0, %v4621
        %v4623 = vsel %vm4617, %v4622, %v4621
        %vm4624 = vcmp.ne.s32.totalorder %v4623, 0
        %vm4625 = vcmp.lt.s32.totalorder %v4623, 0
        %vm4626 = vmand %vm4625, %vm4624
        %v4627 = vadd.s32 %v4623, 8
        %v4628 = vsel %vm4626, %v4627, %v4623
        %vm4629 = vcmp.ne.s32.totalorder %v4628, 7
        %v4630 = vsel %vm4629, 1, 0
        %vm4631 = vcmp.eq.s32.totalorder %v4630, 1
        %v4632 = vsel %vm4631, %v4614, 0.0
        %v4633 = vsel %vm4631, %v4615, 0.0
        %4636 = vrot.lane.b32.xlu0 %v4632, 7
        %v4637 = vpop.permute.xlu0 %4636
        %4638 = vrot.lane.b32.xlu0 %v4633, 7
        %v4639 = vpop.permute.xlu0 %4638
        %vm4642 = vcmask 523320
        %4643 = vst.msk [vmem:[#allocation2 + $0x100] sm:$0xff] %vm4642, %v4637
        %4644 = vst.msk [vmem:[#allocation2 + $0x140] sm:$0xff] %vm4642, %v4639
        %vm4645 = vcmask 56320
        %4646 = vst.msk [vmem:[#allocation2 + $0x100] sm:$0xff] %vm4645, 0.0
        %4647 = vst.msk [vmem:[#allocation2 + $0x140] sm:$0xff] %vm4645, 0.0
        %v4648 = vld [vmem:[#allocation8] sm:$0xff]
        %v4649 = vld [vmem:[#allocation8 + $0x8] sm:$0xff]
        %vm4650 = vcmp.lt.s32.totalorder %v1186, 0
        %v4651 = vsub.s32 0, %v1186
        %v4652 = vsel %vm4650, %v4651, %v1186
        %v4653 = vshrl.u32 %v4652, 3
        %v4654 = vand.u32 %v4652, 7
        %v4655 = vsub.s32 0, %v4654
        %v4656 = vsel %vm4650, %v4655, %v4654
        %vm4657 = vcmp.ne.s32.totalorder %v4656, 0
        %vm4658 = vcmp.lt.s32.totalorder %v4656, 0
        %vm4659 = vmand %vm4658, %vm4657
        %v4660 = vadd.s32 %v4656, 8
        %v4661 = vsel %vm4659, %v4660, %v4656
        %vm4662 = vcmp.ne.s32.totalorder %v4661, 0
        %v4663 = vsel %vm4662, 1, 0
        %vm4664 = vcmp.eq.s32.totalorder %v4663, 1
        %v4665 = vsel %vm4664, %v4648, 0.0
        %v4666 = vsel %vm4664, %v4649, 0.0
        %4669 = vrot.lane.b32.xlu0 %v4665, 1
        %v4670 = vpop.permute.xlu0 %4669
        %4671 = vrot.lane.b32.xlu0 %v4666, 1
        %v4672 = vpop.permute.xlu0 %4671
        %vm4675 = vcmask 523272
        %4676 = vst.msk [vmem:[#allocation2 + $0x180] sm:$0xff] %vm4675, %v4670
        %4677 = vst.msk [vmem:[#allocation2 + $0x1c0] sm:$0xff] %vm4675, %v4672
        %4678 = vst.msk [vmem:[#allocation2 + $0x180] sm:$0xff] %vm1381, 0.0
        %4679 = vst.msk [vmem:[#allocation2 + $0x1c0] sm:$0xff] %vm1381, 0.0
        %v4680 = vld [vmem:[#allocation8] sm:$0xff]
        %v4681 = vld [vmem:[#allocation8 + $0x8] sm:$0xff]
        %4682 = vst.msk [vmem:[#allocation2 + $0x200] sm:$0xff] %vm4561, %v4680
        %4683 = vst.msk [vmem:[#allocation2 + $0x240] sm:$0xff] %vm4561, %v4681
        %v4684 = vld [vmem:[#allocation8] sm:$0xff]
        %v4685 = vld [vmem:[#allocation8 + $0x8] sm:$0xff]
        %vm4686 = vcmp.lt.s32.totalorder %v649, 0
        %v4687 = vsub.s32 0, %v649
        %v4688 = vsel %vm4686, %v4687, %v649
        %v4689 = vshrl.u32 %v4688, 3
        %v4690 = vand.u32 %v4688, 7
        %v4691 = vsub.s32 0, %v4690
        %v4692 = vsel %vm4686, %v4691, %v4690
        %vm4693 = vcmp.ne.s32.totalorder %v4692, 0
        %vm4694 = vcmp.lt.s32.totalorder %v4692, 0
        %vm4695 = vmand %vm4694, %vm4693
        %v4696 = vadd.s32 %v4692, 8
        %v4697 = vsel %vm4695, %v4696, %v4692
        %vm4698 = vcmp.ne.s32.totalorder %v4697, 7
        %v4699 = vsel %vm4698, 1, 0
        %vm4700 = vcmp.eq.s32.totalorder %v4699, 1
        %4703 = vrot.lane.b32.xlu0 %v4684, 127
        %v4704 = vpop.permute.xlu0 %4703
        %4705 = vrot.lane.b32.xlu0 %v4685, 127
        %v4706 = vpop.permute.xlu0 %4705
        %v4709 = vsel %vm4700, %v4704, 0.0
        %v4710 = vsel %vm4700, %v4706, 0.0
        %vm4711 = vcmask 515072
        %4712 = vst.msk [vmem:[#allocation2 + $0x280] sm:$0xff] %vm4711, %v4709
        %4713 = vst.msk [vmem:[#allocation2 + $0x2c0] sm:$0xff] %vm4711, %v4710
        %vm4714 = vcmask 523768
        %4715 = vst.msk [vmem:[#allocation2 + $0x280] sm:$0xff] %vm4714, 0.0
        %4716 = vst.msk [vmem:[#allocation2 + $0x2c0] sm:$0xff] %vm4714, 0.0
        %v4717 = vld [vmem:[#allocation8] sm:$0xff]
        %v4718 = vld [vmem:[#allocation8 + $0x8] sm:$0xff]
        %vm4719 = vcmp.ne.s32.totalorder %v4697, 0
        %v4720 = vsel %vm4719, 1, 0
        %vm4721 = vcmp.eq.s32.totalorder %v4720, 1
        %4724 = vrot.lane.b32.xlu0 %v4717, 121
        %v4725 = vpop.permute.xlu0 %4724
        %4726 = vrot.lane.b32.xlu0 %v4718, 121
        %v4727 = vpop.permute.xlu0 %4726
        %v4730 = vsel %vm4721, %v4725, 0.0
        %v4731 = vsel %vm4721, %v4727, 0.0
        %vm4732 = vcmask 465920
        %4733 = vst.msk [vmem:[#allocation2 + $0x300] sm:$0xff] %vm4732, %v4730
        %4734 = vst.msk [vmem:[#allocation2 + $0x340] sm:$0xff] %vm4732, %v4731
        %vm4735 = vcmask 523720
        %4736 = vst.msk [vmem:[#allocation2 + $0x300] sm:$0xff] %vm4735, 0.0
        %4737 = vst.msk [vmem:[#allocation2 + $0x340] sm:$0xff] %vm4735, 0.0
        %v4738 = vld [vmem:[#allocation8] sm:$0xff]
        %v4739 = vld [vmem:[#allocation8 + $0x8] sm:$0xff]
        %4742 = vrot.lane.b32.xlu0 %v4738, 120
        %v4743 = vpop.permute.xlu0 %4742
        %4744 = vrot.lane.b32.xlu0 %v4739, 120
        %v4745 = vpop.permute.xlu0 %4744
        %vm4748 = vcmask 457728
        %4749 = vst.msk [vmem:[#allocation2 + $0x380] sm:$0xff] %vm4748, %v4743
        %4750 = vst.msk [vmem:[#allocation2 + $0x3c0] sm:$0xff] %vm4748, %v4745
        %vm4751 = vcmask 523712
        %4752 = vst.msk [vmem:[#allocation2 + $0x380] sm:$0xff] %vm4751, 0.0
        %4753 = vst.msk [vmem:[#allocation2 + $0x3c0] sm:$0xff] %vm4751, 0.0
        %v4754 = vld [vmem:[#allocation8] sm:$0xff]
        %v4755 = vld [vmem:[#allocation8 + $0x8] sm:$0xff]
        %4758 = vrot.lane.b32.xlu0 %v4754, 119
        %v4759 = vpop.permute.xlu0 %4758
        %4760 = vrot.lane.b32.xlu0 %v4755, 119
        %v4761 = vpop.permute.xlu0 %4760
        %v4764 = vsel %vm4700, %v4759, 0.0
        %v4765 = vsel %vm4700, %v4761, 0.0
        %vm4766 = vcmask 449536
        %4767 = vst.msk [vmem:[#allocation2 + $0x400] sm:$0xff] %vm4766, %v4764
        %4768 = vst.msk [vmem:[#allocation2 + $0x440] sm:$0xff] %vm4766, %v4765
        %vm4769 = vcmask 523704
        %4770 = vst.msk [vmem:[#allocation2 + $0x400] sm:$0xff] %vm4769, 0.0
        %4771 = vst.msk [vmem:[#allocation2 + $0x440] sm:$0xff] %vm4769, 0.0
        %v4772 = vld [vmem:[#allocation2] sm:$0xff]
        %v4773 = vld [vmem:[#allocation2 + $0x40] sm:$0xff]
        %v4774 = vld [vmem:[#allocation2 + $0x80] sm:$0xff]
        %v4775 = vld [vmem:[#allocation2 + $0xc0] sm:$0xff]
        %v4776 = vld [vmem:[#allocation2 + $0x100] sm:$0xff]
        %v4777 = vld [vmem:[#allocation2 + $0x140] sm:$0xff]
        %v4778 = vld [vmem:[#allocation2 + $0x180] sm:$0xff]
        %v4779 = vld [vmem:[#allocation2 + $0x1c0] sm:$0xff]
        %v4780 = vld [vmem:[#allocation2 + $0x200] sm:$0xff]
        %v4781 = vld [vmem:[#allocation2 + $0x240] sm:$0xff]
        %v4782 = vld [vmem:[#allocation2 + $0x280] sm:$0xff]
        %v4783 = vld [vmem:[#allocation2 + $0x2c0] sm:$0xff]
        %v4784 = vld [vmem:[#allocation2 + $0x300] sm:$0xff]
        %v4785 = vld [vmem:[#allocation2 + $0x340] sm:$0xff]
        %v4786 = vld [vmem:[#allocation2 + $0x380] sm:$0xff]
        %v4787 = vld [vmem:[#allocation2 + $0x3c0] sm:$0xff]
        %v4788 = vld [vmem:[#allocation2 + $0x400] sm:$0xff]
        %v4789 = vld [vmem:[#allocation2 + $0x440] sm:$0xff]
        %v4790 = vld [vmem:[%s9] sm:$0xff]
        %v4791 = vld [vmem:[%s9 + $0x8] sm:$0xff]
        %v4792 = vld [vmem:[%s9 + $0x10] sm:$0xff]
        %v4793 = vld [vmem:[%s9 + $0x18] sm:$0xff]
        %v4794 = vld [vmem:[%s9 + $0x20] sm:$0xff]
        %v4795 = vld [vmem:[%s9 + $0x28] sm:$0xff]
        %v4796 = vld [vmem:[%s9 + $0x30] sm:$0xff]
        %v4797 = vld [vmem:[%s9 + $0x38] sm:$0xff]
        %v4798 = vld [vmem:[%s10] sm:$0xff]
        %v4799 = vld [vmem:[%s10 + $0x8] sm:$0xff]
        %v4800 = vld [vmem:[%s10 + $0x10] sm:$0xff]
        %v4801 = vld [vmem:[%s10 + $0x18] sm:$0xff]
        %4803 = vset.pattern.permute.xlu0 0
        %4804 = vperm.xlu0 %4803, %v4798
        %v4805 = vpop.permute.xlu0 %4804
        %4808 = vset.pattern.permute.xlu0 0
        %4809 = vperm.xlu0 %4808, %v4799
        %v4810 = vpop.permute.xlu0 %4809
        %4813 = vset.pattern.permute.xlu0 0
        %4814 = vperm.xlu0 %4813, %v4800
        %v4815 = vpop.permute.xlu0 %4814
        %4818 = vset.pattern.permute.xlu0 0
        %4819 = vperm.xlu0 %4818, %v4801
        %v4820 = vpop.permute.xlu0 %4819
        %v4823 = vsel %vm3710, %v4791, 0
        %v4826 = vsel %vm3710, %v4793, 0
        %v4829 = vsel %vm3710, %v4795, 0
        %v4832 = vsel %vm3710, %v4797, 0
        %4834 = vmatpush.msra.mxu0 %v4787
        %4835 = vmatpush.msra.mxu0 %v4786
        %4836 = vmatpush.msra.mxu0 %v4785
        %4837 = vmatpush.msra.mxu0 %v4784
        %4838 = vmatpush.msra.mxu0 %v4783
        %4839 = vmatpush.msra.mxu0 %v4782
        %4840 = vmatpush.msra.mxu0 %v4781
        %4841 = vmatpush.msra.mxu0 %v4780
        %4842 = vmatpush.msra.mxu0 %v4779
        %4843 = vmatpush.msra.mxu0 %v4778
        %4844 = vmatpush.msra.mxu0 %v4777
        %4845 = vmatpush.msra.mxu0 %v4776
        %4846 = vmatpush.msra.mxu0 %v4775
        %4847 = vmatpush.msra.mxu0 %v4774
        %4848 = vmatpush.msra.mxu0 %v4773
        %4849 = vmatpush.msra.mxu0 %v4772
        %4850 = vmatmul.f32.gmra.mxu0 %v4790
        %v4851 = vpop.f32.mrf.mxu0
        %v4852 = vadd.f32 %v4805, %v4851
        %4853 = vmatmul.f32.gmra.mxu0 %v4792
        %v4854 = vpop.f32.mrf.mxu0
        %v4855 = vadd.f32 %v4810, %v4854
        %4856 = vmatmul.f32.gmra.mxu0 %v4794
        %v4857 = vpop.f32.mrf.mxu0
        %v4858 = vadd.f32 %v4815, %v4857
        %4859 = vmatmul.f32.gmra.mxu0 %v4796
        %v4860 = vpop.f32.mrf.mxu0
        %v4861 = vadd.f32 %v4820, %v4860
        %4862 = vdwg.mxu0
        %4863 = vmatpush.msra.mxu0 0.0
        %4864 = vmatpush.msra.mxu0 0.0
        %4865 = vmatpush.msra.mxu0 0.0
        %4866 = vmatpush.msra.mxu0 0.0
        %4867 = vmatpush.msra.mxu0 0.0
        %4868 = vmatpush.msra.mxu0 0.0
        %4869 = vmatpush.msra.mxu0 0.0
        %4870 = vmatpush.msra.mxu0 0.0
        %4871 = vmatpush.msra.mxu0 0.0
        %4872 = vmatpush.msra.mxu0 0.0
        %4873 = vmatpush.msra.mxu0 0.0
        %4874 = vmatpush.msra.mxu0 0.0
        %4875 = vmatpush.msra.mxu0 0.0
        %4876 = vmatpush.msra.mxu0 0.0
        %4877 = vmatpush.msra.mxu0 %v4789
        %4878 = vmatpush.msra.mxu0 %v4788
        %4879 = vmatmul.f32.gmra.mxu0 %v4823
        %v4880 = vpop.f32.mrf.mxu0
        %v4881 = vadd.f32 %v4852, %v4880
        %4882 = vmatmul.f32.gmra.mxu0 %v4826
        %v4883 = vpop.f32.mrf.mxu0
        %v4884 = vadd.f32 %v4855, %v4883
        %4885 = vmatmul.f32.gmra.mxu0 %v4829
        %v4886 = vpop.f32.mrf.mxu0
        %v4887 = vadd.f32 %v4858, %v4886
        %4888 = vmatmul.f32.gmra.mxu0 %v4832
        %v4889 = vpop.f32.mrf.mxu0
        %v4890 = vadd.f32 %v4861, %v4889
        %4891 = vdwg.mxu0
        %v4892 = vmax.f32 %v4881, 0.0
        %v4893 = vmax.f32 %v4884, 0.0
        %v4894 = vmax.f32 %v4887, 0.0
        %v4895 = vmax.f32 %v4890, 0.0
        %4896 = vst.msk [vmem:[#allocation9] sm:$0xff] %vm4561, %v4892
        %4897 = vst.msk [vmem:[#allocation9 + $0x8] sm:$0xff] %vm4561, %v4893
        %4898 = vst.msk [vmem:[#allocation9 + $0x10] sm:$0xff] %vm4561, %v4894
        %4899 = vst.msk [vmem:[#allocation9 + $0x18] sm:$0xff] %vm4561, %v4895
        %v4900 = vld [vmem:[#allocation9] sm:$0xff]
        %v4901 = vld [vmem:[#allocation9 + $0x8] sm:$0xff]
        %v4902 = vld [vmem:[#allocation9 + $0x10] sm:$0xff]
        %v4903 = vld [vmem:[#allocation9 + $0x18] sm:$0xff]
        %v4904 = vsel %vm4581, %v4900, 0.0
        %v4905 = vsel %vm4581, %v4901, 0.0
        %v4906 = vsel %vm4581, %v4902, 0.0
        %v4907 = vsel %vm4581, %v4903, 0.0
        %4912 = vrot.lane.b32.xlu0 %v4904, 9
        %v4913 = vpop.permute.xlu0 %4912
        %4914 = vrot.lane.b32.xlu0 %v4905, 9
        %v4915 = vpop.permute.xlu0 %4914
        %4916 = vrot.lane.b32.xlu0 %v4906, 9
        %v4917 = vpop.permute.xlu0 %4916
        %4918 = vrot.lane.b32.xlu0 %v4907, 9
        %v4919 = vpop.permute.xlu0 %4918
        %4924 = vst.msk [vmem:[#allocation2] sm:$0xff] %vm4592, %v4913
        %4925 = vst.msk [vmem:[#allocation2 + $0x40] sm:$0xff] %vm4592, %v4915
        %4926 = vst.msk [vmem:[#allocation2 + $0x80] sm:$0xff] %vm4592, %v4917
        %4927 = vst.msk [vmem:[#allocation2 + $0xc0] sm:$0xff] %vm4592, %v4919
        %4928 = vst.msk [vmem:[#allocation2] sm:$0xff] %vm4595, 0.0
        %4929 = vst.msk [vmem:[#allocation2 + $0x40] sm:$0xff] %vm4595, 0.0
        %4930 = vst.msk [vmem:[#allocation2 + $0x80] sm:$0xff] %vm4595, 0.0
        %4931 = vst.msk [vmem:[#allocation2 + $0xc0] sm:$0xff] %vm4595, 0.0
        %v4932 = vld [vmem:[#allocation9] sm:$0xff]
        %v4933 = vld [vmem:[#allocation9 + $0x8] sm:$0xff]
        %v4934 = vld [vmem:[#allocation9 + $0x10] sm:$0xff]
        %v4935 = vld [vmem:[#allocation9 + $0x18] sm:$0xff]
        %4940 = vrot.lane.b32.xlu0 %v4932, 8
        %v4941 = vpop.permute.xlu0 %4940
        %4942 = vrot.lane.b32.xlu0 %v4933, 8
        %v4943 = vpop.permute.xlu0 %4942
        %4944 = vrot.lane.b32.xlu0 %v4934, 8
        %v4945 = vpop.permute.xlu0 %4944
        %4946 = vrot.lane.b32.xlu0 %v4935, 8
        %v4947 = vpop.permute.xlu0 %4946
        %4952 = vst.msk [vmem:[#allocation2 + $0x100] sm:$0xff] %vm4608, %v4941
        %4953 = vst.msk [vmem:[#allocation2 + $0x140] sm:$0xff] %vm4608, %v4943
        %4954 = vst.msk [vmem:[#allocation2 + $0x180] sm:$0xff] %vm4608, %v4945
        %4955 = vst.msk [vmem:[#allocation2 + $0x1c0] sm:$0xff] %vm4608, %v4947
        %4956 = vst.msk [vmem:[#allocation2 + $0x100] sm:$0xff] %vm4611, 0.0
        %4957 = vst.msk [vmem:[#allocation2 + $0x140] sm:$0xff] %vm4611, 0.0
        %4958 = vst.msk [vmem:[#allocation2 + $0x180] sm:$0xff] %vm4611, 0.0
        %4959 = vst.msk [vmem:[#allocation2 + $0x1c0] sm:$0xff] %vm4611, 0.0
        %v4960 = vld [vmem:[#allocation9] sm:$0xff]
        %v4961 = vld [vmem:[#allocation9 + $0x8] sm:$0xff]
        %v4962 = vld [vmem:[#allocation9 + $0x10] sm:$0xff]
        %v4963 = vld [vmem:[#allocation9 + $0x18] sm:$0xff]
        %v4964 = vsel %vm4631, %v4960, 0.0
        %v4965 = vsel %vm4631, %v4961, 0.0
        %v4966 = vsel %vm4631, %v4962, 0.0
        %v4967 = vsel %vm4631, %v4963, 0.0
        %4972 = vrot.lane.b32.xlu0 %v4964, 7
        %v4973 = vpop.permute.xlu0 %4972
        %4974 = vrot.lane.b32.xlu0 %v4965, 7
        %v4975 = vpop.permute.xlu0 %4974
        %4976 = vrot.lane.b32.xlu0 %v4966, 7
        %v4977 = vpop.permute.xlu0 %4976
        %4978 = vrot.lane.b32.xlu0 %v4967, 7
        %v4979 = vpop.permute.xlu0 %4978
        %4984 = vst.msk [vmem:[#allocation2 + $0x200] sm:$0xff] %vm4642, %v4973
        %4985 = vst.msk [vmem:[#allocation2 + $0x240] sm:$0xff] %vm4642, %v4975
        %4986 = vst.msk [vmem:[#allocation2 + $0x280] sm:$0xff] %vm4642, %v4977
        %4987 = vst.msk [vmem:[#allocation2 + $0x2c0] sm:$0xff] %vm4642, %v4979
        %4988 = vst.msk [vmem:[#allocation2 + $0x200] sm:$0xff] %vm4645, 0.0
        %4989 = vst.msk [vmem:[#allocation2 + $0x240] sm:$0xff] %vm4645, 0.0
        %4990 = vst.msk [vmem:[#allocation2 + $0x280] sm:$0xff] %vm4645, 0.0
        %4991 = vst.msk [vmem:[#allocation2 + $0x2c0] sm:$0xff] %vm4645, 0.0
        %v4992 = vld [vmem:[#allocation9] sm:$0xff]
        %v4993 = vld [vmem:[#allocation9 + $0x8] sm:$0xff]
        %v4994 = vld [vmem:[#allocation9 + $0x10] sm:$0xff]
        %v4995 = vld [vmem:[#allocation9 + $0x18] sm:$0xff]
        %v4996 = vsel %vm4664, %v4992, 0.0
        %v4997 = vsel %vm4664, %v4993, 0.0
        %v4998 = vsel %vm4664, %v4994, 0.0
        %v4999 = vsel %vm4664, %v4995, 0.0
        %5004 = vrot.lane.b32.xlu0 %v4996, 1
        %v5005 = vpop.permute.xlu0 %5004
        %5006 = vrot.lane.b32.xlu0 %v4997, 1
        %v5007 = vpop.permute.xlu0 %5006
        %5008 = vrot.lane.b32.xlu0 %v4998, 1
        %v5009 = vpop.permute.xlu0 %5008
        %5010 = vrot.lane.b32.xlu0 %v4999, 1
        %v5011 = vpop.permute.xlu0 %5010
        %5016 = vst.msk [vmem:[#allocation2 + $0x300] sm:$0xff] %vm4675, %v5005
        %5017 = vst.msk [vmem:[#allocation2 + $0x340] sm:$0xff] %vm4675, %v5007
        %5018 = vst.msk [vmem:[#allocation2 + $0x380] sm:$0xff] %vm4675, %v5009
        %5019 = vst.msk [vmem:[#allocation2 + $0x3c0] sm:$0xff] %vm4675, %v5011
        %5020 = vst.msk [vmem:[#allocation2 + $0x300] sm:$0xff] %vm1381, 0.0
        %5021 = vst.msk [vmem:[#allocation2 + $0x340] sm:$0xff] %vm1381, 0.0
        %5022 = vst.msk [vmem:[#allocation2 + $0x380] sm:$0xff] %vm1381, 0.0
        %5023 = vst.msk [vmem:[#allocation2 + $0x3c0] sm:$0xff] %vm1381, 0.0
        %v5024 = vld [vmem:[#allocation9] sm:$0xff]
        %v5025 = vld [vmem:[#allocation9 + $0x8] sm:$0xff]
        %v5026 = vld [vmem:[#allocation9 + $0x10] sm:$0xff]
        %v5027 = vld [vmem:[#allocation9 + $0x18] sm:$0xff]
        %5028 = vst.msk [vmem:[#allocation2 + $0x400] sm:$0xff] %vm4561, %v5024
        %5029 = vst.msk [vmem:[#allocation2 + $0x440] sm:$0xff] %vm4561, %v5025
        %5030 = vst.msk [vmem:[#allocation2 + $0x480] sm:$0xff] %vm4561, %v5026
        %5031 = vst.msk [vmem:[#allocation2 + $0x4c0] sm:$0xff] %vm4561, %v5027
        %v5032 = vld [vmem:[#allocation9] sm:$0xff]
        %v5033 = vld [vmem:[#allocation9 + $0x8] sm:$0xff]
        %v5034 = vld [vmem:[#allocation9 + $0x10] sm:$0xff]
        %v5035 = vld [vmem:[#allocation9 + $0x18] sm:$0xff]
        %5040 = vrot.lane.b32.xlu0 %v5032, 127
        %v5041 = vpop.permute.xlu0 %5040
        %5042 = vrot.lane.b32.xlu0 %v5033, 127
        %v5043 = vpop.permute.xlu0 %5042
        %5044 = vrot.lane.b32.xlu0 %v5034, 127
        %v5045 = vpop.permute.xlu0 %5044
        %5046 = vrot.lane.b32.xlu0 %v5035, 127
        %v5047 = vpop.permute.xlu0 %5046
        %v5052 = vsel %vm4700, %v5041, 0.0
        %v5053 = vsel %vm4700, %v5043, 0.0
        %v5054 = vsel %vm4700, %v5045, 0.0
        %v5055 = vsel %vm4700, %v5047, 0.0
        %5056 = vst.msk [vmem:[#allocation2 + $0x500] sm:$0xff] %vm4711, %v5052
        %5057 = vst.msk [vmem:[#allocation2 + $0x540] sm:$0xff] %vm4711, %v5053
        %5058 = vst.msk [vmem:[#allocation2 + $0x580] sm:$0xff] %vm4711, %v5054
        %5059 = vst.msk [vmem:[#allocation2 + $0x5c0] sm:$0xff] %vm4711, %v5055
        %5060 = vst.msk [vmem:[#allocation2 + $0x500] sm:$0xff] %vm4714, 0.0
        %5061 = vst.msk [vmem:[#allocation2 + $0x540] sm:$0xff] %vm4714, 0.0
        %5062 = vst.msk [vmem:[#allocation2 + $0x580] sm:$0xff] %vm4714, 0.0
        %5063 = vst.msk [vmem:[#allocation2 + $0x5c0] sm:$0xff] %vm4714, 0.0
        %v5064 = vld [vmem:[#allocation9] sm:$0xff]
        %v5065 = vld [vmem:[#allocation9 + $0x8] sm:$0xff]
        %v5066 = vld [vmem:[#allocation9 + $0x10] sm:$0xff]
        %v5067 = vld [vmem:[#allocation9 + $0x18] sm:$0xff]
        %5072 = vrot.lane.b32.xlu0 %v5064, 121
        %v5073 = vpop.permute.xlu0 %5072
        %5074 = vrot.lane.b32.xlu0 %v5065, 121
        %v5075 = vpop.permute.xlu0 %5074
        %5076 = vrot.lane.b32.xlu0 %v5066, 121
        %v5077 = vpop.permute.xlu0 %5076
        %5078 = vrot.lane.b32.xlu0 %v5067, 121
        %v5079 = vpop.permute.xlu0 %5078
        %v5084 = vsel %vm4721, %v5073, 0.0
        %v5085 = vsel %vm4721, %v5075, 0.0
        %v5086 = vsel %vm4721, %v5077, 0.0
        %v5087 = vsel %vm4721, %v5079, 0.0
        %5088 = vst.msk [vmem:[#allocation2 + $0x600] sm:$0xff] %vm4732, %v5084
        %5089 = vst.msk [vmem:[#allocation2 + $0x640] sm:$0xff] %vm4732, %v5085
        %5090 = vst.msk [vmem:[#allocation2 + $0x680] sm:$0xff] %vm4732, %v5086
        %5091 = vst.msk [vmem:[#allocation2 + $0x6c0] sm:$0xff] %vm4732, %v5087
        %5092 = vst.msk [vmem:[#allocation2 + $0x600] sm:$0xff] %vm4735, 0.0
        %5093 = vst.msk [vmem:[#allocation2 + $0x640] sm:$0xff] %vm4735, 0.0
        %5094 = vst.msk [vmem:[#allocation2 + $0x680] sm:$0xff] %vm4735, 0.0
        %5095 = vst.msk [vmem:[#allocation2 + $0x6c0] sm:$0xff] %vm4735, 0.0
        %v5096 = vld [vmem:[#allocation9] sm:$0xff]
        %v5097 = vld [vmem:[#allocation9 + $0x8] sm:$0xff]
        %v5098 = vld [vmem:[#allocation9 + $0x10] sm:$0xff]
        %v5099 = vld [vmem:[#allocation9 + $0x18] sm:$0xff]
        %5104 = vrot.lane.b32.xlu0 %v5096, 120
        %v5105 = vpop.permute.xlu0 %5104
        %5106 = vrot.lane.b32.xlu0 %v5097, 120
        %v5107 = vpop.permute.xlu0 %5106
        %5108 = vrot.lane.b32.xlu0 %v5098, 120
        %v5109 = vpop.permute.xlu0 %5108
        %5110 = vrot.lane.b32.xlu0 %v5099, 120
        %v5111 = vpop.permute.xlu0 %5110
        %5116 = vst.msk [vmem:[#allocation2 + $0x700] sm:$0xff] %vm4748, %v5105
        %5117 = vst.msk [vmem:[#allocation2 + $0x740] sm:$0xff] %vm4748, %v5107
        %5118 = vst.msk [vmem:[#allocation2 + $0x780] sm:$0xff] %vm4748, %v5109
        %5119 = vst.msk [vmem:[#allocation2 + $0x7c0] sm:$0xff] %vm4748, %v5111
        %5120 = vst.msk [vmem:[#allocation2 + $0x700] sm:$0xff] %vm4751, 0.0
        %5121 = vst.msk [vmem:[#allocation2 + $0x740] sm:$0xff] %vm4751, 0.0
        %5122 = vst.msk [vmem:[#allocation2 + $0x780] sm:$0xff] %vm4751, 0.0
        %5123 = vst.msk [vmem:[#allocation2 + $0x7c0] sm:$0xff] %vm4751, 0.0
        %v5124 = vld [vmem:[#allocation9] sm:$0xff]
        %v5125 = vld [vmem:[#allocation9 + $0x8] sm:$0xff]
        %v5126 = vld [vmem:[#allocation9 + $0x10] sm:$0xff]
        %v5127 = vld [vmem:[#allocation9 + $0x18] sm:$0xff]
        %5132 = vrot.lane.b32.xlu0 %v5124, 119
        %v5133 = vpop.permute.xlu0 %5132
        %5134 = vrot.lane.b32.xlu0 %v5125, 119
        %v5135 = vpop.permute.xlu0 %5134
        %5136 = vrot.lane.b32.xlu0 %v5126, 119
        %v5137 = vpop.permute.xlu0 %5136
        %5138 = vrot.lane.b32.xlu0 %v5127, 119
        %v5139 = vpop.permute.xlu0 %5138
        %v5144 = vsel %vm4700, %v5133, 0.0
        %v5145 = vsel %vm4700, %v5135, 0.0
        %v5146 = vsel %vm4700, %v5137, 0.0
        %v5147 = vsel %vm4700, %v5139, 0.0
        %5148 = vst.msk [vmem:[#allocation2 + $0x800] sm:$0xff] %vm4766, %v5144
        %5149 = vst.msk [vmem:[#allocation2 + $0x840] sm:$0xff] %vm4766, %v5145
        %5150 = vst.msk [vmem:[#allocation2 + $0x880] sm:$0xff] %vm4766, %v5146
        %5151 = vst.msk [vmem:[#allocation2 + $0x8c0] sm:$0xff] %vm4766, %v5147
        %5152 = vst.msk [vmem:[#allocation2 + $0x800] sm:$0xff] %vm4769, 0.0
        %5153 = vst.msk [vmem:[#allocation2 + $0x840] sm:$0xff] %vm4769, 0.0
        %5154 = vst.msk [vmem:[#allocation2 + $0x880] sm:$0xff] %vm4769, 0.0
        %5155 = vst.msk [vmem:[#allocation2 + $0x8c0] sm:$0xff] %vm4769, 0.0
        %v5156 = vld [vmem:[#allocation2] sm:$0xff]
        %v5157 = vld [vmem:[#allocation2 + $0x40] sm:$0xff]
        %v5158 = vld [vmem:[#allocation2 + $0x80] sm:$0xff]
        %v5159 = vld [vmem:[#allocation2 + $0xc0] sm:$0xff]
        %v5160 = vld [vmem:[#allocation2 + $0x100] sm:$0xff]
        %v5161 = vld [vmem:[#allocation2 + $0x140] sm:$0xff]
        %v5162 = vld [vmem:[#allocation2 + $0x180] sm:$0xff]
        %v5163 = vld [vmem:[#allocation2 + $0x1c0] sm:$0xff]
        %v5164 = vld [vmem:[#allocation2 + $0x200] sm:$0xff]
        %v5165 = vld [vmem:[#allocation2 + $0x240] sm:$0xff]
        %v5166 = vld [vmem:[#allocation2 + $0x280] sm:$0xff]
        %v5167 = vld [vmem:[#allocation2 + $0x2c0] sm:$0xff]
        %v5168 = vld [vmem:[#allocation2 + $0x300] sm:$0xff]
        %v5169 = vld [vmem:[#allocation2 + $0x340] sm:$0xff]
        %v5170 = vld [vmem:[#allocation2 + $0x380] sm:$0xff]
        %v5171 = vld [vmem:[#allocation2 + $0x3c0] sm:$0xff]
        %v5172 = vld [vmem:[#allocation2 + $0x400] sm:$0xff]
        %v5173 = vld [vmem:[#allocation2 + $0x440] sm:$0xff]
        %v5174 = vld [vmem:[#allocation2 + $0x480] sm:$0xff]
        %v5175 = vld [vmem:[#allocation2 + $0x4c0] sm:$0xff]
        %v5176 = vld [vmem:[#allocation2 + $0x500] sm:$0xff]
        %v5177 = vld [vmem:[#allocation2 + $0x540] sm:$0xff]
        %v5178 = vld [vmem:[#allocation2 + $0x580] sm:$0xff]
        %v5179 = vld [vmem:[#allocation2 + $0x5c0] sm:$0xff]
        %v5180 = vld [vmem:[#allocation2 + $0x600] sm:$0xff]
        %v5181 = vld [vmem:[#allocation2 + $0x640] sm:$0xff]
        %v5182 = vld [vmem:[#allocation2 + $0x680] sm:$0xff]
        %v5183 = vld [vmem:[#allocation2 + $0x6c0] sm:$0xff]
        %v5184 = vld [vmem:[#allocation2 + $0x700] sm:$0xff]
        %v5185 = vld [vmem:[#allocation2 + $0x740] sm:$0xff]
        %v5186 = vld [vmem:[#allocation2 + $0x780] sm:$0xff]
        %v5187 = vld [vmem:[#allocation2 + $0x7c0] sm:$0xff]
        %v5188 = vld [vmem:[#allocation2 + $0x800] sm:$0xff]
        %v5189 = vld [vmem:[#allocation2 + $0x840] sm:$0xff]
        %v5190 = vld [vmem:[#allocation2 + $0x880] sm:$0xff]
        %v5191 = vld [vmem:[#allocation2 + $0x8c0] sm:$0xff]
        %v5192 = vld [vmem:[%s11] sm:$0xff]
        %v5193 = vld [vmem:[%s11 + $0x8] sm:$0xff]
        %v5194 = vld [vmem:[%s11 + $0x10] sm:$0xff]
        %v5195 = vld [vmem:[%s11 + $0x18] sm:$0xff]
        %v5196 = vld [vmem:[%s11 + $0x20] sm:$0xff]
        %v5197 = vld [vmem:[%s11 + $0x28] sm:$0xff]
        %v5198 = vld [vmem:[%s11 + $0x30] sm:$0xff]
        %v5199 = vld [vmem:[%s11 + $0x38] sm:$0xff]
        %v5200 = vld [vmem:[%s11 + $0x40] sm:$0xff]
        %v5201 = vld [vmem:[%s11 + $0x48] sm:$0xff]
        %v5202 = vld [vmem:[%s11 + $0x50] sm:$0xff]
        %v5203 = vld [vmem:[%s11 + $0x58] sm:$0xff]
        %v5204 = vld [vmem:[%s12] sm:$0xff]
        %v5205 = vld [vmem:[%s12 + $0x8] sm:$0xff]
        %v5206 = vld [vmem:[%s12 + $0x10] sm:$0xff]
        %v5207 = vld [vmem:[%s12 + $0x18] sm:$0xff]
        %5209 = vset.pattern.permute.xlu0 0
        %5210 = vperm.xlu0 %5209, %v5204
        %v5211 = vpop.permute.xlu0 %5210
        %5214 = vset.pattern.permute.xlu0 0
        %5215 = vperm.xlu0 %5214, %v5205
        %v5216 = vpop.permute.xlu0 %5215
        %5219 = vset.pattern.permute.xlu0 0
        %5220 = vperm.xlu0 %5219, %v5206
        %v5221 = vpop.permute.xlu0 %5220
        %5224 = vset.pattern.permute.xlu0 0
        %5225 = vperm.xlu0 %5224, %v5207
        %v5226 = vpop.permute.xlu0 %5225
        %v5229 = vsel %vm918, %v5194, 0
        %v5232 = vsel %vm918, %v5197, 0
        %v5235 = vsel %vm918, %v5200, 0
        %v5238 = vsel %vm918, %v5203, 0
        %5240 = vmatpush.msra.mxu0 %v5171
        %5241 = vmatpush.msra.mxu0 %v5170
        %5242 = vmatpush.msra.mxu0 %v5169
        %5243 = vmatpush.msra.mxu0 %v5168
        %5244 = vmatpush.msra.mxu0 %v5167
        %5245 = vmatpush.msra.mxu0 %v5166
        %5246 = vmatpush.msra.mxu0 %v5165
        %5247 = vmatpush.msra.mxu0 %v5164
        %5248 = vmatpush.msra.mxu0 %v5163
        %5249 = vmatpush.msra.mxu0 %v5162
        %5250 = vmatpush.msra.mxu0 %v5161
        %5251 = vmatpush.msra.mxu0 %v5160
        %5252 = vmatpush.msra.mxu0 %v5159
        %5253 = vmatpush.msra.mxu0 %v5158
        %5254 = vmatpush.msra.mxu0 %v5157
        %5255 = vmatpush.msra.mxu0 %v5156
        %5256 = vmatmul.f32.gmra.mxu0 %v5192
        %v5257 = vpop.f32.mrf.mxu0
        %v5258 = vadd.f32 %v5211, %v5257
        %5259 = vmatmul.f32.gmra.mxu0 %v5195
        %v5260 = vpop.f32.mrf.mxu0
        %v5261 = vadd.f32 %v5216, %v5260
        %5262 = vmatmul.f32.gmra.mxu0 %v5198
        %v5263 = vpop.f32.mrf.mxu0
        %v5264 = vadd.f32 %v5221, %v5263
        %5265 = vmatmul.f32.gmra.mxu0 %v5201
        %v5266 = vpop.f32.mrf.mxu0
        %v5267 = vadd.f32 %v5226, %v5266
        %5268 = vdwg.mxu0
        %5269 = vmatpush.msra.mxu0 %v5187
        %5270 = vmatpush.msra.mxu0 %v5186
        %5271 = vmatpush.msra.mxu0 %v5185
        %5272 = vmatpush.msra.mxu0 %v5184
        %5273 = vmatpush.msra.mxu0 %v5183
        %5274 = vmatpush.msra.mxu0 %v5182
        %5275 = vmatpush.msra.mxu0 %v5181
        %5276 = vmatpush.msra.mxu0 %v5180
        %5277 = vmatpush.msra.mxu0 %v5179
        %5278 = vmatpush.msra.mxu0 %v5178
        %5279 = vmatpush.msra.mxu0 %v5177
        %5280 = vmatpush.msra.mxu0 %v5176
        %5281 = vmatpush.msra.mxu0 %v5175
        %5282 = vmatpush.msra.mxu0 %v5174
        %5283 = vmatpush.msra.mxu0 %v5173
        %5284 = vmatpush.msra.mxu0 %v5172
        %5285 = vmatmul.f32.gmra.mxu0 %v5193
        %v5286 = vpop.f32.mrf.mxu0
        %v5287 = vadd.f32 %v5258, %v5286
        %5288 = vmatmul.f32.gmra.mxu0 %v5196
        %v5289 = vpop.f32.mrf.mxu0
        %v5290 = vadd.f32 %v5261, %v5289
        %5291 = vmatmul.f32.gmra.mxu0 %v5199
        %v5292 = vpop.f32.mrf.mxu0
        %v5293 = vadd.f32 %v5264, %v5292
        %5294 = vmatmul.f32.gmra.mxu0 %v5202
        %v5295 = vpop.f32.mrf.mxu0
        %v5296 = vadd.f32 %v5267, %v5295
        %5297 = vdwg.mxu0
        %5298 = vmatpush.msra.mxu0 0.0
        %5299 = vmatpush.msra.mxu0 0.0
        %5300 = vmatpush.msra.mxu0 0.0
        %5301 = vmatpush.msra.mxu0 0.0
        %5302 = vmatpush.msra.mxu0 0.0
        %5303 = vmatpush.msra.mxu0 0.0
        %5304 = vmatpush.msra.mxu0 0.0
        %5305 = vmatpush.msra.mxu0 0.0
        %5306 = vmatpush.msra.mxu0 0.0
        %5307 = vmatpush.msra.mxu0 0.0
        %5308 = vmatpush.msra.mxu0 0.0
        %5309 = vmatpush.msra.mxu0 0.0
        %5310 = vmatpush.msra.mxu0 %v5191
        %5311 = vmatpush.msra.mxu0 %v5190
        %5312 = vmatpush.msra.mxu0 %v5189
        %5313 = vmatpush.msra.mxu0 %v5188
        %5314 = vmatmul.f32.gmra.mxu0 %v5229
        %v5315 = vpop.f32.mrf.mxu0
        %v5316 = vadd.f32 %v5287, %v5315
        %5317 = vmatmul.f32.gmra.mxu0 %v5232
        %v5318 = vpop.f32.mrf.mxu0
        %v5319 = vadd.f32 %v5290, %v5318
        %5320 = vmatmul.f32.gmra.mxu0 %v5235
        %v5321 = vpop.f32.mrf.mxu0
        %v5322 = vadd.f32 %v5293, %v5321
        %5323 = vmatmul.f32.gmra.mxu0 %v5238
        %v5324 = vpop.f32.mrf.mxu0
        %v5325 = vadd.f32 %v5296, %v5324
        %5326 = vdwg.mxu0
        %v5327 = vmax.f32 %v5316, 0.0
        %v5328 = vmax.f32 %v5319, 0.0
        %v5329 = vmax.f32 %v5322, 0.0
        %v5330 = vmax.f32 %v5325, 0.0
        %5331 = vst.msk [vmem:[#allocation10] sm:$0xff] %vm4561, %v5327
        %5332 = vst.msk [vmem:[#allocation10 + $0x8] sm:$0xff] %vm4561, %v5328
        %5333 = vst.msk [vmem:[#allocation10 + $0x10] sm:$0xff] %vm4561, %v5329
        %5334 = vst.msk [vmem:[#allocation10 + $0x18] sm:$0xff] %vm4561, %v5330
        %v5335 = vld [vmem:[#allocation10] sm:$0xff]
        %v5336 = vld [vmem:[#allocation10 + $0x8] sm:$0xff]
        %v5337 = vld [vmem:[#allocation10 + $0x10] sm:$0xff]
        %v5338 = vld [vmem:[#allocation10 + $0x18] sm:$0xff]
        %5343 = vrot.lane.b32.xlu0 %v5335, 127
        %v5344 = vpop.permute.xlu0 %5343
        %5345 = vrot.lane.b32.xlu0 %v5336, 127
        %v5346 = vpop.permute.xlu0 %5345
        %5347 = vrot.lane.b32.xlu0 %v5337, 127
        %v5348 = vpop.permute.xlu0 %5347
        %5349 = vrot.lane.b32.xlu0 %v5338, 127
        %v5350 = vpop.permute.xlu0 %5349
        %v5355 = vmax.f32 %v5335, %v5344
        %v5356 = vmax.f32 %v5336, %v5346
        %v5357 = vmax.f32 %v5337, %v5348
        %v5358 = vmax.f32 %v5338, %v5350
        %5363 = vrot.lane.b32.xlu0 %v5355, 120
        %v5364 = vpop.permute.xlu0 %5363
        %5365 = vrot.lane.b32.xlu0 %v5356, 120
        %v5366 = vpop.permute.xlu0 %5365
        %5367 = vrot.lane.b32.xlu0 %v5357, 120
        %v5368 = vpop.permute.xlu0 %5367
        %5369 = vrot.lane.b32.xlu0 %v5358, 120
        %v5370 = vpop.permute.xlu0 %5369
        %v5375 = vmax.f32 %v5355, %v5364
        %v5376 = vmax.f32 %v5356, %v5366
        %v5377 = vmax.f32 %v5357, %v5368
        %v5378 = vmax.f32 %v5358, %v5370
        %v5379 = vld [vmem:[%s15] sm:$0xff]
        %v5380 = vld [vmem:[%s15 + $0x8] sm:$0xff]
        %v5381 = vld [vmem:[%s15 + $0x10] sm:$0xff]
        %v5382 = vld [vmem:[%s15 + $0x18] sm:$0xff]
        %v5383 = vld [vmem:[%s15 + $0x20] sm:$0xff]
        %v5384 = vld [vmem:[%s15 + $0x28] sm:$0xff]
        %v5385 = vld [vmem:[%s15 + $0x30] sm:$0x7f]
        %v5387 = vsel %vm4766, %v5375, 0
        %v5390 = vsel %vm4766, %v5376, 0
        %v5393 = vsel %vm4766, %v5377, 0
        %v5396 = vsel %vm4766, %v5378, 0
        %v5399 = vsel %vm3323, %v5385, 0
        %5401 = vmatpush.msra.mxu0 0.0
        %5402 = vmatpush.msra.mxu0 0.0
        %5403 = vmatpush.msra.mxu0 0.0
        %5404 = vmatpush.msra.mxu0 0.0
        %5405 = vmatpush.msra.mxu0 0.0
        %5406 = vmatpush.msra.mxu0 0.0
        %5407 = vmatpush.msra.mxu0 0.0
        %5408 = vmatpush.msra.mxu0 0.0
        %5409 = vmatpush.msra.mxu0 0.0
        %5410 = vmatpush.msra.mxu0 %v5399
        %5411 = vmatpush.msra.mxu0 %v5384
        %5412 = vmatpush.msra.mxu0 %v5383
        %5413 = vmatpush.msra.mxu0 %v5382
        %5414 = vmatpush.msra.mxu0 %v5381
        %5415 = vmatpush.msra.mxu0 %v5380
        %5416 = vmatpush.msra.mxu0 %v5379
        %5417 = vmatmul.f32.gmra.mxu0 %v5387
        %v5418 = vpop.f32.mrf.mxu0
        %v5419 = vadd.f32 0.0, %v5418
        %5420 = vmatmul.f32.gmra.mxu0 %v5390
        %v5421 = vpop.f32.mrf.mxu0
        %v5422 = vadd.f32 0.0, %v5421
        %5423 = vmatmul.f32.gmra.mxu0 %v5393
        %v5424 = vpop.f32.mrf.mxu0
        %v5425 = vadd.f32 0.0, %v5424
        %5426 = vmatmul.f32.gmra.mxu0 %v5396
        %v5427 = vpop.f32.mrf.mxu0
        %v5428 = vadd.f32 0.0, %v5427
        %5429 = vdwg.mxu0
        %5430 = vst.msk [vmem:[#allocation11] sm:$0xff] %vm3710, %v5419
        %5431 = vst.msk [vmem:[#allocation11 + $0x8] sm:$0xff] %vm3710, %v5422
        %5432 = vst.msk [vmem:[#allocation11 + $0x10] sm:$0xff] %vm3710, %v5425
        %5433 = vst.msk [vmem:[#allocation11 + $0x18] sm:$0xff] %vm3710, %v5428
        %v5434 = vld [vmem:[#allocation11] sm:$0x1]
        %v5435 = vlaneseq
        %vm5436 = vcmp.ge.s32.totalorder %v5435, 0
        %vm5437 = vcmp.lt.s32.totalorder %v5435, 16
        %vm5438 = vmand %vm5436, %vm5437
        %5439 = vst.msk [vmem:[#allocation12] sm:$0x1] %vm5438, %v5434
        %v5440 = vld [vmem:[#allocation11 + $0x1] sm:$0x1]
        %5442 = vrot.lane.b32.xlu0 %v5440, 16
        %v5443 = vpop.permute.xlu0 %5442
        %vm5445 = vcmp.ge.s32.totalorder %v5435, 16
        %vm5446 = vcmp.lt.s32.totalorder %v5435, 32
        %vm5447 = vmand %vm5445, %vm5446
        %5448 = vst.msk [vmem:[#allocation12] sm:$0x1] %vm5447, %v5443
        %v5449 = vld [vmem:[#allocation11 + $0x2] sm:$0x1]
        %5451 = vrot.lane.b32.xlu0 %v5449, 32
        %v5452 = vpop.permute.xlu0 %5451
        %vm5454 = vcmp.ge.s32.totalorder %v5435, 32
        %vm5455 = vcmp.lt.s32.totalorder %v5435, 48
        %vm5456 = vmand %vm5454, %vm5455
        %5457 = vst.msk [vmem:[#allocation12] sm:$0x1] %vm5456, %v5452
        %v5458 = vld [vmem:[#allocation11 + $0x3] sm:$0x1]
        %5460 = vrot.lane.b32.xlu0 %v5458, 48
        %v5461 = vpop.permute.xlu0 %5460
        %vm5463 = vcmp.ge.s32.totalorder %v5435, 48
        %vm5464 = vcmp.lt.s32.totalorder %v5435, 64
        %vm5465 = vmand %vm5463, %vm5464
        %5466 = vst.msk [vmem:[#allocation12] sm:$0x1] %vm5465, %v5461
        %v5467 = vld [vmem:[#allocation11 + $0x4] sm:$0x1]
        %5469 = vrot.lane.b32.xlu0 %v5467, 64
        %v5470 = vpop.permute.xlu0 %5469
        %vm5472 = vcmp.ge.s32.totalorder %v5435, 64
        %vm5473 = vcmp.lt.s32.totalorder %v5435, 80
        %vm5474 = vmand %vm5472, %vm5473
        %5475 = vst.msk [vmem:[#allocation12] sm:$0x1] %vm5474, %v5470
        %v5476 = vld [vmem:[#allocation11 + $0x5] sm:$0x1]
        %5478 = vrot.lane.b32.xlu0 %v5476, 80
        %v5479 = vpop.permute.xlu0 %5478
        %vm5481 = vcmp.ge.s32.totalorder %v5435, 80
        %vm5482 = vcmp.lt.s32.totalorder %v5435, 96
        %vm5483 = vmand %vm5481, %vm5482
        %5484 = vst.msk [vmem:[#allocation12] sm:$0x1] %vm5483, %v5479
        %v5485 = vld [vmem:[#allocation11 + $0x6] sm:$0x1]
        %5487 = vrot.lane.b32.xlu0 %v5485, 96
        %v5488 = vpop.permute.xlu0 %5487
        %vm5490 = vcmp.ge.s32.totalorder %v5435, 96
        %vm5491 = vcmp.lt.s32.totalorder %v5435, 112
        %vm5492 = vmand %vm5490, %vm5491
        %5493 = vst.msk [vmem:[#allocation12] sm:$0x1] %vm5492, %v5488
        %v5494 = vld [vmem:[#allocation11 + $0x7] sm:$0x1]
        %5496 = vrot.lane.b32.xlu0 %v5494, 112
        %v5497 = vpop.permute.xlu0 %5496
        %vm5499 = vcmp.ge.s32.totalorder %v5435, 112
        %vm5500 = vcmp.lt.s32.totalorder %v5435, 128
        %vm5501 = vmand %vm5499, %vm5500
        %5502 = vst.msk [vmem:[#allocation12] sm:$0x1] %vm5501, %v5497
        %v5503 = vld [vmem:[#allocation11 + $0x8] sm:$0x1]
        %5504 = vst.msk [vmem:[#allocation12 + $0x1] sm:$0x1] %vm5438, %v5503
        %v5505 = vld [vmem:[#allocation11 + $0x9] sm:$0x1]
        %5507 = vrot.lane.b32.xlu0 %v5505, 16
        %v5508 = vpop.permute.xlu0 %5507
        %5510 = vst.msk [vmem:[#allocation12 + $0x1] sm:$0x1] %vm5447, %v5508
        %v5511 = vld [vmem:[#allocation11 + $0xa] sm:$0x1]
        %5513 = vrot.lane.b32.xlu0 %v5511, 32
        %v5514 = vpop.permute.xlu0 %5513
        %5516 = vst.msk [vmem:[#allocation12 + $0x1] sm:$0x1] %vm5456, %v5514
        %v5517 = vld [vmem:[#allocation11 + $0xb] sm:$0x1]
        %5519 = vrot.lane.b32.xlu0 %v5517, 48
        %v5520 = vpop.permute.xlu0 %5519
        %5522 = vst.msk [vmem:[#allocation12 + $0x1] sm:$0x1] %vm5465, %v5520
        %v5523 = vld [vmem:[#allocation11 + $0xc] sm:$0x1]
        %5525 = vrot.lane.b32.xlu0 %v5523, 64
        %v5526 = vpop.permute.xlu0 %5525
        %5528 = vst.msk [vmem:[#allocation12 + $0x1] sm:$0x1] %vm5474, %v5526
        %v5529 = vld [vmem:[#allocation11 + $0xd] sm:$0x1]
        %5531 = vrot.lane.b32.xlu0 %v5529, 80
        %v5532 = vpop.permute.xlu0 %5531
        %5534 = vst.msk [vmem:[#allocation12 + $0x1] sm:$0x1] %vm5483, %v5532
        %v5535 = vld [vmem:[#allocation11 + $0xe] sm:$0x1]
        %5537 = vrot.lane.b32.xlu0 %v5535, 96
        %v5538 = vpop.permute.xlu0 %5537
        %5540 = vst.msk [vmem:[#allocation12 + $0x1] sm:$0x1] %vm5492, %v5538
        %v5541 = vld [vmem:[#allocation11 + $0xf] sm:$0x1]
        %5543 = vrot.lane.b32.xlu0 %v5541, 112
        %v5544 = vpop.permute.xlu0 %5543
        %5546 = vst.msk [vmem:[#allocation12 + $0x1] sm:$0x1] %vm5501, %v5544
        %v5547 = vld [vmem:[#allocation11 + $0x10] sm:$0x1]
        %5548 = vst.msk [vmem:[#allocation12 + $0x2] sm:$0x1] %vm5438, %v5547
        %v5549 = vld [vmem:[#allocation11 + $0x11] sm:$0x1]
        %5551 = vrot.lane.b32.xlu0 %v5549, 16
        %v5552 = vpop.permute.xlu0 %5551
        %5554 = vst.msk [vmem:[#allocation12 + $0x2] sm:$0x1] %vm5447, %v5552
        %v5555 = vld [vmem:[#allocation11 + $0x12] sm:$0x1]
        %5557 = vrot.lane.b32.xlu0 %v5555, 32
        %v5558 = vpop.permute.xlu0 %5557
        %5560 = vst.msk [vmem:[#allocation12 + $0x2] sm:$0x1] %vm5456, %v5558
        %v5561 = vld [vmem:[#allocation11 + $0x13] sm:$0x1]
        %5563 = vrot.lane.b32.xlu0 %v5561, 48
        %v5564 = vpop.permute.xlu0 %5563
        %5566 = vst.msk [vmem:[#allocation12 + $0x2] sm:$0x1] %vm5465, %v5564
        %v5567 = vld [vmem:[#allocation11 + $0x14] sm:$0x1]
        %5569 = vrot.lane.b32.xlu0 %v5567, 64
        %v5570 = vpop.permute.xlu0 %5569
        %5572 = vst.msk [vmem:[#allocation12 + $0x2] sm:$0x1] %vm5474, %v5570
        %v5573 = vld [vmem:[#allocation11 + $0x15] sm:$0x1]
        %5575 = vrot.lane.b32.xlu0 %v5573, 80
        %v5576 = vpop.permute.xlu0 %5575
        %5578 = vst.msk [vmem:[#allocation12 + $0x2] sm:$0x1] %vm5483, %v5576
        %v5579 = vld [vmem:[#allocation11 + $0x16] sm:$0x1]
        %5581 = vrot.lane.b32.xlu0 %v5579, 96
        %v5582 = vpop.permute.xlu0 %5581
        %5584 = vst.msk [vmem:[#allocation12 + $0x2] sm:$0x1] %vm5492, %v5582
        %v5585 = vld [vmem:[#allocation11 + $0x17] sm:$0x1]
        %5587 = vrot.lane.b32.xlu0 %v5585, 112
        %v5588 = vpop.permute.xlu0 %5587
        %5590 = vst.msk [vmem:[#allocation12 + $0x2] sm:$0x1] %vm5501, %v5588
        %v5591 = vld [vmem:[#allocation11 + $0x18] sm:$0x1]
        %5592 = vst.msk [vmem:[#allocation12 + $0x3] sm:$0x1] %vm5438, %v5591
        %v5593 = vld [vmem:[#allocation11 + $0x19] sm:$0x1]
        %5595 = vrot.lane.b32.xlu0 %v5593, 16
        %v5596 = vpop.permute.xlu0 %5595
        %5598 = vst.msk [vmem:[#allocation12 + $0x3] sm:$0x1] %vm5447, %v5596
        %v5599 = vld [vmem:[#allocation11 + $0x1a] sm:$0x1]
        %5601 = vrot.lane.b32.xlu0 %v5599, 32
        %v5602 = vpop.permute.xlu0 %5601
        %5604 = vst.msk [vmem:[#allocation12 + $0x3] sm:$0x1] %vm5456, %v5602
        %v5605 = vld [vmem:[#allocation11 + $0x1b] sm:$0x1]
        %5607 = vrot.lane.b32.xlu0 %v5605, 48
        %v5608 = vpop.permute.xlu0 %5607
        %5610 = vst.msk [vmem:[#allocation12 + $0x3] sm:$0x1] %vm5465, %v5608
        %v5611 = vld [vmem:[#allocation11 + $0x1c] sm:$0x1]
        %5613 = vrot.lane.b32.xlu0 %v5611, 64
        %v5614 = vpop.permute.xlu0 %5613
        %5616 = vst.msk [vmem:[#allocation12 + $0x3] sm:$0x1] %vm5474, %v5614
        %v5617 = vld [vmem:[#allocation11 + $0x1d] sm:$0x1]
        %5619 = vrot.lane.b32.xlu0 %v5617, 80
        %v5620 = vpop.permute.xlu0 %5619
        %5622 = vst.msk [vmem:[#allocation12 + $0x3] sm:$0x1] %vm5483, %v5620
        %v5623 = vld [vmem:[#allocation11 + $0x1e] sm:$0x1]
        %5625 = vrot.lane.b32.xlu0 %v5623, 96
        %v5626 = vpop.permute.xlu0 %5625
        %5628 = vst.msk [vmem:[#allocation12 + $0x3] sm:$0x1] %vm5492, %v5626
        %v5629 = vld [vmem:[#allocation11 + $0x1f] sm:$0x1]
        %5631 = vrot.lane.b32.xlu0 %v5629, 112
        %v5632 = vpop.permute.xlu0 %5631
        %5634 = vst.msk [vmem:[#allocation12 + $0x3] sm:$0x1] %vm5501, %v5632
        %v5635 = vld [vmem:[#allocation12] sm:$0xf]
        %v5636 = vld [vmem:[%s16] sm:$0xff]
        %v5637 = vld [vmem:[%s16 + $0x8] sm:$0xff]
        %v5638 = vld [vmem:[%s16 + $0x10] sm:$0xff]
        %v5639 = vld [vmem:[%s16 + $0x18] sm:$0xff]
        %v5640 = vld [vmem:[%s16 + $0x20] sm:$0xff]
        %v5641 = vld [vmem:[%s16 + $0x28] sm:$0xff]
        %v5642 = vld [vmem:[%s16 + $0x30] sm:$0xff]
        %v5643 = vld [vmem:[%s16 + $0x38] sm:$0xff]
        %v5644 = vld [vmem:[%s16 + $0x40] sm:$0xff]
        %v5645 = vld [vmem:[%s16 + $0x48] sm:$0xff]
        %v5646 = vld [vmem:[%s16 + $0x50] sm:$0xff]
        %v5647 = vld [vmem:[%s16 + $0x58] sm:$0xff]
        %v5648 = vld [vmem:[%s16 + $0x60] sm:$0xff]
        %v5649 = vld [vmem:[%s16 + $0x68] sm:$0xff]
        %v5650 = vld [vmem:[%s16 + $0x70] sm:$0xff]
        %v5651 = vld [vmem:[%s16 + $0x78] sm:$0xff]
        %v5652 = vld [vmem:[%s16 + $0x80] sm:$0xff]
        %v5653 = vld [vmem:[%s16 + $0x88] sm:$0xff]
        %v5654 = vld [vmem:[%s16 + $0x90] sm:$0xff]
        %v5655 = vld [vmem:[%s16 + $0x98] sm:$0xff]
        %v5656 = vld [vmem:[%s16 + $0xa0] sm:$0xff]
        %v5657 = vld [vmem:[%s16 + $0xa8] sm:$0xff]
        %v5658 = vld [vmem:[%s16 + $0xb0] sm:$0xff]
        %v5659 = vld [vmem:[%s16 + $0xb8] sm:$0xff]
        %v5660 = vld [vmem:[%s16 + $0xc0] sm:$0xff]
        %v5661 = vld [vmem:[%s16 + $0xc8] sm:$0xff]
        %v5662 = vld [vmem:[%s16 + $0xd0] sm:$0xff]
        %v5663 = vld [vmem:[%s16 + $0xd8] sm:$0xff]
        %v5664 = vld [vmem:[%s16 + $0xe0] sm:$0xff]
        %v5665 = vld [vmem:[%s16 + $0xe8] sm:$0xff]
        %v5666 = vld [vmem:[%s16 + $0xf0] sm:$0xff]
        %v5667 = vld [vmem:[%s16 + $0xf8] sm:$0xff]
        %v5668 = vld [vmem:[%s16 + $0x100] sm:$0xff]
        %v5669 = vld [vmem:[%s16 + $0x108] sm:$0xff]
        %v5670 = vld [vmem:[%s16 + $0x110] sm:$0xff]
        %v5671 = vld [vmem:[%s16 + $0x118] sm:$0xff]
        %v5672 = vld [vmem:[%s16 + $0x120] sm:$0xff]
        %v5673 = vld [vmem:[%s16 + $0x128] sm:$0xff]
        %v5674 = vld [vmem:[%s16 + $0x130] sm:$0xff]
        %v5675 = vld [vmem:[%s16 + $0x138] sm:$0xff]
        %v5676 = vld [vmem:[%s16 + $0x140] sm:$0xff]
        %v5677 = vld [vmem:[%s16 + $0x148] sm:$0xff]
        %v5678 = vld [vmem:[%s16 + $0x150] sm:$0xff]
        %v5679 = vld [vmem:[%s16 + $0x158] sm:$0xff]
        %v5680 = vld [vmem:[%s16 + $0x160] sm:$0xff]
        %v5681 = vld [vmem:[%s16 + $0x168] sm:$0xff]
        %v5682 = vld [vmem:[%s16 + $0x170] sm:$0xff]
        %v5683 = vld [vmem:[%s16 + $0x178] sm:$0xff]
        %v5684 = vld [vmem:[%s16 + $0x180] sm:$0xff]
        %v5685 = vld [vmem:[%s16 + $0x188] sm:$0xff]
        %v5686 = vld [vmem:[%s16 + $0x190] sm:$0xff]
        %v5687 = vld [vmem:[%s16 + $0x198] sm:$0xff]
        %v5688 = vld [vmem:[%s16 + $0x1a0] sm:$0xff]
        %v5689 = vld [vmem:[%s16 + $0x1a8] sm:$0xff]
        %v5690 = vld [vmem:[%s16 + $0x1b0] sm:$0xff]
        %v5691 = vld [vmem:[%s16 + $0x1b8] sm:$0xff]
        %v5692 = vld [vmem:[%s16 + $0x1c0] sm:$0xff]
        %v5693 = vld [vmem:[%s16 + $0x1c8] sm:$0xff]
        %v5694 = vld [vmem:[%s16 + $0x1d0] sm:$0xff]
        %v5695 = vld [vmem:[%s16 + $0x1d8] sm:$0xff]
        %v5696 = vld [vmem:[%s16 + $0x1e0] sm:$0xff]
        %v5697 = vld [vmem:[%s16 + $0x1e8] sm:$0xff]
        %v5698 = vld [vmem:[%s16 + $0x1f0] sm:$0xff]
        %v5699 = vld [vmem:[%s16 + $0x1f8] sm:$0xff]
        %v5700 = vld [vmem:[%s17] sm:$0x1]
        %v5702 = vperm.slane %v5635, 0
        %v5703 = vperm.slane %v5635, 1
        %v5704 = vperm.slane %v5635, 2
        %v5705 = vperm.slane %v5635, 3
        %5710 = vmatpush.msra.mxu0 %v5651
        %5711 = vmatpush.msra.mxu0 %v5650
        %5712 = vmatpush.msra.mxu0 %v5649
        %5713 = vmatpush.msra.mxu0 %v5648
        %5714 = vmatpush.msra.mxu0 %v5647
        %5715 = vmatpush.msra.mxu0 %v5646
        %5716 = vmatpush.msra.mxu0 %v5645
        %5717 = vmatpush.msra.mxu0 %v5644
        %5718 = vmatpush.msra.mxu0 %v5643
        %5719 = vmatpush.msra.mxu0 %v5642
        %5720 = vmatpush.msra.mxu0 %v5641
        %5721 = vmatpush.msra.mxu0 %v5640
        %5722 = vmatpush.msra.mxu0 %v5639
        %5723 = vmatpush.msra.mxu0 %v5638
        %5724 = vmatpush.msra.mxu0 %v5637
        %5725 = vmatpush.msra.mxu0 %v5636
        %5726 = vmatmul.f32.gmra.mxu0 %v5702
        %v5727 = vpop.f32.mrf.mxu0
        %v5728 = vadd.f32 %v5700, %v5727
        %5729 = vdwg.mxu0
        %5730 = vmatpush.msra.mxu0 %v5667
        %5731 = vmatpush.msra.mxu0 %v5666
        %5732 = vmatpush.msra.mxu0 %v5665
        %5733 = vmatpush.msra.mxu0 %v5664
        %5734 = vmatpush.msra.mxu0 %v5663
        %5735 = vmatpush.msra.mxu0 %v5662
        %5736 = vmatpush.msra.mxu0 %v5661
        %5737 = vmatpush.msra.mxu0 %v5660
        %5738 = vmatpush.msra.mxu0 %v5659
        %5739 = vmatpush.msra.mxu0 %v5658
        %5740 = vmatpush.msra.mxu0 %v5657
        %5741 = vmatpush.msra.mxu0 %v5656
        %5742 = vmatpush.msra.mxu0 %v5655
        %5743 = vmatpush.msra.mxu0 %v5654
        %5744 = vmatpush.msra.mxu0 %v5653
        %5745 = vmatpush.msra.mxu0 %v5652
        %5746 = vmatmul.f32.gmra.mxu0 %v5703
        %v5747 = vpop.f32.mrf.mxu0
        %v5748 = vadd.f32 %v5728, %v5747
        %5749 = vdwg.mxu0
        %5750 = vmatpush.msra.mxu0 %v5683
        %5751 = vmatpush.msra.mxu0 %v5682
        %5752 = vmatpush.msra.mxu0 %v5681
        %5753 = vmatpush.msra.mxu0 %v5680
        %5754 = vmatpush.msra.mxu0 %v5679
        %5755 = vmatpush.msra.mxu0 %v5678
        %5756 = vmatpush.msra.mxu0 %v5677
        %5757 = vmatpush.msra.mxu0 %v5676
        %5758 = vmatpush.msra.mxu0 %v5675
        %5759 = vmatpush.msra.mxu0 %v5674
        %5760 = vmatpush.msra.mxu0 %v5673
        %5761 = vmatpush.msra.mxu0 %v5672
        %5762 = vmatpush.msra.mxu0 %v5671
        %5763 = vmatpush.msra.mxu0 %v5670
        %5764 = vmatpush.msra.mxu0 %v5669
        %5765 = vmatpush.msra.mxu0 %v5668
        %5766 = vmatmul.f32.gmra.mxu0 %v5704
        %v5767 = vpop.f32.mrf.mxu0
        %v5768 = vadd.f32 %v5748, %v5767
        %5769 = vdwg.mxu0
        %5770 = vmatpush.msra.mxu0 %v5699
        %5771 = vmatpush.msra.mxu0 %v5698
        %5772 = vmatpush.msra.mxu0 %v5697
        %5773 = vmatpush.msra.mxu0 %v5696
        %5774 = vmatpush.msra.mxu0 %v5695
        %5775 = vmatpush.msra.mxu0 %v5694
        %5776 = vmatpush.msra.mxu0 %v5693
        %5777 = vmatpush.msra.mxu0 %v5692
        %5778 = vmatpush.msra.mxu0 %v5691
        %5779 = vmatpush.msra.mxu0 %v5690
        %5780 = vmatpush.msra.mxu0 %v5689
        %5781 = vmatpush.msra.mxu0 %v5688
        %5782 = vmatpush.msra.mxu0 %v5687
        %5783 = vmatpush.msra.mxu0 %v5686
        %5784 = vmatpush.msra.mxu0 %v5685
        %5785 = vmatpush.msra.mxu0 %v5684
        %5786 = vmatmul.f32.gmra.mxu0 %v5705
        %v5787 = vpop.f32.mrf.mxu0
        %v5788 = vadd.f32 %v5768, %v5787
        %5789 = vdwg.mxu0
        %v5790 = vmax.f32 %v5788, 0.0
        %v5791 = vld [vmem:[%s18] sm:$0xff]
        %v5792 = vld [vmem:[%s18 + $0x8] sm:$0xff]
        %v5793 = vld [vmem:[%s18 + $0x10] sm:$0xff]
        %v5794 = vld [vmem:[%s18 + $0x18] sm:$0xff]
        %v5795 = vld [vmem:[%s19] sm:$0x1]
        %v5797 = vsel %vm918, %v5790, 0
        %5799 = vmatpush.msra.mxu0 0.0
        %5800 = vmatpush.msra.mxu0 0.0
        %5801 = vmatpush.msra.mxu0 0.0
        %5802 = vmatpush.msra.mxu0 0.0
        %5803 = vmatpush.msra.mxu0 0.0
        %5804 = vmatpush.msra.mxu0 0.0
        %5805 = vmatpush.msra.mxu0 0.0
        %5806 = vmatpush.msra.mxu0 0.0
        %5807 = vmatpush.msra.mxu0 0.0
        %5808 = vmatpush.msra.mxu0 0.0
        %5809 = vmatpush.msra.mxu0 0.0
        %5810 = vmatpush.msra.mxu0 0.0
        %5811 = vmatpush.msra.mxu0 %v5794
        %5812 = vmatpush.msra.mxu0 %v5793
        %5813 = vmatpush.msra.mxu0 %v5792
        %5814 = vmatpush.msra.mxu0 %v5791
        %5815 = vmatmul.f32.gmra.mxu0 %v5797
        %v5816 = vpop.f32.mrf.mxu0
        %v5817 = vadd.f32 %v5795, %v5816
        %5818 = vdwg.mxu0
        %5819 = vst [vmem:[%s638] sm:$0x1] %v5817
        %s5820 = sand.u32 %s468, 1
        %s5821 = scalar_lea.sflag [#allocation15], %s5820
        %s5822 = sand.u32 %s468, 1
        %s5823 = scalar_lea.vmem [#allocation16], %s5822
        // Predicated region
        $region105: #{traffic_sign_forward.1} parent=99 // pred_check
          %p5824 = pneg %p478
        $region106: #{traffic_sign_forward.1} parent=99 // pred_check_branch
          %5826 = sbr.rel (%p5824) target = $region108
        $region107: #{traffic_sign_forward.1} parent=99 // pred_region
          %5828 = vsyncadd %s5821, 0
          %s5829 = scalar_lea.hbm %s20, %s35
          %s5831 = sshll.u32 %s5823, 4
          %s5832 = int_to_ptr.vmem [resolvable:$true] %s5831
          %s5833 = sshll.u32 %s5829, 4
          %s5834 = int_to_ptr.hbm [resolvable:$true] %s5833
          %5836 = dma.vmem_to_hbm [thread:$0]  %s5832, 16, %s5834, %s5821
        $region108: #{traffic_sign_forward.1} parent=99 // pred_fallthru
          _
      $region100: #{traffic_sign_forward.1} parent=5 // pred_fallthru
        _
      %p5837 = scmp.le.s32.totalorder 2, %s30
      // Predicated region
      $region109: #{traffic_sign_forward.1} parent=5 // pred_check
        %p5838 = pneg %p5837
      $region110: #{traffic_sign_forward.1} parent=5 // pred_check_branch
        %5840 = sbr.rel (%p5838) target = $region112
      $region111: #{traffic_sign_forward.1} parent=5 // pred_region
        %s5841 = ssub.s32 %s30, 2
        // Predicated region
        $region113: #{traffic_sign_forward.1} parent=111 // pred_check
          %p5842 = pneg %p484
        $region114: #{traffic_sign_forward.1} parent=111 // pred_check_branch
          %5844 = sbr.rel (%p5842) target = $region116
        $region115: #{traffic_sign_forward.1} parent=111 // pred_region
          %s5845 = sand.u32 %s469, 1
          %s5846 = scalar_lea.sflag [#allocation15], %s5845
          %s5847 = sand.u32 %s469, 1
          %s5848 = scalar_lea.vmem [#allocation16], %s5847
          %5850 = dma.done %s5846, 16
        $region116: #{traffic_sign_forward.1} parent=111 // pred_fallthru
          _
      $region112: #{traffic_sign_forward.1} parent=5 // pred_fallthru
        _
    $region6: #{traffic_sign_forward.1} parent=1 // loop_footer
      %s34 = sadd.s32 1, %s30
    $region7: #{traffic_sign_forward.1} parent=1 // loop_footer_branch
      %29 = sbr.rel target = $region3
    $region8: #{traffic_sign_forward.1} parent=1 // loop_exit
      _
    %5851 = vsyncpa [#allocation14], 1
    %s5852 = scalar_lea.sflag [#allocation14], 1
    %5853 = vsyncpa %s5852, 1
    %5854 = vsyncpa [#allocation15], 1
    %s5855 = scalar_lea.sflag [#allocation15], 1
    %5856 = vsyncpa %s5855, 1

</llo_original>
